<compile_context>
chip_gen: v7x
topology: tpu7x:2x2x1
jax: 0.10.0
libtpu: 0.0.40
codegen_flags: <defaults>
</compile_context>

<pallas_src>
import jax
import jax.numpy as jnp
from jax.experimental import pallas as pl
from jax.experimental.pallas import tpu as pltpu

IN_FEATURES = 12 * 12 * 12 * 6   # 10368 = 81 * 128
HIDDEN = 200                     # logical hidden size (PyTorch fc1 out)
HIDDEN_PAD = 256                 # padded to a full 128-lane multiple
OUT = 6
OUT_PAD = 128                    # lane-dense output stores
NEG_BIG = -1.0e30                # bias for padded class columns -> exp() == 0


def simplenet_kernel(x_ref, w1_ref, b1_ref, w2_ref, b2_ref, o_ref):
    # fc1 on the MXU: cast x to bf16 in-kernel (W1 is stored bf16), f32 accum.
    x = x_ref[...].astype(jnp.bfloat16)
    h = jnp.dot(x, w1_ref[...], preferred_element_type=jnp.float32)
    # bias + ReLU in f32; padded hidden columns stay exactly 0 (zero W1 cols,
    # zero b1 pad), and padded W2 rows are zero, so they never contribute.
    h = jnp.maximum(h + b1_ref[...], 0.0)
    # fc2 (tiny) + bias; padded class columns get bias -1e30.
    logits = jnp.dot(h, w2_ref[...],
                     preferred_element_type=jnp.float32) + b2_ref[...]
    # numerically stable log_softmax over the class axis; padded columns
    # contribute exp(-1e30 - m) == 0 to the sum.
    m = jnp.max(logits, axis=-1, keepdims=True)
    shifted = logits - m
    lse = jnp.log(jnp.sum(jnp.exp(shifted), axis=-1, keepdims=True))
    o_ref[...] = shifted - lse


def prepare_params(w1, b1, w2, b2):
    """One-time weight prep (cast + pad). Do this at load time, NOT per call."""
    w1_b = jnp.pad(w1.astype(jnp.bfloat16),
                   ((0, 0), (0, HIDDEN_PAD - HIDDEN)))
    b1_p = jnp.pad(b1.astype(jnp.float32).reshape(1, HIDDEN),
                   ((0, 0), (0, HIDDEN_PAD - HIDDEN)))
    w2_p = jnp.pad(w2.astype(jnp.float32),
                   ((0, HIDDEN_PAD - HIDDEN), (0, OUT_PAD - OUT)))
    b2_p = jnp.pad(b2.astype(jnp.float32).reshape(1, OUT),
                   ((0, 0), (0, OUT_PAD - OUT)),
                   constant_values=NEG_BIG)
    return w1_b, b1_p, w2_p, b2_p


def simplenet_forward(x, params, *, bm_max=256):
    """x: (B, 10368) float32; params: output of prepare_params()."""
    w1_b, b1_p, w2_p, b2_p = params
    B = x.shape[0]

    # Batch tile: multiple of 8 sublanes, capped at bm_max (VMEM-safe on v7x).
    bm = min(bm_max, max(8, ((B + 7) // 8) * 8))
    Bp = ((B + bm - 1) // bm) * bm
    x_p = x if Bp == B else jnp.pad(x, ((0, Bp - B), (0, 0)))

    n_tiles = Bp // bm
    # On v7x, "parallel" shards batch tiles across the 2 TCs but duplicates the
    # resident W1 DMA per core; only worth it with several tiles per core.
    batch_sem = "parallel" if n_tiles > 2 else "arbitrary"

    cost = pl.CostEstimate(
        flops=2 * Bp * IN_FEATURES * HIDDEN_PAD + 2 * Bp * HIDDEN_PAD * OUT_PAD,
        transcendentals=Bp * (OUT + 1),
        bytes_accessed=(x_p.size * 4            # x streamed as f32
                        + w1_b.size * 2         # W1 streamed ONCE (resident)
                        + b1_p.size * 4 + w2_p.size * 4 + b2_p.size * 4
                        + Bp * OUT_PAD * 4),
    )

    out = pl.pallas_call(
        simplenet_kernel,
        out_shape=jax.ShapeDtypeStruct((Bp, OUT_PAD), jnp.float32),
        grid=(n_tiles,),
        in_specs=[
            pl.BlockSpec((bm, IN_FEATURES), lambda i: (i, 0)),          # x tile
            pl.BlockSpec((IN_FEATURES, HIDDEN_PAD), lambda i: (0, 0)),  # W1 (resident)
            pl.BlockSpec((1, HIDDEN_PAD), lambda i: (0, 0)),            # b1
            pl.BlockSpec((HIDDEN_PAD, OUT_PAD), lambda i: (0, 0)),      # W2
            pl.BlockSpec((1, OUT_PAD), lambda i: (0, 0)),               # b2
        ],
        out_specs=pl.BlockSpec((bm, OUT_PAD), lambda i: (i, 0)),
        compiler_params=pltpu.CompilerParams(
            dimension_semantics=(batch_sem,),
            vmem_limit_bytes=48 << 20,
        ),
        cost_estimate=cost,
    )(x_p, w1_b, b1_p, w2_p, b2_p)

    return out[:B, :OUT]


def init_params(key):
    # Deterministic init mimicking PyTorch nn.Linear default:
    # U(-1/sqrt(fan_in), 1/sqrt(fan_in)); weights stored as (in, out).
    k1, k2, k3, k4 = jax.random.split(key, 4)
    bound1 = 1.0 / jnp.sqrt(jnp.float32(IN_FEATURES))
    bound2 = 1.0 / jnp.sqrt(jnp.float32(HIDDEN))
    w1 = jax.random.uniform(k1, (IN_FEATURES, HIDDEN), jnp.float32, -bound1, bound1)
    b1 = jax.random.uniform(k2, (1, HIDDEN), jnp.float32, -bound1, bound1)
    w2 = jax.random.uniform(k3, (HIDDEN, OUT), jnp.float32, -bound2, bound2)
    b2 = jax.random.uniform(k4, (1, OUT), jnp.float32, -bound2, bound2)
    return w1, b1, w2, b2


if __name__ == "__main__":
    key = jax.random.PRNGKey(0)
    kx, kp = jax.random.split(key)

    B = 16   # small batch; kernel adapts bm and pads to a sublane multiple
    x = jax.random.normal(kx, (B, IN_FEATURES), jnp.float32)
    w1, b1, w2, b2 = init_params(kp)

    params = prepare_params(w1, b1, w2, b2)   # one-time cast/pad (hoisted)
    out = simplenet_forward(x, params)
    out = jax.block_until_ready(out)

    # Reference in plain JAX at the same (bf16 x / bf16 W1) precision.
    xf = x.astype(jnp.bfloat16).astype(jnp.float32)
    w1f = w1.astype(jnp.bfloat16).astype(jnp.float32)
    h_ref = jnp.maximum(
        jnp.dot(xf, w1f, precision=jax.lax.Precision.HIGHEST) + b1, 0.0)
    logits_ref = jnp.dot(h_ref, w2, precision=jax.lax.Precision.HIGHEST) + b2
    ref = jax.nn.log_softmax(logits_ref, axis=1)

    assert out.shape == (B, OUT)
    assert jnp.allclose(out, ref, atol=2e-3, rtol=2e-3), (
        float(jnp.max(jnp.abs(out - ref))))

    print("KERNEL_OK")
</pallas_src>

<mosaic_0001>
module attributes {stable_mosaic.version = 11 : i64} {
  func.func @simplenet_kernel(%arg0: i32, %arg1: memref<16x10368xf32, #tpu.memory_space<vmem>>, %arg2: memref<10368x256xbf16, #tpu.memory_space<vmem>>, %arg3: memref<1x256xf32, #tpu.memory_space<vmem>>, %arg4: memref<256x128xf32, #tpu.memory_space<vmem>>, %arg5: memref<1x128xf32, #tpu.memory_space<vmem>>, %arg6: memref<16x128xf32, #tpu.memory_space<vmem>>) attributes {dimension_semantics = [#tpu.dimension_semantics<arbitrary>], iteration_bounds = array<i64: 1>, scalar_prefetch = 0 : i64, scratch_operands = 0 : i64, tpu.core_type = #tpu.core_type<tc>, window_params = [{transform_indices = @transform_0, window_bounds = array<i64: 16, 10368>}, {pipeline_mode = #tpu.pipeline_mode<synchronous>, transform_indices = @transform_1, window_bounds = array<i64: 10368, 256>}, {pipeline_mode = #tpu.pipeline_mode<synchronous>, transform_indices = @transform_2, window_bounds = array<i64: 1, 256>}, {pipeline_mode = #tpu.pipeline_mode<synchronous>, transform_indices = @transform_3, window_bounds = array<i64: 256, 128>}, {pipeline_mode = #tpu.pipeline_mode<synchronous>, transform_indices = @transform_4, window_bounds = array<i64: 1, 128>}, {transform_indices = @transform_5, window_bounds = array<i64: 16, 128>}]} {
    %c0 = arith.constant 0 : index
    %c0_0 = arith.constant 0 : index
    %0 = vector.load %arg1[%c0, %c0_0] : memref<16x10368xf32, #tpu.memory_space<vmem>>, vector<16x10368xf32>
    %1 = arith.truncf %0 : vector<16x10368xf32> to vector<16x10368xbf16>
    %c0_1 = arith.constant 0 : index
    %c0_2 = arith.constant 0 : index
    %2 = vector.load %arg2[%c0_1, %c0_2] : memref<10368x256xbf16, #tpu.memory_space<vmem>>, vector<10368x256xbf16>
    %cst = arith.constant dense<0.000000e+00> : vector<16x256xf32>
    %3 = tpu.matmul %1, %2, %cst {dimension_numbers = #tpu.dot_dimension_numbers<[1], [0], [0], [1], [0, 0, 1, 1], [], []>} : vector<16x10368xbf16>, vector<10368x256xbf16>, vector<16x256xf32> -> vector<16x256xf32>
    %c0_3 = arith.constant 0 : index
    %c0_4 = arith.constant 0 : index
    %4 = vector.load %arg3[%c0_3, %c0_4] : memref<1x256xf32, #tpu.memory_space<vmem>>, vector<1x256xf32>
    %5 = vector.broadcast %4 : vector<1x256xf32> to vector<16x256xf32>
    %6 = arith.addf %3, %5 : vector<16x256xf32>
    %cst_5 = arith.constant 0.000000e+00 : f32
    %7 = vector.broadcast %cst_5 : f32 to vector<16x256xf32>
    %8 = arith.maximumf %6, %7 : vector<16x256xf32>
    %c0_6 = arith.constant 0 : index
    %c0_7 = arith.constant 0 : index
    %9 = vector.load %arg4[%c0_6, %c0_7] : memref<256x128xf32, #tpu.memory_space<vmem>>, vector<256x128xf32>
    %cst_8 = arith.constant dense<0.000000e+00> : vector<16x128xf32>
    %10 = tpu.matmul %8, %9, %cst_8 {dimension_numbers = #tpu.dot_dimension_numbers<[1], [0], [0], [1], [0, 0, 1, 1], [], []>} : vector<16x256xf32>, vector<256x128xf32>, vector<16x128xf32> -> vector<16x128xf32>
    %c0_9 = arith.constant 0 : index
    %c0_10 = arith.constant 0 : index
    %11 = vector.load %arg5[%c0_9, %c0_10] : memref<1x128xf32, #tpu.memory_space<vmem>>, vector<1x128xf32>
    %12 = vector.broadcast %11 : vector<1x128xf32> to vector<16x128xf32>
    %13 = arith.addf %10, %12 : vector<16x128xf32>
    %cst_11 = arith.constant dense<0xFF800000> : vector<16xf32>
    %14 = vector.multi_reduction <maximumf>, %13, %cst_11 [1] : vector<16x128xf32> to vector<16xf32>
    %15 = vector.shape_cast %14 : vector<16xf32> to vector<16x1xf32>
    %16 = vector.broadcast %15 : vector<16x1xf32> to vector<16x128xf32>
    %17 = arith.subf %13, %16 : vector<16x128xf32>
    %18 = math.exp %17 : vector<16x128xf32>
    %cst_12 = arith.constant dense<0.000000e+00> : vector<16xf32>
    %19 = vector.multi_reduction <add>, %18, %cst_12 [1] : vector<16x128xf32> to vector<16xf32>
    %20 = vector.shape_cast %19 : vector<16xf32> to vector<16x1xf32>
    %21 = math.log %20 : vector<16x1xf32>
    %22 = vector.broadcast %21 : vector<16x1xf32> to vector<16x128xf32>
    %23 = arith.subf %17, %22 : vector<16x128xf32>
    %c0_13 = arith.constant 0 : index
    %c0_14 = arith.constant 0 : index
    %24 = vector.load %arg6[%c0_13, %c0_14] : memref<16x128xf32, #tpu.memory_space<vmem>>, vector<16x128xf32>
    tpu.vector_store %arg6[%c0_13, %c0_14], %23 {strides = array<i32>} : memref<16x128xf32, #tpu.memory_space<vmem>>, vector<16x128xf32>,
    return
  }
  func.func @transform_0(%arg0: i32) -> (i32, i32) {
    %c0_i32 = arith.constant 0 : i32
    %c0_i32_0 = arith.constant 0 : i32
    return %arg0, %c0_i32 : i32, i32
  }
  func.func @transform_1(%arg0: i32) -> (i32, i32) {
    %c0_i32 = arith.constant 0 : i32
    %c0_i32_0 = arith.constant 0 : i32
    %c0_i32_1 = arith.constant 0 : i32
    return %c0_i32, %c0_i32_0 : i32, i32
  }
  func.func @transform_2(%arg0: i32) -> (i32, i32) {
    %c0_i32 = arith.constant 0 : i32
    %c0_i32_0 = arith.constant 0 : i32
    %c0_i32_1 = arith.constant 0 : i32
    return %c0_i32, %c0_i32_0 : i32, i32
  }
  func.func @transform_3(%arg0: i32) -> (i32, i32) {
    %c0_i32 = arith.constant 0 : i32
    %c0_i32_0 = arith.constant 0 : i32
    %c0_i32_1 = arith.constant 0 : i32
    return %c0_i32, %c0_i32_0 : i32, i32
  }
  func.func @transform_4(%arg0: i32) -> (i32, i32) {
    %c0_i32 = arith.constant 0 : i32
    %c0_i32_0 = arith.constant 0 : i32
    %c0_i32_1 = arith.constant 0 : i32
    return %c0_i32, %c0_i32_0 : i32, i32
  }
  func.func @transform_5(%arg0: i32) -> (i32, i32) {
    %c0_i32 = arith.constant 0 : i32
    %c0_i32_0 = arith.constant 0 : i32
    return %arg0, %c0_i32 : i32, i32
  }
}

</mosaic_0001>

<llo_original>
// kernel: tpu_custom_call.1
$region0: #{tpu_custom_call.1}
  #allocation0 [shape = 'u32[]', space=smem, size = 0x4, offset = 0x4, fixed_abs, tag = 'smem constant byte address 0x4 - core index']
  #allocation1 [shape = 'u32[144,128]{1,0:T(1,128)}', space=vmem, size = 0x12000, scoped, tag = 'internal scratch']
  %s0 = inlined_call_operand.hbm [shape: f32[16,10368], index: 0, kind: input, shape index: {}]
  %s1 = inlined_call_operand.hbm [shape: bf16[10368,256], index: 1, kind: input, shape index: {}]
  %s2 = inlined_call_operand.hbm [shape: f32[1,256], index: 2, kind: input, shape index: {}]
  %s3 = inlined_call_operand.hbm [shape: f32[256,128], index: 3, kind: input, shape index: {}]
  %s4 = inlined_call_operand.hbm [shape: f32[1,128], index: 4, kind: input, shape index: {}]
  %s5 = inlined_call_operand.hbm [shape: f32[16,128], index: 5, kind: output, shape index: {}]
  %s6 = sld [smem:[#allocation0]]
  $region50: #{tpu_custom_call.1} parent=0
    _
  %s8 = ssub.s32 1, %s6
  %s9 = scalar_select 0, %s8, %s6
  $region1: #{tpu_custom_call.1} parent=0
    #allocation2 [shape = 'u8[663552]{0}', space=vmem, size = 0xa2000, scoped, tag = 'input window, operand 0, single buffered']
    #allocation3 [shape = 's32[1]{0}', space=sflag, size = 0x4, scoped, tag = 'scoped memory for tpu_custom_call.1']
    #allocation4 [shape = 's32[1]{0}', space=sflag, size = 0x4, scoped, tag = 'scoped memory for tpu_custom_call.1']
    #allocation5 [shape = 'u8[5308416]{0}', space=vmem, size = 0x510000, scoped, tag = 'input window, operand 1, single buffered']
    #allocation6 [shape = 's32[1]{0}', space=sflag, size = 0x4, scoped, tag = 'scoped memory for tpu_custom_call.1']
    #allocation7 [shape = 'u8[1024]{0}', space=vmem, size = 0x400, scoped, tag = 'input window, operand 2, single buffered']
    #allocation8 [shape = 'u8[131072]{0}', space=vmem, size = 0x20000, scoped, tag = 'input window, operand 3, single buffered']
    #allocation9 [shape = 's32[1]{0}', space=sflag, size = 0x4, scoped, tag = 'scoped memory for tpu_custom_call.1']
    #allocation10 [shape = 'u8[512]{0}', space=vmem, size = 0x400, scoped, tag = 'input window, operand 4, single buffered']
    #allocation11 [shape = 'u8[8192]{0}', space=vmem, size = 0x2000, scoped, tag = 'output window, operand 0, single buffered']
    %10 = vsyncpa [#allocation3], 0
    %11 = vsyncpa [#allocation6], 0
    %12 = vsyncpa [#allocation9], 0
    %13 = vsyncpa [#allocation4], 0
    // Predicated region
    $region2: #{tpu_custom_call.1} parent=1 // pred_check
      _
    $region3: #{tpu_custom_call.1} parent=1 // pred_check_branch
      %15 = sbr.rel (0) target = $region5
    $region4: #{tpu_custom_call.1} parent=1 // pred_region
      %s17 = ssub.s32 20736, 20736
      %18 = vsyncadd [#allocation3], %s17
      %s19 = sshll.u32 [#allocation2], 4
      %s20 = int_to_ptr.vmem [resolvable:$true] %s19
      %25 = dma.hbm_to_vmem [thread:$0]  %s0, 20736, %s20, [#allocation3], 10368, 10368, 648
    $region5: #{tpu_custom_call.1} parent=1 // pred_fallthru
      _
    // Predicated region
    $region6: #{tpu_custom_call.1} parent=1 // pred_check
      _
    $region7: #{tpu_custom_call.1} parent=1 // pred_check_branch
      %27 = sbr.rel (0) target = $region9
    $region8: #{tpu_custom_call.1} parent=1 // pred_region
      %s29 = ssub.s32 165888, 165888
      %30 = vsyncadd [#allocation6], %s29
      %s31 = sshll.u32 [#allocation5], 4
      %s32 = int_to_ptr.vmem [resolvable:$true] %s31
      %37 = dma.hbm_to_vmem [thread:$0]  %s1, 165888, %s32, [#allocation6], 128, 128, 8
    $region9: #{tpu_custom_call.1} parent=1 // pred_fallthru
      _
    // Predicated region
    $region10: #{tpu_custom_call.1} parent=1 // pred_check
      _
    $region11: #{tpu_custom_call.1} parent=1 // pred_check_branch
      %39 = sbr.rel (0) target = $region13
    $region12: #{tpu_custom_call.1} parent=1 // pred_region
      %s41 = ssub.s32 32, 32
      %42 = vsyncadd [#allocation6], %s41
      %s44 = sshll.u32 [#allocation7], 4
      %s45 = int_to_ptr.vmem [resolvable:$true] %s44
      %47 = dma.hbm_to_vmem [thread:$0]  %s2, 32, %s45, [#allocation6]
    $region13: #{tpu_custom_call.1} parent=1 // pred_fallthru
      _
    // Predicated region
    $region14: #{tpu_custom_call.1} parent=1 // pred_check
      _
    $region15: #{tpu_custom_call.1} parent=1 // pred_check_branch
      %49 = sbr.rel (0) target = $region17
    $region16: #{tpu_custom_call.1} parent=1 // pred_region
      %s51 = ssub.s32 4096, 4096
      %52 = vsyncadd [#allocation9], %s51
      %s53 = sshll.u32 [#allocation8], 4
      %s54 = int_to_ptr.vmem [resolvable:$true] %s53
      %59 = dma.hbm_to_vmem [thread:$0]  %s3, 4096, %s54, [#allocation9], 128, 128, 8
    $region17: #{tpu_custom_call.1} parent=1 // pred_fallthru
      _
    // Predicated region
    $region18: #{tpu_custom_call.1} parent=1 // pred_check
      _
    $region19: #{tpu_custom_call.1} parent=1 // pred_check_branch
      %61 = sbr.rel (0) target = $region21
    $region20: #{tpu_custom_call.1} parent=1 // pred_region
      %s63 = ssub.s32 16, 16
      %64 = vsyncadd [#allocation9], %s63
      %s66 = sshll.u32 [#allocation10], 4
      %s67 = int_to_ptr.vmem [resolvable:$true] %s66
      %69 = dma.hbm_to_vmem [thread:$0]  %s4, 16, %s67, [#allocation9]
    $region21: #{tpu_custom_call.1} parent=1 // pred_fallthru
      _
    // Predicated region
    $region22: #{tpu_custom_call.1} parent=1 // pred_check
      _
    $region23: #{tpu_custom_call.1} parent=1 // pred_check_branch
      %71 = sbr.rel (0) target = $region25
    $region24: #{tpu_custom_call.1} parent=1 // pred_region
      %72 = dma.done [#allocation3], 20736
    $region25: #{tpu_custom_call.1} parent=1 // pred_fallthru
      _
    // Predicated region
    $region26: #{tpu_custom_call.1} parent=1 // pred_check
      _
    $region27: #{tpu_custom_call.1} parent=1 // pred_check_branch
      %74 = sbr.rel (0) target = $region29
    $region28: #{tpu_custom_call.1} parent=1 // pred_region
      %75 = dma.done [#allocation6], 165888
    $region29: #{tpu_custom_call.1} parent=1 // pred_fallthru
      _
    // Predicated region
    $region30: #{tpu_custom_call.1} parent=1 // pred_check
      _
    $region31: #{tpu_custom_call.1} parent=1 // pred_check_branch
      %77 = sbr.rel (0) target = $region33
    $region32: #{tpu_custom_call.1} parent=1 // pred_region
      %78 = dma.done [#allocation6], 32
    $region33: #{tpu_custom_call.1} parent=1 // pred_fallthru
      _
    // Predicated region
    $region34: #{tpu_custom_call.1} parent=1 // pred_check
      _
    $region35: #{tpu_custom_call.1} parent=1 // pred_check_branch
      %80 = sbr.rel (0) target = $region37
    $region36: #{tpu_custom_call.1} parent=1 // pred_region
      %81 = dma.done [#allocation9], 4096
    $region37: #{tpu_custom_call.1} parent=1 // pred_fallthru
      _
    // Predicated region
    $region38: #{tpu_custom_call.1} parent=1 // pred_check
      _
    $region39: #{tpu_custom_call.1} parent=1 // pred_check_branch
      %83 = sbr.rel (0) target = $region41
    $region40: #{tpu_custom_call.1} parent=1 // pred_region
      %84 = dma.done [#allocation9], 16
    $region41: #{tpu_custom_call.1} parent=1 // pred_fallthru
      _
    %v86 = vld [vmem:[#allocation2] sm:$0xff]
    %v87 = vld [vmem:[#allocation2 + $0x8] sm:$0xff]
    %v88 = vld [vmem:[#allocation2 + $0x10] sm:$0xff]
    %v89 = vld [vmem:[#allocation2 + $0x18] sm:$0xff]
    %v90 = vld [vmem:[#allocation2 + $0x20] sm:$0xff]
    %v91 = vld [vmem:[#allocation2 + $0x28] sm:$0xff]
    %v92 = vld [vmem:[#allocation2 + $0x30] sm:$0xff]
    %v93 = vld [vmem:[#allocation2 + $0x38] sm:$0xff]
    %v94 = vld [vmem:[#allocation2 + $0x40] sm:$0xff]
    %v95 = vld [vmem:[#allocation2 + $0x48] sm:$0xff]
    %v96 = vld [vmem:[#allocation2 + $0x50] sm:$0xff]
    %v97 = vld [vmem:[#allocation2 + $0x58] sm:$0xff]
    %v98 = vld [vmem:[#allocation2 + $0x60] sm:$0xff]
    %v99 = vld [vmem:[#allocation2 + $0x68] sm:$0xff]
    %v100 = vld [vmem:[#allocation2 + $0x70] sm:$0xff]
    %v101 = vld [vmem:[#allocation2 + $0x78] sm:$0xff]
    %v102 = vld [vmem:[#allocation2 + $0x80] sm:$0xff]
    %v103 = vld [vmem:[#allocation2 + $0x88] sm:$0xff]
    %v104 = vld [vmem:[#allocation2 + $0x90] sm:$0xff]
    %v105 = vld [vmem:[#allocation2 + $0x98] sm:$0xff]
    %v106 = vld [vmem:[#allocation2 + $0xa0] sm:$0xff]
    %v107 = vld [vmem:[#allocation2 + $0xa8] sm:$0xff]
    %v108 = vld [vmem:[#allocation2 + $0xb0] sm:$0xff]
    %v109 = vld [vmem:[#allocation2 + $0xb8] sm:$0xff]
    %v110 = vld [vmem:[#allocation2 + $0xc0] sm:$0xff]
    %v111 = vld [vmem:[#allocation2 + $0xc8] sm:$0xff]
    %v112 = vld [vmem:[#allocation2 + $0xd0] sm:$0xff]
    %v113 = vld [vmem:[#allocation2 + $0xd8] sm:$0xff]
    %v114 = vld [vmem:[#allocation2 + $0xe0] sm:$0xff]
    %v115 = vld [vmem:[#allocation2 + $0xe8] sm:$0xff]
    %v116 = vld [vmem:[#allocation2 + $0xf0] sm:$0xff]
    %v117 = vld [vmem:[#allocation2 + $0xf8] sm:$0xff]
    %v118 = vld [vmem:[#allocation2 + $0x100] sm:$0xff]
    %v119 = vld [vmem:[#allocation2 + $0x108] sm:$0xff]
    %v120 = vld [vmem:[#allocation2 + $0x110] sm:$0xff]
    %v121 = vld [vmem:[#allocation2 + $0x118] sm:$0xff]
    %v122 = vld [vmem:[#allocation2 + $0x120] sm:$0xff]
    %v123 = vld [vmem:[#allocation2 + $0x128] sm:$0xff]
    %v124 = vld [vmem:[#allocation2 + $0x130] sm:$0xff]
    %v125 = vld [vmem:[#allocation2 + $0x138] sm:$0xff]
    %v126 = vld [vmem:[#allocation2 + $0x140] sm:$0xff]
    %v127 = vld [vmem:[#allocation2 + $0x148] sm:$0xff]
    %v128 = vld [vmem:[#allocation2 + $0x150] sm:$0xff]
    %v129 = vld [vmem:[#allocation2 + $0x158] sm:$0xff]
    %v130 = vld [vmem:[#allocation2 + $0x160] sm:$0xff]
    %v131 = vld [vmem:[#allocation2 + $0x168] sm:$0xff]
    %v132 = vld [vmem:[#allocation2 + $0x170] sm:$0xff]
    %v133 = vld [vmem:[#allocation2 + $0x178] sm:$0xff]
    %v134 = vld [vmem:[#allocation2 + $0x180] sm:$0xff]
    %v135 = vld [vmem:[#allocation2 + $0x188] sm:$0xff]
    %v136 = vld [vmem:[#allocation2 + $0x190] sm:$0xff]
    %v137 = vld [vmem:[#allocation2 + $0x198] sm:$0xff]
    %v138 = vld [vmem:[#allocation2 + $0x1a0] sm:$0xff]
    %v139 = vld [vmem:[#allocation2 + $0x1a8] sm:$0xff]
    %v140 = vld [vmem:[#allocation2 + $0x1b0] sm:$0xff]
    %v141 = vld [vmem:[#allocation2 + $0x1b8] sm:$0xff]
    %v142 = vld [vmem:[#allocation2 + $0x1c0] sm:$0xff]
    %v143 = vld [vmem:[#allocation2 + $0x1c8] sm:$0xff]
    %v144 = vld [vmem:[#allocation2 + $0x1d0] sm:$0xff]
    %v145 = vld [vmem:[#allocation2 + $0x1d8] sm:$0xff]
    %v146 = vld [vmem:[#allocation2 + $0x1e0] sm:$0xff]
    %v147 = vld [vmem:[#allocation2 + $0x1e8] sm:$0xff]
    %v148 = vld [vmem:[#allocation2 + $0x1f0] sm:$0xff]
    %v149 = vld [vmem:[#allocation2 + $0x1f8] sm:$0xff]
    %v150 = vld [vmem:[#allocation2 + $0x200] sm:$0xff]
    %v151 = vld [vmem:[#allocation2 + $0x208] sm:$0xff]
    %v152 = vld [vmem:[#allocation2 + $0x210] sm:$0xff]
    %v153 = vld [vmem:[#allocation2 + $0x218] sm:$0xff]
    %v154 = vld [vmem:[#allocation2 + $0x220] sm:$0xff]
    %v155 = vld [vmem:[#allocation2 + $0x228] sm:$0xff]
    %v156 = vld [vmem:[#allocation2 + $0x230] sm:$0xff]
    %v157 = vld [vmem:[#allocation2 + $0x238] sm:$0xff]
    %v158 = vld [vmem:[#allocation2 + $0x240] sm:$0xff]
    %v159 = vld [vmem:[#allocation2 + $0x248] sm:$0xff]
    %v160 = vld [vmem:[#allocation2 + $0x250] sm:$0xff]
    %v161 = vld [vmem:[#allocation2 + $0x258] sm:$0xff]
    %v162 = vld [vmem:[#allocation2 + $0x260] sm:$0xff]
    %v163 = vld [vmem:[#allocation2 + $0x268] sm:$0xff]
    %v164 = vld [vmem:[#allocation2 + $0x270] sm:$0xff]
    %v165 = vld [vmem:[#allocation2 + $0x278] sm:$0xff]
    %v166 = vld [vmem:[#allocation2 + $0x280] sm:$0xff]
    %v167 = vld [vmem:[#allocation2 + $0x288] sm:$0xff]
    %v168 = vld [vmem:[#allocation2 + $0x290] sm:$0xff]
    %v169 = vld [vmem:[#allocation2 + $0x298] sm:$0xff]
    %v170 = vld [vmem:[#allocation2 + $0x2a0] sm:$0xff]
    %v171 = vld [vmem:[#allocation2 + $0x2a8] sm:$0xff]
    %v172 = vld [vmem:[#allocation2 + $0x2b0] sm:$0xff]
    %v173 = vld [vmem:[#allocation2 + $0x2b8] sm:$0xff]
    %v174 = vld [vmem:[#allocation2 + $0x2c0] sm:$0xff]
    %v175 = vld [vmem:[#allocation2 + $0x2c8] sm:$0xff]
    %v176 = vld [vmem:[#allocation2 + $0x2d0] sm:$0xff]
    %v177 = vld [vmem:[#allocation2 + $0x2d8] sm:$0xff]
    %v178 = vld [vmem:[#allocation2 + $0x2e0] sm:$0xff]
    %v179 = vld [vmem:[#allocation2 + $0x2e8] sm:$0xff]
    %v180 = vld [vmem:[#allocation2 + $0x2f0] sm:$0xff]
    %v181 = vld [vmem:[#allocation2 + $0x2f8] sm:$0xff]
    %v182 = vld [vmem:[#allocation2 + $0x300] sm:$0xff]
    %v183 = vld [vmem:[#allocation2 + $0x308] sm:$0xff]
    %v184 = vld [vmem:[#allocation2 + $0x310] sm:$0xff]
    %v185 = vld [vmem:[#allocation2 + $0x318] sm:$0xff]
    %v186 = vld [vmem:[#allocation2 + $0x320] sm:$0xff]
    %v187 = vld [vmem:[#allocation2 + $0x328] sm:$0xff]
    %v188 = vld [vmem:[#allocation2 + $0x330] sm:$0xff]
    %v189 = vld [vmem:[#allocation2 + $0x338] sm:$0xff]
    %v190 = vld [vmem:[#allocation2 + $0x340] sm:$0xff]
    %v191 = vld [vmem:[#allocation2 + $0x348] sm:$0xff]
    %v192 = vld [vmem:[#allocation2 + $0x350] sm:$0xff]
    %v193 = vld [vmem:[#allocation2 + $0x358] sm:$0xff]
    %v194 = vld [vmem:[#allocation2 + $0x360] sm:$0xff]
    %v195 = vld [vmem:[#allocation2 + $0x368] sm:$0xff]
    %v196 = vld [vmem:[#allocation2 + $0x370] sm:$0xff]
    %v197 = vld [vmem:[#allocation2 + $0x378] sm:$0xff]
    %v198 = vld [vmem:[#allocation2 + $0x380] sm:$0xff]
    %v199 = vld [vmem:[#allocation2 + $0x388] sm:$0xff]
    %v200 = vld [vmem:[#allocation2 + $0x390] sm:$0xff]
    %v201 = vld [vmem:[#allocation2 + $0x398] sm:$0xff]
    %v202 = vld [vmem:[#allocation2 + $0x3a0] sm:$0xff]
    %v203 = vld [vmem:[#allocation2 + $0x3a8] sm:$0xff]
    %v204 = vld [vmem:[#allocation2 + $0x3b0] sm:$0xff]
    %v205 = vld [vmem:[#allocation2 + $0x3b8] sm:$0xff]
    %v206 = vld [vmem:[#allocation2 + $0x3c0] sm:$0xff]
    %v207 = vld [vmem:[#allocation2 + $0x3c8] sm:$0xff]
    %v208 = vld [vmem:[#allocation2 + $0x3d0] sm:$0xff]
    %v209 = vld [vmem:[#allocation2 + $0x3d8] sm:$0xff]
    %v210 = vld [vmem:[#allocation2 + $0x3e0] sm:$0xff]
    %v211 = vld [vmem:[#allocation2 + $0x3e8] sm:$0xff]
    %v212 = vld [vmem:[#allocation2 + $0x3f0] sm:$0xff]
    %v213 = vld [vmem:[#allocation2 + $0x3f8] sm:$0xff]
    %v214 = vld [vmem:[#allocation2 + $0x400] sm:$0xff]
    %v215 = vld [vmem:[#allocation2 + $0x408] sm:$0xff]
    %v216 = vld [vmem:[#allocation2 + $0x410] sm:$0xff]
    %v217 = vld [vmem:[#allocation2 + $0x418] sm:$0xff]
    %v218 = vld [vmem:[#allocation2 + $0x420] sm:$0xff]
    %v219 = vld [vmem:[#allocation2 + $0x428] sm:$0xff]
    %v220 = vld [vmem:[#allocation2 + $0x430] sm:$0xff]
    %v221 = vld [vmem:[#allocation2 + $0x438] sm:$0xff]
    %v222 = vld [vmem:[#allocation2 + $0x440] sm:$0xff]
    %v223 = vld [vmem:[#allocation2 + $0x448] sm:$0xff]
    %v224 = vld [vmem:[#allocation2 + $0x450] sm:$0xff]
    %v225 = vld [vmem:[#allocation2 + $0x458] sm:$0xff]
    %v226 = vld [vmem:[#allocation2 + $0x460] sm:$0xff]
    %v227 = vld [vmem:[#allocation2 + $0x468] sm:$0xff]
    %v228 = vld [vmem:[#allocation2 + $0x470] sm:$0xff]
    %v229 = vld [vmem:[#allocation2 + $0x478] sm:$0xff]
    %v230 = vld [vmem:[#allocation2 + $0x480] sm:$0xff]
    %v231 = vld [vmem:[#allocation2 + $0x488] sm:$0xff]
    %v232 = vld [vmem:[#allocation2 + $0x490] sm:$0xff]
    %v233 = vld [vmem:[#allocation2 + $0x498] sm:$0xff]
    %v234 = vld [vmem:[#allocation2 + $0x4a0] sm:$0xff]
    %v235 = vld [vmem:[#allocation2 + $0x4a8] sm:$0xff]
    %v236 = vld [vmem:[#allocation2 + $0x4b0] sm:$0xff]
    %v237 = vld [vmem:[#allocation2 + $0x4b8] sm:$0xff]
    %v238 = vld [vmem:[#allocation2 + $0x4c0] sm:$0xff]
    %v239 = vld [vmem:[#allocation2 + $0x4c8] sm:$0xff]
    %v240 = vld [vmem:[#allocation2 + $0x4d0] sm:$0xff]
    %v241 = vld [vmem:[#allocation2 + $0x4d8] sm:$0xff]
    %v242 = vld [vmem:[#allocation2 + $0x4e0] sm:$0xff]
    %v243 = vld [vmem:[#allocation2 + $0x4e8] sm:$0xff]
    %v244 = vld [vmem:[#allocation2 + $0x4f0] sm:$0xff]
    %v245 = vld [vmem:[#allocation2 + $0x4f8] sm:$0xff]
    %v246 = vld [vmem:[#allocation2 + $0x500] sm:$0xff]
    %v247 = vld [vmem:[#allocation2 + $0x508] sm:$0xff]
    %v248 = vpack.c.bf16 %v167, %v86
    %v249 = vpack.c.bf16 %v168, %v87
    %v250 = vpack.c.bf16 %v169, %v88
    %v251 = vpack.c.bf16 %v170, %v89
    %v252 = vpack.c.bf16 %v171, %v90
    %v253 = vpack.c.bf16 %v172, %v91
    %v254 = vpack.c.bf16 %v173, %v92
    %v255 = vpack.c.bf16 %v174, %v93
    %v256 = vpack.c.bf16 %v175, %v94
    %v257 = vpack.c.bf16 %v176, %v95
    %v258 = vpack.c.bf16 %v177, %v96
    %v259 = vpack.c.bf16 %v178, %v97
    %v260 = vpack.c.bf16 %v179, %v98
    %v261 = vpack.c.bf16 %v180, %v99
    %v262 = vpack.c.bf16 %v181, %v100
    %v263 = vpack.c.bf16 %v182, %v101
    %v264 = vpack.c.bf16 %v183, %v102
    %v265 = vpack.c.bf16 %v184, %v103
    %v266 = vpack.c.bf16 %v185, %v104
    %v267 = vpack.c.bf16 %v186, %v105
    %v268 = vpack.c.bf16 %v187, %v106
    %v269 = vpack.c.bf16 %v188, %v107
    %v270 = vpack.c.bf16 %v189, %v108
    %v271 = vpack.c.bf16 %v190, %v109
    %v272 = vpack.c.bf16 %v191, %v110
    %v273 = vpack.c.bf16 %v192, %v111
    %v274 = vpack.c.bf16 %v193, %v112
    %v275 = vpack.c.bf16 %v194, %v113
    %v276 = vpack.c.bf16 %v195, %v114
    %v277 = vpack.c.bf16 %v196, %v115
    %v278 = vpack.c.bf16 %v197, %v116
    %v279 = vpack.c.bf16 %v198, %v117
    %v280 = vpack.c.bf16 %v199, %v118
    %v281 = vpack.c.bf16 %v200, %v119
    %v282 = vpack.c.bf16 %v201, %v120
    %v283 = vpack.c.bf16 %v202, %v121
    %v284 = vpack.c.bf16 %v203, %v122
    %v285 = vpack.c.bf16 %v204, %v123
    %v286 = vpack.c.bf16 %v205, %v124
    %v287 = vpack.c.bf16 %v206, %v125
    %v288 = vpack.c.bf16 %v207, %v126
    %v289 = vpack.c.bf16 %v208, %v127
    %v290 = vpack.c.bf16 %v209, %v128
    %v291 = vpack.c.bf16 %v210, %v129
    %v292 = vpack.c.bf16 %v211, %v130
    %v293 = vpack.c.bf16 %v212, %v131
    %v294 = vpack.c.bf16 %v213, %v132
    %v295 = vpack.c.bf16 %v214, %v133
    %v296 = vpack.c.bf16 %v215, %v134
    %v297 = vpack.c.bf16 %v216, %v135
    %v298 = vpack.c.bf16 %v217, %v136
    %v299 = vpack.c.bf16 %v218, %v137
    %v300 = vpack.c.bf16 %v219, %v138
    %v301 = vpack.c.bf16 %v220, %v139
    %v302 = vpack.c.bf16 %v221, %v140
    %v303 = vpack.c.bf16 %v222, %v141
    %v304 = vpack.c.bf16 %v223, %v142
    %v305 = vpack.c.bf16 %v224, %v143
    %v306 = vpack.c.bf16 %v225, %v144
    %v307 = vpack.c.bf16 %v226, %v145
    %v308 = vpack.c.bf16 %v227, %v146
    %v309 = vpack.c.bf16 %v228, %v147
    %v310 = vpack.c.bf16 %v229, %v148
    %v311 = vpack.c.bf16 %v230, %v149
    %v312 = vpack.c.bf16 %v231, %v150
    %v313 = vpack.c.bf16 %v232, %v151
    %v314 = vpack.c.bf16 %v233, %v152
    %v315 = vpack.c.bf16 %v234, %v153
    %v316 = vpack.c.bf16 %v235, %v154
    %v317 = vpack.c.bf16 %v236, %v155
    %v318 = vpack.c.bf16 %v237, %v156
    %v319 = vpack.c.bf16 %v238, %v157
    %v320 = vpack.c.bf16 %v239, %v158
    %v321 = vpack.c.bf16 %v240, %v159
    %v322 = vpack.c.bf16 %v241, %v160
    %v323 = vpack.c.bf16 %v242, %v161
    %v324 = vpack.c.bf16 %v243, %v162
    %v325 = vpack.c.bf16 %v244, %v163
    %v326 = vpack.c.bf16 %v245, %v164
    %v327 = vpack.c.bf16 %v246, %v165
    %v328 = vpack.c.bf16 %v247, %v166
    %v329 = vld [vmem:[#allocation5] sm:$0xff]
    %v330 = vld [vmem:[#allocation5 + $0x8] sm:$0xff]
    %v331 = vld [vmem:[#allocation5 + $0x10] sm:$0xff]
    %v332 = vld [vmem:[#allocation5 + $0x18] sm:$0xff]
    %v333 = vld [vmem:[#allocation5 + $0x20] sm:$0xff]
    %v334 = vld [vmem:[#allocation5 + $0x28] sm:$0xff]
    %v335 = vld [vmem:[#allocation5 + $0x30] sm:$0xff]
    %v336 = vld [vmem:[#allocation5 + $0x38] sm:$0xff]
    %v337 = vld [vmem:[#allocation5 + $0x40] sm:$0xff]
    %v338 = vld [vmem:[#allocation5 + $0x48] sm:$0xff]
    %v339 = vld [vmem:[#allocation5 + $0x50] sm:$0xff]
    %v340 = vld [vmem:[#allocation5 + $0x58] sm:$0xff]
    %v341 = vld [vmem:[#allocation5 + $0x60] sm:$0xff]
    %v342 = vld [vmem:[#allocation5 + $0x68] sm:$0xff]
    %v343 = vld [vmem:[#allocation5 + $0x70] sm:$0xff]
    %v344 = vld [vmem:[#allocation5 + $0x78] sm:$0xff]
    %v345 = vld [vmem:[#allocation5 + $0x80] sm:$0xff]
    %v346 = vld [vmem:[#allocation5 + $0x88] sm:$0xff]
    %v347 = vld [vmem:[#allocation5 + $0x90] sm:$0xff]
    %v348 = vld [vmem:[#allocation5 + $0x98] sm:$0xff]
    %v349 = vld [vmem:[#allocation5 + $0xa0] sm:$0xff]
    %v350 = vld [vmem:[#allocation5 + $0xa8] sm:$0xff]
    %v351 = vld [vmem:[#allocation5 + $0xb0] sm:$0xff]
    %v352 = vld [vmem:[#allocation5 + $0xb8] sm:$0xff]
    %v353 = vld [vmem:[#allocation5 + $0xc0] sm:$0xff]
    %v354 = vld [vmem:[#allocation5 + $0xc8] sm:$0xff]
    %v355 = vld [vmem:[#allocation5 + $0xd0] sm:$0xff]
    %v356 = vld [vmem:[#allocation5 + $0xd8] sm:$0xff]
    %v357 = vld [vmem:[#allocation5 + $0xe0] sm:$0xff]
    %v358 = vld [vmem:[#allocation5 + $0xe8] sm:$0xff]
    %v359 = vld [vmem:[#allocation5 + $0xf0] sm:$0xff]
    %v360 = vld [vmem:[#allocation5 + $0xf8] sm:$0xff]
    %v361 = vld [vmem:[#allocation5 + $0x100] sm:$0xff]
    %v362 = vld [vmem:[#allocation5 + $0x108] sm:$0xff]
    %v363 = vld [vmem:[#allocation5 + $0x110] sm:$0xff]
    %v364 = vld [vmem:[#allocation5 + $0x118] sm:$0xff]
    %v365 = vld [vmem:[#allocation5 + $0x120] sm:$0xff]
    %v366 = vld [vmem:[#allocation5 + $0x128] sm:$0xff]
    %v367 = vld [vmem:[#allocation5 + $0x130] sm:$0xff]
    %v368 = vld [vmem:[#allocation5 + $0x138] sm:$0xff]
    %v369 = vld [vmem:[#allocation5 + $0x140] sm:$0xff]
    %v370 = vld [vmem:[#allocation5 + $0x148] sm:$0xff]
    %v371 = vld [vmem:[#allocation5 + $0x150] sm:$0xff]
    %v372 = vld [vmem:[#allocation5 + $0x158] sm:$0xff]
    %v373 = vld [vmem:[#allocation5 + $0x160] sm:$0xff]
    %v374 = vld [vmem:[#allocation5 + $0x168] sm:$0xff]
    %v375 = vld [vmem:[#allocation5 + $0x170] sm:$0xff]
    %v376 = vld [vmem:[#allocation5 + $0x178] sm:$0xff]
    %v377 = vld [vmem:[#allocation5 + $0x180] sm:$0xff]
    %v378 = vld [vmem:[#allocation5 + $0x188] sm:$0xff]
    %v379 = vld [vmem:[#allocation5 + $0x190] sm:$0xff]
    %v380 = vld [vmem:[#allocation5 + $0x198] sm:$0xff]
    %v381 = vld [vmem:[#allocation5 + $0x1a0] sm:$0xff]
    %v382 = vld [vmem:[#allocation5 + $0x1a8] sm:$0xff]
    %v383 = vld [vmem:[#allocation5 + $0x1b0] sm:$0xff]
    %v384 = vld [vmem:[#allocation5 + $0x1b8] sm:$0xff]
    %v385 = vld [vmem:[#allocation5 + $0x1c0] sm:$0xff]
    %v386 = vld [vmem:[#allocation5 + $0x1c8] sm:$0xff]
    %v387 = vld [vmem:[#allocation5 + $0x1d0] sm:$0xff]
    %v388 = vld [vmem:[#allocation5 + $0x1d8] sm:$0xff]
    %v389 = vld [vmem:[#allocation5 + $0x1e0] sm:$0xff]
    %v390 = vld [vmem:[#allocation5 + $0x1e8] sm:$0xff]
    %v391 = vld [vmem:[#allocation5 + $0x1f0] sm:$0xff]
    %v392 = vld [vmem:[#allocation5 + $0x1f8] sm:$0xff]
    %v393 = vld [vmem:[#allocation5 + $0x200] sm:$0xff]
    %v394 = vld [vmem:[#allocation5 + $0x208] sm:$0xff]
    %v395 = vld [vmem:[#allocation5 + $0x210] sm:$0xff]
    %v396 = vld [vmem:[#allocation5 + $0x218] sm:$0xff]
    %v397 = vld [vmem:[#allocation5 + $0x220] sm:$0xff]
    %v398 = vld [vmem:[#allocation5 + $0x228] sm:$0xff]
    %v399 = vld [vmem:[#allocation5 + $0x230] sm:$0xff]
    %v400 = vld [vmem:[#allocation5 + $0x238] sm:$0xff]
    %v401 = vld [vmem:[#allocation5 + $0x240] sm:$0xff]
    %v402 = vld [vmem:[#allocation5 + $0x248] sm:$0xff]
    %v403 = vld [vmem:[#allocation5 + $0x250] sm:$0xff]
    %v404 = vld [vmem:[#allocation5 + $0x258] sm:$0xff]
    %v405 = vld [vmem:[#allocation5 + $0x260] sm:$0xff]
    %v406 = vld [vmem:[#allocation5 + $0x268] sm:$0xff]
    %v407 = vld [vmem:[#allocation5 + $0x270] sm:$0xff]
    %v408 = vld [vmem:[#allocation5 + $0x278] sm:$0xff]
    %v409 = vld [vmem:[#allocation5 + $0x280] sm:$0xff]
    %v410 = vld [vmem:[#allocation5 + $0x288] sm:$0xff]
    %v411 = vld [vmem:[#allocation5 + $0x290] sm:$0xff]
    %v412 = vld [vmem:[#allocation5 + $0x298] sm:$0xff]
    %v413 = vld [vmem:[#allocation5 + $0x2a0] sm:$0xff]
    %v414 = vld [vmem:[#allocation5 + $0x2a8] sm:$0xff]
    %v415 = vld [vmem:[#allocation5 + $0x2b0] sm:$0xff]
    %v416 = vld [vmem:[#allocation5 + $0x2b8] sm:$0xff]
    %v417 = vld [vmem:[#allocation5 + $0x2c0] sm:$0xff]
    %v418 = vld [vmem:[#allocation5 + $0x2c8] sm:$0xff]
    %v419 = vld [vmem:[#allocation5 + $0x2d0] sm:$0xff]
    %v420 = vld [vmem:[#allocation5 + $0x2d8] sm:$0xff]
    %v421 = vld [vmem:[#allocation5 + $0x2e0] sm:$0xff]
    %v422 = vld [vmem:[#allocation5 + $0x2e8] sm:$0xff]
    %v423 = vld [vmem:[#allocation5 + $0x2f0] sm:$0xff]
    %v424 = vld [vmem:[#allocation5 + $0x2f8] sm:$0xff]
    %v425 = vld [vmem:[#allocation5 + $0x300] sm:$0xff]
    %v426 = vld [vmem:[#allocation5 + $0x308] sm:$0xff]
    %v427 = vld [vmem:[#allocation5 + $0x310] sm:$0xff]
    %v428 = vld [vmem:[#allocation5 + $0x318] sm:$0xff]
    %v429 = vld [vmem:[#allocation5 + $0x320] sm:$0xff]
    %v430 = vld [vmem:[#allocation5 + $0x328] sm:$0xff]
    %v431 = vld [vmem:[#allocation5 + $0x330] sm:$0xff]
    %v432 = vld [vmem:[#allocation5 + $0x338] sm:$0xff]
    %v433 = vld [vmem:[#allocation5 + $0x340] sm:$0xff]
    %v434 = vld [vmem:[#allocation5 + $0x348] sm:$0xff]
    %v435 = vld [vmem:[#allocation5 + $0x350] sm:$0xff]
    %v436 = vld [vmem:[#allocation5 + $0x358] sm:$0xff]
    %v437 = vld [vmem:[#allocation5 + $0x360] sm:$0xff]
    %v438 = vld [vmem:[#allocation5 + $0x368] sm:$0xff]
    %v439 = vld [vmem:[#allocation5 + $0x370] sm:$0xff]
    %v440 = vld [vmem:[#allocation5 + $0x378] sm:$0xff]
    %v441 = vld [vmem:[#allocation5 + $0x380] sm:$0xff]
    %v442 = vld [vmem:[#allocation5 + $0x388] sm:$0xff]
    %v443 = vld [vmem:[#allocation5 + $0x390] sm:$0xff]
    %v444 = vld [vmem:[#allocation5 + $0x398] sm:$0xff]
    %v445 = vld [vmem:[#allocation5 + $0x3a0] sm:$0xff]
    %v446 = vld [vmem:[#allocation5 + $0x3a8] sm:$0xff]
    %v447 = vld [vmem:[#allocation5 + $0x3b0] sm:$0xff]
    %v448 = vld [vmem:[#allocation5 + $0x3b8] sm:$0xff]
    %v449 = vld [vmem:[#allocation5 + $0x3c0] sm:$0xff]
    %v450 = vld [vmem:[#allocation5 + $0x3c8] sm:$0xff]
    %v451 = vld [vmem:[#allocation5 + $0x3d0] sm:$0xff]
    %v452 = vld [vmem:[#allocation5 + $0x3d8] sm:$0xff]
    %v453 = vld [vmem:[#allocation5 + $0x3e0] sm:$0xff]
    %v454 = vld [vmem:[#allocation5 + $0x3e8] sm:$0xff]
    %v455 = vld [vmem:[#allocation5 + $0x3f0] sm:$0xff]
    %v456 = vld [vmem:[#allocation5 + $0x3f8] sm:$0xff]
    %v457 = vld [vmem:[#allocation5 + $0x400] sm:$0xff]
    %v458 = vld [vmem:[#allocation5 + $0x408] sm:$0xff]
    %v459 = vld [vmem:[#allocation5 + $0x410] sm:$0xff]
    %v460 = vld [vmem:[#allocation5 + $0x418] sm:$0xff]
    %v461 = vld [vmem:[#allocation5 + $0x420] sm:$0xff]
    %v462 = vld [vmem:[#allocation5 + $0x428] sm:$0xff]
    %v463 = vld [vmem:[#allocation5 + $0x430] sm:$0xff]
    %v464 = vld [vmem:[#allocation5 + $0x438] sm:$0xff]
    %v465 = vld [vmem:[#allocation5 + $0x440] sm:$0xff]
    %v466 = vld [vmem:[#allocation5 + $0x448] sm:$0xff]
    %v467 = vld [vmem:[#allocation5 + $0x450] sm:$0xff]
    %v468 = vld [vmem:[#allocation5 + $0x458] sm:$0xff]
    %v469 = vld [vmem:[#allocation5 + $0x460] sm:$0xff]
    %v470 = vld [vmem:[#allocation5 + $0x468] sm:$0xff]
    %v471 = vld [vmem:[#allocation5 + $0x470] sm:$0xff]
    %v472 = vld [vmem:[#allocation5 + $0x478] sm:$0xff]
    %v473 = vld [vmem:[#allocation5 + $0x480] sm:$0xff]
    %v474 = vld [vmem:[#allocation5 + $0x488] sm:$0xff]
    %v475 = vld [vmem:[#allocation5 + $0x490] sm:$0xff]
    %v476 = vld [vmem:[#allocation5 + $0x498] sm:$0xff]
    %v477 = vld [vmem:[#allocation5 + $0x4a0] sm:$0xff]
    %v478 = vld [vmem:[#allocation5 + $0x4a8] sm:$0xff]
    %v479 = vld [vmem:[#allocation5 + $0x4b0] sm:$0xff]
    %v480 = vld [vmem:[#allocation5 + $0x4b8] sm:$0xff]
    %v481 = vld [vmem:[#allocation5 + $0x4c0] sm:$0xff]
    %v482 = vld [vmem:[#allocation5 + $0x4c8] sm:$0xff]
    %v483 = vld [vmem:[#allocation5 + $0x4d0] sm:$0xff]
    %v484 = vld [vmem:[#allocation5 + $0x4d8] sm:$0xff]
    %v485 = vld [vmem:[#allocation5 + $0x4e0] sm:$0xff]
    %v486 = vld [vmem:[#allocation5 + $0x4e8] sm:$0xff]
    %v487 = vld [vmem:[#allocation5 + $0x4f0] sm:$0xff]
    %v488 = vld [vmem:[#allocation5 + $0x4f8] sm:$0xff]
    %v489 = vld [vmem:[#allocation5 + $0x500] sm:$0xff]
    %v490 = vld [vmem:[#allocation5 + $0x508] sm:$0xff]
    %v491 = vld [vmem:[#allocation5 + $0x510] sm:$0xff]
    %v492 = vld [vmem:[#allocation5 + $0x518] sm:$0xff]
    %v493 = vld [vmem:[#allocation5 + $0x520] sm:$0xff]
    %v494 = vld [vmem:[#allocation5 + $0x528] sm:$0xff]
    %v495 = vld [vmem:[#allocation5 + $0x530] sm:$0xff]
    %v496 = vld [vmem:[#allocation5 + $0x538] sm:$0xff]
    %v497 = vld [vmem:[#allocation5 + $0x540] sm:$0xff]
    %v498 = vld [vmem:[#allocation5 + $0x548] sm:$0xff]
    %v499 = vld [vmem:[#allocation5 + $0x550] sm:$0xff]
    %v500 = vld [vmem:[#allocation5 + $0x558] sm:$0xff]
    %v501 = vld [vmem:[#allocation5 + $0x560] sm:$0xff]
    %v502 = vld [vmem:[#allocation5 + $0x568] sm:$0xff]
    %v503 = vld [vmem:[#allocation5 + $0x570] sm:$0xff]
    %v504 = vld [vmem:[#allocation5 + $0x578] sm:$0xff]
    %v505 = vld [vmem:[#allocation5 + $0x580] sm:$0xff]
    %v506 = vld [vmem:[#allocation5 + $0x588] sm:$0xff]
    %v507 = vld [vmem:[#allocation5 + $0x590] sm:$0xff]
    %v508 = vld [vmem:[#allocation5 + $0x598] sm:$0xff]
    %v509 = vld [vmem:[#allocation5 + $0x5a0] sm:$0xff]
    %v510 = vld [vmem:[#allocation5 + $0x5a8] sm:$0xff]
    %v511 = vld [vmem:[#allocation5 + $0x5b0] sm:$0xff]
    %v512 = vld [vmem:[#allocation5 + $0x5b8] sm:$0xff]
    %v513 = vld [vmem:[#allocation5 + $0x5c0] sm:$0xff]
    %v514 = vld [vmem:[#allocation5 + $0x5c8] sm:$0xff]
    %v515 = vld [vmem:[#allocation5 + $0x5d0] sm:$0xff]
    %v516 = vld [vmem:[#allocation5 + $0x5d8] sm:$0xff]
    %v517 = vld [vmem:[#allocation5 + $0x5e0] sm:$0xff]
    %v518 = vld [vmem:[#allocation5 + $0x5e8] sm:$0xff]
    %v519 = vld [vmem:[#allocation5 + $0x5f0] sm:$0xff]
    %v520 = vld [vmem:[#allocation5 + $0x5f8] sm:$0xff]
    %v521 = vld [vmem:[#allocation5 + $0x600] sm:$0xff]
    %v522 = vld [vmem:[#allocation5 + $0x608] sm:$0xff]
    %v523 = vld [vmem:[#allocation5 + $0x610] sm:$0xff]
    %v524 = vld [vmem:[#allocation5 + $0x618] sm:$0xff]
    %v525 = vld [vmem:[#allocation5 + $0x620] sm:$0xff]
    %v526 = vld [vmem:[#allocation5 + $0x628] sm:$0xff]
    %v527 = vld [vmem:[#allocation5 + $0x630] sm:$0xff]
    %v528 = vld [vmem:[#allocation5 + $0x638] sm:$0xff]
    %v529 = vld [vmem:[#allocation5 + $0x640] sm:$0xff]
    %v530 = vld [vmem:[#allocation5 + $0x648] sm:$0xff]
    %v531 = vld [vmem:[#allocation5 + $0x650] sm:$0xff]
    %v532 = vld [vmem:[#allocation5 + $0x658] sm:$0xff]
    %v533 = vld [vmem:[#allocation5 + $0x660] sm:$0xff]
    %v534 = vld [vmem:[#allocation5 + $0x668] sm:$0xff]
    %v535 = vld [vmem:[#allocation5 + $0x670] sm:$0xff]
    %v536 = vld [vmem:[#allocation5 + $0x678] sm:$0xff]
    %v537 = vld [vmem:[#allocation5 + $0x680] sm:$0xff]
    %v538 = vld [vmem:[#allocation5 + $0x688] sm:$0xff]
    %v539 = vld [vmem:[#allocation5 + $0x690] sm:$0xff]
    %v540 = vld [vmem:[#allocation5 + $0x698] sm:$0xff]
    %v541 = vld [vmem:[#allocation5 + $0x6a0] sm:$0xff]
    %v542 = vld [vmem:[#allocation5 + $0x6a8] sm:$0xff]
    %v543 = vld [vmem:[#allocation5 + $0x6b0] sm:$0xff]
    %v544 = vld [vmem:[#allocation5 + $0x6b8] sm:$0xff]
    %v545 = vld [vmem:[#allocation5 + $0x6c0] sm:$0xff]
    %v546 = vld [vmem:[#allocation5 + $0x6c8] sm:$0xff]
    %v547 = vld [vmem:[#allocation5 + $0x6d0] sm:$0xff]
    %v548 = vld [vmem:[#allocation5 + $0x6d8] sm:$0xff]
    %v549 = vld [vmem:[#allocation5 + $0x6e0] sm:$0xff]
    %v550 = vld [vmem:[#allocation5 + $0x6e8] sm:$0xff]
    %v551 = vld [vmem:[#allocation5 + $0x6f0] sm:$0xff]
    %v552 = vld [vmem:[#allocation5 + $0x6f8] sm:$0xff]
    %v553 = vld [vmem:[#allocation5 + $0x700] sm:$0xff]
    %v554 = vld [vmem:[#allocation5 + $0x708] sm:$0xff]
    %v555 = vld [vmem:[#allocation5 + $0x710] sm:$0xff]
    %v556 = vld [vmem:[#allocation5 + $0x718] sm:$0xff]
    %v557 = vld [vmem:[#allocation5 + $0x720] sm:$0xff]
    %v558 = vld [vmem:[#allocation5 + $0x728] sm:$0xff]
    %v559 = vld [vmem:[#allocation5 + $0x730] sm:$0xff]
    %v560 = vld [vmem:[#allocation5 + $0x738] sm:$0xff]
    %v561 = vld [vmem:[#allocation5 + $0x740] sm:$0xff]
    %v562 = vld [vmem:[#allocation5 + $0x748] sm:$0xff]
    %v563 = vld [vmem:[#allocation5 + $0x750] sm:$0xff]
    %v564 = vld [vmem:[#allocation5 + $0x758] sm:$0xff]
    %v565 = vld [vmem:[#allocation5 + $0x760] sm:$0xff]
    %v566 = vld [vmem:[#allocation5 + $0x768] sm:$0xff]
    %v567 = vld [vmem:[#allocation5 + $0x770] sm:$0xff]
    %v568 = vld [vmem:[#allocation5 + $0x778] sm:$0xff]
    %v569 = vld [vmem:[#allocation5 + $0x780] sm:$0xff]
    %v570 = vld [vmem:[#allocation5 + $0x788] sm:$0xff]
    %v571 = vld [vmem:[#allocation5 + $0x790] sm:$0xff]
    %v572 = vld [vmem:[#allocation5 + $0x798] sm:$0xff]
    %v573 = vld [vmem:[#allocation5 + $0x7a0] sm:$0xff]
    %v574 = vld [vmem:[#allocation5 + $0x7a8] sm:$0xff]
    %v575 = vld [vmem:[#allocation5 + $0x7b0] sm:$0xff]
    %v576 = vld [vmem:[#allocation5 + $0x7b8] sm:$0xff]
    %v577 = vld [vmem:[#allocation5 + $0x7c0] sm:$0xff]
    %v578 = vld [vmem:[#allocation5 + $0x7c8] sm:$0xff]
    %v579 = vld [vmem:[#allocation5 + $0x7d0] sm:$0xff]
    %v580 = vld [vmem:[#allocation5 + $0x7d8] sm:$0xff]
    %v581 = vld [vmem:[#allocation5 + $0x7e0] sm:$0xff]
    %v582 = vld [vmem:[#allocation5 + $0x7e8] sm:$0xff]
    %v583 = vld [vmem:[#allocation5 + $0x7f0] sm:$0xff]
    %v584 = vld [vmem:[#allocation5 + $0x7f8] sm:$0xff]
    %v585 = vld [vmem:[#allocation5 + $0x800] sm:$0xff]
    %v586 = vld [vmem:[#allocation5 + $0x808] sm:$0xff]
    %v587 = vld [vmem:[#allocation5 + $0x810] sm:$0xff]
    %v588 = vld [vmem:[#allocation5 + $0x818] sm:$0xff]
    %v589 = vld [vmem:[#allocation5 + $0x820] sm:$0xff]
    %v590 = vld [vmem:[#allocation5 + $0x828] sm:$0xff]
    %v591 = vld [vmem:[#allocation5 + $0x830] sm:$0xff]
    %v592 = vld [vmem:[#allocation5 + $0x838] sm:$0xff]
    %v593 = vld [vmem:[#allocation5 + $0x840] sm:$0xff]
    %v594 = vld [vmem:[#allocation5 + $0x848] sm:$0xff]
    %v595 = vld [vmem:[#allocation5 + $0x850] sm:$0xff]
    %v596 = vld [vmem:[#allocation5 + $0x858] sm:$0xff]
    %v597 = vld [vmem:[#allocation5 + $0x860] sm:$0xff]
    %v598 = vld [vmem:[#allocation5 + $0x868] sm:$0xff]
    %v599 = vld [vmem:[#allocation5 + $0x870] sm:$0xff]
    %v600 = vld [vmem:[#allocation5 + $0x878] sm:$0xff]
    %v601 = vld [vmem:[#allocation5 + $0x880] sm:$0xff]
    %v602 = vld [vmem:[#allocation5 + $0x888] sm:$0xff]
    %v603 = vld [vmem:[#allocation5 + $0x890] sm:$0xff]
    %v604 = vld [vmem:[#allocation5 + $0x898] sm:$0xff]
    %v605 = vld [vmem:[#allocation5 + $0x8a0] sm:$0xff]
    %v606 = vld [vmem:[#allocation5 + $0x8a8] sm:$0xff]
    %v607 = vld [vmem:[#allocation5 + $0x8b0] sm:$0xff]
    %v608 = vld [vmem:[#allocation5 + $0x8b8] sm:$0xff]
    %v609 = vld [vmem:[#allocation5 + $0x8c0] sm:$0xff]
    %v610 = vld [vmem:[#allocation5 + $0x8c8] sm:$0xff]
    %v611 = vld [vmem:[#allocation5 + $0x8d0] sm:$0xff]
    %v612 = vld [vmem:[#allocation5 + $0x8d8] sm:$0xff]
    %v613 = vld [vmem:[#allocation5 + $0x8e0] sm:$0xff]
    %v614 = vld [vmem:[#allocation5 + $0x8e8] sm:$0xff]
    %v615 = vld [vmem:[#allocation5 + $0x8f0] sm:$0xff]
    %v616 = vld [vmem:[#allocation5 + $0x8f8] sm:$0xff]
    %v617 = vld [vmem:[#allocation5 + $0x900] sm:$0xff]
    %v618 = vld [vmem:[#allocation5 + $0x908] sm:$0xff]
    %v619 = vld [vmem:[#allocation5 + $0x910] sm:$0xff]
    %v620 = vld [vmem:[#allocation5 + $0x918] sm:$0xff]
    %v621 = vld [vmem:[#allocation5 + $0x920] sm:$0xff]
    %v622 = vld [vmem:[#allocation5 + $0x928] sm:$0xff]
    %v623 = vld [vmem:[#allocation5 + $0x930] sm:$0xff]
    %v624 = vld [vmem:[#allocation5 + $0x938] sm:$0xff]
    %v625 = vld [vmem:[#allocation5 + $0x940] sm:$0xff]
    %v626 = vld [vmem:[#allocation5 + $0x948] sm:$0xff]
    %v627 = vld [vmem:[#allocation5 + $0x950] sm:$0xff]
    %v628 = vld [vmem:[#allocation5 + $0x958] sm:$0xff]
    %v629 = vld [vmem:[#allocation5 + $0x960] sm:$0xff]
    %v630 = vld [vmem:[#allocation5 + $0x968] sm:$0xff]
    %v631 = vld [vmem:[#allocation5 + $0x970] sm:$0xff]
    %v632 = vld [vmem:[#allocation5 + $0x978] sm:$0xff]
    %v633 = vld [vmem:[#allocation5 + $0x980] sm:$0xff]
    %v634 = vld [vmem:[#allocation5 + $0x988] sm:$0xff]
    %v635 = vld [vmem:[#allocation5 + $0x990] sm:$0xff]
    %v636 = vld [vmem:[#allocation5 + $0x998] sm:$0xff]
    %v637 = vld [vmem:[#allocation5 + $0x9a0] sm:$0xff]
    %v638 = vld [vmem:[#allocation5 + $0x9a8] sm:$0xff]
    %v639 = vld [vmem:[#allocation5 + $0x9b0] sm:$0xff]
    %v640 = vld [vmem:[#allocation5 + $0x9b8] sm:$0xff]
    %v641 = vld [vmem:[#allocation5 + $0x9c0] sm:$0xff]
    %v642 = vld [vmem:[#allocation5 + $0x9c8] sm:$0xff]
    %v643 = vld [vmem:[#allocation5 + $0x9d0] sm:$0xff]
    %v644 = vld [vmem:[#allocation5 + $0x9d8] sm:$0xff]
    %v645 = vld [vmem:[#allocation5 + $0x9e0] sm:$0xff]
    %v646 = vld [vmem:[#allocation5 + $0x9e8] sm:$0xff]
    %v647 = vld [vmem:[#allocation5 + $0x9f0] sm:$0xff]
    %v648 = vld [vmem:[#allocation5 + $0x9f8] sm:$0xff]
    %v649 = vld [vmem:[#allocation5 + $0xa00] sm:$0xff]
    %v650 = vld [vmem:[#allocation5 + $0xa08] sm:$0xff]
    %v651 = vld [vmem:[#allocation5 + $0xa10] sm:$0xff]
    %v652 = vld [vmem:[#allocation5 + $0xa18] sm:$0xff]
    %v653 = vld [vmem:[#allocation5 + $0xa20] sm:$0xff]
    %v654 = vld [vmem:[#allocation5 + $0xa28] sm:$0xff]
    %v655 = vld [vmem:[#allocation5 + $0xa30] sm:$0xff]
    %v656 = vld [vmem:[#allocation5 + $0xa38] sm:$0xff]
    %v657 = vld [vmem:[#allocation5 + $0xa40] sm:$0xff]
    %v658 = vld [vmem:[#allocation5 + $0xa48] sm:$0xff]
    %v659 = vld [vmem:[#allocation5 + $0xa50] sm:$0xff]
    %v660 = vld [vmem:[#allocation5 + $0xa58] sm:$0xff]
    %v661 = vld [vmem:[#allocation5 + $0xa60] sm:$0xff]
    %v662 = vld [vmem:[#allocation5 + $0xa68] sm:$0xff]
    %v663 = vld [vmem:[#allocation5 + $0xa70] sm:$0xff]
    %v664 = vld [vmem:[#allocation5 + $0xa78] sm:$0xff]
    %v665 = vld [vmem:[#allocation5 + $0xa80] sm:$0xff]
    %v666 = vld [vmem:[#allocation5 + $0xa88] sm:$0xff]
    %v667 = vld [vmem:[#allocation5 + $0xa90] sm:$0xff]
    %v668 = vld [vmem:[#allocation5 + $0xa98] sm:$0xff]
    %v669 = vld [vmem:[#allocation5 + $0xaa0] sm:$0xff]
    %v670 = vld [vmem:[#allocation5 + $0xaa8] sm:$0xff]
    %v671 = vld [vmem:[#allocation5 + $0xab0] sm:$0xff]
    %v672 = vld [vmem:[#allocation5 + $0xab8] sm:$0xff]
    %v673 = vld [vmem:[#allocation5 + $0xac0] sm:$0xff]
    %v674 = vld [vmem:[#allocation5 + $0xac8] sm:$0xff]
    %v675 = vld [vmem:[#allocation5 + $0xad0] sm:$0xff]
    %v676 = vld [vmem:[#allocation5 + $0xad8] sm:$0xff]
    %v677 = vld [vmem:[#allocation5 + $0xae0] sm:$0xff]
    %v678 = vld [vmem:[#allocation5 + $0xae8] sm:$0xff]
    %v679 = vld [vmem:[#allocation5 + $0xaf0] sm:$0xff]
    %v680 = vld [vmem:[#allocation5 + $0xaf8] sm:$0xff]
    %v681 = vld [vmem:[#allocation5 + $0xb00] sm:$0xff]
    %v682 = vld [vmem:[#allocation5 + $0xb08] sm:$0xff]
    %v683 = vld [vmem:[#allocation5 + $0xb10] sm:$0xff]
    %v684 = vld [vmem:[#allocation5 + $0xb18] sm:$0xff]
    %v685 = vld [vmem:[#allocation5 + $0xb20] sm:$0xff]
    %v686 = vld [vmem:[#allocation5 + $0xb28] sm:$0xff]
    %v687 = vld [vmem:[#allocation5 + $0xb30] sm:$0xff]
    %v688 = vld [vmem:[#allocation5 + $0xb38] sm:$0xff]
    %v689 = vld [vmem:[#allocation5 + $0xb40] sm:$0xff]
    %v690 = vld [vmem:[#allocation5 + $0xb48] sm:$0xff]
    %v691 = vld [vmem:[#allocation5 + $0xb50] sm:$0xff]
    %v692 = vld [vmem:[#allocation5 + $0xb58] sm:$0xff]
    %v693 = vld [vmem:[#allocation5 + $0xb60] sm:$0xff]
    %v694 = vld [vmem:[#allocation5 + $0xb68] sm:$0xff]
    %v695 = vld [vmem:[#allocation5 + $0xb70] sm:$0xff]
    %v696 = vld [vmem:[#allocation5 + $0xb78] sm:$0xff]
    %v697 = vld [vmem:[#allocation5 + $0xb80] sm:$0xff]
    %v698 = vld [vmem:[#allocation5 + $0xb88] sm:$0xff]
    %v699 = vld [vmem:[#allocation5 + $0xb90] sm:$0xff]
    %v700 = vld [vmem:[#allocation5 + $0xb98] sm:$0xff]
    %v701 = vld [vmem:[#allocation5 + $0xba0] sm:$0xff]
    %v702 = vld [vmem:[#allocation5 + $0xba8] sm:$0xff]
    %v703 = vld [vmem:[#allocation5 + $0xbb0] sm:$0xff]
    %v704 = vld [vmem:[#allocation5 + $0xbb8] sm:$0xff]
    %v705 = vld [vmem:[#allocation5 + $0xbc0] sm:$0xff]
    %v706 = vld [vmem:[#allocation5 + $0xbc8] sm:$0xff]
    %v707 = vld [vmem:[#allocation5 + $0xbd0] sm:$0xff]
    %v708 = vld [vmem:[#allocation5 + $0xbd8] sm:$0xff]
    %v709 = vld [vmem:[#allocation5 + $0xbe0] sm:$0xff]
    %v710 = vld [vmem:[#allocation5 + $0xbe8] sm:$0xff]
    %v711 = vld [vmem:[#allocation5 + $0xbf0] sm:$0xff]
    %v712 = vld [vmem:[#allocation5 + $0xbf8] sm:$0xff]
    %v713 = vld [vmem:[#allocation5 + $0xc00] sm:$0xff]
    %v714 = vld [vmem:[#allocation5 + $0xc08] sm:$0xff]
    %v715 = vld [vmem:[#allocation5 + $0xc10] sm:$0xff]
    %v716 = vld [vmem:[#allocation5 + $0xc18] sm:$0xff]
    %v717 = vld [vmem:[#allocation5 + $0xc20] sm:$0xff]
    %v718 = vld [vmem:[#allocation5 + $0xc28] sm:$0xff]
    %v719 = vld [vmem:[#allocation5 + $0xc30] sm:$0xff]
    %v720 = vld [vmem:[#allocation5 + $0xc38] sm:$0xff]
    %v721 = vld [vmem:[#allocation5 + $0xc40] sm:$0xff]
    %v722 = vld [vmem:[#allocation5 + $0xc48] sm:$0xff]
    %v723 = vld [vmem:[#allocation5 + $0xc50] sm:$0xff]
    %v724 = vld [vmem:[#allocation5 + $0xc58] sm:$0xff]
    %v725 = vld [vmem:[#allocation5 + $0xc60] sm:$0xff]
    %v726 = vld [vmem:[#allocation5 + $0xc68] sm:$0xff]
    %v727 = vld [vmem:[#allocation5 + $0xc70] sm:$0xff]
    %v728 = vld [vmem:[#allocation5 + $0xc78] sm:$0xff]
    %v729 = vld [vmem:[#allocation5 + $0xc80] sm:$0xff]
    %v730 = vld [vmem:[#allocation5 + $0xc88] sm:$0xff]
    %v731 = vld [vmem:[#allocation5 + $0xc90] sm:$0xff]
    %v732 = vld [vmem:[#allocation5 + $0xc98] sm:$0xff]
    %v733 = vld [vmem:[#allocation5 + $0xca0] sm:$0xff]
    %v734 = vld [vmem:[#allocation5 + $0xca8] sm:$0xff]
    %v735 = vld [vmem:[#allocation5 + $0xcb0] sm:$0xff]
    %v736 = vld [vmem:[#allocation5 + $0xcb8] sm:$0xff]
    %v737 = vld [vmem:[#allocation5 + $0xcc0] sm:$0xff]
    %v738 = vld [vmem:[#allocation5 + $0xcc8] sm:$0xff]
    %v739 = vld [vmem:[#allocation5 + $0xcd0] sm:$0xff]
    %v740 = vld [vmem:[#allocation5 + $0xcd8] sm:$0xff]
    %v741 = vld [vmem:[#allocation5 + $0xce0] sm:$0xff]
    %v742 = vld [vmem:[#allocation5 + $0xce8] sm:$0xff]
    %v743 = vld [vmem:[#allocation5 + $0xcf0] sm:$0xff]
    %v744 = vld [vmem:[#allocation5 + $0xcf8] sm:$0xff]
    %v745 = vld [vmem:[#allocation5 + $0xd00] sm:$0xff]
    %v746 = vld [vmem:[#allocation5 + $0xd08] sm:$0xff]
    %v747 = vld [vmem:[#allocation5 + $0xd10] sm:$0xff]
    %v748 = vld [vmem:[#allocation5 + $0xd18] sm:$0xff]
    %v749 = vld [vmem:[#allocation5 + $0xd20] sm:$0xff]
    %v750 = vld [vmem:[#allocation5 + $0xd28] sm:$0xff]
    %v751 = vld [vmem:[#allocation5 + $0xd30] sm:$0xff]
    %v752 = vld [vmem:[#allocation5 + $0xd38] sm:$0xff]
    %v753 = vld [vmem:[#allocation5 + $0xd40] sm:$0xff]
    %v754 = vld [vmem:[#allocation5 + $0xd48] sm:$0xff]
    %v755 = vld [vmem:[#allocation5 + $0xd50] sm:$0xff]
    %v756 = vld [vmem:[#allocation5 + $0xd58] sm:$0xff]
    %v757 = vld [vmem:[#allocation5 + $0xd60] sm:$0xff]
    %v758 = vld [vmem:[#allocation5 + $0xd68] sm:$0xff]
    %v759 = vld [vmem:[#allocation5 + $0xd70] sm:$0xff]
    %v760 = vld [vmem:[#allocation5 + $0xd78] sm:$0xff]
    %v761 = vld [vmem:[#allocation5 + $0xd80] sm:$0xff]
    %v762 = vld [vmem:[#allocation5 + $0xd88] sm:$0xff]
    %v763 = vld [vmem:[#allocation5 + $0xd90] sm:$0xff]
    %v764 = vld [vmem:[#allocation5 + $0xd98] sm:$0xff]
    %v765 = vld [vmem:[#allocation5 + $0xda0] sm:$0xff]
    %v766 = vld [vmem:[#allocation5 + $0xda8] sm:$0xff]
    %v767 = vld [vmem:[#allocation5 + $0xdb0] sm:$0xff]
    %v768 = vld [vmem:[#allocation5 + $0xdb8] sm:$0xff]
    %v769 = vld [vmem:[#allocation5 + $0xdc0] sm:$0xff]
    %v770 = vld [vmem:[#allocation5 + $0xdc8] sm:$0xff]
    %v771 = vld [vmem:[#allocation5 + $0xdd0] sm:$0xff]
    %v772 = vld [vmem:[#allocation5 + $0xdd8] sm:$0xff]
    %v773 = vld [vmem:[#allocation5 + $0xde0] sm:$0xff]
    %v774 = vld [vmem:[#allocation5 + $0xde8] sm:$0xff]
    %v775 = vld [vmem:[#allocation5 + $0xdf0] sm:$0xff]
    %v776 = vld [vmem:[#allocation5 + $0xdf8] sm:$0xff]
    %v777 = vld [vmem:[#allocation5 + $0xe00] sm:$0xff]
    %v778 = vld [vmem:[#allocation5 + $0xe08] sm:$0xff]
    %v779 = vld [vmem:[#allocation5 + $0xe10] sm:$0xff]
    %v780 = vld [vmem:[#allocation5 + $0xe18] sm:$0xff]
    %v781 = vld [vmem:[#allocation5 + $0xe20] sm:$0xff]
    %v782 = vld [vmem:[#allocation5 + $0xe28] sm:$0xff]
    %v783 = vld [vmem:[#allocation5 + $0xe30] sm:$0xff]
    %v784 = vld [vmem:[#allocation5 + $0xe38] sm:$0xff]
    %v785 = vld [vmem:[#allocation5 + $0xe40] sm:$0xff]
    %v786 = vld [vmem:[#allocation5 + $0xe48] sm:$0xff]
    %v787 = vld [vmem:[#allocation5 + $0xe50] sm:$0xff]
    %v788 = vld [vmem:[#allocation5 + $0xe58] sm:$0xff]
    %v789 = vld [vmem:[#allocation5 + $0xe60] sm:$0xff]
    %v790 = vld [vmem:[#allocation5 + $0xe68] sm:$0xff]
    %v791 = vld [vmem:[#allocation5 + $0xe70] sm:$0xff]
    %v792 = vld [vmem:[#allocation5 + $0xe78] sm:$0xff]
    %v793 = vld [vmem:[#allocation5 + $0xe80] sm:$0xff]
    %v794 = vld [vmem:[#allocation5 + $0xe88] sm:$0xff]
    %v795 = vld [vmem:[#allocation5 + $0xe90] sm:$0xff]
    %v796 = vld [vmem:[#allocation5 + $0xe98] sm:$0xff]
    %v797 = vld [vmem:[#allocation5 + $0xea0] sm:$0xff]
    %v798 = vld [vmem:[#allocation5 + $0xea8] sm:$0xff]
    %v799 = vld [vmem:[#allocation5 + $0xeb0] sm:$0xff]
    %v800 = vld [vmem:[#allocation5 + $0xeb8] sm:$0xff]
    %v801 = vld [vmem:[#allocation5 + $0xec0] sm:$0xff]
    %v802 = vld [vmem:[#allocation5 + $0xec8] sm:$0xff]
    %v803 = vld [vmem:[#allocation5 + $0xed0] sm:$0xff]
    %v804 = vld [vmem:[#allocation5 + $0xed8] sm:$0xff]
    %v805 = vld [vmem:[#allocation5 + $0xee0] sm:$0xff]
    %v806 = vld [vmem:[#allocation5 + $0xee8] sm:$0xff]
    %v807 = vld [vmem:[#allocation5 + $0xef0] sm:$0xff]
    %v808 = vld [vmem:[#allocation5 + $0xef8] sm:$0xff]
    %v809 = vld [vmem:[#allocation5 + $0xf00] sm:$0xff]
    %v810 = vld [vmem:[#allocation5 + $0xf08] sm:$0xff]
    %v811 = vld [vmem:[#allocation5 + $0xf10] sm:$0xff]
    %v812 = vld [vmem:[#allocation5 + $0xf18] sm:$0xff]
    %v813 = vld [vmem:[#allocation5 + $0xf20] sm:$0xff]
    %v814 = vld [vmem:[#allocation5 + $0xf28] sm:$0xff]
    %v815 = vld [vmem:[#allocation5 + $0xf30] sm:$0xff]
    %v816 = vld [vmem:[#allocation5 + $0xf38] sm:$0xff]
    %v817 = vld [vmem:[#allocation5 + $0xf40] sm:$0xff]
    %v818 = vld [vmem:[#allocation5 + $0xf48] sm:$0xff]
    %v819 = vld [vmem:[#allocation5 + $0xf50] sm:$0xff]
    %v820 = vld [vmem:[#allocation5 + $0xf58] sm:$0xff]
    %v821 = vld [vmem:[#allocation5 + $0xf60] sm:$0xff]
    %v822 = vld [vmem:[#allocation5 + $0xf68] sm:$0xff]
    %v823 = vld [vmem:[#allocation5 + $0xf70] sm:$0xff]
    %v824 = vld [vmem:[#allocation5 + $0xf78] sm:$0xff]
    %v825 = vld [vmem:[#allocation5 + $0xf80] sm:$0xff]
    %v826 = vld [vmem:[#allocation5 + $0xf88] sm:$0xff]
    %v827 = vld [vmem:[#allocation5 + $0xf90] sm:$0xff]
    %v828 = vld [vmem:[#allocation5 + $0xf98] sm:$0xff]
    %v829 = vld [vmem:[#allocation5 + $0xfa0] sm:$0xff]
    %v830 = vld [vmem:[#allocation5 + $0xfa8] sm:$0xff]
    %v831 = vld [vmem:[#allocation5 + $0xfb0] sm:$0xff]
    %v832 = vld [vmem:[#allocation5 + $0xfb8] sm:$0xff]
    %v833 = vld [vmem:[#allocation5 + $0xfc0] sm:$0xff]
    %v834 = vld [vmem:[#allocation5 + $0xfc8] sm:$0xff]
    %v835 = vld [vmem:[#allocation5 + $0xfd0] sm:$0xff]
    %v836 = vld [vmem:[#allocation5 + $0xfd8] sm:$0xff]
    %v837 = vld [vmem:[#allocation5 + $0xfe0] sm:$0xff]
    %v838 = vld [vmem:[#allocation5 + $0xfe8] sm:$0xff]
    %v839 = vld [vmem:[#allocation5 + $0xff0] sm:$0xff]
    %v840 = vld [vmem:[#allocation5 + $0xff8] sm:$0xff]
    %v841 = vld [vmem:[#allocation5 + $0x1000] sm:$0xff]
    %v842 = vld [vmem:[#allocation5 + $0x1008] sm:$0xff]
    %v843 = vld [vmem:[#allocation5 + $0x1010] sm:$0xff]
    %v844 = vld [vmem:[#allocation5 + $0x1018] sm:$0xff]
    %v845 = vld [vmem:[#allocation5 + $0x1020] sm:$0xff]
    %v846 = vld [vmem:[#allocation5 + $0x1028] sm:$0xff]
    %v847 = vld [vmem:[#allocation5 + $0x1030] sm:$0xff]
    %v848 = vld [vmem:[#allocation5 + $0x1038] sm:$0xff]
    %v849 = vld [vmem:[#allocation5 + $0x1040] sm:$0xff]
    %v850 = vld [vmem:[#allocation5 + $0x1048] sm:$0xff]
    %v851 = vld [vmem:[#allocation5 + $0x1050] sm:$0xff]
    %v852 = vld [vmem:[#allocation5 + $0x1058] sm:$0xff]
    %v853 = vld [vmem:[#allocation5 + $0x1060] sm:$0xff]
    %v854 = vld [vmem:[#allocation5 + $0x1068] sm:$0xff]
    %v855 = vld [vmem:[#allocation5 + $0x1070] sm:$0xff]
    %v856 = vld [vmem:[#allocation5 + $0x1078] sm:$0xff]
    %v857 = vld [vmem:[#allocation5 + $0x1080] sm:$0xff]
    %v858 = vld [vmem:[#allocation5 + $0x1088] sm:$0xff]
    %v859 = vld [vmem:[#allocation5 + $0x1090] sm:$0xff]
    %v860 = vld [vmem:[#allocation5 + $0x1098] sm:$0xff]
    %v861 = vld [vmem:[#allocation5 + $0x10a0] sm:$0xff]
    %v862 = vld [vmem:[#allocation5 + $0x10a8] sm:$0xff]
    %v863 = vld [vmem:[#allocation5 + $0x10b0] sm:$0xff]
    %v864 = vld [vmem:[#allocation5 + $0x10b8] sm:$0xff]
    %v865 = vld [vmem:[#allocation5 + $0x10c0] sm:$0xff]
    %v866 = vld [vmem:[#allocation5 + $0x10c8] sm:$0xff]
    %v867 = vld [vmem:[#allocation5 + $0x10d0] sm:$0xff]
    %v868 = vld [vmem:[#allocation5 + $0x10d8] sm:$0xff]
    %v869 = vld [vmem:[#allocation5 + $0x10e0] sm:$0xff]
    %v870 = vld [vmem:[#allocation5 + $0x10e8] sm:$0xff]
    %v871 = vld [vmem:[#allocation5 + $0x10f0] sm:$0xff]
    %v872 = vld [vmem:[#allocation5 + $0x10f8] sm:$0xff]
    %v873 = vld [vmem:[#allocation5 + $0x1100] sm:$0xff]
    %v874 = vld [vmem:[#allocation5 + $0x1108] sm:$0xff]
    %v875 = vld [vmem:[#allocation5 + $0x1110] sm:$0xff]
    %v876 = vld [vmem:[#allocation5 + $0x1118] sm:$0xff]
    %v877 = vld [vmem:[#allocation5 + $0x1120] sm:$0xff]
    %v878 = vld [vmem:[#allocation5 + $0x1128] sm:$0xff]
    %v879 = vld [vmem:[#allocation5 + $0x1130] sm:$0xff]
    %v880 = vld [vmem:[#allocation5 + $0x1138] sm:$0xff]
    %v881 = vld [vmem:[#allocation5 + $0x1140] sm:$0xff]
    %v882 = vld [vmem:[#allocation5 + $0x1148] sm:$0xff]
    %v883 = vld [vmem:[#allocation5 + $0x1150] sm:$0xff]
    %v884 = vld [vmem:[#allocation5 + $0x1158] sm:$0xff]
    %v885 = vld [vmem:[#allocation5 + $0x1160] sm:$0xff]
    %v886 = vld [vmem:[#allocation5 + $0x1168] sm:$0xff]
    %v887 = vld [vmem:[#allocation5 + $0x1170] sm:$0xff]
    %v888 = vld [vmem:[#allocation5 + $0x1178] sm:$0xff]
    %v889 = vld [vmem:[#allocation5 + $0x1180] sm:$0xff]
    %v890 = vld [vmem:[#allocation5 + $0x1188] sm:$0xff]
    %v891 = vld [vmem:[#allocation5 + $0x1190] sm:$0xff]
    %v892 = vld [vmem:[#allocation5 + $0x1198] sm:$0xff]
    %v893 = vld [vmem:[#allocation5 + $0x11a0] sm:$0xff]
    %v894 = vld [vmem:[#allocation5 + $0x11a8] sm:$0xff]
    %v895 = vld [vmem:[#allocation5 + $0x11b0] sm:$0xff]
    %v896 = vld [vmem:[#allocation5 + $0x11b8] sm:$0xff]
    %v897 = vld [vmem:[#allocation5 + $0x11c0] sm:$0xff]
    %v898 = vld [vmem:[#allocation5 + $0x11c8] sm:$0xff]
    %v899 = vld [vmem:[#allocation5 + $0x11d0] sm:$0xff]
    %v900 = vld [vmem:[#allocation5 + $0x11d8] sm:$0xff]
    %v901 = vld [vmem:[#allocation5 + $0x11e0] sm:$0xff]
    %v902 = vld [vmem:[#allocation5 + $0x11e8] sm:$0xff]
    %v903 = vld [vmem:[#allocation5 + $0x11f0] sm:$0xff]
    %v904 = vld [vmem:[#allocation5 + $0x11f8] sm:$0xff]
    %v905 = vld [vmem:[#allocation5 + $0x1200] sm:$0xff]
    %v906 = vld [vmem:[#allocation5 + $0x1208] sm:$0xff]
    %v907 = vld [vmem:[#allocation5 + $0x1210] sm:$0xff]
    %v908 = vld [vmem:[#allocation5 + $0x1218] sm:$0xff]
    %v909 = vld [vmem:[#allocation5 + $0x1220] sm:$0xff]
    %v910 = vld [vmem:[#allocation5 + $0x1228] sm:$0xff]
    %v911 = vld [vmem:[#allocation5 + $0x1230] sm:$0xff]
    %v912 = vld [vmem:[#allocation5 + $0x1238] sm:$0xff]
    %v913 = vld [vmem:[#allocation5 + $0x1240] sm:$0xff]
    %v914 = vld [vmem:[#allocation5 + $0x1248] sm:$0xff]
    %v915 = vld [vmem:[#allocation5 + $0x1250] sm:$0xff]
    %v916 = vld [vmem:[#allocation5 + $0x1258] sm:$0xff]
    %v917 = vld [vmem:[#allocation5 + $0x1260] sm:$0xff]
    %v918 = vld [vmem:[#allocation5 + $0x1268] sm:$0xff]
    %v919 = vld [vmem:[#allocation5 + $0x1270] sm:$0xff]
    %v920 = vld [vmem:[#allocation5 + $0x1278] sm:$0xff]
    %v921 = vld [vmem:[#allocation5 + $0x1280] sm:$0xff]
    %v922 = vld [vmem:[#allocation5 + $0x1288] sm:$0xff]
    %v923 = vld [vmem:[#allocation5 + $0x1290] sm:$0xff]
    %v924 = vld [vmem:[#allocation5 + $0x1298] sm:$0xff]
    %v925 = vld [vmem:[#allocation5 + $0x12a0] sm:$0xff]
    %v926 = vld [vmem:[#allocation5 + $0x12a8] sm:$0xff]
    %v927 = vld [vmem:[#allocation5 + $0x12b0] sm:$0xff]
    %v928 = vld [vmem:[#allocation5 + $0x12b8] sm:$0xff]
    %v929 = vld [vmem:[#allocation5 + $0x12c0] sm:$0xff]
    %v930 = vld [vmem:[#allocation5 + $0x12c8] sm:$0xff]
    %v931 = vld [vmem:[#allocation5 + $0x12d0] sm:$0xff]
    %v932 = vld [vmem:[#allocation5 + $0x12d8] sm:$0xff]
    %v933 = vld [vmem:[#allocation5 + $0x12e0] sm:$0xff]
    %v934 = vld [vmem:[#allocation5 + $0x12e8] sm:$0xff]
    %v935 = vld [vmem:[#allocation5 + $0x12f0] sm:$0xff]
    %v936 = vld [vmem:[#allocation5 + $0x12f8] sm:$0xff]
    %v937 = vld [vmem:[#allocation5 + $0x1300] sm:$0xff]
    %v938 = vld [vmem:[#allocation5 + $0x1308] sm:$0xff]
    %v939 = vld [vmem:[#allocation5 + $0x1310] sm:$0xff]
    %v940 = vld [vmem:[#allocation5 + $0x1318] sm:$0xff]
    %v941 = vld [vmem:[#allocation5 + $0x1320] sm:$0xff]
    %v942 = vld [vmem:[#allocation5 + $0x1328] sm:$0xff]
    %v943 = vld [vmem:[#allocation5 + $0x1330] sm:$0xff]
    %v944 = vld [vmem:[#allocation5 + $0x1338] sm:$0xff]
    %v945 = vld [vmem:[#allocation5 + $0x1340] sm:$0xff]
    %v946 = vld [vmem:[#allocation5 + $0x1348] sm:$0xff]
    %v947 = vld [vmem:[#allocation5 + $0x1350] sm:$0xff]
    %v948 = vld [vmem:[#allocation5 + $0x1358] sm:$0xff]
    %v949 = vld [vmem:[#allocation5 + $0x1360] sm:$0xff]
    %v950 = vld [vmem:[#allocation5 + $0x1368] sm:$0xff]
    %v951 = vld [vmem:[#allocation5 + $0x1370] sm:$0xff]
    %v952 = vld [vmem:[#allocation5 + $0x1378] sm:$0xff]
    %v953 = vld [vmem:[#allocation5 + $0x1380] sm:$0xff]
    %v954 = vld [vmem:[#allocation5 + $0x1388] sm:$0xff]
    %v955 = vld [vmem:[#allocation5 + $0x1390] sm:$0xff]
    %v956 = vld [vmem:[#allocation5 + $0x1398] sm:$0xff]
    %v957 = vld [vmem:[#allocation5 + $0x13a0] sm:$0xff]
    %v958 = vld [vmem:[#allocation5 + $0x13a8] sm:$0xff]
    %v959 = vld [vmem:[#allocation5 + $0x13b0] sm:$0xff]
    %v960 = vld [vmem:[#allocation5 + $0x13b8] sm:$0xff]
    %v961 = vld [vmem:[#allocation5 + $0x13c0] sm:$0xff]
    %v962 = vld [vmem:[#allocation5 + $0x13c8] sm:$0xff]
    %v963 = vld [vmem:[#allocation5 + $0x13d0] sm:$0xff]
    %v964 = vld [vmem:[#allocation5 + $0x13d8] sm:$0xff]
    %v965 = vld [vmem:[#allocation5 + $0x13e0] sm:$0xff]
    %v966 = vld [vmem:[#allocation5 + $0x13e8] sm:$0xff]
    %v967 = vld [vmem:[#allocation5 + $0x13f0] sm:$0xff]
    %v968 = vld [vmem:[#allocation5 + $0x13f8] sm:$0xff]
    %v969 = vld [vmem:[#allocation5 + $0x1400] sm:$0xff]
    %v970 = vld [vmem:[#allocation5 + $0x1408] sm:$0xff]
    %v971 = vld [vmem:[#allocation5 + $0x1410] sm:$0xff]
    %v972 = vld [vmem:[#allocation5 + $0x1418] sm:$0xff]
    %v973 = vld [vmem:[#allocation5 + $0x1420] sm:$0xff]
    %v974 = vld [vmem:[#allocation5 + $0x1428] sm:$0xff]
    %v975 = vld [vmem:[#allocation5 + $0x1430] sm:$0xff]
    %v976 = vld [vmem:[#allocation5 + $0x1438] sm:$0xff]
    %v977 = vld [vmem:[#allocation5 + $0x1440] sm:$0xff]
    %v978 = vld [vmem:[#allocation5 + $0x1448] sm:$0xff]
    %v979 = vld [vmem:[#allocation5 + $0x1450] sm:$0xff]
    %v980 = vld [vmem:[#allocation5 + $0x1458] sm:$0xff]
    %v981 = vld [vmem:[#allocation5 + $0x1460] sm:$0xff]
    %v982 = vld [vmem:[#allocation5 + $0x1468] sm:$0xff]
    %v983 = vld [vmem:[#allocation5 + $0x1470] sm:$0xff]
    %v984 = vld [vmem:[#allocation5 + $0x1478] sm:$0xff]
    %v985 = vld [vmem:[#allocation5 + $0x1480] sm:$0xff]
    %v986 = vld [vmem:[#allocation5 + $0x1488] sm:$0xff]
    %v987 = vld [vmem:[#allocation5 + $0x1490] sm:$0xff]
    %v988 = vld [vmem:[#allocation5 + $0x1498] sm:$0xff]
    %v989 = vld [vmem:[#allocation5 + $0x14a0] sm:$0xff]
    %v990 = vld [vmem:[#allocation5 + $0x14a8] sm:$0xff]
    %v991 = vld [vmem:[#allocation5 + $0x14b0] sm:$0xff]
    %v992 = vld [vmem:[#allocation5 + $0x14b8] sm:$0xff]
    %v993 = vld [vmem:[#allocation5 + $0x14c0] sm:$0xff]
    %v994 = vld [vmem:[#allocation5 + $0x14c8] sm:$0xff]
    %v995 = vld [vmem:[#allocation5 + $0x14d0] sm:$0xff]
    %v996 = vld [vmem:[#allocation5 + $0x14d8] sm:$0xff]
    %v997 = vld [vmem:[#allocation5 + $0x14e0] sm:$0xff]
    %v998 = vld [vmem:[#allocation5 + $0x14e8] sm:$0xff]
    %v999 = vld [vmem:[#allocation5 + $0x14f0] sm:$0xff]
    %v1000 = vld [vmem:[#allocation5 + $0x14f8] sm:$0xff]
    %v1001 = vld [vmem:[#allocation5 + $0x1500] sm:$0xff]
    %v1002 = vld [vmem:[#allocation5 + $0x1508] sm:$0xff]
    %v1003 = vld [vmem:[#allocation5 + $0x1510] sm:$0xff]
    %v1004 = vld [vmem:[#allocation5 + $0x1518] sm:$0xff]
    %v1005 = vld [vmem:[#allocation5 + $0x1520] sm:$0xff]
    %v1006 = vld [vmem:[#allocation5 + $0x1528] sm:$0xff]
    %v1007 = vld [vmem:[#allocation5 + $0x1530] sm:$0xff]
    %v1008 = vld [vmem:[#allocation5 + $0x1538] sm:$0xff]
    %v1009 = vld [vmem:[#allocation5 + $0x1540] sm:$0xff]
    %v1010 = vld [vmem:[#allocation5 + $0x1548] sm:$0xff]
    %v1011 = vld [vmem:[#allocation5 + $0x1550] sm:$0xff]
    %v1012 = vld [vmem:[#allocation5 + $0x1558] sm:$0xff]
    %v1013 = vld [vmem:[#allocation5 + $0x1560] sm:$0xff]
    %v1014 = vld [vmem:[#allocation5 + $0x1568] sm:$0xff]
    %v1015 = vld [vmem:[#allocation5 + $0x1570] sm:$0xff]
    %v1016 = vld [vmem:[#allocation5 + $0x1578] sm:$0xff]
    %v1017 = vld [vmem:[#allocation5 + $0x1580] sm:$0xff]
    %v1018 = vld [vmem:[#allocation5 + $0x1588] sm:$0xff]
    %v1019 = vld [vmem:[#allocation5 + $0x1590] sm:$0xff]
    %v1020 = vld [vmem:[#allocation5 + $0x1598] sm:$0xff]
    %v1021 = vld [vmem:[#allocation5 + $0x15a0] sm:$0xff]
    %v1022 = vld [vmem:[#allocation5 + $0x15a8] sm:$0xff]
    %v1023 = vld [vmem:[#allocation5 + $0x15b0] sm:$0xff]
    %v1024 = vld [vmem:[#allocation5 + $0x15b8] sm:$0xff]
    %v1025 = vld [vmem:[#allocation5 + $0x15c0] sm:$0xff]
    %v1026 = vld [vmem:[#allocation5 + $0x15c8] sm:$0xff]
    %v1027 = vld [vmem:[#allocation5 + $0x15d0] sm:$0xff]
    %v1028 = vld [vmem:[#allocation5 + $0x15d8] sm:$0xff]
    %v1029 = vld [vmem:[#allocation5 + $0x15e0] sm:$0xff]
    %v1030 = vld [vmem:[#allocation5 + $0x15e8] sm:$0xff]
    %v1031 = vld [vmem:[#allocation5 + $0x15f0] sm:$0xff]
    %v1032 = vld [vmem:[#allocation5 + $0x15f8] sm:$0xff]
    %v1033 = vld [vmem:[#allocation5 + $0x1600] sm:$0xff]
    %v1034 = vld [vmem:[#allocation5 + $0x1608] sm:$0xff]
    %v1035 = vld [vmem:[#allocation5 + $0x1610] sm:$0xff]
    %v1036 = vld [vmem:[#allocation5 + $0x1618] sm:$0xff]
    %v1037 = vld [vmem:[#allocation5 + $0x1620] sm:$0xff]
    %v1038 = vld [vmem:[#allocation5 + $0x1628] sm:$0xff]
    %v1039 = vld [vmem:[#allocation5 + $0x1630] sm:$0xff]
    %v1040 = vld [vmem:[#allocation5 + $0x1638] sm:$0xff]
    %v1041 = vld [vmem:[#allocation5 + $0x1640] sm:$0xff]
    %v1042 = vld [vmem:[#allocation5 + $0x1648] sm:$0xff]
    %v1043 = vld [vmem:[#allocation5 + $0x1650] sm:$0xff]
    %v1044 = vld [vmem:[#allocation5 + $0x1658] sm:$0xff]
    %v1045 = vld [vmem:[#allocation5 + $0x1660] sm:$0xff]
    %v1046 = vld [vmem:[#allocation5 + $0x1668] sm:$0xff]
    %v1047 = vld [vmem:[#allocation5 + $0x1670] sm:$0xff]
    %v1048 = vld [vmem:[#allocation5 + $0x1678] sm:$0xff]
    %v1049 = vld [vmem:[#allocation5 + $0x1680] sm:$0xff]
    %v1050 = vld [vmem:[#allocation5 + $0x1688] sm:$0xff]
    %v1051 = vld [vmem:[#allocation5 + $0x1690] sm:$0xff]
    %v1052 = vld [vmem:[#allocation5 + $0x1698] sm:$0xff]
    %v1053 = vld [vmem:[#allocation5 + $0x16a0] sm:$0xff]
    %v1054 = vld [vmem:[#allocation5 + $0x16a8] sm:$0xff]
    %v1055 = vld [vmem:[#allocation5 + $0x16b0] sm:$0xff]
    %v1056 = vld [vmem:[#allocation5 + $0x16b8] sm:$0xff]
    %v1057 = vld [vmem:[#allocation5 + $0x16c0] sm:$0xff]
    %v1058 = vld [vmem:[#allocation5 + $0x16c8] sm:$0xff]
    %v1059 = vld [vmem:[#allocation5 + $0x16d0] sm:$0xff]
    %v1060 = vld [vmem:[#allocation5 + $0x16d8] sm:$0xff]
    %v1061 = vld [vmem:[#allocation5 + $0x16e0] sm:$0xff]
    %v1062 = vld [vmem:[#allocation5 + $0x16e8] sm:$0xff]
    %v1063 = vld [vmem:[#allocation5 + $0x16f0] sm:$0xff]
    %v1064 = vld [vmem:[#allocation5 + $0x16f8] sm:$0xff]
    %v1065 = vld [vmem:[#allocation5 + $0x1700] sm:$0xff]
    %v1066 = vld [vmem:[#allocation5 + $0x1708] sm:$0xff]
    %v1067 = vld [vmem:[#allocation5 + $0x1710] sm:$0xff]
    %v1068 = vld [vmem:[#allocation5 + $0x1718] sm:$0xff]
    %v1069 = vld [vmem:[#allocation5 + $0x1720] sm:$0xff]
    %v1070 = vld [vmem:[#allocation5 + $0x1728] sm:$0xff]
    %v1071 = vld [vmem:[#allocation5 + $0x1730] sm:$0xff]
    %v1072 = vld [vmem:[#allocation5 + $0x1738] sm:$0xff]
    %v1073 = vld [vmem:[#allocation5 + $0x1740] sm:$0xff]
    %v1074 = vld [vmem:[#allocation5 + $0x1748] sm:$0xff]
    %v1075 = vld [vmem:[#allocation5 + $0x1750] sm:$0xff]
    %v1076 = vld [vmem:[#allocation5 + $0x1758] sm:$0xff]
    %v1077 = vld [vmem:[#allocation5 + $0x1760] sm:$0xff]
    %v1078 = vld [vmem:[#allocation5 + $0x1768] sm:$0xff]
    %v1079 = vld [vmem:[#allocation5 + $0x1770] sm:$0xff]
    %v1080 = vld [vmem:[#allocation5 + $0x1778] sm:$0xff]
    %v1081 = vld [vmem:[#allocation5 + $0x1780] sm:$0xff]
    %v1082 = vld [vmem:[#allocation5 + $0x1788] sm:$0xff]
    %v1083 = vld [vmem:[#allocation5 + $0x1790] sm:$0xff]
    %v1084 = vld [vmem:[#allocation5 + $0x1798] sm:$0xff]
    %v1085 = vld [vmem:[#allocation5 + $0x17a0] sm:$0xff]
    %v1086 = vld [vmem:[#allocation5 + $0x17a8] sm:$0xff]
    %v1087 = vld [vmem:[#allocation5 + $0x17b0] sm:$0xff]
    %v1088 = vld [vmem:[#allocation5 + $0x17b8] sm:$0xff]
    %v1089 = vld [vmem:[#allocation5 + $0x17c0] sm:$0xff]
    %v1090 = vld [vmem:[#allocation5 + $0x17c8] sm:$0xff]
    %v1091 = vld [vmem:[#allocation5 + $0x17d0] sm:$0xff]
    %v1092 = vld [vmem:[#allocation5 + $0x17d8] sm:$0xff]
    %v1093 = vld [vmem:[#allocation5 + $0x17e0] sm:$0xff]
    %v1094 = vld [vmem:[#allocation5 + $0x17e8] sm:$0xff]
    %v1095 = vld [vmem:[#allocation5 + $0x17f0] sm:$0xff]
    %v1096 = vld [vmem:[#allocation5 + $0x17f8] sm:$0xff]
    %v1097 = vld [vmem:[#allocation5 + $0x1800] sm:$0xff]
    %v1098 = vld [vmem:[#allocation5 + $0x1808] sm:$0xff]
    %v1099 = vld [vmem:[#allocation5 + $0x1810] sm:$0xff]
    %v1100 = vld [vmem:[#allocation5 + $0x1818] sm:$0xff]
    %v1101 = vld [vmem:[#allocation5 + $0x1820] sm:$0xff]
    %v1102 = vld [vmem:[#allocation5 + $0x1828] sm:$0xff]
    %v1103 = vld [vmem:[#allocation5 + $0x1830] sm:$0xff]
    %v1104 = vld [vmem:[#allocation5 + $0x1838] sm:$0xff]
    %v1105 = vld [vmem:[#allocation5 + $0x1840] sm:$0xff]
    %v1106 = vld [vmem:[#allocation5 + $0x1848] sm:$0xff]
    %v1107 = vld [vmem:[#allocation5 + $0x1850] sm:$0xff]
    %v1108 = vld [vmem:[#allocation5 + $0x1858] sm:$0xff]
    %v1109 = vld [vmem:[#allocation5 + $0x1860] sm:$0xff]
    %v1110 = vld [vmem:[#allocation5 + $0x1868] sm:$0xff]
    %v1111 = vld [vmem:[#allocation5 + $0x1870] sm:$0xff]
    %v1112 = vld [vmem:[#allocation5 + $0x1878] sm:$0xff]
    %v1113 = vld [vmem:[#allocation5 + $0x1880] sm:$0xff]
    %v1114 = vld [vmem:[#allocation5 + $0x1888] sm:$0xff]
    %v1115 = vld [vmem:[#allocation5 + $0x1890] sm:$0xff]
    %v1116 = vld [vmem:[#allocation5 + $0x1898] sm:$0xff]
    %v1117 = vld [vmem:[#allocation5 + $0x18a0] sm:$0xff]
    %v1118 = vld [vmem:[#allocation5 + $0x18a8] sm:$0xff]
    %v1119 = vld [vmem:[#allocation5 + $0x18b0] sm:$0xff]
    %v1120 = vld [vmem:[#allocation5 + $0x18b8] sm:$0xff]
    %v1121 = vld [vmem:[#allocation5 + $0x18c0] sm:$0xff]
    %v1122 = vld [vmem:[#allocation5 + $0x18c8] sm:$0xff]
    %v1123 = vld [vmem:[#allocation5 + $0x18d0] sm:$0xff]
    %v1124 = vld [vmem:[#allocation5 + $0x18d8] sm:$0xff]
    %v1125 = vld [vmem:[#allocation5 + $0x18e0] sm:$0xff]
    %v1126 = vld [vmem:[#allocation5 + $0x18e8] sm:$0xff]
    %v1127 = vld [vmem:[#allocation5 + $0x18f0] sm:$0xff]
    %v1128 = vld [vmem:[#allocation5 + $0x18f8] sm:$0xff]
    %v1129 = vld [vmem:[#allocation5 + $0x1900] sm:$0xff]
    %v1130 = vld [vmem:[#allocation5 + $0x1908] sm:$0xff]
    %v1131 = vld [vmem:[#allocation5 + $0x1910] sm:$0xff]
    %v1132 = vld [vmem:[#allocation5 + $0x1918] sm:$0xff]
    %v1133 = vld [vmem:[#allocation5 + $0x1920] sm:$0xff]
    %v1134 = vld [vmem:[#allocation5 + $0x1928] sm:$0xff]
    %v1135 = vld [vmem:[#allocation5 + $0x1930] sm:$0xff]
    %v1136 = vld [vmem:[#allocation5 + $0x1938] sm:$0xff]
    %v1137 = vld [vmem:[#allocation5 + $0x1940] sm:$0xff]
    %v1138 = vld [vmem:[#allocation5 + $0x1948] sm:$0xff]
    %v1139 = vld [vmem:[#allocation5 + $0x1950] sm:$0xff]
    %v1140 = vld [vmem:[#allocation5 + $0x1958] sm:$0xff]
    %v1141 = vld [vmem:[#allocation5 + $0x1960] sm:$0xff]
    %v1142 = vld [vmem:[#allocation5 + $0x1968] sm:$0xff]
    %v1143 = vld [vmem:[#allocation5 + $0x1970] sm:$0xff]
    %v1144 = vld [vmem:[#allocation5 + $0x1978] sm:$0xff]
    %v1145 = vld [vmem:[#allocation5 + $0x1980] sm:$0xff]
    %v1146 = vld [vmem:[#allocation5 + $0x1988] sm:$0xff]
    %v1147 = vld [vmem:[#allocation5 + $0x1990] sm:$0xff]
    %v1148 = vld [vmem:[#allocation5 + $0x1998] sm:$0xff]
    %v1149 = vld [vmem:[#allocation5 + $0x19a0] sm:$0xff]
    %v1150 = vld [vmem:[#allocation5 + $0x19a8] sm:$0xff]
    %v1151 = vld [vmem:[#allocation5 + $0x19b0] sm:$0xff]
    %v1152 = vld [vmem:[#allocation5 + $0x19b8] sm:$0xff]
    %v1153 = vld [vmem:[#allocation5 + $0x19c0] sm:$0xff]
    %v1154 = vld [vmem:[#allocation5 + $0x19c8] sm:$0xff]
    %v1155 = vld [vmem:[#allocation5 + $0x19d0] sm:$0xff]
    %v1156 = vld [vmem:[#allocation5 + $0x19d8] sm:$0xff]
    %v1157 = vld [vmem:[#allocation5 + $0x19e0] sm:$0xff]
    %v1158 = vld [vmem:[#allocation5 + $0x19e8] sm:$0xff]
    %v1159 = vld [vmem:[#allocation5 + $0x19f0] sm:$0xff]
    %v1160 = vld [vmem:[#allocation5 + $0x19f8] sm:$0xff]
    %v1161 = vld [vmem:[#allocation5 + $0x1a00] sm:$0xff]
    %v1162 = vld [vmem:[#allocation5 + $0x1a08] sm:$0xff]
    %v1163 = vld [vmem:[#allocation5 + $0x1a10] sm:$0xff]
    %v1164 = vld [vmem:[#allocation5 + $0x1a18] sm:$0xff]
    %v1165 = vld [vmem:[#allocation5 + $0x1a20] sm:$0xff]
    %v1166 = vld [vmem:[#allocation5 + $0x1a28] sm:$0xff]
    %v1167 = vld [vmem:[#allocation5 + $0x1a30] sm:$0xff]
    %v1168 = vld [vmem:[#allocation5 + $0x1a38] sm:$0xff]
    %v1169 = vld [vmem:[#allocation5 + $0x1a40] sm:$0xff]
    %v1170 = vld [vmem:[#allocation5 + $0x1a48] sm:$0xff]
    %v1171 = vld [vmem:[#allocation5 + $0x1a50] sm:$0xff]
    %v1172 = vld [vmem:[#allocation5 + $0x1a58] sm:$0xff]
    %v1173 = vld [vmem:[#allocation5 + $0x1a60] sm:$0xff]
    %v1174 = vld [vmem:[#allocation5 + $0x1a68] sm:$0xff]
    %v1175 = vld [vmem:[#allocation5 + $0x1a70] sm:$0xff]
    %v1176 = vld [vmem:[#allocation5 + $0x1a78] sm:$0xff]
    %v1177 = vld [vmem:[#allocation5 + $0x1a80] sm:$0xff]
    %v1178 = vld [vmem:[#allocation5 + $0x1a88] sm:$0xff]
    %v1179 = vld [vmem:[#allocation5 + $0x1a90] sm:$0xff]
    %v1180 = vld [vmem:[#allocation5 + $0x1a98] sm:$0xff]
    %v1181 = vld [vmem:[#allocation5 + $0x1aa0] sm:$0xff]
    %v1182 = vld [vmem:[#allocation5 + $0x1aa8] sm:$0xff]
    %v1183 = vld [vmem:[#allocation5 + $0x1ab0] sm:$0xff]
    %v1184 = vld [vmem:[#allocation5 + $0x1ab8] sm:$0xff]
    %v1185 = vld [vmem:[#allocation5 + $0x1ac0] sm:$0xff]
    %v1186 = vld [vmem:[#allocation5 + $0x1ac8] sm:$0xff]
    %v1187 = vld [vmem:[#allocation5 + $0x1ad0] sm:$0xff]
    %v1188 = vld [vmem:[#allocation5 + $0x1ad8] sm:$0xff]
    %v1189 = vld [vmem:[#allocation5 + $0x1ae0] sm:$0xff]
    %v1190 = vld [vmem:[#allocation5 + $0x1ae8] sm:$0xff]
    %v1191 = vld [vmem:[#allocation5 + $0x1af0] sm:$0xff]
    %v1192 = vld [vmem:[#allocation5 + $0x1af8] sm:$0xff]
    %v1193 = vld [vmem:[#allocation5 + $0x1b00] sm:$0xff]
    %v1194 = vld [vmem:[#allocation5 + $0x1b08] sm:$0xff]
    %v1195 = vld [vmem:[#allocation5 + $0x1b10] sm:$0xff]
    %v1196 = vld [vmem:[#allocation5 + $0x1b18] sm:$0xff]
    %v1197 = vld [vmem:[#allocation5 + $0x1b20] sm:$0xff]
    %v1198 = vld [vmem:[#allocation5 + $0x1b28] sm:$0xff]
    %v1199 = vld [vmem:[#allocation5 + $0x1b30] sm:$0xff]
    %v1200 = vld [vmem:[#allocation5 + $0x1b38] sm:$0xff]
    %v1201 = vld [vmem:[#allocation5 + $0x1b40] sm:$0xff]
    %v1202 = vld [vmem:[#allocation5 + $0x1b48] sm:$0xff]
    %v1203 = vld [vmem:[#allocation5 + $0x1b50] sm:$0xff]
    %v1204 = vld [vmem:[#allocation5 + $0x1b58] sm:$0xff]
    %v1205 = vld [vmem:[#allocation5 + $0x1b60] sm:$0xff]
    %v1206 = vld [vmem:[#allocation5 + $0x1b68] sm:$0xff]
    %v1207 = vld [vmem:[#allocation5 + $0x1b70] sm:$0xff]
    %v1208 = vld [vmem:[#allocation5 + $0x1b78] sm:$0xff]
    %v1209 = vld [vmem:[#allocation5 + $0x1b80] sm:$0xff]
    %v1210 = vld [vmem:[#allocation5 + $0x1b88] sm:$0xff]
    %v1211 = vld [vmem:[#allocation5 + $0x1b90] sm:$0xff]
    %v1212 = vld [vmem:[#allocation5 + $0x1b98] sm:$0xff]
    %v1213 = vld [vmem:[#allocation5 + $0x1ba0] sm:$0xff]
    %v1214 = vld [vmem:[#allocation5 + $0x1ba8] sm:$0xff]
    %v1215 = vld [vmem:[#allocation5 + $0x1bb0] sm:$0xff]
    %v1216 = vld [vmem:[#allocation5 + $0x1bb8] sm:$0xff]
    %v1217 = vld [vmem:[#allocation5 + $0x1bc0] sm:$0xff]
    %v1218 = vld [vmem:[#allocation5 + $0x1bc8] sm:$0xff]
    %v1219 = vld [vmem:[#allocation5 + $0x1bd0] sm:$0xff]
    %v1220 = vld [vmem:[#allocation5 + $0x1bd8] sm:$0xff]
    %v1221 = vld [vmem:[#allocation5 + $0x1be0] sm:$0xff]
    %v1222 = vld [vmem:[#allocation5 + $0x1be8] sm:$0xff]
    %v1223 = vld [vmem:[#allocation5 + $0x1bf0] sm:$0xff]
    %v1224 = vld [vmem:[#allocation5 + $0x1bf8] sm:$0xff]
    %v1225 = vld [vmem:[#allocation5 + $0x1c00] sm:$0xff]
    %v1226 = vld [vmem:[#allocation5 + $0x1c08] sm:$0xff]
    %v1227 = vld [vmem:[#allocation5 + $0x1c10] sm:$0xff]
    %v1228 = vld [vmem:[#allocation5 + $0x1c18] sm:$0xff]
    %v1229 = vld [vmem:[#allocation5 + $0x1c20] sm:$0xff]
    %v1230 = vld [vmem:[#allocation5 + $0x1c28] sm:$0xff]
    %v1231 = vld [vmem:[#allocation5 + $0x1c30] sm:$0xff]
    %v1232 = vld [vmem:[#allocation5 + $0x1c38] sm:$0xff]
    %v1233 = vld [vmem:[#allocation5 + $0x1c40] sm:$0xff]
    %v1234 = vld [vmem:[#allocation5 + $0x1c48] sm:$0xff]
    %v1235 = vld [vmem:[#allocation5 + $0x1c50] sm:$0xff]
    %v1236 = vld [vmem:[#allocation5 + $0x1c58] sm:$0xff]
    %v1237 = vld [vmem:[#allocation5 + $0x1c60] sm:$0xff]
    %v1238 = vld [vmem:[#allocation5 + $0x1c68] sm:$0xff]
    %v1239 = vld [vmem:[#allocation5 + $0x1c70] sm:$0xff]
    %v1240 = vld [vmem:[#allocation5 + $0x1c78] sm:$0xff]
    %v1241 = vld [vmem:[#allocation5 + $0x1c80] sm:$0xff]
    %v1242 = vld [vmem:[#allocation5 + $0x1c88] sm:$0xff]
    %v1243 = vld [vmem:[#allocation5 + $0x1c90] sm:$0xff]
    %v1244 = vld [vmem:[#allocation5 + $0x1c98] sm:$0xff]
    %v1245 = vld [vmem:[#allocation5 + $0x1ca0] sm:$0xff]
    %v1246 = vld [vmem:[#allocation5 + $0x1ca8] sm:$0xff]
    %v1247 = vld [vmem:[#allocation5 + $0x1cb0] sm:$0xff]
    %v1248 = vld [vmem:[#allocation5 + $0x1cb8] sm:$0xff]
    %v1249 = vld [vmem:[#allocation5 + $0x1cc0] sm:$0xff]
    %v1250 = vld [vmem:[#allocation5 + $0x1cc8] sm:$0xff]
    %v1251 = vld [vmem:[#allocation5 + $0x1cd0] sm:$0xff]
    %v1252 = vld [vmem:[#allocation5 + $0x1cd8] sm:$0xff]
    %v1253 = vld [vmem:[#allocation5 + $0x1ce0] sm:$0xff]
    %v1254 = vld [vmem:[#allocation5 + $0x1ce8] sm:$0xff]
    %v1255 = vld [vmem:[#allocation5 + $0x1cf0] sm:$0xff]
    %v1256 = vld [vmem:[#allocation5 + $0x1cf8] sm:$0xff]
    %v1257 = vld [vmem:[#allocation5 + $0x1d00] sm:$0xff]
    %v1258 = vld [vmem:[#allocation5 + $0x1d08] sm:$0xff]
    %v1259 = vld [vmem:[#allocation5 + $0x1d10] sm:$0xff]
    %v1260 = vld [vmem:[#allocation5 + $0x1d18] sm:$0xff]
    %v1261 = vld [vmem:[#allocation5 + $0x1d20] sm:$0xff]
    %v1262 = vld [vmem:[#allocation5 + $0x1d28] sm:$0xff]
    %v1263 = vld [vmem:[#allocation5 + $0x1d30] sm:$0xff]
    %v1264 = vld [vmem:[#allocation5 + $0x1d38] sm:$0xff]
    %v1265 = vld [vmem:[#allocation5 + $0x1d40] sm:$0xff]
    %v1266 = vld [vmem:[#allocation5 + $0x1d48] sm:$0xff]
    %v1267 = vld [vmem:[#allocation5 + $0x1d50] sm:$0xff]
    %v1268 = vld [vmem:[#allocation5 + $0x1d58] sm:$0xff]
    %v1269 = vld [vmem:[#allocation5 + $0x1d60] sm:$0xff]
    %v1270 = vld [vmem:[#allocation5 + $0x1d68] sm:$0xff]
    %v1271 = vld [vmem:[#allocation5 + $0x1d70] sm:$0xff]
    %v1272 = vld [vmem:[#allocation5 + $0x1d78] sm:$0xff]
    %v1273 = vld [vmem:[#allocation5 + $0x1d80] sm:$0xff]
    %v1274 = vld [vmem:[#allocation5 + $0x1d88] sm:$0xff]
    %v1275 = vld [vmem:[#allocation5 + $0x1d90] sm:$0xff]
    %v1276 = vld [vmem:[#allocation5 + $0x1d98] sm:$0xff]
    %v1277 = vld [vmem:[#allocation5 + $0x1da0] sm:$0xff]
    %v1278 = vld [vmem:[#allocation5 + $0x1da8] sm:$0xff]
    %v1279 = vld [vmem:[#allocation5 + $0x1db0] sm:$0xff]
    %v1280 = vld [vmem:[#allocation5 + $0x1db8] sm:$0xff]
    %v1281 = vld [vmem:[#allocation5 + $0x1dc0] sm:$0xff]
    %v1282 = vld [vmem:[#allocation5 + $0x1dc8] sm:$0xff]
    %v1283 = vld [vmem:[#allocation5 + $0x1dd0] sm:$0xff]
    %v1284 = vld [vmem:[#allocation5 + $0x1dd8] sm:$0xff]
    %v1285 = vld [vmem:[#allocation5 + $0x1de0] sm:$0xff]
    %v1286 = vld [vmem:[#allocation5 + $0x1de8] sm:$0xff]
    %v1287 = vld [vmem:[#allocation5 + $0x1df0] sm:$0xff]
    %v1288 = vld [vmem:[#allocation5 + $0x1df8] sm:$0xff]
    %v1289 = vld [vmem:[#allocation5 + $0x1e00] sm:$0xff]
    %v1290 = vld [vmem:[#allocation5 + $0x1e08] sm:$0xff]
    %v1291 = vld [vmem:[#allocation5 + $0x1e10] sm:$0xff]
    %v1292 = vld [vmem:[#allocation5 + $0x1e18] sm:$0xff]
    %v1293 = vld [vmem:[#allocation5 + $0x1e20] sm:$0xff]
    %v1294 = vld [vmem:[#allocation5 + $0x1e28] sm:$0xff]
    %v1295 = vld [vmem:[#allocation5 + $0x1e30] sm:$0xff]
    %v1296 = vld [vmem:[#allocation5 + $0x1e38] sm:$0xff]
    %v1297 = vld [vmem:[#allocation5 + $0x1e40] sm:$0xff]
    %v1298 = vld [vmem:[#allocation5 + $0x1e48] sm:$0xff]
    %v1299 = vld [vmem:[#allocation5 + $0x1e50] sm:$0xff]
    %v1300 = vld [vmem:[#allocation5 + $0x1e58] sm:$0xff]
    %v1301 = vld [vmem:[#allocation5 + $0x1e60] sm:$0xff]
    %v1302 = vld [vmem:[#allocation5 + $0x1e68] sm:$0xff]
    %v1303 = vld [vmem:[#allocation5 + $0x1e70] sm:$0xff]
    %v1304 = vld [vmem:[#allocation5 + $0x1e78] sm:$0xff]
    %v1305 = vld [vmem:[#allocation5 + $0x1e80] sm:$0xff]
    %v1306 = vld [vmem:[#allocation5 + $0x1e88] sm:$0xff]
    %v1307 = vld [vmem:[#allocation5 + $0x1e90] sm:$0xff]
    %v1308 = vld [vmem:[#allocation5 + $0x1e98] sm:$0xff]
    %v1309 = vld [vmem:[#allocation5 + $0x1ea0] sm:$0xff]
    %v1310 = vld [vmem:[#allocation5 + $0x1ea8] sm:$0xff]
    %v1311 = vld [vmem:[#allocation5 + $0x1eb0] sm:$0xff]
    %v1312 = vld [vmem:[#allocation5 + $0x1eb8] sm:$0xff]
    %v1313 = vld [vmem:[#allocation5 + $0x1ec0] sm:$0xff]
    %v1314 = vld [vmem:[#allocation5 + $0x1ec8] sm:$0xff]
    %v1315 = vld [vmem:[#allocation5 + $0x1ed0] sm:$0xff]
    %v1316 = vld [vmem:[#allocation5 + $0x1ed8] sm:$0xff]
    %v1317 = vld [vmem:[#allocation5 + $0x1ee0] sm:$0xff]
    %v1318 = vld [vmem:[#allocation5 + $0x1ee8] sm:$0xff]
    %v1319 = vld [vmem:[#allocation5 + $0x1ef0] sm:$0xff]
    %v1320 = vld [vmem:[#allocation5 + $0x1ef8] sm:$0xff]
    %v1321 = vld [vmem:[#allocation5 + $0x1f00] sm:$0xff]
    %v1322 = vld [vmem:[#allocation5 + $0x1f08] sm:$0xff]
    %v1323 = vld [vmem:[#allocation5 + $0x1f10] sm:$0xff]
    %v1324 = vld [vmem:[#allocation5 + $0x1f18] sm:$0xff]
    %v1325 = vld [vmem:[#allocation5 + $0x1f20] sm:$0xff]
    %v1326 = vld [vmem:[#allocation5 + $0x1f28] sm:$0xff]
    %v1327 = vld [vmem:[#allocation5 + $0x1f30] sm:$0xff]
    %v1328 = vld [vmem:[#allocation5 + $0x1f38] sm:$0xff]
    %v1329 = vld [vmem:[#allocation5 + $0x1f40] sm:$0xff]
    %v1330 = vld [vmem:[#allocation5 + $0x1f48] sm:$0xff]
    %v1331 = vld [vmem:[#allocation5 + $0x1f50] sm:$0xff]
    %v1332 = vld [vmem:[#allocation5 + $0x1f58] sm:$0xff]
    %v1333 = vld [vmem:[#allocation5 + $0x1f60] sm:$0xff]
    %v1334 = vld [vmem:[#allocation5 + $0x1f68] sm:$0xff]
    %v1335 = vld [vmem:[#allocation5 + $0x1f70] sm:$0xff]
    %v1336 = vld [vmem:[#allocation5 + $0x1f78] sm:$0xff]
    %v1337 = vld [vmem:[#allocation5 + $0x1f80] sm:$0xff]
    %v1338 = vld [vmem:[#allocation5 + $0x1f88] sm:$0xff]
    %v1339 = vld [vmem:[#allocation5 + $0x1f90] sm:$0xff]
    %v1340 = vld [vmem:[#allocation5 + $0x1f98] sm:$0xff]
    %v1341 = vld [vmem:[#allocation5 + $0x1fa0] sm:$0xff]
    %v1342 = vld [vmem:[#allocation5 + $0x1fa8] sm:$0xff]
    %v1343 = vld [vmem:[#allocation5 + $0x1fb0] sm:$0xff]
    %v1344 = vld [vmem:[#allocation5 + $0x1fb8] sm:$0xff]
    %v1345 = vld [vmem:[#allocation5 + $0x1fc0] sm:$0xff]
    %v1346 = vld [vmem:[#allocation5 + $0x1fc8] sm:$0xff]
    %v1347 = vld [vmem:[#allocation5 + $0x1fd0] sm:$0xff]
    %v1348 = vld [vmem:[#allocation5 + $0x1fd8] sm:$0xff]
    %v1349 = vld [vmem:[#allocation5 + $0x1fe0] sm:$0xff]
    %v1350 = vld [vmem:[#allocation5 + $0x1fe8] sm:$0xff]
    %v1351 = vld [vmem:[#allocation5 + $0x1ff0] sm:$0xff]
    %v1352 = vld [vmem:[#allocation5 + $0x1ff8] sm:$0xff]
    %v1353 = vld [vmem:[#allocation5 + $0x2000] sm:$0xff]
    %v1354 = vld [vmem:[#allocation5 + $0x2008] sm:$0xff]
    %v1355 = vld [vmem:[#allocation5 + $0x2010] sm:$0xff]
    %v1356 = vld [vmem:[#allocation5 + $0x2018] sm:$0xff]
    %v1357 = vld [vmem:[#allocation5 + $0x2020] sm:$0xff]
    %v1358 = vld [vmem:[#allocation5 + $0x2028] sm:$0xff]
    %v1359 = vld [vmem:[#allocation5 + $0x2030] sm:$0xff]
    %v1360 = vld [vmem:[#allocation5 + $0x2038] sm:$0xff]
    %v1361 = vld [vmem:[#allocation5 + $0x2040] sm:$0xff]
    %v1362 = vld [vmem:[#allocation5 + $0x2048] sm:$0xff]
    %v1363 = vld [vmem:[#allocation5 + $0x2050] sm:$0xff]
    %v1364 = vld [vmem:[#allocation5 + $0x2058] sm:$0xff]
    %v1365 = vld [vmem:[#allocation5 + $0x2060] sm:$0xff]
    %v1366 = vld [vmem:[#allocation5 + $0x2068] sm:$0xff]
    %v1367 = vld [vmem:[#allocation5 + $0x2070] sm:$0xff]
    %v1368 = vld [vmem:[#allocation5 + $0x2078] sm:$0xff]
    %v1369 = vld [vmem:[#allocation5 + $0x2080] sm:$0xff]
    %v1370 = vld [vmem:[#allocation5 + $0x2088] sm:$0xff]
    %v1371 = vld [vmem:[#allocation5 + $0x2090] sm:$0xff]
    %v1372 = vld [vmem:[#allocation5 + $0x2098] sm:$0xff]
    %v1373 = vld [vmem:[#allocation5 + $0x20a0] sm:$0xff]
    %v1374 = vld [vmem:[#allocation5 + $0x20a8] sm:$0xff]
    %v1375 = vld [vmem:[#allocation5 + $0x20b0] sm:$0xff]
    %v1376 = vld [vmem:[#allocation5 + $0x20b8] sm:$0xff]
    %v1377 = vld [vmem:[#allocation5 + $0x20c0] sm:$0xff]
    %v1378 = vld [vmem:[#allocation5 + $0x20c8] sm:$0xff]
    %v1379 = vld [vmem:[#allocation5 + $0x20d0] sm:$0xff]
    %v1380 = vld [vmem:[#allocation5 + $0x20d8] sm:$0xff]
    %v1381 = vld [vmem:[#allocation5 + $0x20e0] sm:$0xff]
    %v1382 = vld [vmem:[#allocation5 + $0x20e8] sm:$0xff]
    %v1383 = vld [vmem:[#allocation5 + $0x20f0] sm:$0xff]
    %v1384 = vld [vmem:[#allocation5 + $0x20f8] sm:$0xff]
    %v1385 = vld [vmem:[#allocation5 + $0x2100] sm:$0xff]
    %v1386 = vld [vmem:[#allocation5 + $0x2108] sm:$0xff]
    %v1387 = vld [vmem:[#allocation5 + $0x2110] sm:$0xff]
    %v1388 = vld [vmem:[#allocation5 + $0x2118] sm:$0xff]
    %v1389 = vld [vmem:[#allocation5 + $0x2120] sm:$0xff]
    %v1390 = vld [vmem:[#allocation5 + $0x2128] sm:$0xff]
    %v1391 = vld [vmem:[#allocation5 + $0x2130] sm:$0xff]
    %v1392 = vld [vmem:[#allocation5 + $0x2138] sm:$0xff]
    %v1393 = vld [vmem:[#allocation5 + $0x2140] sm:$0xff]
    %v1394 = vld [vmem:[#allocation5 + $0x2148] sm:$0xff]
    %v1395 = vld [vmem:[#allocation5 + $0x2150] sm:$0xff]
    %v1396 = vld [vmem:[#allocation5 + $0x2158] sm:$0xff]
    %v1397 = vld [vmem:[#allocation5 + $0x2160] sm:$0xff]
    %v1398 = vld [vmem:[#allocation5 + $0x2168] sm:$0xff]
    %v1399 = vld [vmem:[#allocation5 + $0x2170] sm:$0xff]
    %v1400 = vld [vmem:[#allocation5 + $0x2178] sm:$0xff]
    %v1401 = vld [vmem:[#allocation5 + $0x2180] sm:$0xff]
    %v1402 = vld [vmem:[#allocation5 + $0x2188] sm:$0xff]
    %v1403 = vld [vmem:[#allocation5 + $0x2190] sm:$0xff]
    %v1404 = vld [vmem:[#allocation5 + $0x2198] sm:$0xff]
    %v1405 = vld [vmem:[#allocation5 + $0x21a0] sm:$0xff]
    %v1406 = vld [vmem:[#allocation5 + $0x21a8] sm:$0xff]
    %v1407 = vld [vmem:[#allocation5 + $0x21b0] sm:$0xff]
    %v1408 = vld [vmem:[#allocation5 + $0x21b8] sm:$0xff]
    %v1409 = vld [vmem:[#allocation5 + $0x21c0] sm:$0xff]
    %v1410 = vld [vmem:[#allocation5 + $0x21c8] sm:$0xff]
    %v1411 = vld [vmem:[#allocation5 + $0x21d0] sm:$0xff]
    %v1412 = vld [vmem:[#allocation5 + $0x21d8] sm:$0xff]
    %v1413 = vld [vmem:[#allocation5 + $0x21e0] sm:$0xff]
    %v1414 = vld [vmem:[#allocation5 + $0x21e8] sm:$0xff]
    %v1415 = vld [vmem:[#allocation5 + $0x21f0] sm:$0xff]
    %v1416 = vld [vmem:[#allocation5 + $0x21f8] sm:$0xff]
    %v1417 = vld [vmem:[#allocation5 + $0x2200] sm:$0xff]
    %v1418 = vld [vmem:[#allocation5 + $0x2208] sm:$0xff]
    %v1419 = vld [vmem:[#allocation5 + $0x2210] sm:$0xff]
    %v1420 = vld [vmem:[#allocation5 + $0x2218] sm:$0xff]
    %v1421 = vld [vmem:[#allocation5 + $0x2220] sm:$0xff]
    %v1422 = vld [vmem:[#allocation5 + $0x2228] sm:$0xff]
    %v1423 = vld [vmem:[#allocation5 + $0x2230] sm:$0xff]
    %v1424 = vld [vmem:[#allocation5 + $0x2238] sm:$0xff]
    %v1425 = vld [vmem:[#allocation5 + $0x2240] sm:$0xff]
    %v1426 = vld [vmem:[#allocation5 + $0x2248] sm:$0xff]
    %v1427 = vld [vmem:[#allocation5 + $0x2250] sm:$0xff]
    %v1428 = vld [vmem:[#allocation5 + $0x2258] sm:$0xff]
    %v1429 = vld [vmem:[#allocation5 + $0x2260] sm:$0xff]
    %v1430 = vld [vmem:[#allocation5 + $0x2268] sm:$0xff]
    %v1431 = vld [vmem:[#allocation5 + $0x2270] sm:$0xff]
    %v1432 = vld [vmem:[#allocation5 + $0x2278] sm:$0xff]
    %v1433 = vld [vmem:[#allocation5 + $0x2280] sm:$0xff]
    %v1434 = vld [vmem:[#allocation5 + $0x2288] sm:$0xff]
    %v1435 = vld [vmem:[#allocation5 + $0x2290] sm:$0xff]
    %v1436 = vld [vmem:[#allocation5 + $0x2298] sm:$0xff]
    %v1437 = vld [vmem:[#allocation5 + $0x22a0] sm:$0xff]
    %v1438 = vld [vmem:[#allocation5 + $0x22a8] sm:$0xff]
    %v1439 = vld [vmem:[#allocation5 + $0x22b0] sm:$0xff]
    %v1440 = vld [vmem:[#allocation5 + $0x22b8] sm:$0xff]
    %v1441 = vld [vmem:[#allocation5 + $0x22c0] sm:$0xff]
    %v1442 = vld [vmem:[#allocation5 + $0x22c8] sm:$0xff]
    %v1443 = vld [vmem:[#allocation5 + $0x22d0] sm:$0xff]
    %v1444 = vld [vmem:[#allocation5 + $0x22d8] sm:$0xff]
    %v1445 = vld [vmem:[#allocation5 + $0x22e0] sm:$0xff]
    %v1446 = vld [vmem:[#allocation5 + $0x22e8] sm:$0xff]
    %v1447 = vld [vmem:[#allocation5 + $0x22f0] sm:$0xff]
    %v1448 = vld [vmem:[#allocation5 + $0x22f8] sm:$0xff]
    %v1449 = vld [vmem:[#allocation5 + $0x2300] sm:$0xff]
    %v1450 = vld [vmem:[#allocation5 + $0x2308] sm:$0xff]
    %v1451 = vld [vmem:[#allocation5 + $0x2310] sm:$0xff]
    %v1452 = vld [vmem:[#allocation5 + $0x2318] sm:$0xff]
    %v1453 = vld [vmem:[#allocation5 + $0x2320] sm:$0xff]
    %v1454 = vld [vmem:[#allocation5 + $0x2328] sm:$0xff]
    %v1455 = vld [vmem:[#allocation5 + $0x2330] sm:$0xff]
    %v1456 = vld [vmem:[#allocation5 + $0x2338] sm:$0xff]
    %v1457 = vld [vmem:[#allocation5 + $0x2340] sm:$0xff]
    %v1458 = vld [vmem:[#allocation5 + $0x2348] sm:$0xff]
    %v1459 = vld [vmem:[#allocation5 + $0x2350] sm:$0xff]
    %v1460 = vld [vmem:[#allocation5 + $0x2358] sm:$0xff]
    %v1461 = vld [vmem:[#allocation5 + $0x2360] sm:$0xff]
    %v1462 = vld [vmem:[#allocation5 + $0x2368] sm:$0xff]
    %v1463 = vld [vmem:[#allocation5 + $0x2370] sm:$0xff]
    %v1464 = vld [vmem:[#allocation5 + $0x2378] sm:$0xff]
    %v1465 = vld [vmem:[#allocation5 + $0x2380] sm:$0xff]
    %v1466 = vld [vmem:[#allocation5 + $0x2388] sm:$0xff]
    %v1467 = vld [vmem:[#allocation5 + $0x2390] sm:$0xff]
    %v1468 = vld [vmem:[#allocation5 + $0x2398] sm:$0xff]
    %v1469 = vld [vmem:[#allocation5 + $0x23a0] sm:$0xff]
    %v1470 = vld [vmem:[#allocation5 + $0x23a8] sm:$0xff]
    %v1471 = vld [vmem:[#allocation5 + $0x23b0] sm:$0xff]
    %v1472 = vld [vmem:[#allocation5 + $0x23b8] sm:$0xff]
    %v1473 = vld [vmem:[#allocation5 + $0x23c0] sm:$0xff]
    %v1474 = vld [vmem:[#allocation5 + $0x23c8] sm:$0xff]
    %v1475 = vld [vmem:[#allocation5 + $0x23d0] sm:$0xff]
    %v1476 = vld [vmem:[#allocation5 + $0x23d8] sm:$0xff]
    %v1477 = vld [vmem:[#allocation5 + $0x23e0] sm:$0xff]
    %v1478 = vld [vmem:[#allocation5 + $0x23e8] sm:$0xff]
    %v1479 = vld [vmem:[#allocation5 + $0x23f0] sm:$0xff]
    %v1480 = vld [vmem:[#allocation5 + $0x23f8] sm:$0xff]
    %v1481 = vld [vmem:[#allocation5 + $0x2400] sm:$0xff]
    %v1482 = vld [vmem:[#allocation5 + $0x2408] sm:$0xff]
    %v1483 = vld [vmem:[#allocation5 + $0x2410] sm:$0xff]
    %v1484 = vld [vmem:[#allocation5 + $0x2418] sm:$0xff]
    %v1485 = vld [vmem:[#allocation5 + $0x2420] sm:$0xff]
    %v1486 = vld [vmem:[#allocation5 + $0x2428] sm:$0xff]
    %v1487 = vld [vmem:[#allocation5 + $0x2430] sm:$0xff]
    %v1488 = vld [vmem:[#allocation5 + $0x2438] sm:$0xff]
    %v1489 = vld [vmem:[#allocation5 + $0x2440] sm:$0xff]
    %v1490 = vld [vmem:[#allocation5 + $0x2448] sm:$0xff]
    %v1491 = vld [vmem:[#allocation5 + $0x2450] sm:$0xff]
    %v1492 = vld [vmem:[#allocation5 + $0x2458] sm:$0xff]
    %v1493 = vld [vmem:[#allocation5 + $0x2460] sm:$0xff]
    %v1494 = vld [vmem:[#allocation5 + $0x2468] sm:$0xff]
    %v1495 = vld [vmem:[#allocation5 + $0x2470] sm:$0xff]
    %v1496 = vld [vmem:[#allocation5 + $0x2478] sm:$0xff]
    %v1497 = vld [vmem:[#allocation5 + $0x2480] sm:$0xff]
    %v1498 = vld [vmem:[#allocation5 + $0x2488] sm:$0xff]
    %v1499 = vld [vmem:[#allocation5 + $0x2490] sm:$0xff]
    %v1500 = vld [vmem:[#allocation5 + $0x2498] sm:$0xff]
    %v1501 = vld [vmem:[#allocation5 + $0x24a0] sm:$0xff]
    %v1502 = vld [vmem:[#allocation5 + $0x24a8] sm:$0xff]
    %v1503 = vld [vmem:[#allocation5 + $0x24b0] sm:$0xff]
    %v1504 = vld [vmem:[#allocation5 + $0x24b8] sm:$0xff]
    %v1505 = vld [vmem:[#allocation5 + $0x24c0] sm:$0xff]
    %v1506 = vld [vmem:[#allocation5 + $0x24c8] sm:$0xff]
    %v1507 = vld [vmem:[#allocation5 + $0x24d0] sm:$0xff]
    %v1508 = vld [vmem:[#allocation5 + $0x24d8] sm:$0xff]
    %v1509 = vld [vmem:[#allocation5 + $0x24e0] sm:$0xff]
    %v1510 = vld [vmem:[#allocation5 + $0x24e8] sm:$0xff]
    %v1511 = vld [vmem:[#allocation5 + $0x24f0] sm:$0xff]
    %v1512 = vld [vmem:[#allocation5 + $0x24f8] sm:$0xff]
    %v1513 = vld [vmem:[#allocation5 + $0x2500] sm:$0xff]
    %v1514 = vld [vmem:[#allocation5 + $0x2508] sm:$0xff]
    %v1515 = vld [vmem:[#allocation5 + $0x2510] sm:$0xff]
    %v1516 = vld [vmem:[#allocation5 + $0x2518] sm:$0xff]
    %v1517 = vld [vmem:[#allocation5 + $0x2520] sm:$0xff]
    %v1518 = vld [vmem:[#allocation5 + $0x2528] sm:$0xff]
    %v1519 = vld [vmem:[#allocation5 + $0x2530] sm:$0xff]
    %v1520 = vld [vmem:[#allocation5 + $0x2538] sm:$0xff]
    %v1521 = vld [vmem:[#allocation5 + $0x2540] sm:$0xff]
    %v1522 = vld [vmem:[#allocation5 + $0x2548] sm:$0xff]
    %v1523 = vld [vmem:[#allocation5 + $0x2550] sm:$0xff]
    %v1524 = vld [vmem:[#allocation5 + $0x2558] sm:$0xff]
    %v1525 = vld [vmem:[#allocation5 + $0x2560] sm:$0xff]
    %v1526 = vld [vmem:[#allocation5 + $0x2568] sm:$0xff]
    %v1527 = vld [vmem:[#allocation5 + $0x2570] sm:$0xff]
    %v1528 = vld [vmem:[#allocation5 + $0x2578] sm:$0xff]
    %v1529 = vld [vmem:[#allocation5 + $0x2580] sm:$0xff]
    %v1530 = vld [vmem:[#allocation5 + $0x2588] sm:$0xff]
    %v1531 = vld [vmem:[#allocation5 + $0x2590] sm:$0xff]
    %v1532 = vld [vmem:[#allocation5 + $0x2598] sm:$0xff]
    %v1533 = vld [vmem:[#allocation5 + $0x25a0] sm:$0xff]
    %v1534 = vld [vmem:[#allocation5 + $0x25a8] sm:$0xff]
    %v1535 = vld [vmem:[#allocation5 + $0x25b0] sm:$0xff]
    %v1536 = vld [vmem:[#allocation5 + $0x25b8] sm:$0xff]
    %v1537 = vld [vmem:[#allocation5 + $0x25c0] sm:$0xff]
    %v1538 = vld [vmem:[#allocation5 + $0x25c8] sm:$0xff]
    %v1539 = vld [vmem:[#allocation5 + $0x25d0] sm:$0xff]
    %v1540 = vld [vmem:[#allocation5 + $0x25d8] sm:$0xff]
    %v1541 = vld [vmem:[#allocation5 + $0x25e0] sm:$0xff]
    %v1542 = vld [vmem:[#allocation5 + $0x25e8] sm:$0xff]
    %v1543 = vld [vmem:[#allocation5 + $0x25f0] sm:$0xff]
    %v1544 = vld [vmem:[#allocation5 + $0x25f8] sm:$0xff]
    %v1545 = vld [vmem:[#allocation5 + $0x2600] sm:$0xff]
    %v1546 = vld [vmem:[#allocation5 + $0x2608] sm:$0xff]
    %v1547 = vld [vmem:[#allocation5 + $0x2610] sm:$0xff]
    %v1548 = vld [vmem:[#allocation5 + $0x2618] sm:$0xff]
    %v1549 = vld [vmem:[#allocation5 + $0x2620] sm:$0xff]
    %v1550 = vld [vmem:[#allocation5 + $0x2628] sm:$0xff]
    %v1551 = vld [vmem:[#allocation5 + $0x2630] sm:$0xff]
    %v1552 = vld [vmem:[#allocation5 + $0x2638] sm:$0xff]
    %v1553 = vld [vmem:[#allocation5 + $0x2640] sm:$0xff]
    %v1554 = vld [vmem:[#allocation5 + $0x2648] sm:$0xff]
    %v1555 = vld [vmem:[#allocation5 + $0x2650] sm:$0xff]
    %v1556 = vld [vmem:[#allocation5 + $0x2658] sm:$0xff]
    %v1557 = vld [vmem:[#allocation5 + $0x2660] sm:$0xff]
    %v1558 = vld [vmem:[#allocation5 + $0x2668] sm:$0xff]
    %v1559 = vld [vmem:[#allocation5 + $0x2670] sm:$0xff]
    %v1560 = vld [vmem:[#allocation5 + $0x2678] sm:$0xff]
    %v1561 = vld [vmem:[#allocation5 + $0x2680] sm:$0xff]
    %v1562 = vld [vmem:[#allocation5 + $0x2688] sm:$0xff]
    %v1563 = vld [vmem:[#allocation5 + $0x2690] sm:$0xff]
    %v1564 = vld [vmem:[#allocation5 + $0x2698] sm:$0xff]
    %v1565 = vld [vmem:[#allocation5 + $0x26a0] sm:$0xff]
    %v1566 = vld [vmem:[#allocation5 + $0x26a8] sm:$0xff]
    %v1567 = vld [vmem:[#allocation5 + $0x26b0] sm:$0xff]
    %v1568 = vld [vmem:[#allocation5 + $0x26b8] sm:$0xff]
    %v1569 = vld [vmem:[#allocation5 + $0x26c0] sm:$0xff]
    %v1570 = vld [vmem:[#allocation5 + $0x26c8] sm:$0xff]
    %v1571 = vld [vmem:[#allocation5 + $0x26d0] sm:$0xff]
    %v1572 = vld [vmem:[#allocation5 + $0x26d8] sm:$0xff]
    %v1573 = vld [vmem:[#allocation5 + $0x26e0] sm:$0xff]
    %v1574 = vld [vmem:[#allocation5 + $0x26e8] sm:$0xff]
    %v1575 = vld [vmem:[#allocation5 + $0x26f0] sm:$0xff]
    %v1576 = vld [vmem:[#allocation5 + $0x26f8] sm:$0xff]
    %v1577 = vld [vmem:[#allocation5 + $0x2700] sm:$0xff]
    %v1578 = vld [vmem:[#allocation5 + $0x2708] sm:$0xff]
    %v1579 = vld [vmem:[#allocation5 + $0x2710] sm:$0xff]
    %v1580 = vld [vmem:[#allocation5 + $0x2718] sm:$0xff]
    %v1581 = vld [vmem:[#allocation5 + $0x2720] sm:$0xff]
    %v1582 = vld [vmem:[#allocation5 + $0x2728] sm:$0xff]
    %v1583 = vld [vmem:[#allocation5 + $0x2730] sm:$0xff]
    %v1584 = vld [vmem:[#allocation5 + $0x2738] sm:$0xff]
    %v1585 = vld [vmem:[#allocation5 + $0x2740] sm:$0xff]
    %v1586 = vld [vmem:[#allocation5 + $0x2748] sm:$0xff]
    %v1587 = vld [vmem:[#allocation5 + $0x2750] sm:$0xff]
    %v1588 = vld [vmem:[#allocation5 + $0x2758] sm:$0xff]
    %v1589 = vld [vmem:[#allocation5 + $0x2760] sm:$0xff]
    %v1590 = vld [vmem:[#allocation5 + $0x2768] sm:$0xff]
    %v1591 = vld [vmem:[#allocation5 + $0x2770] sm:$0xff]
    %v1592 = vld [vmem:[#allocation5 + $0x2778] sm:$0xff]
    %v1593 = vld [vmem:[#allocation5 + $0x2780] sm:$0xff]
    %v1594 = vld [vmem:[#allocation5 + $0x2788] sm:$0xff]
    %v1595 = vld [vmem:[#allocation5 + $0x2790] sm:$0xff]
    %v1596 = vld [vmem:[#allocation5 + $0x2798] sm:$0xff]
    %v1597 = vld [vmem:[#allocation5 + $0x27a0] sm:$0xff]
    %v1598 = vld [vmem:[#allocation5 + $0x27a8] sm:$0xff]
    %v1599 = vld [vmem:[#allocation5 + $0x27b0] sm:$0xff]
    %v1600 = vld [vmem:[#allocation5 + $0x27b8] sm:$0xff]
    %v1601 = vld [vmem:[#allocation5 + $0x27c0] sm:$0xff]
    %v1602 = vld [vmem:[#allocation5 + $0x27c8] sm:$0xff]
    %v1603 = vld [vmem:[#allocation5 + $0x27d0] sm:$0xff]
    %v1604 = vld [vmem:[#allocation5 + $0x27d8] sm:$0xff]
    %v1605 = vld [vmem:[#allocation5 + $0x27e0] sm:$0xff]
    %v1606 = vld [vmem:[#allocation5 + $0x27e8] sm:$0xff]
    %v1607 = vld [vmem:[#allocation5 + $0x27f0] sm:$0xff]
    %v1608 = vld [vmem:[#allocation5 + $0x27f8] sm:$0xff]
    %v1609 = vld [vmem:[#allocation5 + $0x2800] sm:$0xff]
    %v1610 = vld [vmem:[#allocation5 + $0x2808] sm:$0xff]
    %v1611 = vld [vmem:[#allocation5 + $0x2810] sm:$0xff]
    %v1612 = vld [vmem:[#allocation5 + $0x2818] sm:$0xff]
    %v1613 = vld [vmem:[#allocation5 + $0x2820] sm:$0xff]
    %v1614 = vld [vmem:[#allocation5 + $0x2828] sm:$0xff]
    %v1615 = vld [vmem:[#allocation5 + $0x2830] sm:$0xff]
    %v1616 = vld [vmem:[#allocation5 + $0x2838] sm:$0xff]
    %v1617 = vld [vmem:[#allocation5 + $0x2840] sm:$0xff]
    %v1618 = vld [vmem:[#allocation5 + $0x2848] sm:$0xff]
    %v1619 = vld [vmem:[#allocation5 + $0x2850] sm:$0xff]
    %v1620 = vld [vmem:[#allocation5 + $0x2858] sm:$0xff]
    %v1621 = vld [vmem:[#allocation5 + $0x2860] sm:$0xff]
    %v1622 = vld [vmem:[#allocation5 + $0x2868] sm:$0xff]
    %v1623 = vld [vmem:[#allocation5 + $0x2870] sm:$0xff]
    %v1624 = vld [vmem:[#allocation5 + $0x2878] sm:$0xff]
    %v1625 = vld [vmem:[#allocation7] sm:$0x3]
    %v1627 = vlaneseq
    %v1628 = vshrl.u32 %v1627, 7
    %v1629 = vsub.s32 0, %v1628
    %v1630 = vrot.slane %v1625, %v1629
    %v1631 = vlaneseq
    %v1632 = vshrl.u32 %v1631, 7
    %v1633 = vsub.s32 1, %v1632
    %v1634 = vrot.slane %v1625, %v1633
    %v2933 = vunpack.c.l.b16 %v329
    %v2934 = vunpack.c.h.b16 %v329
    %v2935 = vunpack.c.l.b16 %v330
    %v2936 = vunpack.c.h.b16 %v330
    %v2937 = vunpack.c.l.b16 %v331
    %v2938 = vunpack.c.h.b16 %v331
    %v2939 = vunpack.c.l.b16 %v332
    %v2940 = vunpack.c.h.b16 %v332
    %v2941 = vunpack.c.l.b16 %v333
    %v2942 = vunpack.c.h.b16 %v333
    %v2943 = vunpack.c.l.b16 %v334
    %v2944 = vunpack.c.h.b16 %v334
    %v2945 = vunpack.c.l.b16 %v335
    %v2946 = vunpack.c.h.b16 %v335
    %v2947 = vunpack.c.l.b16 %v336
    %v2948 = vunpack.c.h.b16 %v336
    %v2949 = vunpack.c.l.b16 %v337
    %v2950 = vunpack.c.h.b16 %v337
    %v2951 = vunpack.c.l.b16 %v338
    %v2952 = vunpack.c.h.b16 %v338
    %v2953 = vunpack.c.l.b16 %v339
    %v2954 = vunpack.c.h.b16 %v339
    %v2955 = vunpack.c.l.b16 %v340
    %v2956 = vunpack.c.h.b16 %v340
    %v2957 = vunpack.c.l.b16 %v341
    %v2958 = vunpack.c.h.b16 %v341
    %v2959 = vunpack.c.l.b16 %v342
    %v2960 = vunpack.c.h.b16 %v342
    %v2961 = vunpack.c.l.b16 %v343
    %v2962 = vunpack.c.h.b16 %v343
    %v2963 = vunpack.c.l.b16 %v344
    %v2964 = vunpack.c.h.b16 %v344
    %v2965 = vunpack.c.l.b16 %v345
    %v2966 = vunpack.c.h.b16 %v345
    %v2967 = vunpack.c.l.b16 %v346
    %v2968 = vunpack.c.h.b16 %v346
    %v2969 = vunpack.c.l.b16 %v347
    %v2970 = vunpack.c.h.b16 %v347
    %v2971 = vunpack.c.l.b16 %v348
    %v2972 = vunpack.c.h.b16 %v348
    %v2973 = vunpack.c.l.b16 %v349
    %v2974 = vunpack.c.h.b16 %v349
    %v2975 = vunpack.c.l.b16 %v350
    %v2976 = vunpack.c.h.b16 %v350
    %v2977 = vunpack.c.l.b16 %v351
    %v2978 = vunpack.c.h.b16 %v351
    %v2979 = vunpack.c.l.b16 %v352
    %v2980 = vunpack.c.h.b16 %v352
    %v2981 = vunpack.c.l.b16 %v353
    %v2982 = vunpack.c.h.b16 %v353
    %v2983 = vunpack.c.l.b16 %v354
    %v2984 = vunpack.c.h.b16 %v354
    %v2985 = vunpack.c.l.b16 %v355
    %v2986 = vunpack.c.h.b16 %v355
    %v2987 = vunpack.c.l.b16 %v356
    %v2988 = vunpack.c.h.b16 %v356
    %v2989 = vunpack.c.l.b16 %v357
    %v2990 = vunpack.c.h.b16 %v357
    %v2991 = vunpack.c.l.b16 %v358
    %v2992 = vunpack.c.h.b16 %v358
    %v2993 = vunpack.c.l.b16 %v359
    %v2994 = vunpack.c.h.b16 %v359
    %v2995 = vunpack.c.l.b16 %v360
    %v2996 = vunpack.c.h.b16 %v360
    %v2997 = vunpack.c.l.b16 %v361
    %v2998 = vunpack.c.h.b16 %v361
    %v2999 = vunpack.c.l.b16 %v362
    %v3000 = vunpack.c.h.b16 %v362
    %v3001 = vunpack.c.l.b16 %v363
    %v3002 = vunpack.c.h.b16 %v363
    %v3003 = vunpack.c.l.b16 %v364
    %v3004 = vunpack.c.h.b16 %v364
    %v3005 = vunpack.c.l.b16 %v365
    %v3006 = vunpack.c.h.b16 %v365
    %v3007 = vunpack.c.l.b16 %v366
    %v3008 = vunpack.c.h.b16 %v366
    %v3009 = vunpack.c.l.b16 %v367
    %v3010 = vunpack.c.h.b16 %v367
    %v3011 = vunpack.c.l.b16 %v368
    %v3012 = vunpack.c.h.b16 %v368
    %v3013 = vunpack.c.l.b16 %v369
    %v3014 = vunpack.c.h.b16 %v369
    %v3015 = vunpack.c.l.b16 %v370
    %v3016 = vunpack.c.h.b16 %v370
    %v3017 = vunpack.c.l.b16 %v371
    %v3018 = vunpack.c.h.b16 %v371
    %v3019 = vunpack.c.l.b16 %v372
    %v3020 = vunpack.c.h.b16 %v372
    %v3021 = vunpack.c.l.b16 %v373
    %v3022 = vunpack.c.h.b16 %v373
    %v3023 = vunpack.c.l.b16 %v374
    %v3024 = vunpack.c.h.b16 %v374
    %v3025 = vunpack.c.l.b16 %v375
    %v3026 = vunpack.c.h.b16 %v375
    %v3027 = vunpack.c.l.b16 %v376
    %v3028 = vunpack.c.h.b16 %v376
    %v3029 = vunpack.c.l.b16 %v377
    %v3030 = vunpack.c.h.b16 %v377
    %v3031 = vunpack.c.l.b16 %v378
    %v3032 = vunpack.c.h.b16 %v378
    %v3033 = vunpack.c.l.b16 %v379
    %v3034 = vunpack.c.h.b16 %v379
    %v3035 = vunpack.c.l.b16 %v380
    %v3036 = vunpack.c.h.b16 %v380
    %v3037 = vunpack.c.l.b16 %v381
    %v3038 = vunpack.c.h.b16 %v381
    %v3039 = vunpack.c.l.b16 %v382
    %v3040 = vunpack.c.h.b16 %v382
    %v3041 = vunpack.c.l.b16 %v383
    %v3042 = vunpack.c.h.b16 %v383
    %v3043 = vunpack.c.l.b16 %v384
    %v3044 = vunpack.c.h.b16 %v384
    %v3045 = vunpack.c.l.b16 %v385
    %v3046 = vunpack.c.h.b16 %v385
    %v3047 = vunpack.c.l.b16 %v386
    %v3048 = vunpack.c.h.b16 %v386
    %v3049 = vunpack.c.l.b16 %v387
    %v3050 = vunpack.c.h.b16 %v387
    %v3051 = vunpack.c.l.b16 %v388
    %v3052 = vunpack.c.h.b16 %v388
    %v3053 = vunpack.c.l.b16 %v389
    %v3054 = vunpack.c.h.b16 %v389
    %v3055 = vunpack.c.l.b16 %v390
    %v3056 = vunpack.c.h.b16 %v390
    %v3057 = vunpack.c.l.b16 %v391
    %v3058 = vunpack.c.h.b16 %v391
    %v3059 = vunpack.c.l.b16 %v392
    %v3060 = vunpack.c.h.b16 %v392
    %v3061 = vunpack.c.l.b16 %v393
    %v3062 = vunpack.c.h.b16 %v393
    %v3063 = vunpack.c.l.b16 %v394
    %v3064 = vunpack.c.h.b16 %v394
    %v3065 = vunpack.c.l.b16 %v395
    %v3066 = vunpack.c.h.b16 %v395
    %v3067 = vunpack.c.l.b16 %v396
    %v3068 = vunpack.c.h.b16 %v396
    %v3069 = vunpack.c.l.b16 %v397
    %v3070 = vunpack.c.h.b16 %v397
    %v3071 = vunpack.c.l.b16 %v398
    %v3072 = vunpack.c.h.b16 %v398
    %v3073 = vunpack.c.l.b16 %v399
    %v3074 = vunpack.c.h.b16 %v399
    %v3075 = vunpack.c.l.b16 %v400
    %v3076 = vunpack.c.h.b16 %v400
    %v3077 = vunpack.c.l.b16 %v401
    %v3078 = vunpack.c.h.b16 %v401
    %v3079 = vunpack.c.l.b16 %v402
    %v3080 = vunpack.c.h.b16 %v402
    %v3081 = vunpack.c.l.b16 %v403
    %v3082 = vunpack.c.h.b16 %v403
    %v3083 = vunpack.c.l.b16 %v404
    %v3084 = vunpack.c.h.b16 %v404
    %v3085 = vunpack.c.l.b16 %v405
    %v3086 = vunpack.c.h.b16 %v405
    %v3087 = vunpack.c.l.b16 %v406
    %v3088 = vunpack.c.h.b16 %v406
    %v3089 = vunpack.c.l.b16 %v407
    %v3090 = vunpack.c.h.b16 %v407
    %v3091 = vunpack.c.l.b16 %v408
    %v3092 = vunpack.c.h.b16 %v408
    %v3093 = vunpack.c.l.b16 %v409
    %v3094 = vunpack.c.h.b16 %v409
    %v3095 = vunpack.c.l.b16 %v410
    %v3096 = vunpack.c.h.b16 %v410
    %v3097 = vunpack.c.l.b16 %v411
    %v3098 = vunpack.c.h.b16 %v411
    %v3099 = vunpack.c.l.b16 %v412
    %v3100 = vunpack.c.h.b16 %v412
    %v3101 = vunpack.c.l.b16 %v413
    %v3102 = vunpack.c.h.b16 %v413
    %v3103 = vunpack.c.l.b16 %v414
    %v3104 = vunpack.c.h.b16 %v414
    %v3105 = vunpack.c.l.b16 %v415
    %v3106 = vunpack.c.h.b16 %v415
    %v3107 = vunpack.c.l.b16 %v416
    %v3108 = vunpack.c.h.b16 %v416
    %v3109 = vunpack.c.l.b16 %v417
    %v3110 = vunpack.c.h.b16 %v417
    %v3111 = vunpack.c.l.b16 %v418
    %v3112 = vunpack.c.h.b16 %v418
    %v3113 = vunpack.c.l.b16 %v419
    %v3114 = vunpack.c.h.b16 %v419
    %v3115 = vunpack.c.l.b16 %v420
    %v3116 = vunpack.c.h.b16 %v420
    %v3117 = vunpack.c.l.b16 %v421
    %v3118 = vunpack.c.h.b16 %v421
    %v3119 = vunpack.c.l.b16 %v422
    %v3120 = vunpack.c.h.b16 %v422
    %v3121 = vunpack.c.l.b16 %v423
    %v3122 = vunpack.c.h.b16 %v423
    %v3123 = vunpack.c.l.b16 %v424
    %v3124 = vunpack.c.h.b16 %v424
    %v3125 = vunpack.c.l.b16 %v425
    %v3126 = vunpack.c.h.b16 %v425
    %v3127 = vunpack.c.l.b16 %v426
    %v3128 = vunpack.c.h.b16 %v426
    %v3129 = vunpack.c.l.b16 %v427
    %v3130 = vunpack.c.h.b16 %v427
    %v3131 = vunpack.c.l.b16 %v428
    %v3132 = vunpack.c.h.b16 %v428
    %v3133 = vunpack.c.l.b16 %v429
    %v3134 = vunpack.c.h.b16 %v429
    %v3135 = vunpack.c.l.b16 %v430
    %v3136 = vunpack.c.h.b16 %v430
    %v3137 = vunpack.c.l.b16 %v431
    %v3138 = vunpack.c.h.b16 %v431
    %v3139 = vunpack.c.l.b16 %v432
    %v3140 = vunpack.c.h.b16 %v432
    %v3141 = vunpack.c.l.b16 %v433
    %v3142 = vunpack.c.h.b16 %v433
    %v3143 = vunpack.c.l.b16 %v434
    %v3144 = vunpack.c.h.b16 %v434
    %v3145 = vunpack.c.l.b16 %v435
    %v3146 = vunpack.c.h.b16 %v435
    %v3147 = vunpack.c.l.b16 %v436
    %v3148 = vunpack.c.h.b16 %v436
    %v3149 = vunpack.c.l.b16 %v437
    %v3150 = vunpack.c.h.b16 %v437
    %v3151 = vunpack.c.l.b16 %v438
    %v3152 = vunpack.c.h.b16 %v438
    %v3153 = vunpack.c.l.b16 %v439
    %v3154 = vunpack.c.h.b16 %v439
    %v3155 = vunpack.c.l.b16 %v440
    %v3156 = vunpack.c.h.b16 %v440
    %v3157 = vunpack.c.l.b16 %v441
    %v3158 = vunpack.c.h.b16 %v441
    %v3159 = vunpack.c.l.b16 %v442
    %v3160 = vunpack.c.h.b16 %v442
    %v3161 = vunpack.c.l.b16 %v443
    %v3162 = vunpack.c.h.b16 %v443
    %v3163 = vunpack.c.l.b16 %v444
    %v3164 = vunpack.c.h.b16 %v444
    %v3165 = vunpack.c.l.b16 %v445
    %v3166 = vunpack.c.h.b16 %v445
    %v3167 = vunpack.c.l.b16 %v446
    %v3168 = vunpack.c.h.b16 %v446
    %v3169 = vunpack.c.l.b16 %v447
    %v3170 = vunpack.c.h.b16 %v447
    %v3171 = vunpack.c.l.b16 %v448
    %v3172 = vunpack.c.h.b16 %v448
    %v3173 = vunpack.c.l.b16 %v449
    %v3174 = vunpack.c.h.b16 %v449
    %v3175 = vunpack.c.l.b16 %v450
    %v3176 = vunpack.c.h.b16 %v450
    %v3177 = vunpack.c.l.b16 %v451
    %v3178 = vunpack.c.h.b16 %v451
    %v3179 = vunpack.c.l.b16 %v452
    %v3180 = vunpack.c.h.b16 %v452
    %v3181 = vunpack.c.l.b16 %v453
    %v3182 = vunpack.c.h.b16 %v453
    %v3183 = vunpack.c.l.b16 %v454
    %v3184 = vunpack.c.h.b16 %v454
    %v3185 = vunpack.c.l.b16 %v455
    %v3186 = vunpack.c.h.b16 %v455
    %v3187 = vunpack.c.l.b16 %v456
    %v3188 = vunpack.c.h.b16 %v456
    %v3189 = vunpack.c.l.b16 %v457
    %v3190 = vunpack.c.h.b16 %v457
    %v3191 = vunpack.c.l.b16 %v458
    %v3192 = vunpack.c.h.b16 %v458
    %v3193 = vunpack.c.l.b16 %v459
    %v3194 = vunpack.c.h.b16 %v459
    %v3195 = vunpack.c.l.b16 %v460
    %v3196 = vunpack.c.h.b16 %v460
    %v3197 = vunpack.c.l.b16 %v461
    %v3198 = vunpack.c.h.b16 %v461
    %v3199 = vunpack.c.l.b16 %v462
    %v3200 = vunpack.c.h.b16 %v462
    %v3201 = vunpack.c.l.b16 %v463
    %v3202 = vunpack.c.h.b16 %v463
    %v3203 = vunpack.c.l.b16 %v464
    %v3204 = vunpack.c.h.b16 %v464
    %v3205 = vunpack.c.l.b16 %v465
    %v3206 = vunpack.c.h.b16 %v465
    %v3207 = vunpack.c.l.b16 %v466
    %v3208 = vunpack.c.h.b16 %v466
    %v3209 = vunpack.c.l.b16 %v467
    %v3210 = vunpack.c.h.b16 %v467
    %v3211 = vunpack.c.l.b16 %v468
    %v3212 = vunpack.c.h.b16 %v468
    %v3213 = vunpack.c.l.b16 %v469
    %v3214 = vunpack.c.h.b16 %v469
    %v3215 = vunpack.c.l.b16 %v470
    %v3216 = vunpack.c.h.b16 %v470
    %v3217 = vunpack.c.l.b16 %v471
    %v3218 = vunpack.c.h.b16 %v471
    %v3219 = vunpack.c.l.b16 %v472
    %v3220 = vunpack.c.h.b16 %v472
    %v3221 = vunpack.c.l.b16 %v473
    %v3222 = vunpack.c.h.b16 %v473
    %v3223 = vunpack.c.l.b16 %v474
    %v3224 = vunpack.c.h.b16 %v474
    %v3225 = vunpack.c.l.b16 %v475
    %v3226 = vunpack.c.h.b16 %v475
    %v3227 = vunpack.c.l.b16 %v476
    %v3228 = vunpack.c.h.b16 %v476
    %v3229 = vunpack.c.l.b16 %v477
    %v3230 = vunpack.c.h.b16 %v477
    %v3231 = vunpack.c.l.b16 %v478
    %v3232 = vunpack.c.h.b16 %v478
    %v3233 = vunpack.c.l.b16 %v479
    %v3234 = vunpack.c.h.b16 %v479
    %v3235 = vunpack.c.l.b16 %v480
    %v3236 = vunpack.c.h.b16 %v480
    %v3237 = vunpack.c.l.b16 %v481
    %v3238 = vunpack.c.h.b16 %v481
    %v3239 = vunpack.c.l.b16 %v482
    %v3240 = vunpack.c.h.b16 %v482
    %v3241 = vunpack.c.l.b16 %v483
    %v3242 = vunpack.c.h.b16 %v483
    %v3243 = vunpack.c.l.b16 %v484
    %v3244 = vunpack.c.h.b16 %v484
    %v3245 = vunpack.c.l.b16 %v485
    %v3246 = vunpack.c.h.b16 %v485
    %v3247 = vunpack.c.l.b16 %v486
    %v3248 = vunpack.c.h.b16 %v486
    %v3249 = vunpack.c.l.b16 %v487
    %v3250 = vunpack.c.h.b16 %v487
    %v3251 = vunpack.c.l.b16 %v488
    %v3252 = vunpack.c.h.b16 %v488
    %v3253 = vunpack.c.l.b16 %v489
    %v3254 = vunpack.c.h.b16 %v489
    %v3255 = vunpack.c.l.b16 %v490
    %v3256 = vunpack.c.h.b16 %v490
    %v3257 = vunpack.c.l.b16 %v491
    %v3258 = vunpack.c.h.b16 %v491
    %v3259 = vunpack.c.l.b16 %v492
    %v3260 = vunpack.c.h.b16 %v492
    %v3261 = vunpack.c.l.b16 %v493
    %v3262 = vunpack.c.h.b16 %v493
    %v3263 = vunpack.c.l.b16 %v494
    %v3264 = vunpack.c.h.b16 %v494
    %v3265 = vunpack.c.l.b16 %v495
    %v3266 = vunpack.c.h.b16 %v495
    %v3267 = vunpack.c.l.b16 %v496
    %v3268 = vunpack.c.h.b16 %v496
    %v3269 = vunpack.c.l.b16 %v497
    %v3270 = vunpack.c.h.b16 %v497
    %v3271 = vunpack.c.l.b16 %v498
    %v3272 = vunpack.c.h.b16 %v498
    %v3273 = vunpack.c.l.b16 %v499
    %v3274 = vunpack.c.h.b16 %v499
    %v3275 = vunpack.c.l.b16 %v500
    %v3276 = vunpack.c.h.b16 %v500
    %v3277 = vunpack.c.l.b16 %v501
    %v3278 = vunpack.c.h.b16 %v501
    %v3279 = vunpack.c.l.b16 %v502
    %v3280 = vunpack.c.h.b16 %v502
    %v3281 = vunpack.c.l.b16 %v503
    %v3282 = vunpack.c.h.b16 %v503
    %v3283 = vunpack.c.l.b16 %v504
    %v3284 = vunpack.c.h.b16 %v504
    %v3285 = vunpack.c.l.b16 %v505
    %v3286 = vunpack.c.h.b16 %v505
    %v3287 = vunpack.c.l.b16 %v506
    %v3288 = vunpack.c.h.b16 %v506
    %v3289 = vunpack.c.l.b16 %v507
    %v3290 = vunpack.c.h.b16 %v507
    %v3291 = vunpack.c.l.b16 %v508
    %v3292 = vunpack.c.h.b16 %v508
    %v3293 = vunpack.c.l.b16 %v509
    %v3294 = vunpack.c.h.b16 %v509
    %v3295 = vunpack.c.l.b16 %v510
    %v3296 = vunpack.c.h.b16 %v510
    %v3297 = vunpack.c.l.b16 %v511
    %v3298 = vunpack.c.h.b16 %v511
    %v3299 = vunpack.c.l.b16 %v512
    %v3300 = vunpack.c.h.b16 %v512
    %v3301 = vunpack.c.l.b16 %v513
    %v3302 = vunpack.c.h.b16 %v513
    %v3303 = vunpack.c.l.b16 %v514
    %v3304 = vunpack.c.h.b16 %v514
    %v3305 = vunpack.c.l.b16 %v515
    %v3306 = vunpack.c.h.b16 %v515
    %v3307 = vunpack.c.l.b16 %v516
    %v3308 = vunpack.c.h.b16 %v516
    %v3309 = vunpack.c.l.b16 %v517
    %v3310 = vunpack.c.h.b16 %v517
    %v3311 = vunpack.c.l.b16 %v518
    %v3312 = vunpack.c.h.b16 %v518
    %v3313 = vunpack.c.l.b16 %v519
    %v3314 = vunpack.c.h.b16 %v519
    %v3315 = vunpack.c.l.b16 %v520
    %v3316 = vunpack.c.h.b16 %v520
    %v3317 = vunpack.c.l.b16 %v521
    %v3318 = vunpack.c.h.b16 %v521
    %v3319 = vunpack.c.l.b16 %v522
    %v3320 = vunpack.c.h.b16 %v522
    %v3321 = vunpack.c.l.b16 %v523
    %v3322 = vunpack.c.h.b16 %v523
    %v3323 = vunpack.c.l.b16 %v524
    %v3324 = vunpack.c.h.b16 %v524
    %v3325 = vunpack.c.l.b16 %v525
    %v3326 = vunpack.c.h.b16 %v525
    %v3327 = vunpack.c.l.b16 %v526
    %v3328 = vunpack.c.h.b16 %v526
    %v3329 = vunpack.c.l.b16 %v527
    %v3330 = vunpack.c.h.b16 %v527
    %v3331 = vunpack.c.l.b16 %v528
    %v3332 = vunpack.c.h.b16 %v528
    %v3333 = vunpack.c.l.b16 %v529
    %v3334 = vunpack.c.h.b16 %v529
    %v3335 = vunpack.c.l.b16 %v530
    %v3336 = vunpack.c.h.b16 %v530
    %v3337 = vunpack.c.l.b16 %v531
    %v3338 = vunpack.c.h.b16 %v531
    %v3339 = vunpack.c.l.b16 %v532
    %v3340 = vunpack.c.h.b16 %v532
    %v3341 = vunpack.c.l.b16 %v533
    %v3342 = vunpack.c.h.b16 %v533
    %v3343 = vunpack.c.l.b16 %v534
    %v3344 = vunpack.c.h.b16 %v534
    %v3345 = vunpack.c.l.b16 %v535
    %v3346 = vunpack.c.h.b16 %v535
    %v3347 = vunpack.c.l.b16 %v536
    %v3348 = vunpack.c.h.b16 %v536
    %v3349 = vunpack.c.l.b16 %v537
    %v3350 = vunpack.c.h.b16 %v537
    %v3351 = vunpack.c.l.b16 %v538
    %v3352 = vunpack.c.h.b16 %v538
    %v3353 = vunpack.c.l.b16 %v539
    %v3354 = vunpack.c.h.b16 %v539
    %v3355 = vunpack.c.l.b16 %v540
    %v3356 = vunpack.c.h.b16 %v540
    %v3357 = vunpack.c.l.b16 %v541
    %v3358 = vunpack.c.h.b16 %v541
    %v3359 = vunpack.c.l.b16 %v542
    %v3360 = vunpack.c.h.b16 %v542
    %v3361 = vunpack.c.l.b16 %v543
    %v3362 = vunpack.c.h.b16 %v543
    %v3363 = vunpack.c.l.b16 %v544
    %v3364 = vunpack.c.h.b16 %v544
    %v3365 = vunpack.c.l.b16 %v545
    %v3366 = vunpack.c.h.b16 %v545
    %v3367 = vunpack.c.l.b16 %v546
    %v3368 = vunpack.c.h.b16 %v546
    %v3369 = vunpack.c.l.b16 %v547
    %v3370 = vunpack.c.h.b16 %v547
    %v3371 = vunpack.c.l.b16 %v548
    %v3372 = vunpack.c.h.b16 %v548
    %v3373 = vunpack.c.l.b16 %v549
    %v3374 = vunpack.c.h.b16 %v549
    %v3375 = vunpack.c.l.b16 %v550
    %v3376 = vunpack.c.h.b16 %v550
    %v3377 = vunpack.c.l.b16 %v551
    %v3378 = vunpack.c.h.b16 %v551
    %v3379 = vunpack.c.l.b16 %v552
    %v3380 = vunpack.c.h.b16 %v552
    %v3381 = vunpack.c.l.b16 %v553
    %v3382 = vunpack.c.h.b16 %v553
    %v3383 = vunpack.c.l.b16 %v554
    %v3384 = vunpack.c.h.b16 %v554
    %v3385 = vunpack.c.l.b16 %v555
    %v3386 = vunpack.c.h.b16 %v555
    %v3387 = vunpack.c.l.b16 %v556
    %v3388 = vunpack.c.h.b16 %v556
    %v3389 = vunpack.c.l.b16 %v557
    %v3390 = vunpack.c.h.b16 %v557
    %v3391 = vunpack.c.l.b16 %v558
    %v3392 = vunpack.c.h.b16 %v558
    %v3393 = vunpack.c.l.b16 %v559
    %v3394 = vunpack.c.h.b16 %v559
    %v3395 = vunpack.c.l.b16 %v560
    %v3396 = vunpack.c.h.b16 %v560
    %v3397 = vunpack.c.l.b16 %v561
    %v3398 = vunpack.c.h.b16 %v561
    %v3399 = vunpack.c.l.b16 %v562
    %v3400 = vunpack.c.h.b16 %v562
    %v3401 = vunpack.c.l.b16 %v563
    %v3402 = vunpack.c.h.b16 %v563
    %v3403 = vunpack.c.l.b16 %v564
    %v3404 = vunpack.c.h.b16 %v564
    %v3405 = vunpack.c.l.b16 %v565
    %v3406 = vunpack.c.h.b16 %v565
    %v3407 = vunpack.c.l.b16 %v566
    %v3408 = vunpack.c.h.b16 %v566
    %v3409 = vunpack.c.l.b16 %v567
    %v3410 = vunpack.c.h.b16 %v567
    %v3411 = vunpack.c.l.b16 %v568
    %v3412 = vunpack.c.h.b16 %v568
    %v3413 = vunpack.c.l.b16 %v569
    %v3414 = vunpack.c.h.b16 %v569
    %v3415 = vunpack.c.l.b16 %v570
    %v3416 = vunpack.c.h.b16 %v570
    %v3417 = vunpack.c.l.b16 %v571
    %v3418 = vunpack.c.h.b16 %v571
    %v3419 = vunpack.c.l.b16 %v572
    %v3420 = vunpack.c.h.b16 %v572
    %v3421 = vunpack.c.l.b16 %v573
    %v3422 = vunpack.c.h.b16 %v573
    %v3423 = vunpack.c.l.b16 %v574
    %v3424 = vunpack.c.h.b16 %v574
    %v3425 = vunpack.c.l.b16 %v575
    %v3426 = vunpack.c.h.b16 %v575
    %v3427 = vunpack.c.l.b16 %v576
    %v3428 = vunpack.c.h.b16 %v576
    %v3429 = vunpack.c.l.b16 %v577
    %v3430 = vunpack.c.h.b16 %v577
    %v3431 = vunpack.c.l.b16 %v578
    %v3432 = vunpack.c.h.b16 %v578
    %v3433 = vunpack.c.l.b16 %v579
    %v3434 = vunpack.c.h.b16 %v579
    %v3435 = vunpack.c.l.b16 %v580
    %v3436 = vunpack.c.h.b16 %v580
    %v3437 = vunpack.c.l.b16 %v581
    %v3438 = vunpack.c.h.b16 %v581
    %v3439 = vunpack.c.l.b16 %v582
    %v3440 = vunpack.c.h.b16 %v582
    %v3441 = vunpack.c.l.b16 %v583
    %v3442 = vunpack.c.h.b16 %v583
    %v3443 = vunpack.c.l.b16 %v584
    %v3444 = vunpack.c.h.b16 %v584
    %v3445 = vunpack.c.l.b16 %v585
    %v3446 = vunpack.c.h.b16 %v585
    %v3447 = vunpack.c.l.b16 %v586
    %v3448 = vunpack.c.h.b16 %v586
    %v3449 = vunpack.c.l.b16 %v587
    %v3450 = vunpack.c.h.b16 %v587
    %v3451 = vunpack.c.l.b16 %v588
    %v3452 = vunpack.c.h.b16 %v588
    %v3453 = vunpack.c.l.b16 %v589
    %v3454 = vunpack.c.h.b16 %v589
    %v3455 = vunpack.c.l.b16 %v590
    %v3456 = vunpack.c.h.b16 %v590
    %v3457 = vunpack.c.l.b16 %v591
    %v3458 = vunpack.c.h.b16 %v591
    %v3459 = vunpack.c.l.b16 %v592
    %v3460 = vunpack.c.h.b16 %v592
    %v3461 = vunpack.c.l.b16 %v593
    %v3462 = vunpack.c.h.b16 %v593
    %v3463 = vunpack.c.l.b16 %v594
    %v3464 = vunpack.c.h.b16 %v594
    %v3465 = vunpack.c.l.b16 %v595
    %v3466 = vunpack.c.h.b16 %v595
    %v3467 = vunpack.c.l.b16 %v596
    %v3468 = vunpack.c.h.b16 %v596
    %v3469 = vunpack.c.l.b16 %v597
    %v3470 = vunpack.c.h.b16 %v597
    %v3471 = vunpack.c.l.b16 %v598
    %v3472 = vunpack.c.h.b16 %v598
    %v3473 = vunpack.c.l.b16 %v599
    %v3474 = vunpack.c.h.b16 %v599
    %v3475 = vunpack.c.l.b16 %v600
    %v3476 = vunpack.c.h.b16 %v600
    %v3477 = vunpack.c.l.b16 %v601
    %v3478 = vunpack.c.h.b16 %v601
    %v3479 = vunpack.c.l.b16 %v602
    %v3480 = vunpack.c.h.b16 %v602
    %v3481 = vunpack.c.l.b16 %v603
    %v3482 = vunpack.c.h.b16 %v603
    %v3483 = vunpack.c.l.b16 %v604
    %v3484 = vunpack.c.h.b16 %v604
    %v3485 = vunpack.c.l.b16 %v605
    %v3486 = vunpack.c.h.b16 %v605
    %v3487 = vunpack.c.l.b16 %v606
    %v3488 = vunpack.c.h.b16 %v606
    %v3489 = vunpack.c.l.b16 %v607
    %v3490 = vunpack.c.h.b16 %v607
    %v3491 = vunpack.c.l.b16 %v608
    %v3492 = vunpack.c.h.b16 %v608
    %v3493 = vunpack.c.l.b16 %v609
    %v3494 = vunpack.c.h.b16 %v609
    %v3495 = vunpack.c.l.b16 %v610
    %v3496 = vunpack.c.h.b16 %v610
    %v3497 = vunpack.c.l.b16 %v611
    %v3498 = vunpack.c.h.b16 %v611
    %v3499 = vunpack.c.l.b16 %v612
    %v3500 = vunpack.c.h.b16 %v612
    %v3501 = vunpack.c.l.b16 %v613
    %v3502 = vunpack.c.h.b16 %v613
    %v3503 = vunpack.c.l.b16 %v614
    %v3504 = vunpack.c.h.b16 %v614
    %v3505 = vunpack.c.l.b16 %v615
    %v3506 = vunpack.c.h.b16 %v615
    %v3507 = vunpack.c.l.b16 %v616
    %v3508 = vunpack.c.h.b16 %v616
    %v3509 = vunpack.c.l.b16 %v617
    %v3510 = vunpack.c.h.b16 %v617
    %v3511 = vunpack.c.l.b16 %v618
    %v3512 = vunpack.c.h.b16 %v618
    %v3513 = vunpack.c.l.b16 %v619
    %v3514 = vunpack.c.h.b16 %v619
    %v3515 = vunpack.c.l.b16 %v620
    %v3516 = vunpack.c.h.b16 %v620
    %v3517 = vunpack.c.l.b16 %v621
    %v3518 = vunpack.c.h.b16 %v621
    %v3519 = vunpack.c.l.b16 %v622
    %v3520 = vunpack.c.h.b16 %v622
    %v3521 = vunpack.c.l.b16 %v623
    %v3522 = vunpack.c.h.b16 %v623
    %v3523 = vunpack.c.l.b16 %v624
    %v3524 = vunpack.c.h.b16 %v624
    %v3525 = vunpack.c.l.b16 %v625
    %v3526 = vunpack.c.h.b16 %v625
    %v3527 = vunpack.c.l.b16 %v626
    %v3528 = vunpack.c.h.b16 %v626
    %v3529 = vunpack.c.l.b16 %v627
    %v3530 = vunpack.c.h.b16 %v627
    %v3531 = vunpack.c.l.b16 %v628
    %v3532 = vunpack.c.h.b16 %v628
    %v3533 = vunpack.c.l.b16 %v629
    %v3534 = vunpack.c.h.b16 %v629
    %v3535 = vunpack.c.l.b16 %v630
    %v3536 = vunpack.c.h.b16 %v630
    %v3537 = vunpack.c.l.b16 %v631
    %v3538 = vunpack.c.h.b16 %v631
    %v3539 = vunpack.c.l.b16 %v632
    %v3540 = vunpack.c.h.b16 %v632
    %v3541 = vunpack.c.l.b16 %v633
    %v3542 = vunpack.c.h.b16 %v633
    %v3543 = vunpack.c.l.b16 %v634
    %v3544 = vunpack.c.h.b16 %v634
    %v3545 = vunpack.c.l.b16 %v635
    %v3546 = vunpack.c.h.b16 %v635
    %v3547 = vunpack.c.l.b16 %v636
    %v3548 = vunpack.c.h.b16 %v636
    %v3549 = vunpack.c.l.b16 %v637
    %v3550 = vunpack.c.h.b16 %v637
    %v3551 = vunpack.c.l.b16 %v638
    %v3552 = vunpack.c.h.b16 %v638
    %v3553 = vunpack.c.l.b16 %v639
    %v3554 = vunpack.c.h.b16 %v639
    %v3555 = vunpack.c.l.b16 %v640
    %v3556 = vunpack.c.h.b16 %v640
    %v3557 = vunpack.c.l.b16 %v641
    %v3558 = vunpack.c.h.b16 %v641
    %v3559 = vunpack.c.l.b16 %v642
    %v3560 = vunpack.c.h.b16 %v642
    %v3561 = vunpack.c.l.b16 %v643
    %v3562 = vunpack.c.h.b16 %v643
    %v3563 = vunpack.c.l.b16 %v644
    %v3564 = vunpack.c.h.b16 %v644
    %v3565 = vunpack.c.l.b16 %v645
    %v3566 = vunpack.c.h.b16 %v645
    %v3567 = vunpack.c.l.b16 %v646
    %v3568 = vunpack.c.h.b16 %v646
    %v3569 = vunpack.c.l.b16 %v647
    %v3570 = vunpack.c.h.b16 %v647
    %v3571 = vunpack.c.l.b16 %v648
    %v3572 = vunpack.c.h.b16 %v648
    %v3573 = vunpack.c.l.b16 %v649
    %v3574 = vunpack.c.h.b16 %v649
    %v3575 = vunpack.c.l.b16 %v650
    %v3576 = vunpack.c.h.b16 %v650
    %v3577 = vunpack.c.l.b16 %v651
    %v3578 = vunpack.c.h.b16 %v651
    %v3579 = vunpack.c.l.b16 %v652
    %v3580 = vunpack.c.h.b16 %v652
    %v3581 = vunpack.c.l.b16 %v653
    %v3582 = vunpack.c.h.b16 %v653
    %v3583 = vunpack.c.l.b16 %v654
    %v3584 = vunpack.c.h.b16 %v654
    %v3585 = vunpack.c.l.b16 %v655
    %v3586 = vunpack.c.h.b16 %v655
    %v3587 = vunpack.c.l.b16 %v656
    %v3588 = vunpack.c.h.b16 %v656
    %v3589 = vunpack.c.l.b16 %v657
    %v3590 = vunpack.c.h.b16 %v657
    %v3591 = vunpack.c.l.b16 %v658
    %v3592 = vunpack.c.h.b16 %v658
    %v3593 = vunpack.c.l.b16 %v659
    %v3594 = vunpack.c.h.b16 %v659
    %v3595 = vunpack.c.l.b16 %v660
    %v3596 = vunpack.c.h.b16 %v660
    %v3597 = vunpack.c.l.b16 %v661
    %v3598 = vunpack.c.h.b16 %v661
    %v3599 = vunpack.c.l.b16 %v662
    %v3600 = vunpack.c.h.b16 %v662
    %v3601 = vunpack.c.l.b16 %v663
    %v3602 = vunpack.c.h.b16 %v663
    %v3603 = vunpack.c.l.b16 %v664
    %v3604 = vunpack.c.h.b16 %v664
    %v3605 = vunpack.c.l.b16 %v665
    %v3606 = vunpack.c.h.b16 %v665
    %v3607 = vunpack.c.l.b16 %v666
    %v3608 = vunpack.c.h.b16 %v666
    %v3609 = vunpack.c.l.b16 %v667
    %v3610 = vunpack.c.h.b16 %v667
    %v3611 = vunpack.c.l.b16 %v668
    %v3612 = vunpack.c.h.b16 %v668
    %v3613 = vunpack.c.l.b16 %v669
    %v3614 = vunpack.c.h.b16 %v669
    %v3615 = vunpack.c.l.b16 %v670
    %v3616 = vunpack.c.h.b16 %v670
    %v3617 = vunpack.c.l.b16 %v671
    %v3618 = vunpack.c.h.b16 %v671
    %v3619 = vunpack.c.l.b16 %v672
    %v3620 = vunpack.c.h.b16 %v672
    %v3621 = vunpack.c.l.b16 %v673
    %v3622 = vunpack.c.h.b16 %v673
    %v3623 = vunpack.c.l.b16 %v674
    %v3624 = vunpack.c.h.b16 %v674
    %v3625 = vunpack.c.l.b16 %v675
    %v3626 = vunpack.c.h.b16 %v675
    %v3627 = vunpack.c.l.b16 %v676
    %v3628 = vunpack.c.h.b16 %v676
    %v3629 = vunpack.c.l.b16 %v677
    %v3630 = vunpack.c.h.b16 %v677
    %v3631 = vunpack.c.l.b16 %v678
    %v3632 = vunpack.c.h.b16 %v678
    %v3633 = vunpack.c.l.b16 %v679
    %v3634 = vunpack.c.h.b16 %v679
    %v3635 = vunpack.c.l.b16 %v680
    %v3636 = vunpack.c.h.b16 %v680
    %v3637 = vunpack.c.l.b16 %v681
    %v3638 = vunpack.c.h.b16 %v681
    %v3639 = vunpack.c.l.b16 %v682
    %v3640 = vunpack.c.h.b16 %v682
    %v3641 = vunpack.c.l.b16 %v683
    %v3642 = vunpack.c.h.b16 %v683
    %v3643 = vunpack.c.l.b16 %v684
    %v3644 = vunpack.c.h.b16 %v684
    %v3645 = vunpack.c.l.b16 %v685
    %v3646 = vunpack.c.h.b16 %v685
    %v3647 = vunpack.c.l.b16 %v686
    %v3648 = vunpack.c.h.b16 %v686
    %v3649 = vunpack.c.l.b16 %v687
    %v3650 = vunpack.c.h.b16 %v687
    %v3651 = vunpack.c.l.b16 %v688
    %v3652 = vunpack.c.h.b16 %v688
    %v3653 = vunpack.c.l.b16 %v689
    %v3654 = vunpack.c.h.b16 %v689
    %v3655 = vunpack.c.l.b16 %v690
    %v3656 = vunpack.c.h.b16 %v690
    %v3657 = vunpack.c.l.b16 %v691
    %v3658 = vunpack.c.h.b16 %v691
    %v3659 = vunpack.c.l.b16 %v692
    %v3660 = vunpack.c.h.b16 %v692
    %v3661 = vunpack.c.l.b16 %v693
    %v3662 = vunpack.c.h.b16 %v693
    %v3663 = vunpack.c.l.b16 %v694
    %v3664 = vunpack.c.h.b16 %v694
    %v3665 = vunpack.c.l.b16 %v695
    %v3666 = vunpack.c.h.b16 %v695
    %v3667 = vunpack.c.l.b16 %v696
    %v3668 = vunpack.c.h.b16 %v696
    %v3669 = vunpack.c.l.b16 %v697
    %v3670 = vunpack.c.h.b16 %v697
    %v3671 = vunpack.c.l.b16 %v698
    %v3672 = vunpack.c.h.b16 %v698
    %v3673 = vunpack.c.l.b16 %v699
    %v3674 = vunpack.c.h.b16 %v699
    %v3675 = vunpack.c.l.b16 %v700
    %v3676 = vunpack.c.h.b16 %v700
    %v3677 = vunpack.c.l.b16 %v701
    %v3678 = vunpack.c.h.b16 %v701
    %v3679 = vunpack.c.l.b16 %v702
    %v3680 = vunpack.c.h.b16 %v702
    %v3681 = vunpack.c.l.b16 %v703
    %v3682 = vunpack.c.h.b16 %v703
    %v3683 = vunpack.c.l.b16 %v704
    %v3684 = vunpack.c.h.b16 %v704
    %v3685 = vunpack.c.l.b16 %v705
    %v3686 = vunpack.c.h.b16 %v705
    %v3687 = vunpack.c.l.b16 %v706
    %v3688 = vunpack.c.h.b16 %v706
    %v3689 = vunpack.c.l.b16 %v707
    %v3690 = vunpack.c.h.b16 %v707
    %v3691 = vunpack.c.l.b16 %v708
    %v3692 = vunpack.c.h.b16 %v708
    %v3693 = vunpack.c.l.b16 %v709
    %v3694 = vunpack.c.h.b16 %v709
    %v3695 = vunpack.c.l.b16 %v710
    %v3696 = vunpack.c.h.b16 %v710
    %v3697 = vunpack.c.l.b16 %v711
    %v3698 = vunpack.c.h.b16 %v711
    %v3699 = vunpack.c.l.b16 %v712
    %v3700 = vunpack.c.h.b16 %v712
    %v3701 = vunpack.c.l.b16 %v713
    %v3702 = vunpack.c.h.b16 %v713
    %v3703 = vunpack.c.l.b16 %v714
    %v3704 = vunpack.c.h.b16 %v714
    %v3705 = vunpack.c.l.b16 %v715
    %v3706 = vunpack.c.h.b16 %v715
    %v3707 = vunpack.c.l.b16 %v716
    %v3708 = vunpack.c.h.b16 %v716
    %v3709 = vunpack.c.l.b16 %v717
    %v3710 = vunpack.c.h.b16 %v717
    %v3711 = vunpack.c.l.b16 %v718
    %v3712 = vunpack.c.h.b16 %v718
    %v3713 = vunpack.c.l.b16 %v719
    %v3714 = vunpack.c.h.b16 %v719
    %v3715 = vunpack.c.l.b16 %v720
    %v3716 = vunpack.c.h.b16 %v720
    %v3717 = vunpack.c.l.b16 %v721
    %v3718 = vunpack.c.h.b16 %v721
    %v3719 = vunpack.c.l.b16 %v722
    %v3720 = vunpack.c.h.b16 %v722
    %v3721 = vunpack.c.l.b16 %v723
    %v3722 = vunpack.c.h.b16 %v723
    %v3723 = vunpack.c.l.b16 %v724
    %v3724 = vunpack.c.h.b16 %v724
    %v3725 = vunpack.c.l.b16 %v725
    %v3726 = vunpack.c.h.b16 %v725
    %v3727 = vunpack.c.l.b16 %v726
    %v3728 = vunpack.c.h.b16 %v726
    %v3729 = vunpack.c.l.b16 %v727
    %v3730 = vunpack.c.h.b16 %v727
    %v3731 = vunpack.c.l.b16 %v728
    %v3732 = vunpack.c.h.b16 %v728
    %v3733 = vunpack.c.l.b16 %v729
    %v3734 = vunpack.c.h.b16 %v729
    %v3735 = vunpack.c.l.b16 %v730
    %v3736 = vunpack.c.h.b16 %v730
    %v3737 = vunpack.c.l.b16 %v731
    %v3738 = vunpack.c.h.b16 %v731
    %v3739 = vunpack.c.l.b16 %v732
    %v3740 = vunpack.c.h.b16 %v732
    %v3741 = vunpack.c.l.b16 %v733
    %v3742 = vunpack.c.h.b16 %v733
    %v3743 = vunpack.c.l.b16 %v734
    %v3744 = vunpack.c.h.b16 %v734
    %v3745 = vunpack.c.l.b16 %v735
    %v3746 = vunpack.c.h.b16 %v735
    %v3747 = vunpack.c.l.b16 %v736
    %v3748 = vunpack.c.h.b16 %v736
    %v3749 = vunpack.c.l.b16 %v737
    %v3750 = vunpack.c.h.b16 %v737
    %v3751 = vunpack.c.l.b16 %v738
    %v3752 = vunpack.c.h.b16 %v738
    %v3753 = vunpack.c.l.b16 %v739
    %v3754 = vunpack.c.h.b16 %v739
    %v3755 = vunpack.c.l.b16 %v740
    %v3756 = vunpack.c.h.b16 %v740
    %v3757 = vunpack.c.l.b16 %v741
    %v3758 = vunpack.c.h.b16 %v741
    %v3759 = vunpack.c.l.b16 %v742
    %v3760 = vunpack.c.h.b16 %v742
    %v3761 = vunpack.c.l.b16 %v743
    %v3762 = vunpack.c.h.b16 %v743
    %v3763 = vunpack.c.l.b16 %v744
    %v3764 = vunpack.c.h.b16 %v744
    %v3765 = vunpack.c.l.b16 %v745
    %v3766 = vunpack.c.h.b16 %v745
    %v3767 = vunpack.c.l.b16 %v746
    %v3768 = vunpack.c.h.b16 %v746
    %v3769 = vunpack.c.l.b16 %v747
    %v3770 = vunpack.c.h.b16 %v747
    %v3771 = vunpack.c.l.b16 %v748
    %v3772 = vunpack.c.h.b16 %v748
    %v3773 = vunpack.c.l.b16 %v749
    %v3774 = vunpack.c.h.b16 %v749
    %v3775 = vunpack.c.l.b16 %v750
    %v3776 = vunpack.c.h.b16 %v750
    %v3777 = vunpack.c.l.b16 %v751
    %v3778 = vunpack.c.h.b16 %v751
    %v3779 = vunpack.c.l.b16 %v752
    %v3780 = vunpack.c.h.b16 %v752
    %v3781 = vunpack.c.l.b16 %v753
    %v3782 = vunpack.c.h.b16 %v753
    %v3783 = vunpack.c.l.b16 %v754
    %v3784 = vunpack.c.h.b16 %v754
    %v3785 = vunpack.c.l.b16 %v755
    %v3786 = vunpack.c.h.b16 %v755
    %v3787 = vunpack.c.l.b16 %v756
    %v3788 = vunpack.c.h.b16 %v756
    %v3789 = vunpack.c.l.b16 %v757
    %v3790 = vunpack.c.h.b16 %v757
    %v3791 = vunpack.c.l.b16 %v758
    %v3792 = vunpack.c.h.b16 %v758
    %v3793 = vunpack.c.l.b16 %v759
    %v3794 = vunpack.c.h.b16 %v759
    %v3795 = vunpack.c.l.b16 %v760
    %v3796 = vunpack.c.h.b16 %v760
    %v3797 = vunpack.c.l.b16 %v761
    %v3798 = vunpack.c.h.b16 %v761
    %v3799 = vunpack.c.l.b16 %v762
    %v3800 = vunpack.c.h.b16 %v762
    %v3801 = vunpack.c.l.b16 %v763
    %v3802 = vunpack.c.h.b16 %v763
    %v3803 = vunpack.c.l.b16 %v764
    %v3804 = vunpack.c.h.b16 %v764
    %v3805 = vunpack.c.l.b16 %v765
    %v3806 = vunpack.c.h.b16 %v765
    %v3807 = vunpack.c.l.b16 %v766
    %v3808 = vunpack.c.h.b16 %v766
    %v3809 = vunpack.c.l.b16 %v767
    %v3810 = vunpack.c.h.b16 %v767
    %v3811 = vunpack.c.l.b16 %v768
    %v3812 = vunpack.c.h.b16 %v768
    %v3813 = vunpack.c.l.b16 %v769
    %v3814 = vunpack.c.h.b16 %v769
    %v3815 = vunpack.c.l.b16 %v770
    %v3816 = vunpack.c.h.b16 %v770
    %v3817 = vunpack.c.l.b16 %v771
    %v3818 = vunpack.c.h.b16 %v771
    %v3819 = vunpack.c.l.b16 %v772
    %v3820 = vunpack.c.h.b16 %v772
    %v3821 = vunpack.c.l.b16 %v773
    %v3822 = vunpack.c.h.b16 %v773
    %v3823 = vunpack.c.l.b16 %v774
    %v3824 = vunpack.c.h.b16 %v774
    %v3825 = vunpack.c.l.b16 %v775
    %v3826 = vunpack.c.h.b16 %v775
    %v3827 = vunpack.c.l.b16 %v776
    %v3828 = vunpack.c.h.b16 %v776
    %v3829 = vunpack.c.l.b16 %v777
    %v3830 = vunpack.c.h.b16 %v777
    %v3831 = vunpack.c.l.b16 %v778
    %v3832 = vunpack.c.h.b16 %v778
    %v3833 = vunpack.c.l.b16 %v779
    %v3834 = vunpack.c.h.b16 %v779
    %v3835 = vunpack.c.l.b16 %v780
    %v3836 = vunpack.c.h.b16 %v780
    %v3837 = vunpack.c.l.b16 %v781
    %v3838 = vunpack.c.h.b16 %v781
    %v3839 = vunpack.c.l.b16 %v782
    %v3840 = vunpack.c.h.b16 %v782
    %v3841 = vunpack.c.l.b16 %v783
    %v3842 = vunpack.c.h.b16 %v783
    %v3843 = vunpack.c.l.b16 %v784
    %v3844 = vunpack.c.h.b16 %v784
    %v3845 = vunpack.c.l.b16 %v785
    %v3846 = vunpack.c.h.b16 %v785
    %v3847 = vunpack.c.l.b16 %v786
    %v3848 = vunpack.c.h.b16 %v786
    %v3849 = vunpack.c.l.b16 %v787
    %v3850 = vunpack.c.h.b16 %v787
    %v3851 = vunpack.c.l.b16 %v788
    %v3852 = vunpack.c.h.b16 %v788
    %v3853 = vunpack.c.l.b16 %v789
    %v3854 = vunpack.c.h.b16 %v789
    %v3855 = vunpack.c.l.b16 %v790
    %v3856 = vunpack.c.h.b16 %v790
    %v3857 = vunpack.c.l.b16 %v791
    %v3858 = vunpack.c.h.b16 %v791
    %v3859 = vunpack.c.l.b16 %v792
    %v3860 = vunpack.c.h.b16 %v792
    %v3861 = vunpack.c.l.b16 %v793
    %v3862 = vunpack.c.h.b16 %v793
    %v3863 = vunpack.c.l.b16 %v794
    %v3864 = vunpack.c.h.b16 %v794
    %v3865 = vunpack.c.l.b16 %v795
    %v3866 = vunpack.c.h.b16 %v795
    %v3867 = vunpack.c.l.b16 %v796
    %v3868 = vunpack.c.h.b16 %v796
    %v3869 = vunpack.c.l.b16 %v797
    %v3870 = vunpack.c.h.b16 %v797
    %v3871 = vunpack.c.l.b16 %v798
    %v3872 = vunpack.c.h.b16 %v798
    %v3873 = vunpack.c.l.b16 %v799
    %v3874 = vunpack.c.h.b16 %v799
    %v3875 = vunpack.c.l.b16 %v800
    %v3876 = vunpack.c.h.b16 %v800
    %v3877 = vunpack.c.l.b16 %v801
    %v3878 = vunpack.c.h.b16 %v801
    %v3879 = vunpack.c.l.b16 %v802
    %v3880 = vunpack.c.h.b16 %v802
    %v3881 = vunpack.c.l.b16 %v803
    %v3882 = vunpack.c.h.b16 %v803
    %v3883 = vunpack.c.l.b16 %v804
    %v3884 = vunpack.c.h.b16 %v804
    %v3885 = vunpack.c.l.b16 %v805
    %v3886 = vunpack.c.h.b16 %v805
    %v3887 = vunpack.c.l.b16 %v806
    %v3888 = vunpack.c.h.b16 %v806
    %v3889 = vunpack.c.l.b16 %v807
    %v3890 = vunpack.c.h.b16 %v807
    %v3891 = vunpack.c.l.b16 %v808
    %v3892 = vunpack.c.h.b16 %v808
    %v3893 = vunpack.c.l.b16 %v809
    %v3894 = vunpack.c.h.b16 %v809
    %v3895 = vunpack.c.l.b16 %v810
    %v3896 = vunpack.c.h.b16 %v810
    %v3897 = vunpack.c.l.b16 %v811
    %v3898 = vunpack.c.h.b16 %v811
    %v3899 = vunpack.c.l.b16 %v812
    %v3900 = vunpack.c.h.b16 %v812
    %v3901 = vunpack.c.l.b16 %v813
    %v3902 = vunpack.c.h.b16 %v813
    %v3903 = vunpack.c.l.b16 %v814
    %v3904 = vunpack.c.h.b16 %v814
    %v3905 = vunpack.c.l.b16 %v815
    %v3906 = vunpack.c.h.b16 %v815
    %v3907 = vunpack.c.l.b16 %v816
    %v3908 = vunpack.c.h.b16 %v816
    %v3909 = vunpack.c.l.b16 %v817
    %v3910 = vunpack.c.h.b16 %v817
    %v3911 = vunpack.c.l.b16 %v818
    %v3912 = vunpack.c.h.b16 %v818
    %v3913 = vunpack.c.l.b16 %v819
    %v3914 = vunpack.c.h.b16 %v819
    %v3915 = vunpack.c.l.b16 %v820
    %v3916 = vunpack.c.h.b16 %v820
    %v3917 = vunpack.c.l.b16 %v821
    %v3918 = vunpack.c.h.b16 %v821
    %v3919 = vunpack.c.l.b16 %v822
    %v3920 = vunpack.c.h.b16 %v822
    %v3921 = vunpack.c.l.b16 %v823
    %v3922 = vunpack.c.h.b16 %v823
    %v3923 = vunpack.c.l.b16 %v824
    %v3924 = vunpack.c.h.b16 %v824
    %v3925 = vunpack.c.l.b16 %v825
    %v3926 = vunpack.c.h.b16 %v825
    %v3927 = vunpack.c.l.b16 %v826
    %v3928 = vunpack.c.h.b16 %v826
    %v3929 = vunpack.c.l.b16 %v827
    %v3930 = vunpack.c.h.b16 %v827
    %v3931 = vunpack.c.l.b16 %v828
    %v3932 = vunpack.c.h.b16 %v828
    %v3933 = vunpack.c.l.b16 %v829
    %v3934 = vunpack.c.h.b16 %v829
    %v3935 = vunpack.c.l.b16 %v830
    %v3936 = vunpack.c.h.b16 %v830
    %v3937 = vunpack.c.l.b16 %v831
    %v3938 = vunpack.c.h.b16 %v831
    %v3939 = vunpack.c.l.b16 %v832
    %v3940 = vunpack.c.h.b16 %v832
    %v3941 = vunpack.c.l.b16 %v833
    %v3942 = vunpack.c.h.b16 %v833
    %v3943 = vunpack.c.l.b16 %v834
    %v3944 = vunpack.c.h.b16 %v834
    %v3945 = vunpack.c.l.b16 %v835
    %v3946 = vunpack.c.h.b16 %v835
    %v3947 = vunpack.c.l.b16 %v836
    %v3948 = vunpack.c.h.b16 %v836
    %v3949 = vunpack.c.l.b16 %v837
    %v3950 = vunpack.c.h.b16 %v837
    %v3951 = vunpack.c.l.b16 %v838
    %v3952 = vunpack.c.h.b16 %v838
    %v3953 = vunpack.c.l.b16 %v839
    %v3954 = vunpack.c.h.b16 %v839
    %v3955 = vunpack.c.l.b16 %v840
    %v3956 = vunpack.c.h.b16 %v840
    %v3957 = vunpack.c.l.b16 %v841
    %v3958 = vunpack.c.h.b16 %v841
    %v3959 = vunpack.c.l.b16 %v842
    %v3960 = vunpack.c.h.b16 %v842
    %v3961 = vunpack.c.l.b16 %v843
    %v3962 = vunpack.c.h.b16 %v843
    %v3963 = vunpack.c.l.b16 %v844
    %v3964 = vunpack.c.h.b16 %v844
    %v3965 = vunpack.c.l.b16 %v845
    %v3966 = vunpack.c.h.b16 %v845
    %v3967 = vunpack.c.l.b16 %v846
    %v3968 = vunpack.c.h.b16 %v846
    %v3969 = vunpack.c.l.b16 %v847
    %v3970 = vunpack.c.h.b16 %v847
    %v3971 = vunpack.c.l.b16 %v848
    %v3972 = vunpack.c.h.b16 %v848
    %v3973 = vunpack.c.l.b16 %v849
    %v3974 = vunpack.c.h.b16 %v849
    %v3975 = vunpack.c.l.b16 %v850
    %v3976 = vunpack.c.h.b16 %v850
    %v3977 = vunpack.c.l.b16 %v851
    %v3978 = vunpack.c.h.b16 %v851
    %v3979 = vunpack.c.l.b16 %v852
    %v3980 = vunpack.c.h.b16 %v852
    %v3981 = vunpack.c.l.b16 %v853
    %v3982 = vunpack.c.h.b16 %v853
    %v3983 = vunpack.c.l.b16 %v854
    %v3984 = vunpack.c.h.b16 %v854
    %v3985 = vunpack.c.l.b16 %v855
    %v3986 = vunpack.c.h.b16 %v855
    %v3987 = vunpack.c.l.b16 %v856
    %v3988 = vunpack.c.h.b16 %v856
    %v3989 = vunpack.c.l.b16 %v857
    %v3990 = vunpack.c.h.b16 %v857
    %v3991 = vunpack.c.l.b16 %v858
    %v3992 = vunpack.c.h.b16 %v858
    %v3993 = vunpack.c.l.b16 %v859
    %v3994 = vunpack.c.h.b16 %v859
    %v3995 = vunpack.c.l.b16 %v860
    %v3996 = vunpack.c.h.b16 %v860
    %v3997 = vunpack.c.l.b16 %v861
    %v3998 = vunpack.c.h.b16 %v861
    %v3999 = vunpack.c.l.b16 %v862
    %v4000 = vunpack.c.h.b16 %v862
    %v4001 = vunpack.c.l.b16 %v863
    %v4002 = vunpack.c.h.b16 %v863
    %v4003 = vunpack.c.l.b16 %v864
    %v4004 = vunpack.c.h.b16 %v864
    %v4005 = vunpack.c.l.b16 %v865
    %v4006 = vunpack.c.h.b16 %v865
    %v4007 = vunpack.c.l.b16 %v866
    %v4008 = vunpack.c.h.b16 %v866
    %v4009 = vunpack.c.l.b16 %v867
    %v4010 = vunpack.c.h.b16 %v867
    %v4011 = vunpack.c.l.b16 %v868
    %v4012 = vunpack.c.h.b16 %v868
    %v4013 = vunpack.c.l.b16 %v869
    %v4014 = vunpack.c.h.b16 %v869
    %v4015 = vunpack.c.l.b16 %v870
    %v4016 = vunpack.c.h.b16 %v870
    %v4017 = vunpack.c.l.b16 %v871
    %v4018 = vunpack.c.h.b16 %v871
    %v4019 = vunpack.c.l.b16 %v872
    %v4020 = vunpack.c.h.b16 %v872
    %v4021 = vunpack.c.l.b16 %v873
    %v4022 = vunpack.c.h.b16 %v873
    %v4023 = vunpack.c.l.b16 %v874
    %v4024 = vunpack.c.h.b16 %v874
    %v4025 = vunpack.c.l.b16 %v875
    %v4026 = vunpack.c.h.b16 %v875
    %v4027 = vunpack.c.l.b16 %v876
    %v4028 = vunpack.c.h.b16 %v876
    %v4029 = vunpack.c.l.b16 %v877
    %v4030 = vunpack.c.h.b16 %v877
    %v4031 = vunpack.c.l.b16 %v878
    %v4032 = vunpack.c.h.b16 %v878
    %v4033 = vunpack.c.l.b16 %v879
    %v4034 = vunpack.c.h.b16 %v879
    %v4035 = vunpack.c.l.b16 %v880
    %v4036 = vunpack.c.h.b16 %v880
    %v4037 = vunpack.c.l.b16 %v881
    %v4038 = vunpack.c.h.b16 %v881
    %v4039 = vunpack.c.l.b16 %v882
    %v4040 = vunpack.c.h.b16 %v882
    %v4041 = vunpack.c.l.b16 %v883
    %v4042 = vunpack.c.h.b16 %v883
    %v4043 = vunpack.c.l.b16 %v884
    %v4044 = vunpack.c.h.b16 %v884
    %v4045 = vunpack.c.l.b16 %v885
    %v4046 = vunpack.c.h.b16 %v885
    %v4047 = vunpack.c.l.b16 %v886
    %v4048 = vunpack.c.h.b16 %v886
    %v4049 = vunpack.c.l.b16 %v887
    %v4050 = vunpack.c.h.b16 %v887
    %v4051 = vunpack.c.l.b16 %v888
    %v4052 = vunpack.c.h.b16 %v888
    %v4053 = vunpack.c.l.b16 %v889
    %v4054 = vunpack.c.h.b16 %v889
    %v4055 = vunpack.c.l.b16 %v890
    %v4056 = vunpack.c.h.b16 %v890
    %v4057 = vunpack.c.l.b16 %v891
    %v4058 = vunpack.c.h.b16 %v891
    %v4059 = vunpack.c.l.b16 %v892
    %v4060 = vunpack.c.h.b16 %v892
    %v4061 = vunpack.c.l.b16 %v893
    %v4062 = vunpack.c.h.b16 %v893
    %v4063 = vunpack.c.l.b16 %v894
    %v4064 = vunpack.c.h.b16 %v894
    %v4065 = vunpack.c.l.b16 %v895
    %v4066 = vunpack.c.h.b16 %v895
    %v4067 = vunpack.c.l.b16 %v896
    %v4068 = vunpack.c.h.b16 %v896
    %v4069 = vunpack.c.l.b16 %v897
    %v4070 = vunpack.c.h.b16 %v897
    %v4071 = vunpack.c.l.b16 %v898
    %v4072 = vunpack.c.h.b16 %v898
    %v4073 = vunpack.c.l.b16 %v899
    %v4074 = vunpack.c.h.b16 %v899
    %v4075 = vunpack.c.l.b16 %v900
    %v4076 = vunpack.c.h.b16 %v900
    %v4077 = vunpack.c.l.b16 %v901
    %v4078 = vunpack.c.h.b16 %v901
    %v4079 = vunpack.c.l.b16 %v902
    %v4080 = vunpack.c.h.b16 %v902
    %v4081 = vunpack.c.l.b16 %v903
    %v4082 = vunpack.c.h.b16 %v903
    %v4083 = vunpack.c.l.b16 %v904
    %v4084 = vunpack.c.h.b16 %v904
    %v4085 = vunpack.c.l.b16 %v905
    %v4086 = vunpack.c.h.b16 %v905
    %v4087 = vunpack.c.l.b16 %v906
    %v4088 = vunpack.c.h.b16 %v906
    %v4089 = vunpack.c.l.b16 %v907
    %v4090 = vunpack.c.h.b16 %v907
    %v4091 = vunpack.c.l.b16 %v908
    %v4092 = vunpack.c.h.b16 %v908
    %v4093 = vunpack.c.l.b16 %v909
    %v4094 = vunpack.c.h.b16 %v909
    %v4095 = vunpack.c.l.b16 %v910
    %v4096 = vunpack.c.h.b16 %v910
    %v4097 = vunpack.c.l.b16 %v911
    %v4098 = vunpack.c.h.b16 %v911
    %v4099 = vunpack.c.l.b16 %v912
    %v4100 = vunpack.c.h.b16 %v912
    %v4101 = vunpack.c.l.b16 %v913
    %v4102 = vunpack.c.h.b16 %v913
    %v4103 = vunpack.c.l.b16 %v914
    %v4104 = vunpack.c.h.b16 %v914
    %v4105 = vunpack.c.l.b16 %v915
    %v4106 = vunpack.c.h.b16 %v915
    %v4107 = vunpack.c.l.b16 %v916
    %v4108 = vunpack.c.h.b16 %v916
    %v4109 = vunpack.c.l.b16 %v917
    %v4110 = vunpack.c.h.b16 %v917
    %v4111 = vunpack.c.l.b16 %v918
    %v4112 = vunpack.c.h.b16 %v918
    %v4113 = vunpack.c.l.b16 %v919
    %v4114 = vunpack.c.h.b16 %v919
    %v4115 = vunpack.c.l.b16 %v920
    %v4116 = vunpack.c.h.b16 %v920
    %v4117 = vunpack.c.l.b16 %v921
    %v4118 = vunpack.c.h.b16 %v921
    %v4119 = vunpack.c.l.b16 %v922
    %v4120 = vunpack.c.h.b16 %v922
    %v4121 = vunpack.c.l.b16 %v923
    %v4122 = vunpack.c.h.b16 %v923
    %v4123 = vunpack.c.l.b16 %v924
    %v4124 = vunpack.c.h.b16 %v924
    %v4125 = vunpack.c.l.b16 %v925
    %v4126 = vunpack.c.h.b16 %v925
    %v4127 = vunpack.c.l.b16 %v926
    %v4128 = vunpack.c.h.b16 %v926
    %v4129 = vunpack.c.l.b16 %v927
    %v4130 = vunpack.c.h.b16 %v927
    %v4131 = vunpack.c.l.b16 %v928
    %v4132 = vunpack.c.h.b16 %v928
    %v4133 = vunpack.c.l.b16 %v929
    %v4134 = vunpack.c.h.b16 %v929
    %v4135 = vunpack.c.l.b16 %v930
    %v4136 = vunpack.c.h.b16 %v930
    %v4137 = vunpack.c.l.b16 %v931
    %v4138 = vunpack.c.h.b16 %v931
    %v4139 = vunpack.c.l.b16 %v932
    %v4140 = vunpack.c.h.b16 %v932
    %v4141 = vunpack.c.l.b16 %v933
    %v4142 = vunpack.c.h.b16 %v933
    %v4143 = vunpack.c.l.b16 %v934
    %v4144 = vunpack.c.h.b16 %v934
    %v4145 = vunpack.c.l.b16 %v935
    %v4146 = vunpack.c.h.b16 %v935
    %v4147 = vunpack.c.l.b16 %v936
    %v4148 = vunpack.c.h.b16 %v936
    %v4149 = vunpack.c.l.b16 %v937
    %v4150 = vunpack.c.h.b16 %v937
    %v4151 = vunpack.c.l.b16 %v938
    %v4152 = vunpack.c.h.b16 %v938
    %v4153 = vunpack.c.l.b16 %v939
    %v4154 = vunpack.c.h.b16 %v939
    %v4155 = vunpack.c.l.b16 %v940
    %v4156 = vunpack.c.h.b16 %v940
    %v4157 = vunpack.c.l.b16 %v941
    %v4158 = vunpack.c.h.b16 %v941
    %v4159 = vunpack.c.l.b16 %v942
    %v4160 = vunpack.c.h.b16 %v942
    %v4161 = vunpack.c.l.b16 %v943
    %v4162 = vunpack.c.h.b16 %v943
    %v4163 = vunpack.c.l.b16 %v944
    %v4164 = vunpack.c.h.b16 %v944
    %v4165 = vunpack.c.l.b16 %v945
    %v4166 = vunpack.c.h.b16 %v945
    %v4167 = vunpack.c.l.b16 %v946
    %v4168 = vunpack.c.h.b16 %v946
    %v4169 = vunpack.c.l.b16 %v947
    %v4170 = vunpack.c.h.b16 %v947
    %v4171 = vunpack.c.l.b16 %v948
    %v4172 = vunpack.c.h.b16 %v948
    %v4173 = vunpack.c.l.b16 %v949
    %v4174 = vunpack.c.h.b16 %v949
    %v4175 = vunpack.c.l.b16 %v950
    %v4176 = vunpack.c.h.b16 %v950
    %v4177 = vunpack.c.l.b16 %v951
    %v4178 = vunpack.c.h.b16 %v951
    %v4179 = vunpack.c.l.b16 %v952
    %v4180 = vunpack.c.h.b16 %v952
    %v4181 = vunpack.c.l.b16 %v953
    %v4182 = vunpack.c.h.b16 %v953
    %v4183 = vunpack.c.l.b16 %v954
    %v4184 = vunpack.c.h.b16 %v954
    %v4185 = vunpack.c.l.b16 %v955
    %v4186 = vunpack.c.h.b16 %v955
    %v4187 = vunpack.c.l.b16 %v956
    %v4188 = vunpack.c.h.b16 %v956
    %v4189 = vunpack.c.l.b16 %v957
    %v4190 = vunpack.c.h.b16 %v957
    %v4191 = vunpack.c.l.b16 %v958
    %v4192 = vunpack.c.h.b16 %v958
    %v4193 = vunpack.c.l.b16 %v959
    %v4194 = vunpack.c.h.b16 %v959
    %v4195 = vunpack.c.l.b16 %v960
    %v4196 = vunpack.c.h.b16 %v960
    %v4197 = vunpack.c.l.b16 %v961
    %v4198 = vunpack.c.h.b16 %v961
    %v4199 = vunpack.c.l.b16 %v962
    %v4200 = vunpack.c.h.b16 %v962
    %v4201 = vunpack.c.l.b16 %v963
    %v4202 = vunpack.c.h.b16 %v963
    %v4203 = vunpack.c.l.b16 %v964
    %v4204 = vunpack.c.h.b16 %v964
    %v4205 = vunpack.c.l.b16 %v965
    %v4206 = vunpack.c.h.b16 %v965
    %v4207 = vunpack.c.l.b16 %v966
    %v4208 = vunpack.c.h.b16 %v966
    %v4209 = vunpack.c.l.b16 %v967
    %v4210 = vunpack.c.h.b16 %v967
    %v4211 = vunpack.c.l.b16 %v968
    %v4212 = vunpack.c.h.b16 %v968
    %v4213 = vunpack.c.l.b16 %v969
    %v4214 = vunpack.c.h.b16 %v969
    %v4215 = vunpack.c.l.b16 %v970
    %v4216 = vunpack.c.h.b16 %v970
    %v4217 = vunpack.c.l.b16 %v971
    %v4218 = vunpack.c.h.b16 %v971
    %v4219 = vunpack.c.l.b16 %v972
    %v4220 = vunpack.c.h.b16 %v972
    %v4221 = vunpack.c.l.b16 %v973
    %v4222 = vunpack.c.h.b16 %v973
    %v4223 = vunpack.c.l.b16 %v974
    %v4224 = vunpack.c.h.b16 %v974
    %v4225 = vunpack.c.l.b16 %v975
    %v4226 = vunpack.c.h.b16 %v975
    %v4227 = vunpack.c.l.b16 %v976
    %v4228 = vunpack.c.h.b16 %v976
    %v4229 = vunpack.c.l.b16 %v977
    %v4230 = vunpack.c.h.b16 %v977
    %v4231 = vunpack.c.l.b16 %v978
    %v4232 = vunpack.c.h.b16 %v978
    %v4233 = vunpack.c.l.b16 %v979
    %v4234 = vunpack.c.h.b16 %v979
    %v4235 = vunpack.c.l.b16 %v980
    %v4236 = vunpack.c.h.b16 %v980
    %v4237 = vunpack.c.l.b16 %v981
    %v4238 = vunpack.c.h.b16 %v981
    %v4239 = vunpack.c.l.b16 %v982
    %v4240 = vunpack.c.h.b16 %v982
    %v4241 = vunpack.c.l.b16 %v983
    %v4242 = vunpack.c.h.b16 %v983
    %v4243 = vunpack.c.l.b16 %v984
    %v4244 = vunpack.c.h.b16 %v984
    %v4245 = vunpack.c.l.b16 %v985
    %v4246 = vunpack.c.h.b16 %v985
    %v4247 = vunpack.c.l.b16 %v986
    %v4248 = vunpack.c.h.b16 %v986
    %v4249 = vunpack.c.l.b16 %v987
    %v4250 = vunpack.c.h.b16 %v987
    %v4251 = vunpack.c.l.b16 %v988
    %v4252 = vunpack.c.h.b16 %v988
    %v4253 = vunpack.c.l.b16 %v989
    %v4254 = vunpack.c.h.b16 %v989
    %v4255 = vunpack.c.l.b16 %v990
    %v4256 = vunpack.c.h.b16 %v990
    %v4257 = vunpack.c.l.b16 %v991
    %v4258 = vunpack.c.h.b16 %v991
    %v4259 = vunpack.c.l.b16 %v992
    %v4260 = vunpack.c.h.b16 %v992
    %v4261 = vunpack.c.l.b16 %v993
    %v4262 = vunpack.c.h.b16 %v993
    %v4263 = vunpack.c.l.b16 %v994
    %v4264 = vunpack.c.h.b16 %v994
    %v4265 = vunpack.c.l.b16 %v995
    %v4266 = vunpack.c.h.b16 %v995
    %v4267 = vunpack.c.l.b16 %v996
    %v4268 = vunpack.c.h.b16 %v996
    %v4269 = vunpack.c.l.b16 %v997
    %v4270 = vunpack.c.h.b16 %v997
    %v4271 = vunpack.c.l.b16 %v998
    %v4272 = vunpack.c.h.b16 %v998
    %v4273 = vunpack.c.l.b16 %v999
    %v4274 = vunpack.c.h.b16 %v999
    %v4275 = vunpack.c.l.b16 %v1000
    %v4276 = vunpack.c.h.b16 %v1000
    %v4277 = vunpack.c.l.b16 %v1001
    %v4278 = vunpack.c.h.b16 %v1001
    %v4279 = vunpack.c.l.b16 %v1002
    %v4280 = vunpack.c.h.b16 %v1002
    %v4281 = vunpack.c.l.b16 %v1003
    %v4282 = vunpack.c.h.b16 %v1003
    %v4283 = vunpack.c.l.b16 %v1004
    %v4284 = vunpack.c.h.b16 %v1004
    %v4285 = vunpack.c.l.b16 %v1005
    %v4286 = vunpack.c.h.b16 %v1005
    %v4287 = vunpack.c.l.b16 %v1006
    %v4288 = vunpack.c.h.b16 %v1006
    %v4289 = vunpack.c.l.b16 %v1007
    %v4290 = vunpack.c.h.b16 %v1007
    %v4291 = vunpack.c.l.b16 %v1008
    %v4292 = vunpack.c.h.b16 %v1008
    %v4293 = vunpack.c.l.b16 %v1009
    %v4294 = vunpack.c.h.b16 %v1009
    %v4295 = vunpack.c.l.b16 %v1010
    %v4296 = vunpack.c.h.b16 %v1010
    %v4297 = vunpack.c.l.b16 %v1011
    %v4298 = vunpack.c.h.b16 %v1011
    %v4299 = vunpack.c.l.b16 %v1012
    %v4300 = vunpack.c.h.b16 %v1012
    %v4301 = vunpack.c.l.b16 %v1013
    %v4302 = vunpack.c.h.b16 %v1013
    %v4303 = vunpack.c.l.b16 %v1014
    %v4304 = vunpack.c.h.b16 %v1014
    %v4305 = vunpack.c.l.b16 %v1015
    %v4306 = vunpack.c.h.b16 %v1015
    %v4307 = vunpack.c.l.b16 %v1016
    %v4308 = vunpack.c.h.b16 %v1016
    %v4309 = vunpack.c.l.b16 %v1017
    %v4310 = vunpack.c.h.b16 %v1017
    %v4311 = vunpack.c.l.b16 %v1018
    %v4312 = vunpack.c.h.b16 %v1018
    %v4313 = vunpack.c.l.b16 %v1019
    %v4314 = vunpack.c.h.b16 %v1019
    %v4315 = vunpack.c.l.b16 %v1020
    %v4316 = vunpack.c.h.b16 %v1020
    %v4317 = vunpack.c.l.b16 %v1021
    %v4318 = vunpack.c.h.b16 %v1021
    %v4319 = vunpack.c.l.b16 %v1022
    %v4320 = vunpack.c.h.b16 %v1022
    %v4321 = vunpack.c.l.b16 %v1023
    %v4322 = vunpack.c.h.b16 %v1023
    %v4323 = vunpack.c.l.b16 %v1024
    %v4324 = vunpack.c.h.b16 %v1024
    %v4325 = vunpack.c.l.b16 %v1025
    %v4326 = vunpack.c.h.b16 %v1025
    %v4327 = vunpack.c.l.b16 %v1026
    %v4328 = vunpack.c.h.b16 %v1026
    %v4329 = vunpack.c.l.b16 %v1027
    %v4330 = vunpack.c.h.b16 %v1027
    %v4331 = vunpack.c.l.b16 %v1028
    %v4332 = vunpack.c.h.b16 %v1028
    %v4333 = vunpack.c.l.b16 %v1029
    %v4334 = vunpack.c.h.b16 %v1029
    %v4335 = vunpack.c.l.b16 %v1030
    %v4336 = vunpack.c.h.b16 %v1030
    %v4337 = vunpack.c.l.b16 %v1031
    %v4338 = vunpack.c.h.b16 %v1031
    %v4339 = vunpack.c.l.b16 %v1032
    %v4340 = vunpack.c.h.b16 %v1032
    %v4341 = vunpack.c.l.b16 %v1033
    %v4342 = vunpack.c.h.b16 %v1033
    %v4343 = vunpack.c.l.b16 %v1034
    %v4344 = vunpack.c.h.b16 %v1034
    %v4345 = vunpack.c.l.b16 %v1035
    %v4346 = vunpack.c.h.b16 %v1035
    %v4347 = vunpack.c.l.b16 %v1036
    %v4348 = vunpack.c.h.b16 %v1036
    %v4349 = vunpack.c.l.b16 %v1037
    %v4350 = vunpack.c.h.b16 %v1037
    %v4351 = vunpack.c.l.b16 %v1038
    %v4352 = vunpack.c.h.b16 %v1038
    %v4353 = vunpack.c.l.b16 %v1039
    %v4354 = vunpack.c.h.b16 %v1039
    %v4355 = vunpack.c.l.b16 %v1040
    %v4356 = vunpack.c.h.b16 %v1040
    %v4357 = vunpack.c.l.b16 %v1041
    %v4358 = vunpack.c.h.b16 %v1041
    %v4359 = vunpack.c.l.b16 %v1042
    %v4360 = vunpack.c.h.b16 %v1042
    %v4361 = vunpack.c.l.b16 %v1043
    %v4362 = vunpack.c.h.b16 %v1043
    %v4363 = vunpack.c.l.b16 %v1044
    %v4364 = vunpack.c.h.b16 %v1044
    %v4365 = vunpack.c.l.b16 %v1045
    %v4366 = vunpack.c.h.b16 %v1045
    %v4367 = vunpack.c.l.b16 %v1046
    %v4368 = vunpack.c.h.b16 %v1046
    %v4369 = vunpack.c.l.b16 %v1047
    %v4370 = vunpack.c.h.b16 %v1047
    %v4371 = vunpack.c.l.b16 %v1048
    %v4372 = vunpack.c.h.b16 %v1048
    %v4373 = vunpack.c.l.b16 %v1049
    %v4374 = vunpack.c.h.b16 %v1049
    %v4375 = vunpack.c.l.b16 %v1050
    %v4376 = vunpack.c.h.b16 %v1050
    %v4377 = vunpack.c.l.b16 %v1051
    %v4378 = vunpack.c.h.b16 %v1051
    %v4379 = vunpack.c.l.b16 %v1052
    %v4380 = vunpack.c.h.b16 %v1052
    %v4381 = vunpack.c.l.b16 %v1053
    %v4382 = vunpack.c.h.b16 %v1053
    %v4383 = vunpack.c.l.b16 %v1054
    %v4384 = vunpack.c.h.b16 %v1054
    %v4385 = vunpack.c.l.b16 %v1055
    %v4386 = vunpack.c.h.b16 %v1055
    %v4387 = vunpack.c.l.b16 %v1056
    %v4388 = vunpack.c.h.b16 %v1056
    %v4389 = vunpack.c.l.b16 %v1057
    %v4390 = vunpack.c.h.b16 %v1057
    %v4391 = vunpack.c.l.b16 %v1058
    %v4392 = vunpack.c.h.b16 %v1058
    %v4393 = vunpack.c.l.b16 %v1059
    %v4394 = vunpack.c.h.b16 %v1059
    %v4395 = vunpack.c.l.b16 %v1060
    %v4396 = vunpack.c.h.b16 %v1060
    %v4397 = vunpack.c.l.b16 %v1061
    %v4398 = vunpack.c.h.b16 %v1061
    %v4399 = vunpack.c.l.b16 %v1062
    %v4400 = vunpack.c.h.b16 %v1062
    %v4401 = vunpack.c.l.b16 %v1063
    %v4402 = vunpack.c.h.b16 %v1063
    %v4403 = vunpack.c.l.b16 %v1064
    %v4404 = vunpack.c.h.b16 %v1064
    %v4405 = vunpack.c.l.b16 %v1065
    %v4406 = vunpack.c.h.b16 %v1065
    %v4407 = vunpack.c.l.b16 %v1066
    %v4408 = vunpack.c.h.b16 %v1066
    %v4409 = vunpack.c.l.b16 %v1067
    %v4410 = vunpack.c.h.b16 %v1067
    %v4411 = vunpack.c.l.b16 %v1068
    %v4412 = vunpack.c.h.b16 %v1068
    %v4413 = vunpack.c.l.b16 %v1069
    %v4414 = vunpack.c.h.b16 %v1069
    %v4415 = vunpack.c.l.b16 %v1070
    %v4416 = vunpack.c.h.b16 %v1070
    %v4417 = vunpack.c.l.b16 %v1071
    %v4418 = vunpack.c.h.b16 %v1071
    %v4419 = vunpack.c.l.b16 %v1072
    %v4420 = vunpack.c.h.b16 %v1072
    %v4421 = vunpack.c.l.b16 %v1073
    %v4422 = vunpack.c.h.b16 %v1073
    %v4423 = vunpack.c.l.b16 %v1074
    %v4424 = vunpack.c.h.b16 %v1074
    %v4425 = vunpack.c.l.b16 %v1075
    %v4426 = vunpack.c.h.b16 %v1075
    %v4427 = vunpack.c.l.b16 %v1076
    %v4428 = vunpack.c.h.b16 %v1076
    %v4429 = vunpack.c.l.b16 %v1077
    %v4430 = vunpack.c.h.b16 %v1077
    %v4431 = vunpack.c.l.b16 %v1078
    %v4432 = vunpack.c.h.b16 %v1078
    %v4433 = vunpack.c.l.b16 %v1079
    %v4434 = vunpack.c.h.b16 %v1079
    %v4435 = vunpack.c.l.b16 %v1080
    %v4436 = vunpack.c.h.b16 %v1080
    %v4437 = vunpack.c.l.b16 %v1081
    %v4438 = vunpack.c.h.b16 %v1081
    %v4439 = vunpack.c.l.b16 %v1082
    %v4440 = vunpack.c.h.b16 %v1082
    %v4441 = vunpack.c.l.b16 %v1083
    %v4442 = vunpack.c.h.b16 %v1083
    %v4443 = vunpack.c.l.b16 %v1084
    %v4444 = vunpack.c.h.b16 %v1084
    %v4445 = vunpack.c.l.b16 %v1085
    %v4446 = vunpack.c.h.b16 %v1085
    %v4447 = vunpack.c.l.b16 %v1086
    %v4448 = vunpack.c.h.b16 %v1086
    %v4449 = vunpack.c.l.b16 %v1087
    %v4450 = vunpack.c.h.b16 %v1087
    %v4451 = vunpack.c.l.b16 %v1088
    %v4452 = vunpack.c.h.b16 %v1088
    %v4453 = vunpack.c.l.b16 %v1089
    %v4454 = vunpack.c.h.b16 %v1089
    %v4455 = vunpack.c.l.b16 %v1090
    %v4456 = vunpack.c.h.b16 %v1090
    %v4457 = vunpack.c.l.b16 %v1091
    %v4458 = vunpack.c.h.b16 %v1091
    %v4459 = vunpack.c.l.b16 %v1092
    %v4460 = vunpack.c.h.b16 %v1092
    %v4461 = vunpack.c.l.b16 %v1093
    %v4462 = vunpack.c.h.b16 %v1093
    %v4463 = vunpack.c.l.b16 %v1094
    %v4464 = vunpack.c.h.b16 %v1094
    %v4465 = vunpack.c.l.b16 %v1095
    %v4466 = vunpack.c.h.b16 %v1095
    %v4467 = vunpack.c.l.b16 %v1096
    %v4468 = vunpack.c.h.b16 %v1096
    %v4469 = vunpack.c.l.b16 %v1097
    %v4470 = vunpack.c.h.b16 %v1097
    %v4471 = vunpack.c.l.b16 %v1098
    %v4472 = vunpack.c.h.b16 %v1098
    %v4473 = vunpack.c.l.b16 %v1099
    %v4474 = vunpack.c.h.b16 %v1099
    %v4475 = vunpack.c.l.b16 %v1100
    %v4476 = vunpack.c.h.b16 %v1100
    %v4477 = vunpack.c.l.b16 %v1101
    %v4478 = vunpack.c.h.b16 %v1101
    %v4479 = vunpack.c.l.b16 %v1102
    %v4480 = vunpack.c.h.b16 %v1102
    %v4481 = vunpack.c.l.b16 %v1103
    %v4482 = vunpack.c.h.b16 %v1103
    %v4483 = vunpack.c.l.b16 %v1104
    %v4484 = vunpack.c.h.b16 %v1104
    %v4485 = vunpack.c.l.b16 %v1105
    %v4486 = vunpack.c.h.b16 %v1105
    %v4487 = vunpack.c.l.b16 %v1106
    %v4488 = vunpack.c.h.b16 %v1106
    %v4489 = vunpack.c.l.b16 %v1107
    %v4490 = vunpack.c.h.b16 %v1107
    %v4491 = vunpack.c.l.b16 %v1108
    %v4492 = vunpack.c.h.b16 %v1108
    %v4493 = vunpack.c.l.b16 %v1109
    %v4494 = vunpack.c.h.b16 %v1109
    %v4495 = vunpack.c.l.b16 %v1110
    %v4496 = vunpack.c.h.b16 %v1110
    %v4497 = vunpack.c.l.b16 %v1111
    %v4498 = vunpack.c.h.b16 %v1111
    %v4499 = vunpack.c.l.b16 %v1112
    %v4500 = vunpack.c.h.b16 %v1112
    %v4501 = vunpack.c.l.b16 %v1113
    %v4502 = vunpack.c.h.b16 %v1113
    %v4503 = vunpack.c.l.b16 %v1114
    %v4504 = vunpack.c.h.b16 %v1114
    %v4505 = vunpack.c.l.b16 %v1115
    %v4506 = vunpack.c.h.b16 %v1115
    %v4507 = vunpack.c.l.b16 %v1116
    %v4508 = vunpack.c.h.b16 %v1116
    %v4509 = vunpack.c.l.b16 %v1117
    %v4510 = vunpack.c.h.b16 %v1117
    %v4511 = vunpack.c.l.b16 %v1118
    %v4512 = vunpack.c.h.b16 %v1118
    %v4513 = vunpack.c.l.b16 %v1119
    %v4514 = vunpack.c.h.b16 %v1119
    %v4515 = vunpack.c.l.b16 %v1120
    %v4516 = vunpack.c.h.b16 %v1120
    %v4517 = vunpack.c.l.b16 %v1121
    %v4518 = vunpack.c.h.b16 %v1121
    %v4519 = vunpack.c.l.b16 %v1122
    %v4520 = vunpack.c.h.b16 %v1122
    %v4521 = vunpack.c.l.b16 %v1123
    %v4522 = vunpack.c.h.b16 %v1123
    %v4523 = vunpack.c.l.b16 %v1124
    %v4524 = vunpack.c.h.b16 %v1124
    %v4525 = vunpack.c.l.b16 %v1125
    %v4526 = vunpack.c.h.b16 %v1125
    %v4527 = vunpack.c.l.b16 %v1126
    %v4528 = vunpack.c.h.b16 %v1126
    %v4529 = vunpack.c.l.b16 %v1127
    %v4530 = vunpack.c.h.b16 %v1127
    %v4531 = vunpack.c.l.b16 %v1128
    %v4532 = vunpack.c.h.b16 %v1128
    %v4533 = vunpack.c.l.b16 %v1129
    %v4534 = vunpack.c.h.b16 %v1129
    %v4535 = vunpack.c.l.b16 %v1130
    %v4536 = vunpack.c.h.b16 %v1130
    %v4537 = vunpack.c.l.b16 %v1131
    %v4538 = vunpack.c.h.b16 %v1131
    %v4539 = vunpack.c.l.b16 %v1132
    %v4540 = vunpack.c.h.b16 %v1132
    %v4541 = vunpack.c.l.b16 %v1133
    %v4542 = vunpack.c.h.b16 %v1133
    %v4543 = vunpack.c.l.b16 %v1134
    %v4544 = vunpack.c.h.b16 %v1134
    %v4545 = vunpack.c.l.b16 %v1135
    %v4546 = vunpack.c.h.b16 %v1135
    %v4547 = vunpack.c.l.b16 %v1136
    %v4548 = vunpack.c.h.b16 %v1136
    %v4549 = vunpack.c.l.b16 %v1137
    %v4550 = vunpack.c.h.b16 %v1137
    %v4551 = vunpack.c.l.b16 %v1138
    %v4552 = vunpack.c.h.b16 %v1138
    %v4553 = vunpack.c.l.b16 %v1139
    %v4554 = vunpack.c.h.b16 %v1139
    %v4555 = vunpack.c.l.b16 %v1140
    %v4556 = vunpack.c.h.b16 %v1140
    %v4557 = vunpack.c.l.b16 %v1141
    %v4558 = vunpack.c.h.b16 %v1141
    %v4559 = vunpack.c.l.b16 %v1142
    %v4560 = vunpack.c.h.b16 %v1142
    %v4561 = vunpack.c.l.b16 %v1143
    %v4562 = vunpack.c.h.b16 %v1143
    %v4563 = vunpack.c.l.b16 %v1144
    %v4564 = vunpack.c.h.b16 %v1144
    %v4565 = vunpack.c.l.b16 %v1145
    %v4566 = vunpack.c.h.b16 %v1145
    %v4567 = vunpack.c.l.b16 %v1146
    %v4568 = vunpack.c.h.b16 %v1146
    %v4569 = vunpack.c.l.b16 %v1147
    %v4570 = vunpack.c.h.b16 %v1147
    %v4571 = vunpack.c.l.b16 %v1148
    %v4572 = vunpack.c.h.b16 %v1148
    %v4573 = vunpack.c.l.b16 %v1149
    %v4574 = vunpack.c.h.b16 %v1149
    %v4575 = vunpack.c.l.b16 %v1150
    %v4576 = vunpack.c.h.b16 %v1150
    %v4577 = vunpack.c.l.b16 %v1151
    %v4578 = vunpack.c.h.b16 %v1151
    %v4579 = vunpack.c.l.b16 %v1152
    %v4580 = vunpack.c.h.b16 %v1152
    %v4581 = vunpack.c.l.b16 %v1153
    %v4582 = vunpack.c.h.b16 %v1153
    %v4583 = vunpack.c.l.b16 %v1154
    %v4584 = vunpack.c.h.b16 %v1154
    %v4585 = vunpack.c.l.b16 %v1155
    %v4586 = vunpack.c.h.b16 %v1155
    %v4587 = vunpack.c.l.b16 %v1156
    %v4588 = vunpack.c.h.b16 %v1156
    %v4589 = vunpack.c.l.b16 %v1157
    %v4590 = vunpack.c.h.b16 %v1157
    %v4591 = vunpack.c.l.b16 %v1158
    %v4592 = vunpack.c.h.b16 %v1158
    %v4593 = vunpack.c.l.b16 %v1159
    %v4594 = vunpack.c.h.b16 %v1159
    %v4595 = vunpack.c.l.b16 %v1160
    %v4596 = vunpack.c.h.b16 %v1160
    %v4597 = vunpack.c.l.b16 %v1161
    %v4598 = vunpack.c.h.b16 %v1161
    %v4599 = vunpack.c.l.b16 %v1162
    %v4600 = vunpack.c.h.b16 %v1162
    %v4601 = vunpack.c.l.b16 %v1163
    %v4602 = vunpack.c.h.b16 %v1163
    %v4603 = vunpack.c.l.b16 %v1164
    %v4604 = vunpack.c.h.b16 %v1164
    %v4605 = vunpack.c.l.b16 %v1165
    %v4606 = vunpack.c.h.b16 %v1165
    %v4607 = vunpack.c.l.b16 %v1166
    %v4608 = vunpack.c.h.b16 %v1166
    %v4609 = vunpack.c.l.b16 %v1167
    %v4610 = vunpack.c.h.b16 %v1167
    %v4611 = vunpack.c.l.b16 %v1168
    %v4612 = vunpack.c.h.b16 %v1168
    %v4613 = vunpack.c.l.b16 %v1169
    %v4614 = vunpack.c.h.b16 %v1169
    %v4615 = vunpack.c.l.b16 %v1170
    %v4616 = vunpack.c.h.b16 %v1170
    %v4617 = vunpack.c.l.b16 %v1171
    %v4618 = vunpack.c.h.b16 %v1171
    %v4619 = vunpack.c.l.b16 %v1172
    %v4620 = vunpack.c.h.b16 %v1172
    %v4621 = vunpack.c.l.b16 %v1173
    %v4622 = vunpack.c.h.b16 %v1173
    %v4623 = vunpack.c.l.b16 %v1174
    %v4624 = vunpack.c.h.b16 %v1174
    %v4625 = vunpack.c.l.b16 %v1175
    %v4626 = vunpack.c.h.b16 %v1175
    %v4627 = vunpack.c.l.b16 %v1176
    %v4628 = vunpack.c.h.b16 %v1176
    %v4629 = vunpack.c.l.b16 %v1177
    %v4630 = vunpack.c.h.b16 %v1177
    %v4631 = vunpack.c.l.b16 %v1178
    %v4632 = vunpack.c.h.b16 %v1178
    %v4633 = vunpack.c.l.b16 %v1179
    %v4634 = vunpack.c.h.b16 %v1179
    %v4635 = vunpack.c.l.b16 %v1180
    %v4636 = vunpack.c.h.b16 %v1180
    %v4637 = vunpack.c.l.b16 %v1181
    %v4638 = vunpack.c.h.b16 %v1181
    %v4639 = vunpack.c.l.b16 %v1182
    %v4640 = vunpack.c.h.b16 %v1182
    %v4641 = vunpack.c.l.b16 %v1183
    %v4642 = vunpack.c.h.b16 %v1183
    %v4643 = vunpack.c.l.b16 %v1184
    %v4644 = vunpack.c.h.b16 %v1184
    %v4645 = vunpack.c.l.b16 %v1185
    %v4646 = vunpack.c.h.b16 %v1185
    %v4647 = vunpack.c.l.b16 %v1186
    %v4648 = vunpack.c.h.b16 %v1186
    %v4649 = vunpack.c.l.b16 %v1187
    %v4650 = vunpack.c.h.b16 %v1187
    %v4651 = vunpack.c.l.b16 %v1188
    %v4652 = vunpack.c.h.b16 %v1188
    %v4653 = vunpack.c.l.b16 %v1189
    %v4654 = vunpack.c.h.b16 %v1189
    %v4655 = vunpack.c.l.b16 %v1190
    %v4656 = vunpack.c.h.b16 %v1190
    %v4657 = vunpack.c.l.b16 %v1191
    %v4658 = vunpack.c.h.b16 %v1191
    %v4659 = vunpack.c.l.b16 %v1192
    %v4660 = vunpack.c.h.b16 %v1192
    %v4661 = vunpack.c.l.b16 %v1193
    %v4662 = vunpack.c.h.b16 %v1193
    %v4663 = vunpack.c.l.b16 %v1194
    %v4664 = vunpack.c.h.b16 %v1194
    %v4665 = vunpack.c.l.b16 %v1195
    %v4666 = vunpack.c.h.b16 %v1195
    %v4667 = vunpack.c.l.b16 %v1196
    %v4668 = vunpack.c.h.b16 %v1196
    %v4669 = vunpack.c.l.b16 %v1197
    %v4670 = vunpack.c.h.b16 %v1197
    %v4671 = vunpack.c.l.b16 %v1198
    %v4672 = vunpack.c.h.b16 %v1198
    %v4673 = vunpack.c.l.b16 %v1199
    %v4674 = vunpack.c.h.b16 %v1199
    %v4675 = vunpack.c.l.b16 %v1200
    %v4676 = vunpack.c.h.b16 %v1200
    %v4677 = vunpack.c.l.b16 %v1201
    %v4678 = vunpack.c.h.b16 %v1201
    %v4679 = vunpack.c.l.b16 %v1202
    %v4680 = vunpack.c.h.b16 %v1202
    %v4681 = vunpack.c.l.b16 %v1203
    %v4682 = vunpack.c.h.b16 %v1203
    %v4683 = vunpack.c.l.b16 %v1204
    %v4684 = vunpack.c.h.b16 %v1204
    %v4685 = vunpack.c.l.b16 %v1205
    %v4686 = vunpack.c.h.b16 %v1205
    %v4687 = vunpack.c.l.b16 %v1206
    %v4688 = vunpack.c.h.b16 %v1206
    %v4689 = vunpack.c.l.b16 %v1207
    %v4690 = vunpack.c.h.b16 %v1207
    %v4691 = vunpack.c.l.b16 %v1208
    %v4692 = vunpack.c.h.b16 %v1208
    %v4693 = vunpack.c.l.b16 %v1209
    %v4694 = vunpack.c.h.b16 %v1209
    %v4695 = vunpack.c.l.b16 %v1210
    %v4696 = vunpack.c.h.b16 %v1210
    %v4697 = vunpack.c.l.b16 %v1211
    %v4698 = vunpack.c.h.b16 %v1211
    %v4699 = vunpack.c.l.b16 %v1212
    %v4700 = vunpack.c.h.b16 %v1212
    %v4701 = vunpack.c.l.b16 %v1213
    %v4702 = vunpack.c.h.b16 %v1213
    %v4703 = vunpack.c.l.b16 %v1214
    %v4704 = vunpack.c.h.b16 %v1214
    %v4705 = vunpack.c.l.b16 %v1215
    %v4706 = vunpack.c.h.b16 %v1215
    %v4707 = vunpack.c.l.b16 %v1216
    %v4708 = vunpack.c.h.b16 %v1216
    %v4709 = vunpack.c.l.b16 %v1217
    %v4710 = vunpack.c.h.b16 %v1217
    %v4711 = vunpack.c.l.b16 %v1218
    %v4712 = vunpack.c.h.b16 %v1218
    %v4713 = vunpack.c.l.b16 %v1219
    %v4714 = vunpack.c.h.b16 %v1219
    %v4715 = vunpack.c.l.b16 %v1220
    %v4716 = vunpack.c.h.b16 %v1220
    %v4717 = vunpack.c.l.b16 %v1221
    %v4718 = vunpack.c.h.b16 %v1221
    %v4719 = vunpack.c.l.b16 %v1222
    %v4720 = vunpack.c.h.b16 %v1222
    %v4721 = vunpack.c.l.b16 %v1223
    %v4722 = vunpack.c.h.b16 %v1223
    %v4723 = vunpack.c.l.b16 %v1224
    %v4724 = vunpack.c.h.b16 %v1224
    %v4725 = vunpack.c.l.b16 %v1225
    %v4726 = vunpack.c.h.b16 %v1225
    %v4727 = vunpack.c.l.b16 %v1226
    %v4728 = vunpack.c.h.b16 %v1226
    %v4729 = vunpack.c.l.b16 %v1227
    %v4730 = vunpack.c.h.b16 %v1227
    %v4731 = vunpack.c.l.b16 %v1228
    %v4732 = vunpack.c.h.b16 %v1228
    %v4733 = vunpack.c.l.b16 %v1229
    %v4734 = vunpack.c.h.b16 %v1229
    %v4735 = vunpack.c.l.b16 %v1230
    %v4736 = vunpack.c.h.b16 %v1230
    %v4737 = vunpack.c.l.b16 %v1231
    %v4738 = vunpack.c.h.b16 %v1231
    %v4739 = vunpack.c.l.b16 %v1232
    %v4740 = vunpack.c.h.b16 %v1232
    %v4741 = vunpack.c.l.b16 %v1233
    %v4742 = vunpack.c.h.b16 %v1233
    %v4743 = vunpack.c.l.b16 %v1234
    %v4744 = vunpack.c.h.b16 %v1234
    %v4745 = vunpack.c.l.b16 %v1235
    %v4746 = vunpack.c.h.b16 %v1235
    %v4747 = vunpack.c.l.b16 %v1236
    %v4748 = vunpack.c.h.b16 %v1236
    %v4749 = vunpack.c.l.b16 %v1237
    %v4750 = vunpack.c.h.b16 %v1237
    %v4751 = vunpack.c.l.b16 %v1238
    %v4752 = vunpack.c.h.b16 %v1238
    %v4753 = vunpack.c.l.b16 %v1239
    %v4754 = vunpack.c.h.b16 %v1239
    %v4755 = vunpack.c.l.b16 %v1240
    %v4756 = vunpack.c.h.b16 %v1240
    %v4757 = vunpack.c.l.b16 %v1241
    %v4758 = vunpack.c.h.b16 %v1241
    %v4759 = vunpack.c.l.b16 %v1242
    %v4760 = vunpack.c.h.b16 %v1242
    %v4761 = vunpack.c.l.b16 %v1243
    %v4762 = vunpack.c.h.b16 %v1243
    %v4763 = vunpack.c.l.b16 %v1244
    %v4764 = vunpack.c.h.b16 %v1244
    %v4765 = vunpack.c.l.b16 %v1245
    %v4766 = vunpack.c.h.b16 %v1245
    %v4767 = vunpack.c.l.b16 %v1246
    %v4768 = vunpack.c.h.b16 %v1246
    %v4769 = vunpack.c.l.b16 %v1247
    %v4770 = vunpack.c.h.b16 %v1247
    %v4771 = vunpack.c.l.b16 %v1248
    %v4772 = vunpack.c.h.b16 %v1248
    %v4773 = vunpack.c.l.b16 %v1249
    %v4774 = vunpack.c.h.b16 %v1249
    %v4775 = vunpack.c.l.b16 %v1250
    %v4776 = vunpack.c.h.b16 %v1250
    %v4777 = vunpack.c.l.b16 %v1251
    %v4778 = vunpack.c.h.b16 %v1251
    %v4779 = vunpack.c.l.b16 %v1252
    %v4780 = vunpack.c.h.b16 %v1252
    %v4781 = vunpack.c.l.b16 %v1253
    %v4782 = vunpack.c.h.b16 %v1253
    %v4783 = vunpack.c.l.b16 %v1254
    %v4784 = vunpack.c.h.b16 %v1254
    %v4785 = vunpack.c.l.b16 %v1255
    %v4786 = vunpack.c.h.b16 %v1255
    %v4787 = vunpack.c.l.b16 %v1256
    %v4788 = vunpack.c.h.b16 %v1256
    %v4789 = vunpack.c.l.b16 %v1257
    %v4790 = vunpack.c.h.b16 %v1257
    %v4791 = vunpack.c.l.b16 %v1258
    %v4792 = vunpack.c.h.b16 %v1258
    %v4793 = vunpack.c.l.b16 %v1259
    %v4794 = vunpack.c.h.b16 %v1259
    %v4795 = vunpack.c.l.b16 %v1260
    %v4796 = vunpack.c.h.b16 %v1260
    %v4797 = vunpack.c.l.b16 %v1261
    %v4798 = vunpack.c.h.b16 %v1261
    %v4799 = vunpack.c.l.b16 %v1262
    %v4800 = vunpack.c.h.b16 %v1262
    %v4801 = vunpack.c.l.b16 %v1263
    %v4802 = vunpack.c.h.b16 %v1263
    %v4803 = vunpack.c.l.b16 %v1264
    %v4804 = vunpack.c.h.b16 %v1264
    %v4805 = vunpack.c.l.b16 %v1265
    %v4806 = vunpack.c.h.b16 %v1265
    %v4807 = vunpack.c.l.b16 %v1266
    %v4808 = vunpack.c.h.b16 %v1266
    %v4809 = vunpack.c.l.b16 %v1267
    %v4810 = vunpack.c.h.b16 %v1267
    %v4811 = vunpack.c.l.b16 %v1268
    %v4812 = vunpack.c.h.b16 %v1268
    %v4813 = vunpack.c.l.b16 %v1269
    %v4814 = vunpack.c.h.b16 %v1269
    %v4815 = vunpack.c.l.b16 %v1270
    %v4816 = vunpack.c.h.b16 %v1270
    %v4817 = vunpack.c.l.b16 %v1271
    %v4818 = vunpack.c.h.b16 %v1271
    %v4819 = vunpack.c.l.b16 %v1272
    %v4820 = vunpack.c.h.b16 %v1272
    %v4821 = vunpack.c.l.b16 %v1273
    %v4822 = vunpack.c.h.b16 %v1273
    %v4823 = vunpack.c.l.b16 %v1274
    %v4824 = vunpack.c.h.b16 %v1274
    %v4825 = vunpack.c.l.b16 %v1275
    %v4826 = vunpack.c.h.b16 %v1275
    %v4827 = vunpack.c.l.b16 %v1276
    %v4828 = vunpack.c.h.b16 %v1276
    %v4829 = vunpack.c.l.b16 %v1277
    %v4830 = vunpack.c.h.b16 %v1277
    %v4831 = vunpack.c.l.b16 %v1278
    %v4832 = vunpack.c.h.b16 %v1278
    %v4833 = vunpack.c.l.b16 %v1279
    %v4834 = vunpack.c.h.b16 %v1279
    %v4835 = vunpack.c.l.b16 %v1280
    %v4836 = vunpack.c.h.b16 %v1280
    %v4837 = vunpack.c.l.b16 %v1281
    %v4838 = vunpack.c.h.b16 %v1281
    %v4839 = vunpack.c.l.b16 %v1282
    %v4840 = vunpack.c.h.b16 %v1282
    %v4841 = vunpack.c.l.b16 %v1283
    %v4842 = vunpack.c.h.b16 %v1283
    %v4843 = vunpack.c.l.b16 %v1284
    %v4844 = vunpack.c.h.b16 %v1284
    %v4845 = vunpack.c.l.b16 %v1285
    %v4846 = vunpack.c.h.b16 %v1285
    %v4847 = vunpack.c.l.b16 %v1286
    %v4848 = vunpack.c.h.b16 %v1286
    %v4849 = vunpack.c.l.b16 %v1287
    %v4850 = vunpack.c.h.b16 %v1287
    %v4851 = vunpack.c.l.b16 %v1288
    %v4852 = vunpack.c.h.b16 %v1288
    %v4853 = vunpack.c.l.b16 %v1289
    %v4854 = vunpack.c.h.b16 %v1289
    %v4855 = vunpack.c.l.b16 %v1290
    %v4856 = vunpack.c.h.b16 %v1290
    %v4857 = vunpack.c.l.b16 %v1291
    %v4858 = vunpack.c.h.b16 %v1291
    %v4859 = vunpack.c.l.b16 %v1292
    %v4860 = vunpack.c.h.b16 %v1292
    %v4861 = vunpack.c.l.b16 %v1293
    %v4862 = vunpack.c.h.b16 %v1293
    %v4863 = vunpack.c.l.b16 %v1294
    %v4864 = vunpack.c.h.b16 %v1294
    %v4865 = vunpack.c.l.b16 %v1295
    %v4866 = vunpack.c.h.b16 %v1295
    %v4867 = vunpack.c.l.b16 %v1296
    %v4868 = vunpack.c.h.b16 %v1296
    %v4869 = vunpack.c.l.b16 %v1297
    %v4870 = vunpack.c.h.b16 %v1297
    %v4871 = vunpack.c.l.b16 %v1298
    %v4872 = vunpack.c.h.b16 %v1298
    %v4873 = vunpack.c.l.b16 %v1299
    %v4874 = vunpack.c.h.b16 %v1299
    %v4875 = vunpack.c.l.b16 %v1300
    %v4876 = vunpack.c.h.b16 %v1300
    %v4877 = vunpack.c.l.b16 %v1301
    %v4878 = vunpack.c.h.b16 %v1301
    %v4879 = vunpack.c.l.b16 %v1302
    %v4880 = vunpack.c.h.b16 %v1302
    %v4881 = vunpack.c.l.b16 %v1303
    %v4882 = vunpack.c.h.b16 %v1303
    %v4883 = vunpack.c.l.b16 %v1304
    %v4884 = vunpack.c.h.b16 %v1304
    %v4885 = vunpack.c.l.b16 %v1305
    %v4886 = vunpack.c.h.b16 %v1305
    %v4887 = vunpack.c.l.b16 %v1306
    %v4888 = vunpack.c.h.b16 %v1306
    %v4889 = vunpack.c.l.b16 %v1307
    %v4890 = vunpack.c.h.b16 %v1307
    %v4891 = vunpack.c.l.b16 %v1308
    %v4892 = vunpack.c.h.b16 %v1308
    %v4893 = vunpack.c.l.b16 %v1309
    %v4894 = vunpack.c.h.b16 %v1309
    %v4895 = vunpack.c.l.b16 %v1310
    %v4896 = vunpack.c.h.b16 %v1310
    %v4897 = vunpack.c.l.b16 %v1311
    %v4898 = vunpack.c.h.b16 %v1311
    %v4899 = vunpack.c.l.b16 %v1312
    %v4900 = vunpack.c.h.b16 %v1312
    %v4901 = vunpack.c.l.b16 %v1313
    %v4902 = vunpack.c.h.b16 %v1313
    %v4903 = vunpack.c.l.b16 %v1314
    %v4904 = vunpack.c.h.b16 %v1314
    %v4905 = vunpack.c.l.b16 %v1315
    %v4906 = vunpack.c.h.b16 %v1315
    %v4907 = vunpack.c.l.b16 %v1316
    %v4908 = vunpack.c.h.b16 %v1316
    %v4909 = vunpack.c.l.b16 %v1317
    %v4910 = vunpack.c.h.b16 %v1317
    %v4911 = vunpack.c.l.b16 %v1318
    %v4912 = vunpack.c.h.b16 %v1318
    %v4913 = vunpack.c.l.b16 %v1319
    %v4914 = vunpack.c.h.b16 %v1319
    %v4915 = vunpack.c.l.b16 %v1320
    %v4916 = vunpack.c.h.b16 %v1320
    %v4917 = vunpack.c.l.b16 %v1321
    %v4918 = vunpack.c.h.b16 %v1321
    %v4919 = vunpack.c.l.b16 %v1322
    %v4920 = vunpack.c.h.b16 %v1322
    %v4921 = vunpack.c.l.b16 %v1323
    %v4922 = vunpack.c.h.b16 %v1323
    %v4923 = vunpack.c.l.b16 %v1324
    %v4924 = vunpack.c.h.b16 %v1324
    %v4925 = vunpack.c.l.b16 %v1325
    %v4926 = vunpack.c.h.b16 %v1325
    %v4927 = vunpack.c.l.b16 %v1326
    %v4928 = vunpack.c.h.b16 %v1326
    %v4929 = vunpack.c.l.b16 %v1327
    %v4930 = vunpack.c.h.b16 %v1327
    %v4931 = vunpack.c.l.b16 %v1328
    %v4932 = vunpack.c.h.b16 %v1328
    %v4933 = vunpack.c.l.b16 %v1329
    %v4934 = vunpack.c.h.b16 %v1329
    %v4935 = vunpack.c.l.b16 %v1330
    %v4936 = vunpack.c.h.b16 %v1330
    %v4937 = vunpack.c.l.b16 %v1331
    %v4938 = vunpack.c.h.b16 %v1331
    %v4939 = vunpack.c.l.b16 %v1332
    %v4940 = vunpack.c.h.b16 %v1332
    %v4941 = vunpack.c.l.b16 %v1333
    %v4942 = vunpack.c.h.b16 %v1333
    %v4943 = vunpack.c.l.b16 %v1334
    %v4944 = vunpack.c.h.b16 %v1334
    %v4945 = vunpack.c.l.b16 %v1335
    %v4946 = vunpack.c.h.b16 %v1335
    %v4947 = vunpack.c.l.b16 %v1336
    %v4948 = vunpack.c.h.b16 %v1336
    %v4949 = vunpack.c.l.b16 %v1337
    %v4950 = vunpack.c.h.b16 %v1337
    %v4951 = vunpack.c.l.b16 %v1338
    %v4952 = vunpack.c.h.b16 %v1338
    %v4953 = vunpack.c.l.b16 %v1339
    %v4954 = vunpack.c.h.b16 %v1339
    %v4955 = vunpack.c.l.b16 %v1340
    %v4956 = vunpack.c.h.b16 %v1340
    %v4957 = vunpack.c.l.b16 %v1341
    %v4958 = vunpack.c.h.b16 %v1341
    %v4959 = vunpack.c.l.b16 %v1342
    %v4960 = vunpack.c.h.b16 %v1342
    %v4961 = vunpack.c.l.b16 %v1343
    %v4962 = vunpack.c.h.b16 %v1343
    %v4963 = vunpack.c.l.b16 %v1344
    %v4964 = vunpack.c.h.b16 %v1344
    %v4965 = vunpack.c.l.b16 %v1345
    %v4966 = vunpack.c.h.b16 %v1345
    %v4967 = vunpack.c.l.b16 %v1346
    %v4968 = vunpack.c.h.b16 %v1346
    %v4969 = vunpack.c.l.b16 %v1347
    %v4970 = vunpack.c.h.b16 %v1347
    %v4971 = vunpack.c.l.b16 %v1348
    %v4972 = vunpack.c.h.b16 %v1348
    %v4973 = vunpack.c.l.b16 %v1349
    %v4974 = vunpack.c.h.b16 %v1349
    %v4975 = vunpack.c.l.b16 %v1350
    %v4976 = vunpack.c.h.b16 %v1350
    %v4977 = vunpack.c.l.b16 %v1351
    %v4978 = vunpack.c.h.b16 %v1351
    %v4979 = vunpack.c.l.b16 %v1352
    %v4980 = vunpack.c.h.b16 %v1352
    %v4981 = vunpack.c.l.b16 %v1353
    %v4982 = vunpack.c.h.b16 %v1353
    %v4983 = vunpack.c.l.b16 %v1354
    %v4984 = vunpack.c.h.b16 %v1354
    %v4985 = vunpack.c.l.b16 %v1355
    %v4986 = vunpack.c.h.b16 %v1355
    %v4987 = vunpack.c.l.b16 %v1356
    %v4988 = vunpack.c.h.b16 %v1356
    %v4989 = vunpack.c.l.b16 %v1357
    %v4990 = vunpack.c.h.b16 %v1357
    %v4991 = vunpack.c.l.b16 %v1358
    %v4992 = vunpack.c.h.b16 %v1358
    %v4993 = vunpack.c.l.b16 %v1359
    %v4994 = vunpack.c.h.b16 %v1359
    %v4995 = vunpack.c.l.b16 %v1360
    %v4996 = vunpack.c.h.b16 %v1360
    %v4997 = vunpack.c.l.b16 %v1361
    %v4998 = vunpack.c.h.b16 %v1361
    %v4999 = vunpack.c.l.b16 %v1362
    %v5000 = vunpack.c.h.b16 %v1362
    %v5001 = vunpack.c.l.b16 %v1363
    %v5002 = vunpack.c.h.b16 %v1363
    %v5003 = vunpack.c.l.b16 %v1364
    %v5004 = vunpack.c.h.b16 %v1364
    %v5005 = vunpack.c.l.b16 %v1365
    %v5006 = vunpack.c.h.b16 %v1365
    %v5007 = vunpack.c.l.b16 %v1366
    %v5008 = vunpack.c.h.b16 %v1366
    %v5009 = vunpack.c.l.b16 %v1367
    %v5010 = vunpack.c.h.b16 %v1367
    %v5011 = vunpack.c.l.b16 %v1368
    %v5012 = vunpack.c.h.b16 %v1368
    %v5013 = vunpack.c.l.b16 %v1369
    %v5014 = vunpack.c.h.b16 %v1369
    %v5015 = vunpack.c.l.b16 %v1370
    %v5016 = vunpack.c.h.b16 %v1370
    %v5017 = vunpack.c.l.b16 %v1371
    %v5018 = vunpack.c.h.b16 %v1371
    %v5019 = vunpack.c.l.b16 %v1372
    %v5020 = vunpack.c.h.b16 %v1372
    %v5021 = vunpack.c.l.b16 %v1373
    %v5022 = vunpack.c.h.b16 %v1373
    %v5023 = vunpack.c.l.b16 %v1374
    %v5024 = vunpack.c.h.b16 %v1374
    %v5025 = vunpack.c.l.b16 %v1375
    %v5026 = vunpack.c.h.b16 %v1375
    %v5027 = vunpack.c.l.b16 %v1376
    %v5028 = vunpack.c.h.b16 %v1376
    %v5029 = vunpack.c.l.b16 %v1377
    %v5030 = vunpack.c.h.b16 %v1377
    %v5031 = vunpack.c.l.b16 %v1378
    %v5032 = vunpack.c.h.b16 %v1378
    %v5033 = vunpack.c.l.b16 %v1379
    %v5034 = vunpack.c.h.b16 %v1379
    %v5035 = vunpack.c.l.b16 %v1380
    %v5036 = vunpack.c.h.b16 %v1380
    %v5037 = vunpack.c.l.b16 %v1381
    %v5038 = vunpack.c.h.b16 %v1381
    %v5039 = vunpack.c.l.b16 %v1382
    %v5040 = vunpack.c.h.b16 %v1382
    %v5041 = vunpack.c.l.b16 %v1383
    %v5042 = vunpack.c.h.b16 %v1383
    %v5043 = vunpack.c.l.b16 %v1384
    %v5044 = vunpack.c.h.b16 %v1384
    %v5045 = vunpack.c.l.b16 %v1385
    %v5046 = vunpack.c.h.b16 %v1385
    %v5047 = vunpack.c.l.b16 %v1386
    %v5048 = vunpack.c.h.b16 %v1386
    %v5049 = vunpack.c.l.b16 %v1387
    %v5050 = vunpack.c.h.b16 %v1387
    %v5051 = vunpack.c.l.b16 %v1388
    %v5052 = vunpack.c.h.b16 %v1388
    %v5053 = vunpack.c.l.b16 %v1389
    %v5054 = vunpack.c.h.b16 %v1389
    %v5055 = vunpack.c.l.b16 %v1390
    %v5056 = vunpack.c.h.b16 %v1390
    %v5057 = vunpack.c.l.b16 %v1391
    %v5058 = vunpack.c.h.b16 %v1391
    %v5059 = vunpack.c.l.b16 %v1392
    %v5060 = vunpack.c.h.b16 %v1392
    %v5061 = vunpack.c.l.b16 %v1393
    %v5062 = vunpack.c.h.b16 %v1393
    %v5063 = vunpack.c.l.b16 %v1394
    %v5064 = vunpack.c.h.b16 %v1394
    %v5065 = vunpack.c.l.b16 %v1395
    %v5066 = vunpack.c.h.b16 %v1395
    %v5067 = vunpack.c.l.b16 %v1396
    %v5068 = vunpack.c.h.b16 %v1396
    %v5069 = vunpack.c.l.b16 %v1397
    %v5070 = vunpack.c.h.b16 %v1397
    %v5071 = vunpack.c.l.b16 %v1398
    %v5072 = vunpack.c.h.b16 %v1398
    %v5073 = vunpack.c.l.b16 %v1399
    %v5074 = vunpack.c.h.b16 %v1399
    %v5075 = vunpack.c.l.b16 %v1400
    %v5076 = vunpack.c.h.b16 %v1400
    %v5077 = vunpack.c.l.b16 %v1401
    %v5078 = vunpack.c.h.b16 %v1401
    %v5079 = vunpack.c.l.b16 %v1402
    %v5080 = vunpack.c.h.b16 %v1402
    %v5081 = vunpack.c.l.b16 %v1403
    %v5082 = vunpack.c.h.b16 %v1403
    %v5083 = vunpack.c.l.b16 %v1404
    %v5084 = vunpack.c.h.b16 %v1404
    %v5085 = vunpack.c.l.b16 %v1405
    %v5086 = vunpack.c.h.b16 %v1405
    %v5087 = vunpack.c.l.b16 %v1406
    %v5088 = vunpack.c.h.b16 %v1406
    %v5089 = vunpack.c.l.b16 %v1407
    %v5090 = vunpack.c.h.b16 %v1407
    %v5091 = vunpack.c.l.b16 %v1408
    %v5092 = vunpack.c.h.b16 %v1408
    %v5093 = vunpack.c.l.b16 %v1409
    %v5094 = vunpack.c.h.b16 %v1409
    %v5095 = vunpack.c.l.b16 %v1410
    %v5096 = vunpack.c.h.b16 %v1410
    %v5097 = vunpack.c.l.b16 %v1411
    %v5098 = vunpack.c.h.b16 %v1411
    %v5099 = vunpack.c.l.b16 %v1412
    %v5100 = vunpack.c.h.b16 %v1412
    %v5101 = vunpack.c.l.b16 %v1413
    %v5102 = vunpack.c.h.b16 %v1413
    %v5103 = vunpack.c.l.b16 %v1414
    %v5104 = vunpack.c.h.b16 %v1414
    %v5105 = vunpack.c.l.b16 %v1415
    %v5106 = vunpack.c.h.b16 %v1415
    %v5107 = vunpack.c.l.b16 %v1416
    %v5108 = vunpack.c.h.b16 %v1416
    %v5109 = vunpack.c.l.b16 %v1417
    %v5110 = vunpack.c.h.b16 %v1417
    %v5111 = vunpack.c.l.b16 %v1418
    %v5112 = vunpack.c.h.b16 %v1418
    %v5113 = vunpack.c.l.b16 %v1419
    %v5114 = vunpack.c.h.b16 %v1419
    %v5115 = vunpack.c.l.b16 %v1420
    %v5116 = vunpack.c.h.b16 %v1420
    %v5117 = vunpack.c.l.b16 %v1421
    %v5118 = vunpack.c.h.b16 %v1421
    %v5119 = vunpack.c.l.b16 %v1422
    %v5120 = vunpack.c.h.b16 %v1422
    %v5121 = vunpack.c.l.b16 %v1423
    %v5122 = vunpack.c.h.b16 %v1423
    %v5123 = vunpack.c.l.b16 %v1424
    %v5124 = vunpack.c.h.b16 %v1424
    %v5125 = vunpack.c.l.b16 %v1425
    %v5126 = vunpack.c.h.b16 %v1425
    %v5127 = vunpack.c.l.b16 %v1426
    %v5128 = vunpack.c.h.b16 %v1426
    %v5129 = vunpack.c.l.b16 %v1427
    %v5130 = vunpack.c.h.b16 %v1427
    %v5131 = vunpack.c.l.b16 %v1428
    %v5132 = vunpack.c.h.b16 %v1428
    %v5133 = vunpack.c.l.b16 %v1429
    %v5134 = vunpack.c.h.b16 %v1429
    %v5135 = vunpack.c.l.b16 %v1430
    %v5136 = vunpack.c.h.b16 %v1430
    %v5137 = vunpack.c.l.b16 %v1431
    %v5138 = vunpack.c.h.b16 %v1431
    %v5139 = vunpack.c.l.b16 %v1432
    %v5140 = vunpack.c.h.b16 %v1432
    %v5141 = vunpack.c.l.b16 %v1433
    %v5142 = vunpack.c.h.b16 %v1433
    %v5143 = vunpack.c.l.b16 %v1434
    %v5144 = vunpack.c.h.b16 %v1434
    %v5145 = vunpack.c.l.b16 %v1435
    %v5146 = vunpack.c.h.b16 %v1435
    %v5147 = vunpack.c.l.b16 %v1436
    %v5148 = vunpack.c.h.b16 %v1436
    %v5149 = vunpack.c.l.b16 %v1437
    %v5150 = vunpack.c.h.b16 %v1437
    %v5151 = vunpack.c.l.b16 %v1438
    %v5152 = vunpack.c.h.b16 %v1438
    %v5153 = vunpack.c.l.b16 %v1439
    %v5154 = vunpack.c.h.b16 %v1439
    %v5155 = vunpack.c.l.b16 %v1440
    %v5156 = vunpack.c.h.b16 %v1440
    %v5157 = vunpack.c.l.b16 %v1441
    %v5158 = vunpack.c.h.b16 %v1441
    %v5159 = vunpack.c.l.b16 %v1442
    %v5160 = vunpack.c.h.b16 %v1442
    %v5161 = vunpack.c.l.b16 %v1443
    %v5162 = vunpack.c.h.b16 %v1443
    %v5163 = vunpack.c.l.b16 %v1444
    %v5164 = vunpack.c.h.b16 %v1444
    %v5165 = vunpack.c.l.b16 %v1445
    %v5166 = vunpack.c.h.b16 %v1445
    %v5167 = vunpack.c.l.b16 %v1446
    %v5168 = vunpack.c.h.b16 %v1446
    %v5169 = vunpack.c.l.b16 %v1447
    %v5170 = vunpack.c.h.b16 %v1447
    %v5171 = vunpack.c.l.b16 %v1448
    %v5172 = vunpack.c.h.b16 %v1448
    %v5173 = vunpack.c.l.b16 %v1449
    %v5174 = vunpack.c.h.b16 %v1449
    %v5175 = vunpack.c.l.b16 %v1450
    %v5176 = vunpack.c.h.b16 %v1450
    %v5177 = vunpack.c.l.b16 %v1451
    %v5178 = vunpack.c.h.b16 %v1451
    %v5179 = vunpack.c.l.b16 %v1452
    %v5180 = vunpack.c.h.b16 %v1452
    %v5181 = vunpack.c.l.b16 %v1453
    %v5182 = vunpack.c.h.b16 %v1453
    %v5183 = vunpack.c.l.b16 %v1454
    %v5184 = vunpack.c.h.b16 %v1454
    %v5185 = vunpack.c.l.b16 %v1455
    %v5186 = vunpack.c.h.b16 %v1455
    %v5187 = vunpack.c.l.b16 %v1456
    %v5188 = vunpack.c.h.b16 %v1456
    %v5189 = vunpack.c.l.b16 %v1457
    %v5190 = vunpack.c.h.b16 %v1457
    %v5191 = vunpack.c.l.b16 %v1458
    %v5192 = vunpack.c.h.b16 %v1458
    %v5193 = vunpack.c.l.b16 %v1459
    %v5194 = vunpack.c.h.b16 %v1459
    %v5195 = vunpack.c.l.b16 %v1460
    %v5196 = vunpack.c.h.b16 %v1460
    %v5197 = vunpack.c.l.b16 %v1461
    %v5198 = vunpack.c.h.b16 %v1461
    %v5199 = vunpack.c.l.b16 %v1462
    %v5200 = vunpack.c.h.b16 %v1462
    %v5201 = vunpack.c.l.b16 %v1463
    %v5202 = vunpack.c.h.b16 %v1463
    %v5203 = vunpack.c.l.b16 %v1464
    %v5204 = vunpack.c.h.b16 %v1464
    %v5205 = vunpack.c.l.b16 %v1465
    %v5206 = vunpack.c.h.b16 %v1465
    %v5207 = vunpack.c.l.b16 %v1466
    %v5208 = vunpack.c.h.b16 %v1466
    %v5209 = vunpack.c.l.b16 %v1467
    %v5210 = vunpack.c.h.b16 %v1467
    %v5211 = vunpack.c.l.b16 %v1468
    %v5212 = vunpack.c.h.b16 %v1468
    %v5213 = vunpack.c.l.b16 %v1469
    %v5214 = vunpack.c.h.b16 %v1469
    %v5215 = vunpack.c.l.b16 %v1470
    %v5216 = vunpack.c.h.b16 %v1470
    %v5217 = vunpack.c.l.b16 %v1471
    %v5218 = vunpack.c.h.b16 %v1471
    %v5219 = vunpack.c.l.b16 %v1472
    %v5220 = vunpack.c.h.b16 %v1472
    %v5221 = vunpack.c.l.b16 %v1473
    %v5222 = vunpack.c.h.b16 %v1473
    %v5223 = vunpack.c.l.b16 %v1474
    %v5224 = vunpack.c.h.b16 %v1474
    %v5225 = vunpack.c.l.b16 %v1475
    %v5226 = vunpack.c.h.b16 %v1475
    %v5227 = vunpack.c.l.b16 %v1476
    %v5228 = vunpack.c.h.b16 %v1476
    %v5229 = vunpack.c.l.b16 %v1477
    %v5230 = vunpack.c.h.b16 %v1477
    %v5231 = vunpack.c.l.b16 %v1478
    %v5232 = vunpack.c.h.b16 %v1478
    %v5233 = vunpack.c.l.b16 %v1479
    %v5234 = vunpack.c.h.b16 %v1479
    %v5235 = vunpack.c.l.b16 %v1480
    %v5236 = vunpack.c.h.b16 %v1480
    %v5237 = vunpack.c.l.b16 %v1481
    %v5238 = vunpack.c.h.b16 %v1481
    %v5239 = vunpack.c.l.b16 %v1482
    %v5240 = vunpack.c.h.b16 %v1482
    %v5241 = vunpack.c.l.b16 %v1483
    %v5242 = vunpack.c.h.b16 %v1483
    %v5243 = vunpack.c.l.b16 %v1484
    %v5244 = vunpack.c.h.b16 %v1484
    %v5245 = vunpack.c.l.b16 %v1485
    %v5246 = vunpack.c.h.b16 %v1485
    %v5247 = vunpack.c.l.b16 %v1486
    %v5248 = vunpack.c.h.b16 %v1486
    %v5249 = vunpack.c.l.b16 %v1487
    %v5250 = vunpack.c.h.b16 %v1487
    %v5251 = vunpack.c.l.b16 %v1488
    %v5252 = vunpack.c.h.b16 %v1488
    %v5253 = vunpack.c.l.b16 %v1489
    %v5254 = vunpack.c.h.b16 %v1489
    %v5255 = vunpack.c.l.b16 %v1490
    %v5256 = vunpack.c.h.b16 %v1490
    %v5257 = vunpack.c.l.b16 %v1491
    %v5258 = vunpack.c.h.b16 %v1491
    %v5259 = vunpack.c.l.b16 %v1492
    %v5260 = vunpack.c.h.b16 %v1492
    %v5261 = vunpack.c.l.b16 %v1493
    %v5262 = vunpack.c.h.b16 %v1493
    %v5263 = vunpack.c.l.b16 %v1494
    %v5264 = vunpack.c.h.b16 %v1494
    %v5265 = vunpack.c.l.b16 %v1495
    %v5266 = vunpack.c.h.b16 %v1495
    %v5267 = vunpack.c.l.b16 %v1496
    %v5268 = vunpack.c.h.b16 %v1496
    %v5269 = vunpack.c.l.b16 %v1497
    %v5270 = vunpack.c.h.b16 %v1497
    %v5271 = vunpack.c.l.b16 %v1498
    %v5272 = vunpack.c.h.b16 %v1498
    %v5273 = vunpack.c.l.b16 %v1499
    %v5274 = vunpack.c.h.b16 %v1499
    %v5275 = vunpack.c.l.b16 %v1500
    %v5276 = vunpack.c.h.b16 %v1500
    %v5277 = vunpack.c.l.b16 %v1501
    %v5278 = vunpack.c.h.b16 %v1501
    %v5279 = vunpack.c.l.b16 %v1502
    %v5280 = vunpack.c.h.b16 %v1502
    %v5281 = vunpack.c.l.b16 %v1503
    %v5282 = vunpack.c.h.b16 %v1503
    %v5283 = vunpack.c.l.b16 %v1504
    %v5284 = vunpack.c.h.b16 %v1504
    %v5285 = vunpack.c.l.b16 %v1505
    %v5286 = vunpack.c.h.b16 %v1505
    %v5287 = vunpack.c.l.b16 %v1506
    %v5288 = vunpack.c.h.b16 %v1506
    %v5289 = vunpack.c.l.b16 %v1507
    %v5290 = vunpack.c.h.b16 %v1507
    %v5291 = vunpack.c.l.b16 %v1508
    %v5292 = vunpack.c.h.b16 %v1508
    %v5293 = vunpack.c.l.b16 %v1509
    %v5294 = vunpack.c.h.b16 %v1509
    %v5295 = vunpack.c.l.b16 %v1510
    %v5296 = vunpack.c.h.b16 %v1510
    %v5297 = vunpack.c.l.b16 %v1511
    %v5298 = vunpack.c.h.b16 %v1511
    %v5299 = vunpack.c.l.b16 %v1512
    %v5300 = vunpack.c.h.b16 %v1512
    %v5301 = vunpack.c.l.b16 %v1513
    %v5302 = vunpack.c.h.b16 %v1513
    %v5303 = vunpack.c.l.b16 %v1514
    %v5304 = vunpack.c.h.b16 %v1514
    %v5305 = vunpack.c.l.b16 %v1515
    %v5306 = vunpack.c.h.b16 %v1515
    %v5307 = vunpack.c.l.b16 %v1516
    %v5308 = vunpack.c.h.b16 %v1516
    %v5309 = vunpack.c.l.b16 %v1517
    %v5310 = vunpack.c.h.b16 %v1517
    %v5311 = vunpack.c.l.b16 %v1518
    %v5312 = vunpack.c.h.b16 %v1518
    %v5313 = vunpack.c.l.b16 %v1519
    %v5314 = vunpack.c.h.b16 %v1519
    %v5315 = vunpack.c.l.b16 %v1520
    %v5316 = vunpack.c.h.b16 %v1520
    %v5317 = vunpack.c.l.b16 %v1521
    %v5318 = vunpack.c.h.b16 %v1521
    %v5319 = vunpack.c.l.b16 %v1522
    %v5320 = vunpack.c.h.b16 %v1522
    %v5321 = vunpack.c.l.b16 %v1523
    %v5322 = vunpack.c.h.b16 %v1523
    %v5323 = vunpack.c.l.b16 %v1524
    %v5324 = vunpack.c.h.b16 %v1524
    %v5325 = vunpack.c.l.b16 %v1525
    %v5326 = vunpack.c.h.b16 %v1525
    %v5327 = vunpack.c.l.b16 %v1526
    %v5328 = vunpack.c.h.b16 %v1526
    %v5329 = vunpack.c.l.b16 %v1527
    %v5330 = vunpack.c.h.b16 %v1527
    %v5331 = vunpack.c.l.b16 %v1528
    %v5332 = vunpack.c.h.b16 %v1528
    %v5333 = vunpack.c.l.b16 %v1529
    %v5334 = vunpack.c.h.b16 %v1529
    %v5335 = vunpack.c.l.b16 %v1530
    %v5336 = vunpack.c.h.b16 %v1530
    %v5337 = vunpack.c.l.b16 %v1531
    %v5338 = vunpack.c.h.b16 %v1531
    %v5339 = vunpack.c.l.b16 %v1532
    %v5340 = vunpack.c.h.b16 %v1532
    %v5341 = vunpack.c.l.b16 %v1533
    %v5342 = vunpack.c.h.b16 %v1533
    %v5343 = vunpack.c.l.b16 %v1534
    %v5344 = vunpack.c.h.b16 %v1534
    %v5345 = vunpack.c.l.b16 %v1535
    %v5346 = vunpack.c.h.b16 %v1535
    %v5347 = vunpack.c.l.b16 %v1536
    %v5348 = vunpack.c.h.b16 %v1536
    %v5349 = vunpack.c.l.b16 %v1537
    %v5350 = vunpack.c.h.b16 %v1537
    %v5351 = vunpack.c.l.b16 %v1538
    %v5352 = vunpack.c.h.b16 %v1538
    %v5353 = vunpack.c.l.b16 %v1539
    %v5354 = vunpack.c.h.b16 %v1539
    %v5355 = vunpack.c.l.b16 %v1540
    %v5356 = vunpack.c.h.b16 %v1540
    %v5357 = vunpack.c.l.b16 %v1541
    %v5358 = vunpack.c.h.b16 %v1541
    %v5359 = vunpack.c.l.b16 %v1542
    %v5360 = vunpack.c.h.b16 %v1542
    %v5361 = vunpack.c.l.b16 %v1543
    %v5362 = vunpack.c.h.b16 %v1543
    %v5363 = vunpack.c.l.b16 %v1544
    %v5364 = vunpack.c.h.b16 %v1544
    %v5365 = vunpack.c.l.b16 %v1545
    %v5366 = vunpack.c.h.b16 %v1545
    %v5367 = vunpack.c.l.b16 %v1546
    %v5368 = vunpack.c.h.b16 %v1546
    %v5369 = vunpack.c.l.b16 %v1547
    %v5370 = vunpack.c.h.b16 %v1547
    %v5371 = vunpack.c.l.b16 %v1548
    %v5372 = vunpack.c.h.b16 %v1548
    %v5373 = vunpack.c.l.b16 %v1549
    %v5374 = vunpack.c.h.b16 %v1549
    %v5375 = vunpack.c.l.b16 %v1550
    %v5376 = vunpack.c.h.b16 %v1550
    %v5377 = vunpack.c.l.b16 %v1551
    %v5378 = vunpack.c.h.b16 %v1551
    %v5379 = vunpack.c.l.b16 %v1552
    %v5380 = vunpack.c.h.b16 %v1552
    %v5381 = vunpack.c.l.b16 %v1553
    %v5382 = vunpack.c.h.b16 %v1553
    %v5383 = vunpack.c.l.b16 %v1554
    %v5384 = vunpack.c.h.b16 %v1554
    %v5385 = vunpack.c.l.b16 %v1555
    %v5386 = vunpack.c.h.b16 %v1555
    %v5387 = vunpack.c.l.b16 %v1556
    %v5388 = vunpack.c.h.b16 %v1556
    %v5389 = vunpack.c.l.b16 %v1557
    %v5390 = vunpack.c.h.b16 %v1557
    %v5391 = vunpack.c.l.b16 %v1558
    %v5392 = vunpack.c.h.b16 %v1558
    %v5393 = vunpack.c.l.b16 %v1559
    %v5394 = vunpack.c.h.b16 %v1559
    %v5395 = vunpack.c.l.b16 %v1560
    %v5396 = vunpack.c.h.b16 %v1560
    %v5397 = vunpack.c.l.b16 %v1561
    %v5398 = vunpack.c.h.b16 %v1561
    %v5399 = vunpack.c.l.b16 %v1562
    %v5400 = vunpack.c.h.b16 %v1562
    %v5401 = vunpack.c.l.b16 %v1563
    %v5402 = vunpack.c.h.b16 %v1563
    %v5403 = vunpack.c.l.b16 %v1564
    %v5404 = vunpack.c.h.b16 %v1564
    %v5405 = vunpack.c.l.b16 %v1565
    %v5406 = vunpack.c.h.b16 %v1565
    %v5407 = vunpack.c.l.b16 %v1566
    %v5408 = vunpack.c.h.b16 %v1566
    %v5409 = vunpack.c.l.b16 %v1567
    %v5410 = vunpack.c.h.b16 %v1567
    %v5411 = vunpack.c.l.b16 %v1568
    %v5412 = vunpack.c.h.b16 %v1568
    %v5413 = vunpack.c.l.b16 %v1569
    %v5414 = vunpack.c.h.b16 %v1569
    %v5415 = vunpack.c.l.b16 %v1570
    %v5416 = vunpack.c.h.b16 %v1570
    %v5417 = vunpack.c.l.b16 %v1571
    %v5418 = vunpack.c.h.b16 %v1571
    %v5419 = vunpack.c.l.b16 %v1572
    %v5420 = vunpack.c.h.b16 %v1572
    %v5421 = vunpack.c.l.b16 %v1573
    %v5422 = vunpack.c.h.b16 %v1573
    %v5423 = vunpack.c.l.b16 %v1574
    %v5424 = vunpack.c.h.b16 %v1574
    %v5425 = vunpack.c.l.b16 %v1575
    %v5426 = vunpack.c.h.b16 %v1575
    %v5427 = vunpack.c.l.b16 %v1576
    %v5428 = vunpack.c.h.b16 %v1576
    %v5429 = vunpack.c.l.b16 %v1577
    %v5430 = vunpack.c.h.b16 %v1577
    %v5431 = vunpack.c.l.b16 %v1578
    %v5432 = vunpack.c.h.b16 %v1578
    %v5433 = vunpack.c.l.b16 %v1579
    %v5434 = vunpack.c.h.b16 %v1579
    %v5435 = vunpack.c.l.b16 %v1580
    %v5436 = vunpack.c.h.b16 %v1580
    %v5437 = vunpack.c.l.b16 %v1581
    %v5438 = vunpack.c.h.b16 %v1581
    %v5439 = vunpack.c.l.b16 %v1582
    %v5440 = vunpack.c.h.b16 %v1582
    %v5441 = vunpack.c.l.b16 %v1583
    %v5442 = vunpack.c.h.b16 %v1583
    %v5443 = vunpack.c.l.b16 %v1584
    %v5444 = vunpack.c.h.b16 %v1584
    %v5445 = vunpack.c.l.b16 %v1585
    %v5446 = vunpack.c.h.b16 %v1585
    %v5447 = vunpack.c.l.b16 %v1586
    %v5448 = vunpack.c.h.b16 %v1586
    %v5449 = vunpack.c.l.b16 %v1587
    %v5450 = vunpack.c.h.b16 %v1587
    %v5451 = vunpack.c.l.b16 %v1588
    %v5452 = vunpack.c.h.b16 %v1588
    %v5453 = vunpack.c.l.b16 %v1589
    %v5454 = vunpack.c.h.b16 %v1589
    %v5455 = vunpack.c.l.b16 %v1590
    %v5456 = vunpack.c.h.b16 %v1590
    %v5457 = vunpack.c.l.b16 %v1591
    %v5458 = vunpack.c.h.b16 %v1591
    %v5459 = vunpack.c.l.b16 %v1592
    %v5460 = vunpack.c.h.b16 %v1592
    %v5461 = vunpack.c.l.b16 %v1593
    %v5462 = vunpack.c.h.b16 %v1593
    %v5463 = vunpack.c.l.b16 %v1594
    %v5464 = vunpack.c.h.b16 %v1594
    %v5465 = vunpack.c.l.b16 %v1595
    %v5466 = vunpack.c.h.b16 %v1595
    %v5467 = vunpack.c.l.b16 %v1596
    %v5468 = vunpack.c.h.b16 %v1596
    %v5469 = vunpack.c.l.b16 %v1597
    %v5470 = vunpack.c.h.b16 %v1597
    %v5471 = vunpack.c.l.b16 %v1598
    %v5472 = vunpack.c.h.b16 %v1598
    %v5473 = vunpack.c.l.b16 %v1599
    %v5474 = vunpack.c.h.b16 %v1599
    %v5475 = vunpack.c.l.b16 %v1600
    %v5476 = vunpack.c.h.b16 %v1600
    %v5477 = vunpack.c.l.b16 %v1601
    %v5478 = vunpack.c.h.b16 %v1601
    %v5479 = vunpack.c.l.b16 %v1602
    %v5480 = vunpack.c.h.b16 %v1602
    %v5481 = vunpack.c.l.b16 %v1603
    %v5482 = vunpack.c.h.b16 %v1603
    %v5483 = vunpack.c.l.b16 %v1604
    %v5484 = vunpack.c.h.b16 %v1604
    %v5485 = vunpack.c.l.b16 %v1605
    %v5486 = vunpack.c.h.b16 %v1605
    %v5487 = vunpack.c.l.b16 %v1606
    %v5488 = vunpack.c.h.b16 %v1606
    %v5489 = vunpack.c.l.b16 %v1607
    %v5490 = vunpack.c.h.b16 %v1607
    %v5491 = vunpack.c.l.b16 %v1608
    %v5492 = vunpack.c.h.b16 %v1608
    %v5493 = vunpack.c.l.b16 %v1609
    %v5494 = vunpack.c.h.b16 %v1609
    %v5495 = vunpack.c.l.b16 %v1610
    %v5496 = vunpack.c.h.b16 %v1610
    %v5497 = vunpack.c.l.b16 %v1611
    %v5498 = vunpack.c.h.b16 %v1611
    %v5499 = vunpack.c.l.b16 %v1612
    %v5500 = vunpack.c.h.b16 %v1612
    %v5501 = vunpack.c.l.b16 %v1613
    %v5502 = vunpack.c.h.b16 %v1613
    %v5503 = vunpack.c.l.b16 %v1614
    %v5504 = vunpack.c.h.b16 %v1614
    %v5505 = vunpack.c.l.b16 %v1615
    %v5506 = vunpack.c.h.b16 %v1615
    %v5507 = vunpack.c.l.b16 %v1616
    %v5508 = vunpack.c.h.b16 %v1616
    %v5509 = vunpack.c.l.b16 %v1617
    %v5510 = vunpack.c.h.b16 %v1617
    %v5511 = vunpack.c.l.b16 %v1618
    %v5512 = vunpack.c.h.b16 %v1618
    %v5513 = vunpack.c.l.b16 %v1619
    %v5514 = vunpack.c.h.b16 %v1619
    %v5515 = vunpack.c.l.b16 %v1620
    %v5516 = vunpack.c.h.b16 %v1620
    %v5517 = vunpack.c.l.b16 %v1621
    %v5518 = vunpack.c.h.b16 %v1621
    %v5519 = vunpack.c.l.b16 %v1622
    %v5520 = vunpack.c.h.b16 %v1622
    %v5521 = vunpack.c.l.b16 %v1623
    %v5522 = vunpack.c.h.b16 %v1623
    %v5523 = vunpack.c.l.b16 %v1624
    %v5524 = vunpack.c.h.b16 %v1624
    %v5525 = vpack.c.b16 %v2935, %v2933
    %v5526 = vpack.c.b16 %v2936, %v2934
    %v5527 = vpack.c.b16 %v2939, %v2937
    %v5528 = vpack.c.b16 %v2940, %v2938
    %v5529 = vpack.c.b16 %v2943, %v2941
    %v5530 = vpack.c.b16 %v2944, %v2942
    %v5531 = vpack.c.b16 %v2947, %v2945
    %v5532 = vpack.c.b16 %v2948, %v2946
    %v5533 = vpack.c.b16 %v2951, %v2949
    %v5534 = vpack.c.b16 %v2952, %v2950
    %v5535 = vpack.c.b16 %v2955, %v2953
    %v5536 = vpack.c.b16 %v2956, %v2954
    %v5537 = vpack.c.b16 %v2959, %v2957
    %v5538 = vpack.c.b16 %v2960, %v2958
    %v5539 = vpack.c.b16 %v2963, %v2961
    %v5540 = vpack.c.b16 %v2964, %v2962
    %v5541 = vpack.c.b16 %v2967, %v2965
    %v5542 = vpack.c.b16 %v2968, %v2966
    %v5543 = vpack.c.b16 %v2971, %v2969
    %v5544 = vpack.c.b16 %v2972, %v2970
    %v5545 = vpack.c.b16 %v2975, %v2973
    %v5546 = vpack.c.b16 %v2976, %v2974
    %v5547 = vpack.c.b16 %v2979, %v2977
    %v5548 = vpack.c.b16 %v2980, %v2978
    %v5549 = vpack.c.b16 %v2983, %v2981
    %v5550 = vpack.c.b16 %v2984, %v2982
    %v5551 = vpack.c.b16 %v2987, %v2985
    %v5552 = vpack.c.b16 %v2988, %v2986
    %v5553 = vpack.c.b16 %v2991, %v2989
    %v5554 = vpack.c.b16 %v2992, %v2990
    %v5555 = vpack.c.b16 %v2995, %v2993
    %v5556 = vpack.c.b16 %v2996, %v2994
    %v5557 = vpack.c.b16 %v2999, %v2997
    %v5558 = vpack.c.b16 %v3000, %v2998
    %v5559 = vpack.c.b16 %v3003, %v3001
    %v5560 = vpack.c.b16 %v3004, %v3002
    %v5561 = vpack.c.b16 %v3007, %v3005
    %v5562 = vpack.c.b16 %v3008, %v3006
    %v5563 = vpack.c.b16 %v3011, %v3009
    %v5564 = vpack.c.b16 %v3012, %v3010
    %v5565 = vpack.c.b16 %v3015, %v3013
    %v5566 = vpack.c.b16 %v3016, %v3014
    %v5567 = vpack.c.b16 %v3019, %v3017
    %v5568 = vpack.c.b16 %v3020, %v3018
    %v5569 = vpack.c.b16 %v3023, %v3021
    %v5570 = vpack.c.b16 %v3024, %v3022
    %v5571 = vpack.c.b16 %v3027, %v3025
    %v5572 = vpack.c.b16 %v3028, %v3026
    %v5573 = vpack.c.b16 %v3031, %v3029
    %v5574 = vpack.c.b16 %v3032, %v3030
    %v5575 = vpack.c.b16 %v3035, %v3033
    %v5576 = vpack.c.b16 %v3036, %v3034
    %v5577 = vpack.c.b16 %v3039, %v3037
    %v5578 = vpack.c.b16 %v3040, %v3038
    %v5579 = vpack.c.b16 %v3043, %v3041
    %v5580 = vpack.c.b16 %v3044, %v3042
    %v5581 = vpack.c.b16 %v3047, %v3045
    %v5582 = vpack.c.b16 %v3048, %v3046
    %v5583 = vpack.c.b16 %v3051, %v3049
    %v5584 = vpack.c.b16 %v3052, %v3050
    %v5585 = vpack.c.b16 %v3055, %v3053
    %v5586 = vpack.c.b16 %v3056, %v3054
    %v5587 = vpack.c.b16 %v3059, %v3057
    %v5588 = vpack.c.b16 %v3060, %v3058
    %v5589 = vpack.c.b16 %v3063, %v3061
    %v5590 = vpack.c.b16 %v3064, %v3062
    %v5591 = vpack.c.b16 %v3067, %v3065
    %v5592 = vpack.c.b16 %v3068, %v3066
    %v5593 = vpack.c.b16 %v3071, %v3069
    %v5594 = vpack.c.b16 %v3072, %v3070
    %v5595 = vpack.c.b16 %v3075, %v3073
    %v5596 = vpack.c.b16 %v3076, %v3074
    %v5597 = vpack.c.b16 %v3079, %v3077
    %v5598 = vpack.c.b16 %v3080, %v3078
    %v5599 = vpack.c.b16 %v3083, %v3081
    %v5600 = vpack.c.b16 %v3084, %v3082
    %v5601 = vpack.c.b16 %v3087, %v3085
    %v5602 = vpack.c.b16 %v3088, %v3086
    %v5603 = vpack.c.b16 %v3091, %v3089
    %v5604 = vpack.c.b16 %v3092, %v3090
    %v5605 = vpack.c.b16 %v3095, %v3093
    %v5606 = vpack.c.b16 %v3096, %v3094
    %v5607 = vpack.c.b16 %v3099, %v3097
    %v5608 = vpack.c.b16 %v3100, %v3098
    %v5609 = vpack.c.b16 %v3103, %v3101
    %v5610 = vpack.c.b16 %v3104, %v3102
    %v5611 = vpack.c.b16 %v3107, %v3105
    %v5612 = vpack.c.b16 %v3108, %v3106
    %v5613 = vpack.c.b16 %v3111, %v3109
    %v5614 = vpack.c.b16 %v3112, %v3110
    %v5615 = vpack.c.b16 %v3115, %v3113
    %v5616 = vpack.c.b16 %v3116, %v3114
    %v5617 = vpack.c.b16 %v3119, %v3117
    %v5618 = vpack.c.b16 %v3120, %v3118
    %v5619 = vpack.c.b16 %v3123, %v3121
    %v5620 = vpack.c.b16 %v3124, %v3122
    %v5621 = vpack.c.b16 %v3127, %v3125
    %v5622 = vpack.c.b16 %v3128, %v3126
    %v5623 = vpack.c.b16 %v3131, %v3129
    %v5624 = vpack.c.b16 %v3132, %v3130
    %v5625 = vpack.c.b16 %v3135, %v3133
    %v5626 = vpack.c.b16 %v3136, %v3134
    %v5627 = vpack.c.b16 %v3139, %v3137
    %v5628 = vpack.c.b16 %v3140, %v3138
    %v5629 = vpack.c.b16 %v3143, %v3141
    %v5630 = vpack.c.b16 %v3144, %v3142
    %v5631 = vpack.c.b16 %v3147, %v3145
    %v5632 = vpack.c.b16 %v3148, %v3146
    %v5633 = vpack.c.b16 %v3151, %v3149
    %v5634 = vpack.c.b16 %v3152, %v3150
    %v5635 = vpack.c.b16 %v3155, %v3153
    %v5636 = vpack.c.b16 %v3156, %v3154
    %v5637 = vpack.c.b16 %v3159, %v3157
    %v5638 = vpack.c.b16 %v3160, %v3158
    %v5639 = vpack.c.b16 %v3163, %v3161
    %v5640 = vpack.c.b16 %v3164, %v3162
    %v5641 = vpack.c.b16 %v3167, %v3165
    %v5642 = vpack.c.b16 %v3168, %v3166
    %v5643 = vpack.c.b16 %v3171, %v3169
    %v5644 = vpack.c.b16 %v3172, %v3170
    %v5645 = vpack.c.b16 %v3175, %v3173
    %v5646 = vpack.c.b16 %v3176, %v3174
    %v5647 = vpack.c.b16 %v3179, %v3177
    %v5648 = vpack.c.b16 %v3180, %v3178
    %v5649 = vpack.c.b16 %v3183, %v3181
    %v5650 = vpack.c.b16 %v3184, %v3182
    %v5651 = vpack.c.b16 %v3187, %v3185
    %v5652 = vpack.c.b16 %v3188, %v3186
    %v5653 = vpack.c.b16 %v3191, %v3189
    %v5654 = vpack.c.b16 %v3192, %v3190
    %v5655 = vpack.c.b16 %v3195, %v3193
    %v5656 = vpack.c.b16 %v3196, %v3194
    %v5657 = vpack.c.b16 %v3199, %v3197
    %v5658 = vpack.c.b16 %v3200, %v3198
    %v5659 = vpack.c.b16 %v3203, %v3201
    %v5660 = vpack.c.b16 %v3204, %v3202
    %v5661 = vpack.c.b16 %v3207, %v3205
    %v5662 = vpack.c.b16 %v3208, %v3206
    %v5663 = vpack.c.b16 %v3211, %v3209
    %v5664 = vpack.c.b16 %v3212, %v3210
    %v5665 = vpack.c.b16 %v3215, %v3213
    %v5666 = vpack.c.b16 %v3216, %v3214
    %v5667 = vpack.c.b16 %v3219, %v3217
    %v5668 = vpack.c.b16 %v3220, %v3218
    %v5669 = vpack.c.b16 %v3223, %v3221
    %v5670 = vpack.c.b16 %v3224, %v3222
    %v5671 = vpack.c.b16 %v3227, %v3225
    %v5672 = vpack.c.b16 %v3228, %v3226
    %v5673 = vpack.c.b16 %v3231, %v3229
    %v5674 = vpack.c.b16 %v3232, %v3230
    %v5675 = vpack.c.b16 %v3235, %v3233
    %v5676 = vpack.c.b16 %v3236, %v3234
    %v5677 = vpack.c.b16 %v3239, %v3237
    %v5678 = vpack.c.b16 %v3240, %v3238
    %v5679 = vpack.c.b16 %v3243, %v3241
    %v5680 = vpack.c.b16 %v3244, %v3242
    %v5681 = vpack.c.b16 %v3247, %v3245
    %v5682 = vpack.c.b16 %v3248, %v3246
    %v5683 = vpack.c.b16 %v3251, %v3249
    %v5684 = vpack.c.b16 %v3252, %v3250
    %v5685 = vpack.c.b16 %v3255, %v3253
    %v5686 = vpack.c.b16 %v3256, %v3254
    %v5687 = vpack.c.b16 %v3259, %v3257
    %v5688 = vpack.c.b16 %v3260, %v3258
    %v5689 = vpack.c.b16 %v3263, %v3261
    %v5690 = vpack.c.b16 %v3264, %v3262
    %v5691 = vpack.c.b16 %v3267, %v3265
    %v5692 = vpack.c.b16 %v3268, %v3266
    %v5693 = vpack.c.b16 %v3271, %v3269
    %v5694 = vpack.c.b16 %v3272, %v3270
    %v5695 = vpack.c.b16 %v3275, %v3273
    %v5696 = vpack.c.b16 %v3276, %v3274
    %v5697 = vpack.c.b16 %v3279, %v3277
    %v5698 = vpack.c.b16 %v3280, %v3278
    %v5699 = vpack.c.b16 %v3283, %v3281
    %v5700 = vpack.c.b16 %v3284, %v3282
    %v5701 = vpack.c.b16 %v3287, %v3285
    %v5702 = vpack.c.b16 %v3288, %v3286
    %v5703 = vpack.c.b16 %v3291, %v3289
    %v5704 = vpack.c.b16 %v3292, %v3290
    %v5705 = vpack.c.b16 %v3295, %v3293
    %v5706 = vpack.c.b16 %v3296, %v3294
    %v5707 = vpack.c.b16 %v3299, %v3297
    %v5708 = vpack.c.b16 %v3300, %v3298
    %v5709 = vpack.c.b16 %v3303, %v3301
    %v5710 = vpack.c.b16 %v3304, %v3302
    %v5711 = vpack.c.b16 %v3307, %v3305
    %v5712 = vpack.c.b16 %v3308, %v3306
    %v5713 = vpack.c.b16 %v3311, %v3309
    %v5714 = vpack.c.b16 %v3312, %v3310
    %v5715 = vpack.c.b16 %v3315, %v3313
    %v5716 = vpack.c.b16 %v3316, %v3314
    %v5717 = vpack.c.b16 %v3319, %v3317
    %v5718 = vpack.c.b16 %v3320, %v3318
    %v5719 = vpack.c.b16 %v3323, %v3321
    %v5720 = vpack.c.b16 %v3324, %v3322
    %v5721 = vpack.c.b16 %v3327, %v3325
    %v5722 = vpack.c.b16 %v3328, %v3326
    %v5723 = vpack.c.b16 %v3331, %v3329
    %v5724 = vpack.c.b16 %v3332, %v3330
    %v5725 = vpack.c.b16 %v3335, %v3333
    %v5726 = vpack.c.b16 %v3336, %v3334
    %v5727 = vpack.c.b16 %v3339, %v3337
    %v5728 = vpack.c.b16 %v3340, %v3338
    %v5729 = vpack.c.b16 %v3343, %v3341
    %v5730 = vpack.c.b16 %v3344, %v3342
    %v5731 = vpack.c.b16 %v3347, %v3345
    %v5732 = vpack.c.b16 %v3348, %v3346
    %v5733 = vpack.c.b16 %v3351, %v3349
    %v5734 = vpack.c.b16 %v3352, %v3350
    %v5735 = vpack.c.b16 %v3355, %v3353
    %v5736 = vpack.c.b16 %v3356, %v3354
    %v5737 = vpack.c.b16 %v3359, %v3357
    %v5738 = vpack.c.b16 %v3360, %v3358
    %v5739 = vpack.c.b16 %v3363, %v3361
    %v5740 = vpack.c.b16 %v3364, %v3362
    %v5741 = vpack.c.b16 %v3367, %v3365
    %v5742 = vpack.c.b16 %v3368, %v3366
    %v5743 = vpack.c.b16 %v3371, %v3369
    %v5744 = vpack.c.b16 %v3372, %v3370
    %v5745 = vpack.c.b16 %v3375, %v3373
    %v5746 = vpack.c.b16 %v3376, %v3374
    %v5747 = vpack.c.b16 %v3379, %v3377
    %v5748 = vpack.c.b16 %v3380, %v3378
    %v5749 = vpack.c.b16 %v3383, %v3381
    %v5750 = vpack.c.b16 %v3384, %v3382
    %v5751 = vpack.c.b16 %v3387, %v3385
    %v5752 = vpack.c.b16 %v3388, %v3386
    %v5753 = vpack.c.b16 %v3391, %v3389
    %v5754 = vpack.c.b16 %v3392, %v3390
    %v5755 = vpack.c.b16 %v3395, %v3393
    %v5756 = vpack.c.b16 %v3396, %v3394
    %v5757 = vpack.c.b16 %v3399, %v3397
    %v5758 = vpack.c.b16 %v3400, %v3398
    %v5759 = vpack.c.b16 %v3403, %v3401
    %v5760 = vpack.c.b16 %v3404, %v3402
    %v5761 = vpack.c.b16 %v3407, %v3405
    %v5762 = vpack.c.b16 %v3408, %v3406
    %v5763 = vpack.c.b16 %v3411, %v3409
    %v5764 = vpack.c.b16 %v3412, %v3410
    %v5765 = vpack.c.b16 %v3415, %v3413
    %v5766 = vpack.c.b16 %v3416, %v3414
    %v5767 = vpack.c.b16 %v3419, %v3417
    %v5768 = vpack.c.b16 %v3420, %v3418
    %v5769 = vpack.c.b16 %v3423, %v3421
    %v5770 = vpack.c.b16 %v3424, %v3422
    %v5771 = vpack.c.b16 %v3427, %v3425
    %v5772 = vpack.c.b16 %v3428, %v3426
    %v5773 = vpack.c.b16 %v3431, %v3429
    %v5774 = vpack.c.b16 %v3432, %v3430
    %v5775 = vpack.c.b16 %v3435, %v3433
    %v5776 = vpack.c.b16 %v3436, %v3434
    %v5777 = vpack.c.b16 %v3439, %v3437
    %v5778 = vpack.c.b16 %v3440, %v3438
    %v5779 = vpack.c.b16 %v3443, %v3441
    %v5780 = vpack.c.b16 %v3444, %v3442
    %v5781 = vpack.c.b16 %v3447, %v3445
    %v5782 = vpack.c.b16 %v3448, %v3446
    %v5783 = vpack.c.b16 %v3451, %v3449
    %v5784 = vpack.c.b16 %v3452, %v3450
    %v5785 = vpack.c.b16 %v3455, %v3453
    %v5786 = vpack.c.b16 %v3456, %v3454
    %v5787 = vpack.c.b16 %v3459, %v3457
    %v5788 = vpack.c.b16 %v3460, %v3458
    %v5789 = vpack.c.b16 %v3463, %v3461
    %v5790 = vpack.c.b16 %v3464, %v3462
    %v5791 = vpack.c.b16 %v3467, %v3465
    %v5792 = vpack.c.b16 %v3468, %v3466
    %v5793 = vpack.c.b16 %v3471, %v3469
    %v5794 = vpack.c.b16 %v3472, %v3470
    %v5795 = vpack.c.b16 %v3475, %v3473
    %v5796 = vpack.c.b16 %v3476, %v3474
    %v5797 = vpack.c.b16 %v3479, %v3477
    %v5798 = vpack.c.b16 %v3480, %v3478
    %v5799 = vpack.c.b16 %v3483, %v3481
    %v5800 = vpack.c.b16 %v3484, %v3482
    %v5801 = vpack.c.b16 %v3487, %v3485
    %v5802 = vpack.c.b16 %v3488, %v3486
    %v5803 = vpack.c.b16 %v3491, %v3489
    %v5804 = vpack.c.b16 %v3492, %v3490
    %v5805 = vpack.c.b16 %v3495, %v3493
    %v5806 = vpack.c.b16 %v3496, %v3494
    %v5807 = vpack.c.b16 %v3499, %v3497
    %v5808 = vpack.c.b16 %v3500, %v3498
    %v5809 = vpack.c.b16 %v3503, %v3501
    %v5810 = vpack.c.b16 %v3504, %v3502
    %v5811 = vpack.c.b16 %v3507, %v3505
    %v5812 = vpack.c.b16 %v3508, %v3506
    %v5813 = vpack.c.b16 %v3511, %v3509
    %v5814 = vpack.c.b16 %v3512, %v3510
    %v5815 = vpack.c.b16 %v3515, %v3513
    %v5816 = vpack.c.b16 %v3516, %v3514
    %v5817 = vpack.c.b16 %v3519, %v3517
    %v5818 = vpack.c.b16 %v3520, %v3518
    %v5819 = vpack.c.b16 %v3523, %v3521
    %v5820 = vpack.c.b16 %v3524, %v3522
    %v5821 = vpack.c.b16 %v3527, %v3525
    %v5822 = vpack.c.b16 %v3528, %v3526
    %v5823 = vpack.c.b16 %v3531, %v3529
    %v5824 = vpack.c.b16 %v3532, %v3530
    %v5825 = vpack.c.b16 %v3535, %v3533
    %v5826 = vpack.c.b16 %v3536, %v3534
    %v5827 = vpack.c.b16 %v3539, %v3537
    %v5828 = vpack.c.b16 %v3540, %v3538
    %v5829 = vpack.c.b16 %v3543, %v3541
    %v5830 = vpack.c.b16 %v3544, %v3542
    %v5831 = vpack.c.b16 %v3547, %v3545
    %v5832 = vpack.c.b16 %v3548, %v3546
    %v5833 = vpack.c.b16 %v3551, %v3549
    %v5834 = vpack.c.b16 %v3552, %v3550
    %v5835 = vpack.c.b16 %v3555, %v3553
    %v5836 = vpack.c.b16 %v3556, %v3554
    %v5837 = vpack.c.b16 %v3559, %v3557
    %v5838 = vpack.c.b16 %v3560, %v3558
    %v5839 = vpack.c.b16 %v3563, %v3561
    %v5840 = vpack.c.b16 %v3564, %v3562
    %v5841 = vpack.c.b16 %v3567, %v3565
    %v5842 = vpack.c.b16 %v3568, %v3566
    %v5843 = vpack.c.b16 %v3571, %v3569
    %v5844 = vpack.c.b16 %v3572, %v3570
    %v5845 = vpack.c.b16 %v3575, %v3573
    %v5846 = vpack.c.b16 %v3576, %v3574
    %v5847 = vpack.c.b16 %v3579, %v3577
    %v5848 = vpack.c.b16 %v3580, %v3578
    %v5849 = vpack.c.b16 %v3583, %v3581
    %v5850 = vpack.c.b16 %v3584, %v3582
    %v5851 = vpack.c.b16 %v3587, %v3585
    %v5852 = vpack.c.b16 %v3588, %v3586
    %v5853 = vpack.c.b16 %v3591, %v3589
    %v5854 = vpack.c.b16 %v3592, %v3590
    %v5855 = vpack.c.b16 %v3595, %v3593
    %v5856 = vpack.c.b16 %v3596, %v3594
    %v5857 = vpack.c.b16 %v3599, %v3597
    %v5858 = vpack.c.b16 %v3600, %v3598
    %v5859 = vpack.c.b16 %v3603, %v3601
    %v5860 = vpack.c.b16 %v3604, %v3602
    %v5861 = vpack.c.b16 %v3607, %v3605
    %v5862 = vpack.c.b16 %v3608, %v3606
    %v5863 = vpack.c.b16 %v3611, %v3609
    %v5864 = vpack.c.b16 %v3612, %v3610
    %v5865 = vpack.c.b16 %v3615, %v3613
    %v5866 = vpack.c.b16 %v3616, %v3614
    %v5867 = vpack.c.b16 %v3619, %v3617
    %v5868 = vpack.c.b16 %v3620, %v3618
    %v5869 = vpack.c.b16 %v3623, %v3621
    %v5870 = vpack.c.b16 %v3624, %v3622
    %v5871 = vpack.c.b16 %v3627, %v3625
    %v5872 = vpack.c.b16 %v3628, %v3626
    %v5873 = vpack.c.b16 %v3631, %v3629
    %v5874 = vpack.c.b16 %v3632, %v3630
    %v5875 = vpack.c.b16 %v3635, %v3633
    %v5876 = vpack.c.b16 %v3636, %v3634
    %v5877 = vpack.c.b16 %v3639, %v3637
    %v5878 = vpack.c.b16 %v3640, %v3638
    %v5879 = vpack.c.b16 %v3643, %v3641
    %v5880 = vpack.c.b16 %v3644, %v3642
    %v5881 = vpack.c.b16 %v3647, %v3645
    %v5882 = vpack.c.b16 %v3648, %v3646
    %v5883 = vpack.c.b16 %v3651, %v3649
    %v5884 = vpack.c.b16 %v3652, %v3650
    %v5885 = vpack.c.b16 %v3655, %v3653
    %v5886 = vpack.c.b16 %v3656, %v3654
    %v5887 = vpack.c.b16 %v3659, %v3657
    %v5888 = vpack.c.b16 %v3660, %v3658
    %v5889 = vpack.c.b16 %v3663, %v3661
    %v5890 = vpack.c.b16 %v3664, %v3662
    %v5891 = vpack.c.b16 %v3667, %v3665
    %v5892 = vpack.c.b16 %v3668, %v3666
    %v5893 = vpack.c.b16 %v3671, %v3669
    %v5894 = vpack.c.b16 %v3672, %v3670
    %v5895 = vpack.c.b16 %v3675, %v3673
    %v5896 = vpack.c.b16 %v3676, %v3674
    %v5897 = vpack.c.b16 %v3679, %v3677
    %v5898 = vpack.c.b16 %v3680, %v3678
    %v5899 = vpack.c.b16 %v3683, %v3681
    %v5900 = vpack.c.b16 %v3684, %v3682
    %v5901 = vpack.c.b16 %v3687, %v3685
    %v5902 = vpack.c.b16 %v3688, %v3686
    %v5903 = vpack.c.b16 %v3691, %v3689
    %v5904 = vpack.c.b16 %v3692, %v3690
    %v5905 = vpack.c.b16 %v3695, %v3693
    %v5906 = vpack.c.b16 %v3696, %v3694
    %v5907 = vpack.c.b16 %v3699, %v3697
    %v5908 = vpack.c.b16 %v3700, %v3698
    %v5909 = vpack.c.b16 %v3703, %v3701
    %v5910 = vpack.c.b16 %v3704, %v3702
    %v5911 = vpack.c.b16 %v3707, %v3705
    %v5912 = vpack.c.b16 %v3708, %v3706
    %v5913 = vpack.c.b16 %v3711, %v3709
    %v5914 = vpack.c.b16 %v3712, %v3710
    %v5915 = vpack.c.b16 %v3715, %v3713
    %v5916 = vpack.c.b16 %v3716, %v3714
    %v5917 = vpack.c.b16 %v3719, %v3717
    %v5918 = vpack.c.b16 %v3720, %v3718
    %v5919 = vpack.c.b16 %v3723, %v3721
    %v5920 = vpack.c.b16 %v3724, %v3722
    %v5921 = vpack.c.b16 %v3727, %v3725
    %v5922 = vpack.c.b16 %v3728, %v3726
    %v5923 = vpack.c.b16 %v3731, %v3729
    %v5924 = vpack.c.b16 %v3732, %v3730
    %v5925 = vpack.c.b16 %v3735, %v3733
    %v5926 = vpack.c.b16 %v3736, %v3734
    %v5927 = vpack.c.b16 %v3739, %v3737
    %v5928 = vpack.c.b16 %v3740, %v3738
    %v5929 = vpack.c.b16 %v3743, %v3741
    %v5930 = vpack.c.b16 %v3744, %v3742
    %v5931 = vpack.c.b16 %v3747, %v3745
    %v5932 = vpack.c.b16 %v3748, %v3746
    %v5933 = vpack.c.b16 %v3751, %v3749
    %v5934 = vpack.c.b16 %v3752, %v3750
    %v5935 = vpack.c.b16 %v3755, %v3753
    %v5936 = vpack.c.b16 %v3756, %v3754
    %v5937 = vpack.c.b16 %v3759, %v3757
    %v5938 = vpack.c.b16 %v3760, %v3758
    %v5939 = vpack.c.b16 %v3763, %v3761
    %v5940 = vpack.c.b16 %v3764, %v3762
    %v5941 = vpack.c.b16 %v3767, %v3765
    %v5942 = vpack.c.b16 %v3768, %v3766
    %v5943 = vpack.c.b16 %v3771, %v3769
    %v5944 = vpack.c.b16 %v3772, %v3770
    %v5945 = vpack.c.b16 %v3775, %v3773
    %v5946 = vpack.c.b16 %v3776, %v3774
    %v5947 = vpack.c.b16 %v3779, %v3777
    %v5948 = vpack.c.b16 %v3780, %v3778
    %v5949 = vpack.c.b16 %v3783, %v3781
    %v5950 = vpack.c.b16 %v3784, %v3782
    %v5951 = vpack.c.b16 %v3787, %v3785
    %v5952 = vpack.c.b16 %v3788, %v3786
    %v5953 = vpack.c.b16 %v3791, %v3789
    %v5954 = vpack.c.b16 %v3792, %v3790
    %v5955 = vpack.c.b16 %v3795, %v3793
    %v5956 = vpack.c.b16 %v3796, %v3794
    %v5957 = vpack.c.b16 %v3799, %v3797
    %v5958 = vpack.c.b16 %v3800, %v3798
    %v5959 = vpack.c.b16 %v3803, %v3801
    %v5960 = vpack.c.b16 %v3804, %v3802
    %v5961 = vpack.c.b16 %v3807, %v3805
    %v5962 = vpack.c.b16 %v3808, %v3806
    %v5963 = vpack.c.b16 %v3811, %v3809
    %v5964 = vpack.c.b16 %v3812, %v3810
    %v5965 = vpack.c.b16 %v3815, %v3813
    %v5966 = vpack.c.b16 %v3816, %v3814
    %v5967 = vpack.c.b16 %v3819, %v3817
    %v5968 = vpack.c.b16 %v3820, %v3818
    %v5969 = vpack.c.b16 %v3823, %v3821
    %v5970 = vpack.c.b16 %v3824, %v3822
    %v5971 = vpack.c.b16 %v3827, %v3825
    %v5972 = vpack.c.b16 %v3828, %v3826
    %v5973 = vpack.c.b16 %v3831, %v3829
    %v5974 = vpack.c.b16 %v3832, %v3830
    %v5975 = vpack.c.b16 %v3835, %v3833
    %v5976 = vpack.c.b16 %v3836, %v3834
    %v5977 = vpack.c.b16 %v3839, %v3837
    %v5978 = vpack.c.b16 %v3840, %v3838
    %v5979 = vpack.c.b16 %v3843, %v3841
    %v5980 = vpack.c.b16 %v3844, %v3842
    %v5981 = vpack.c.b16 %v3847, %v3845
    %v5982 = vpack.c.b16 %v3848, %v3846
    %v5983 = vpack.c.b16 %v3851, %v3849
    %v5984 = vpack.c.b16 %v3852, %v3850
    %v5985 = vpack.c.b16 %v3855, %v3853
    %v5986 = vpack.c.b16 %v3856, %v3854
    %v5987 = vpack.c.b16 %v3859, %v3857
    %v5988 = vpack.c.b16 %v3860, %v3858
    %v5989 = vpack.c.b16 %v3863, %v3861
    %v5990 = vpack.c.b16 %v3864, %v3862
    %v5991 = vpack.c.b16 %v3867, %v3865
    %v5992 = vpack.c.b16 %v3868, %v3866
    %v5993 = vpack.c.b16 %v3871, %v3869
    %v5994 = vpack.c.b16 %v3872, %v3870
    %v5995 = vpack.c.b16 %v3875, %v3873
    %v5996 = vpack.c.b16 %v3876, %v3874
    %v5997 = vpack.c.b16 %v3879, %v3877
    %v5998 = vpack.c.b16 %v3880, %v3878
    %v5999 = vpack.c.b16 %v3883, %v3881
    %v6000 = vpack.c.b16 %v3884, %v3882
    %v6001 = vpack.c.b16 %v3887, %v3885
    %v6002 = vpack.c.b16 %v3888, %v3886
    %v6003 = vpack.c.b16 %v3891, %v3889
    %v6004 = vpack.c.b16 %v3892, %v3890
    %v6005 = vpack.c.b16 %v3895, %v3893
    %v6006 = vpack.c.b16 %v3896, %v3894
    %v6007 = vpack.c.b16 %v3899, %v3897
    %v6008 = vpack.c.b16 %v3900, %v3898
    %v6009 = vpack.c.b16 %v3903, %v3901
    %v6010 = vpack.c.b16 %v3904, %v3902
    %v6011 = vpack.c.b16 %v3907, %v3905
    %v6012 = vpack.c.b16 %v3908, %v3906
    %v6013 = vpack.c.b16 %v3911, %v3909
    %v6014 = vpack.c.b16 %v3912, %v3910
    %v6015 = vpack.c.b16 %v3915, %v3913
    %v6016 = vpack.c.b16 %v3916, %v3914
    %v6017 = vpack.c.b16 %v3919, %v3917
    %v6018 = vpack.c.b16 %v3920, %v3918
    %v6019 = vpack.c.b16 %v3923, %v3921
    %v6020 = vpack.c.b16 %v3924, %v3922
    %v6021 = vpack.c.b16 %v3927, %v3925
    %v6022 = vpack.c.b16 %v3928, %v3926
    %v6023 = vpack.c.b16 %v3931, %v3929
    %v6024 = vpack.c.b16 %v3932, %v3930
    %v6025 = vpack.c.b16 %v3935, %v3933
    %v6026 = vpack.c.b16 %v3936, %v3934
    %v6027 = vpack.c.b16 %v3939, %v3937
    %v6028 = vpack.c.b16 %v3940, %v3938
    %v6029 = vpack.c.b16 %v3943, %v3941
    %v6030 = vpack.c.b16 %v3944, %v3942
    %v6031 = vpack.c.b16 %v3947, %v3945
    %v6032 = vpack.c.b16 %v3948, %v3946
    %v6033 = vpack.c.b16 %v3951, %v3949
    %v6034 = vpack.c.b16 %v3952, %v3950
    %v6035 = vpack.c.b16 %v3955, %v3953
    %v6036 = vpack.c.b16 %v3956, %v3954
    %v6037 = vpack.c.b16 %v3959, %v3957
    %v6038 = vpack.c.b16 %v3960, %v3958
    %v6039 = vpack.c.b16 %v3963, %v3961
    %v6040 = vpack.c.b16 %v3964, %v3962
    %v6041 = vpack.c.b16 %v3967, %v3965
    %v6042 = vpack.c.b16 %v3968, %v3966
    %v6043 = vpack.c.b16 %v3971, %v3969
    %v6044 = vpack.c.b16 %v3972, %v3970
    %v6045 = vpack.c.b16 %v3975, %v3973
    %v6046 = vpack.c.b16 %v3976, %v3974
    %v6047 = vpack.c.b16 %v3979, %v3977
    %v6048 = vpack.c.b16 %v3980, %v3978
    %v6049 = vpack.c.b16 %v3983, %v3981
    %v6050 = vpack.c.b16 %v3984, %v3982
    %v6051 = vpack.c.b16 %v3987, %v3985
    %v6052 = vpack.c.b16 %v3988, %v3986
    %v6053 = vpack.c.b16 %v3991, %v3989
    %v6054 = vpack.c.b16 %v3992, %v3990
    %v6055 = vpack.c.b16 %v3995, %v3993
    %v6056 = vpack.c.b16 %v3996, %v3994
    %v6057 = vpack.c.b16 %v3999, %v3997
    %v6058 = vpack.c.b16 %v4000, %v3998
    %v6059 = vpack.c.b16 %v4003, %v4001
    %v6060 = vpack.c.b16 %v4004, %v4002
    %v6061 = vpack.c.b16 %v4007, %v4005
    %v6062 = vpack.c.b16 %v4008, %v4006
    %v6063 = vpack.c.b16 %v4011, %v4009
    %v6064 = vpack.c.b16 %v4012, %v4010
    %v6065 = vpack.c.b16 %v4015, %v4013
    %v6066 = vpack.c.b16 %v4016, %v4014
    %v6067 = vpack.c.b16 %v4019, %v4017
    %v6068 = vpack.c.b16 %v4020, %v4018
    %v6069 = vpack.c.b16 %v4023, %v4021
    %v6070 = vpack.c.b16 %v4024, %v4022
    %v6071 = vpack.c.b16 %v4027, %v4025
    %v6072 = vpack.c.b16 %v4028, %v4026
    %v6073 = vpack.c.b16 %v4031, %v4029
    %v6074 = vpack.c.b16 %v4032, %v4030
    %v6075 = vpack.c.b16 %v4035, %v4033
    %v6076 = vpack.c.b16 %v4036, %v4034
    %v6077 = vpack.c.b16 %v4039, %v4037
    %v6078 = vpack.c.b16 %v4040, %v4038
    %v6079 = vpack.c.b16 %v4043, %v4041
    %v6080 = vpack.c.b16 %v4044, %v4042
    %v6081 = vpack.c.b16 %v4047, %v4045
    %v6082 = vpack.c.b16 %v4048, %v4046
    %v6083 = vpack.c.b16 %v4051, %v4049
    %v6084 = vpack.c.b16 %v4052, %v4050
    %v6085 = vpack.c.b16 %v4055, %v4053
    %v6086 = vpack.c.b16 %v4056, %v4054
    %v6087 = vpack.c.b16 %v4059, %v4057
    %v6088 = vpack.c.b16 %v4060, %v4058
    %v6089 = vpack.c.b16 %v4063, %v4061
    %v6090 = vpack.c.b16 %v4064, %v4062
    %v6091 = vpack.c.b16 %v4067, %v4065
    %v6092 = vpack.c.b16 %v4068, %v4066
    %v6093 = vpack.c.b16 %v4071, %v4069
    %v6094 = vpack.c.b16 %v4072, %v4070
    %v6095 = vpack.c.b16 %v4075, %v4073
    %v6096 = vpack.c.b16 %v4076, %v4074
    %v6097 = vpack.c.b16 %v4079, %v4077
    %v6098 = vpack.c.b16 %v4080, %v4078
    %v6099 = vpack.c.b16 %v4083, %v4081
    %v6100 = vpack.c.b16 %v4084, %v4082
    %v6101 = vpack.c.b16 %v4087, %v4085
    %v6102 = vpack.c.b16 %v4088, %v4086
    %v6103 = vpack.c.b16 %v4091, %v4089
    %v6104 = vpack.c.b16 %v4092, %v4090
    %v6105 = vpack.c.b16 %v4095, %v4093
    %v6106 = vpack.c.b16 %v4096, %v4094
    %v6107 = vpack.c.b16 %v4099, %v4097
    %v6108 = vpack.c.b16 %v4100, %v4098
    %v6109 = vpack.c.b16 %v4103, %v4101
    %v6110 = vpack.c.b16 %v4104, %v4102
    %v6111 = vpack.c.b16 %v4107, %v4105
    %v6112 = vpack.c.b16 %v4108, %v4106
    %v6113 = vpack.c.b16 %v4111, %v4109
    %v6114 = vpack.c.b16 %v4112, %v4110
    %v6115 = vpack.c.b16 %v4115, %v4113
    %v6116 = vpack.c.b16 %v4116, %v4114
    %v6117 = vpack.c.b16 %v4119, %v4117
    %v6118 = vpack.c.b16 %v4120, %v4118
    %v6119 = vpack.c.b16 %v4123, %v4121
    %v6120 = vpack.c.b16 %v4124, %v4122
    %v6121 = vpack.c.b16 %v4127, %v4125
    %v6122 = vpack.c.b16 %v4128, %v4126
    %v6123 = vpack.c.b16 %v4131, %v4129
    %v6124 = vpack.c.b16 %v4132, %v4130
    %v6125 = vpack.c.b16 %v4135, %v4133
    %v6126 = vpack.c.b16 %v4136, %v4134
    %v6127 = vpack.c.b16 %v4139, %v4137
    %v6128 = vpack.c.b16 %v4140, %v4138
    %v6129 = vpack.c.b16 %v4143, %v4141
    %v6130 = vpack.c.b16 %v4144, %v4142
    %v6131 = vpack.c.b16 %v4147, %v4145
    %v6132 = vpack.c.b16 %v4148, %v4146
    %v6133 = vpack.c.b16 %v4151, %v4149
    %v6134 = vpack.c.b16 %v4152, %v4150
    %v6135 = vpack.c.b16 %v4155, %v4153
    %v6136 = vpack.c.b16 %v4156, %v4154
    %v6137 = vpack.c.b16 %v4159, %v4157
    %v6138 = vpack.c.b16 %v4160, %v4158
    %v6139 = vpack.c.b16 %v4163, %v4161
    %v6140 = vpack.c.b16 %v4164, %v4162
    %v6141 = vpack.c.b16 %v4167, %v4165
    %v6142 = vpack.c.b16 %v4168, %v4166
    %v6143 = vpack.c.b16 %v4171, %v4169
    %v6144 = vpack.c.b16 %v4172, %v4170
    %v6145 = vpack.c.b16 %v4175, %v4173
    %v6146 = vpack.c.b16 %v4176, %v4174
    %v6147 = vpack.c.b16 %v4179, %v4177
    %v6148 = vpack.c.b16 %v4180, %v4178
    %v6149 = vpack.c.b16 %v4183, %v4181
    %v6150 = vpack.c.b16 %v4184, %v4182
    %v6151 = vpack.c.b16 %v4187, %v4185
    %v6152 = vpack.c.b16 %v4188, %v4186
    %v6153 = vpack.c.b16 %v4191, %v4189
    %v6154 = vpack.c.b16 %v4192, %v4190
    %v6155 = vpack.c.b16 %v4195, %v4193
    %v6156 = vpack.c.b16 %v4196, %v4194
    %v6157 = vpack.c.b16 %v4199, %v4197
    %v6158 = vpack.c.b16 %v4200, %v4198
    %v6159 = vpack.c.b16 %v4203, %v4201
    %v6160 = vpack.c.b16 %v4204, %v4202
    %v6161 = vpack.c.b16 %v4207, %v4205
    %v6162 = vpack.c.b16 %v4208, %v4206
    %v6163 = vpack.c.b16 %v4211, %v4209
    %v6164 = vpack.c.b16 %v4212, %v4210
    %v6165 = vpack.c.b16 %v4215, %v4213
    %v6166 = vpack.c.b16 %v4216, %v4214
    %v6167 = vpack.c.b16 %v4219, %v4217
    %v6168 = vpack.c.b16 %v4220, %v4218
    %v6169 = vpack.c.b16 %v4223, %v4221
    %v6170 = vpack.c.b16 %v4224, %v4222
    %v6171 = vpack.c.b16 %v4227, %v4225
    %v6172 = vpack.c.b16 %v4228, %v4226
    %v6173 = vpack.c.b16 %v4231, %v4229
    %v6174 = vpack.c.b16 %v4232, %v4230
    %v6175 = vpack.c.b16 %v4235, %v4233
    %v6176 = vpack.c.b16 %v4236, %v4234
    %v6177 = vpack.c.b16 %v4239, %v4237
    %v6178 = vpack.c.b16 %v4240, %v4238
    %v6179 = vpack.c.b16 %v4243, %v4241
    %v6180 = vpack.c.b16 %v4244, %v4242
    %v6181 = vpack.c.b16 %v4247, %v4245
    %v6182 = vpack.c.b16 %v4248, %v4246
    %v6183 = vpack.c.b16 %v4251, %v4249
    %v6184 = vpack.c.b16 %v4252, %v4250
    %v6185 = vpack.c.b16 %v4255, %v4253
    %v6186 = vpack.c.b16 %v4256, %v4254
    %v6187 = vpack.c.b16 %v4259, %v4257
    %v6188 = vpack.c.b16 %v4260, %v4258
    %v6189 = vpack.c.b16 %v4263, %v4261
    %v6190 = vpack.c.b16 %v4264, %v4262
    %v6191 = vpack.c.b16 %v4267, %v4265
    %v6192 = vpack.c.b16 %v4268, %v4266
    %v6193 = vpack.c.b16 %v4271, %v4269
    %v6194 = vpack.c.b16 %v4272, %v4270
    %v6195 = vpack.c.b16 %v4275, %v4273
    %v6196 = vpack.c.b16 %v4276, %v4274
    %v6197 = vpack.c.b16 %v4279, %v4277
    %v6198 = vpack.c.b16 %v4280, %v4278
    %v6199 = vpack.c.b16 %v4283, %v4281
    %v6200 = vpack.c.b16 %v4284, %v4282
    %v6201 = vpack.c.b16 %v4287, %v4285
    %v6202 = vpack.c.b16 %v4288, %v4286
    %v6203 = vpack.c.b16 %v4291, %v4289
    %v6204 = vpack.c.b16 %v4292, %v4290
    %v6205 = vpack.c.b16 %v4295, %v4293
    %v6206 = vpack.c.b16 %v4296, %v4294
    %v6207 = vpack.c.b16 %v4299, %v4297
    %v6208 = vpack.c.b16 %v4300, %v4298
    %v6209 = vpack.c.b16 %v4303, %v4301
    %v6210 = vpack.c.b16 %v4304, %v4302
    %v6211 = vpack.c.b16 %v4307, %v4305
    %v6212 = vpack.c.b16 %v4308, %v4306
    %v6213 = vpack.c.b16 %v4311, %v4309
    %v6214 = vpack.c.b16 %v4312, %v4310
    %v6215 = vpack.c.b16 %v4315, %v4313
    %v6216 = vpack.c.b16 %v4316, %v4314
    %v6217 = vpack.c.b16 %v4319, %v4317
    %v6218 = vpack.c.b16 %v4320, %v4318
    %v6219 = vpack.c.b16 %v4323, %v4321
    %v6220 = vpack.c.b16 %v4324, %v4322
    %v6221 = vpack.c.b16 %v4327, %v4325
    %v6222 = vpack.c.b16 %v4328, %v4326
    %v6223 = vpack.c.b16 %v4331, %v4329
    %v6224 = vpack.c.b16 %v4332, %v4330
    %v6225 = vpack.c.b16 %v4335, %v4333
    %v6226 = vpack.c.b16 %v4336, %v4334
    %v6227 = vpack.c.b16 %v4339, %v4337
    %v6228 = vpack.c.b16 %v4340, %v4338
    %v6229 = vpack.c.b16 %v4343, %v4341
    %v6230 = vpack.c.b16 %v4344, %v4342
    %v6231 = vpack.c.b16 %v4347, %v4345
    %v6232 = vpack.c.b16 %v4348, %v4346
    %v6233 = vpack.c.b16 %v4351, %v4349
    %v6234 = vpack.c.b16 %v4352, %v4350
    %v6235 = vpack.c.b16 %v4355, %v4353
    %v6236 = vpack.c.b16 %v4356, %v4354
    %v6237 = vpack.c.b16 %v4359, %v4357
    %v6238 = vpack.c.b16 %v4360, %v4358
    %v6239 = vpack.c.b16 %v4363, %v4361
    %v6240 = vpack.c.b16 %v4364, %v4362
    %v6241 = vpack.c.b16 %v4367, %v4365
    %v6242 = vpack.c.b16 %v4368, %v4366
    %v6243 = vpack.c.b16 %v4371, %v4369
    %v6244 = vpack.c.b16 %v4372, %v4370
    %v6245 = vpack.c.b16 %v4375, %v4373
    %v6246 = vpack.c.b16 %v4376, %v4374
    %v6247 = vpack.c.b16 %v4379, %v4377
    %v6248 = vpack.c.b16 %v4380, %v4378
    %v6249 = vpack.c.b16 %v4383, %v4381
    %v6250 = vpack.c.b16 %v4384, %v4382
    %v6251 = vpack.c.b16 %v4387, %v4385
    %v6252 = vpack.c.b16 %v4388, %v4386
    %v6253 = vpack.c.b16 %v4391, %v4389
    %v6254 = vpack.c.b16 %v4392, %v4390
    %v6255 = vpack.c.b16 %v4395, %v4393
    %v6256 = vpack.c.b16 %v4396, %v4394
    %v6257 = vpack.c.b16 %v4399, %v4397
    %v6258 = vpack.c.b16 %v4400, %v4398
    %v6259 = vpack.c.b16 %v4403, %v4401
    %v6260 = vpack.c.b16 %v4404, %v4402
    %v6261 = vpack.c.b16 %v4407, %v4405
    %v6262 = vpack.c.b16 %v4408, %v4406
    %v6263 = vpack.c.b16 %v4411, %v4409
    %v6264 = vpack.c.b16 %v4412, %v4410
    %v6265 = vpack.c.b16 %v4415, %v4413
    %v6266 = vpack.c.b16 %v4416, %v4414
    %v6267 = vpack.c.b16 %v4419, %v4417
    %v6268 = vpack.c.b16 %v4420, %v4418
    %v6269 = vpack.c.b16 %v4423, %v4421
    %v6270 = vpack.c.b16 %v4424, %v4422
    %v6271 = vpack.c.b16 %v4427, %v4425
    %v6272 = vpack.c.b16 %v4428, %v4426
    %v6273 = vpack.c.b16 %v4431, %v4429
    %v6274 = vpack.c.b16 %v4432, %v4430
    %v6275 = vpack.c.b16 %v4435, %v4433
    %v6276 = vpack.c.b16 %v4436, %v4434
    %v6277 = vpack.c.b16 %v4439, %v4437
    %v6278 = vpack.c.b16 %v4440, %v4438
    %v6279 = vpack.c.b16 %v4443, %v4441
    %v6280 = vpack.c.b16 %v4444, %v4442
    %v6281 = vpack.c.b16 %v4447, %v4445
    %v6282 = vpack.c.b16 %v4448, %v4446
    %v6283 = vpack.c.b16 %v4451, %v4449
    %v6284 = vpack.c.b16 %v4452, %v4450
    %v6285 = vpack.c.b16 %v4455, %v4453
    %v6286 = vpack.c.b16 %v4456, %v4454
    %v6287 = vpack.c.b16 %v4459, %v4457
    %v6288 = vpack.c.b16 %v4460, %v4458
    %v6289 = vpack.c.b16 %v4463, %v4461
    %v6290 = vpack.c.b16 %v4464, %v4462
    %v6291 = vpack.c.b16 %v4467, %v4465
    %v6292 = vpack.c.b16 %v4468, %v4466
    %v6293 = vpack.c.b16 %v4471, %v4469
    %v6294 = vpack.c.b16 %v4472, %v4470
    %v6295 = vpack.c.b16 %v4475, %v4473
    %v6296 = vpack.c.b16 %v4476, %v4474
    %v6297 = vpack.c.b16 %v4479, %v4477
    %v6298 = vpack.c.b16 %v4480, %v4478
    %v6299 = vpack.c.b16 %v4483, %v4481
    %v6300 = vpack.c.b16 %v4484, %v4482
    %v6301 = vpack.c.b16 %v4487, %v4485
    %v6302 = vpack.c.b16 %v4488, %v4486
    %v6303 = vpack.c.b16 %v4491, %v4489
    %v6304 = vpack.c.b16 %v4492, %v4490
    %v6305 = vpack.c.b16 %v4495, %v4493
    %v6306 = vpack.c.b16 %v4496, %v4494
    %v6307 = vpack.c.b16 %v4499, %v4497
    %v6308 = vpack.c.b16 %v4500, %v4498
    %v6309 = vpack.c.b16 %v4503, %v4501
    %v6310 = vpack.c.b16 %v4504, %v4502
    %v6311 = vpack.c.b16 %v4507, %v4505
    %v6312 = vpack.c.b16 %v4508, %v4506
    %v6313 = vpack.c.b16 %v4511, %v4509
    %v6314 = vpack.c.b16 %v4512, %v4510
    %v6315 = vpack.c.b16 %v4515, %v4513
    %v6316 = vpack.c.b16 %v4516, %v4514
    %v6317 = vpack.c.b16 %v4519, %v4517
    %v6318 = vpack.c.b16 %v4520, %v4518
    %v6319 = vpack.c.b16 %v4523, %v4521
    %v6320 = vpack.c.b16 %v4524, %v4522
    %v6321 = vpack.c.b16 %v4527, %v4525
    %v6322 = vpack.c.b16 %v4528, %v4526
    %v6323 = vpack.c.b16 %v4531, %v4529
    %v6324 = vpack.c.b16 %v4532, %v4530
    %v6325 = vpack.c.b16 %v4535, %v4533
    %v6326 = vpack.c.b16 %v4536, %v4534
    %v6327 = vpack.c.b16 %v4539, %v4537
    %v6328 = vpack.c.b16 %v4540, %v4538
    %v6329 = vpack.c.b16 %v4543, %v4541
    %v6330 = vpack.c.b16 %v4544, %v4542
    %v6331 = vpack.c.b16 %v4547, %v4545
    %v6332 = vpack.c.b16 %v4548, %v4546
    %v6333 = vpack.c.b16 %v4551, %v4549
    %v6334 = vpack.c.b16 %v4552, %v4550
    %v6335 = vpack.c.b16 %v4555, %v4553
    %v6336 = vpack.c.b16 %v4556, %v4554
    %v6337 = vpack.c.b16 %v4559, %v4557
    %v6338 = vpack.c.b16 %v4560, %v4558
    %v6339 = vpack.c.b16 %v4563, %v4561
    %v6340 = vpack.c.b16 %v4564, %v4562
    %v6341 = vpack.c.b16 %v4567, %v4565
    %v6342 = vpack.c.b16 %v4568, %v4566
    %v6343 = vpack.c.b16 %v4571, %v4569
    %v6344 = vpack.c.b16 %v4572, %v4570
    %v6345 = vpack.c.b16 %v4575, %v4573
    %v6346 = vpack.c.b16 %v4576, %v4574
    %v6347 = vpack.c.b16 %v4579, %v4577
    %v6348 = vpack.c.b16 %v4580, %v4578
    %v6349 = vpack.c.b16 %v4583, %v4581
    %v6350 = vpack.c.b16 %v4584, %v4582
    %v6351 = vpack.c.b16 %v4587, %v4585
    %v6352 = vpack.c.b16 %v4588, %v4586
    %v6353 = vpack.c.b16 %v4591, %v4589
    %v6354 = vpack.c.b16 %v4592, %v4590
    %v6355 = vpack.c.b16 %v4595, %v4593
    %v6356 = vpack.c.b16 %v4596, %v4594
    %v6357 = vpack.c.b16 %v4599, %v4597
    %v6358 = vpack.c.b16 %v4600, %v4598
    %v6359 = vpack.c.b16 %v4603, %v4601
    %v6360 = vpack.c.b16 %v4604, %v4602
    %v6361 = vpack.c.b16 %v4607, %v4605
    %v6362 = vpack.c.b16 %v4608, %v4606
    %v6363 = vpack.c.b16 %v4611, %v4609
    %v6364 = vpack.c.b16 %v4612, %v4610
    %v6365 = vpack.c.b16 %v4615, %v4613
    %v6366 = vpack.c.b16 %v4616, %v4614
    %v6367 = vpack.c.b16 %v4619, %v4617
    %v6368 = vpack.c.b16 %v4620, %v4618
    %v6369 = vpack.c.b16 %v4623, %v4621
    %v6370 = vpack.c.b16 %v4624, %v4622
    %v6371 = vpack.c.b16 %v4627, %v4625
    %v6372 = vpack.c.b16 %v4628, %v4626
    %v6373 = vpack.c.b16 %v4631, %v4629
    %v6374 = vpack.c.b16 %v4632, %v4630
    %v6375 = vpack.c.b16 %v4635, %v4633
    %v6376 = vpack.c.b16 %v4636, %v4634
    %v6377 = vpack.c.b16 %v4639, %v4637
    %v6378 = vpack.c.b16 %v4640, %v4638
    %v6379 = vpack.c.b16 %v4643, %v4641
    %v6380 = vpack.c.b16 %v4644, %v4642
    %v6381 = vpack.c.b16 %v4647, %v4645
    %v6382 = vpack.c.b16 %v4648, %v4646
    %v6383 = vpack.c.b16 %v4651, %v4649
    %v6384 = vpack.c.b16 %v4652, %v4650
    %v6385 = vpack.c.b16 %v4655, %v4653
    %v6386 = vpack.c.b16 %v4656, %v4654
    %v6387 = vpack.c.b16 %v4659, %v4657
    %v6388 = vpack.c.b16 %v4660, %v4658
    %v6389 = vpack.c.b16 %v4663, %v4661
    %v6390 = vpack.c.b16 %v4664, %v4662
    %v6391 = vpack.c.b16 %v4667, %v4665
    %v6392 = vpack.c.b16 %v4668, %v4666
    %v6393 = vpack.c.b16 %v4671, %v4669
    %v6394 = vpack.c.b16 %v4672, %v4670
    %v6395 = vpack.c.b16 %v4675, %v4673
    %v6396 = vpack.c.b16 %v4676, %v4674
    %v6397 = vpack.c.b16 %v4679, %v4677
    %v6398 = vpack.c.b16 %v4680, %v4678
    %v6399 = vpack.c.b16 %v4683, %v4681
    %v6400 = vpack.c.b16 %v4684, %v4682
    %v6401 = vpack.c.b16 %v4687, %v4685
    %v6402 = vpack.c.b16 %v4688, %v4686
    %v6403 = vpack.c.b16 %v4691, %v4689
    %v6404 = vpack.c.b16 %v4692, %v4690
    %v6405 = vpack.c.b16 %v4695, %v4693
    %v6406 = vpack.c.b16 %v4696, %v4694
    %v6407 = vpack.c.b16 %v4699, %v4697
    %v6408 = vpack.c.b16 %v4700, %v4698
    %v6409 = vpack.c.b16 %v4703, %v4701
    %v6410 = vpack.c.b16 %v4704, %v4702
    %v6411 = vpack.c.b16 %v4707, %v4705
    %v6412 = vpack.c.b16 %v4708, %v4706
    %v6413 = vpack.c.b16 %v4711, %v4709
    %v6414 = vpack.c.b16 %v4712, %v4710
    %v6415 = vpack.c.b16 %v4715, %v4713
    %v6416 = vpack.c.b16 %v4716, %v4714
    %v6417 = vpack.c.b16 %v4719, %v4717
    %v6418 = vpack.c.b16 %v4720, %v4718
    %v6419 = vpack.c.b16 %v4723, %v4721
    %v6420 = vpack.c.b16 %v4724, %v4722
    %v6421 = vpack.c.b16 %v4727, %v4725
    %v6422 = vpack.c.b16 %v4728, %v4726
    %v6423 = vpack.c.b16 %v4731, %v4729
    %v6424 = vpack.c.b16 %v4732, %v4730
    %v6425 = vpack.c.b16 %v4735, %v4733
    %v6426 = vpack.c.b16 %v4736, %v4734
    %v6427 = vpack.c.b16 %v4739, %v4737
    %v6428 = vpack.c.b16 %v4740, %v4738
    %v6429 = vpack.c.b16 %v4743, %v4741
    %v6430 = vpack.c.b16 %v4744, %v4742
    %v6431 = vpack.c.b16 %v4747, %v4745
    %v6432 = vpack.c.b16 %v4748, %v4746
    %v6433 = vpack.c.b16 %v4751, %v4749
    %v6434 = vpack.c.b16 %v4752, %v4750
    %v6435 = vpack.c.b16 %v4755, %v4753
    %v6436 = vpack.c.b16 %v4756, %v4754
    %v6437 = vpack.c.b16 %v4759, %v4757
    %v6438 = vpack.c.b16 %v4760, %v4758
    %v6439 = vpack.c.b16 %v4763, %v4761
    %v6440 = vpack.c.b16 %v4764, %v4762
    %v6441 = vpack.c.b16 %v4767, %v4765
    %v6442 = vpack.c.b16 %v4768, %v4766
    %v6443 = vpack.c.b16 %v4771, %v4769
    %v6444 = vpack.c.b16 %v4772, %v4770
    %v6445 = vpack.c.b16 %v4775, %v4773
    %v6446 = vpack.c.b16 %v4776, %v4774
    %v6447 = vpack.c.b16 %v4779, %v4777
    %v6448 = vpack.c.b16 %v4780, %v4778
    %v6449 = vpack.c.b16 %v4783, %v4781
    %v6450 = vpack.c.b16 %v4784, %v4782
    %v6451 = vpack.c.b16 %v4787, %v4785
    %v6452 = vpack.c.b16 %v4788, %v4786
    %v6453 = vpack.c.b16 %v4791, %v4789
    %v6454 = vpack.c.b16 %v4792, %v4790
    %v6455 = vpack.c.b16 %v4795, %v4793
    %v6456 = vpack.c.b16 %v4796, %v4794
    %v6457 = vpack.c.b16 %v4799, %v4797
    %v6458 = vpack.c.b16 %v4800, %v4798
    %v6459 = vpack.c.b16 %v4803, %v4801
    %v6460 = vpack.c.b16 %v4804, %v4802
    %v6461 = vpack.c.b16 %v4807, %v4805
    %v6462 = vpack.c.b16 %v4808, %v4806
    %v6463 = vpack.c.b16 %v4811, %v4809
    %v6464 = vpack.c.b16 %v4812, %v4810
    %v6465 = vpack.c.b16 %v4815, %v4813
    %v6466 = vpack.c.b16 %v4816, %v4814
    %v6467 = vpack.c.b16 %v4819, %v4817
    %v6468 = vpack.c.b16 %v4820, %v4818
    %v6469 = vpack.c.b16 %v4823, %v4821
    %v6470 = vpack.c.b16 %v4824, %v4822
    %v6471 = vpack.c.b16 %v4827, %v4825
    %v6472 = vpack.c.b16 %v4828, %v4826
    %v6473 = vpack.c.b16 %v4831, %v4829
    %v6474 = vpack.c.b16 %v4832, %v4830
    %v6475 = vpack.c.b16 %v4835, %v4833
    %v6476 = vpack.c.b16 %v4836, %v4834
    %v6477 = vpack.c.b16 %v4839, %v4837
    %v6478 = vpack.c.b16 %v4840, %v4838
    %v6479 = vpack.c.b16 %v4843, %v4841
    %v6480 = vpack.c.b16 %v4844, %v4842
    %v6481 = vpack.c.b16 %v4847, %v4845
    %v6482 = vpack.c.b16 %v4848, %v4846
    %v6483 = vpack.c.b16 %v4851, %v4849
    %v6484 = vpack.c.b16 %v4852, %v4850
    %v6485 = vpack.c.b16 %v4855, %v4853
    %v6486 = vpack.c.b16 %v4856, %v4854
    %v6487 = vpack.c.b16 %v4859, %v4857
    %v6488 = vpack.c.b16 %v4860, %v4858
    %v6489 = vpack.c.b16 %v4863, %v4861
    %v6490 = vpack.c.b16 %v4864, %v4862
    %v6491 = vpack.c.b16 %v4867, %v4865
    %v6492 = vpack.c.b16 %v4868, %v4866
    %v6493 = vpack.c.b16 %v4871, %v4869
    %v6494 = vpack.c.b16 %v4872, %v4870
    %v6495 = vpack.c.b16 %v4875, %v4873
    %v6496 = vpack.c.b16 %v4876, %v4874
    %v6497 = vpack.c.b16 %v4879, %v4877
    %v6498 = vpack.c.b16 %v4880, %v4878
    %v6499 = vpack.c.b16 %v4883, %v4881
    %v6500 = vpack.c.b16 %v4884, %v4882
    %v6501 = vpack.c.b16 %v4887, %v4885
    %v6502 = vpack.c.b16 %v4888, %v4886
    %v6503 = vpack.c.b16 %v4891, %v4889
    %v6504 = vpack.c.b16 %v4892, %v4890
    %v6505 = vpack.c.b16 %v4895, %v4893
    %v6506 = vpack.c.b16 %v4896, %v4894
    %v6507 = vpack.c.b16 %v4899, %v4897
    %v6508 = vpack.c.b16 %v4900, %v4898
    %v6509 = vpack.c.b16 %v4903, %v4901
    %v6510 = vpack.c.b16 %v4904, %v4902
    %v6511 = vpack.c.b16 %v4907, %v4905
    %v6512 = vpack.c.b16 %v4908, %v4906
    %v6513 = vpack.c.b16 %v4911, %v4909
    %v6514 = vpack.c.b16 %v4912, %v4910
    %v6515 = vpack.c.b16 %v4915, %v4913
    %v6516 = vpack.c.b16 %v4916, %v4914
    %v6517 = vpack.c.b16 %v4919, %v4917
    %v6518 = vpack.c.b16 %v4920, %v4918
    %v6519 = vpack.c.b16 %v4923, %v4921
    %v6520 = vpack.c.b16 %v4924, %v4922
    %v6521 = vpack.c.b16 %v4927, %v4925
    %v6522 = vpack.c.b16 %v4928, %v4926
    %v6523 = vpack.c.b16 %v4931, %v4929
    %v6524 = vpack.c.b16 %v4932, %v4930
    %v6525 = vpack.c.b16 %v4935, %v4933
    %v6526 = vpack.c.b16 %v4936, %v4934
    %v6527 = vpack.c.b16 %v4939, %v4937
    %v6528 = vpack.c.b16 %v4940, %v4938
    %v6529 = vpack.c.b16 %v4943, %v4941
    %v6530 = vpack.c.b16 %v4944, %v4942
    %v6531 = vpack.c.b16 %v4947, %v4945
    %v6532 = vpack.c.b16 %v4948, %v4946
    %v6533 = vpack.c.b16 %v4951, %v4949
    %v6534 = vpack.c.b16 %v4952, %v4950
    %v6535 = vpack.c.b16 %v4955, %v4953
    %v6536 = vpack.c.b16 %v4956, %v4954
    %v6537 = vpack.c.b16 %v4959, %v4957
    %v6538 = vpack.c.b16 %v4960, %v4958
    %v6539 = vpack.c.b16 %v4963, %v4961
    %v6540 = vpack.c.b16 %v4964, %v4962
    %v6541 = vpack.c.b16 %v4967, %v4965
    %v6542 = vpack.c.b16 %v4968, %v4966
    %v6543 = vpack.c.b16 %v4971, %v4969
    %v6544 = vpack.c.b16 %v4972, %v4970
    %v6545 = vpack.c.b16 %v4975, %v4973
    %v6546 = vpack.c.b16 %v4976, %v4974
    %v6547 = vpack.c.b16 %v4979, %v4977
    %v6548 = vpack.c.b16 %v4980, %v4978
    %v6549 = vpack.c.b16 %v4983, %v4981
    %v6550 = vpack.c.b16 %v4984, %v4982
    %v6551 = vpack.c.b16 %v4987, %v4985
    %v6552 = vpack.c.b16 %v4988, %v4986
    %v6553 = vpack.c.b16 %v4991, %v4989
    %v6554 = vpack.c.b16 %v4992, %v4990
    %v6555 = vpack.c.b16 %v4995, %v4993
    %v6556 = vpack.c.b16 %v4996, %v4994
    %v6557 = vpack.c.b16 %v4999, %v4997
    %v6558 = vpack.c.b16 %v5000, %v4998
    %v6559 = vpack.c.b16 %v5003, %v5001
    %v6560 = vpack.c.b16 %v5004, %v5002
    %v6561 = vpack.c.b16 %v5007, %v5005
    %v6562 = vpack.c.b16 %v5008, %v5006
    %v6563 = vpack.c.b16 %v5011, %v5009
    %v6564 = vpack.c.b16 %v5012, %v5010
    %v6565 = vpack.c.b16 %v5015, %v5013
    %v6566 = vpack.c.b16 %v5016, %v5014
    %v6567 = vpack.c.b16 %v5019, %v5017
    %v6568 = vpack.c.b16 %v5020, %v5018
    %v6569 = vpack.c.b16 %v5023, %v5021
    %v6570 = vpack.c.b16 %v5024, %v5022
    %v6571 = vpack.c.b16 %v5027, %v5025
    %v6572 = vpack.c.b16 %v5028, %v5026
    %v6573 = vpack.c.b16 %v5031, %v5029
    %v6574 = vpack.c.b16 %v5032, %v5030
    %v6575 = vpack.c.b16 %v5035, %v5033
    %v6576 = vpack.c.b16 %v5036, %v5034
    %v6577 = vpack.c.b16 %v5039, %v5037
    %v6578 = vpack.c.b16 %v5040, %v5038
    %v6579 = vpack.c.b16 %v5043, %v5041
    %v6580 = vpack.c.b16 %v5044, %v5042
    %v6581 = vpack.c.b16 %v5047, %v5045
    %v6582 = vpack.c.b16 %v5048, %v5046
    %v6583 = vpack.c.b16 %v5051, %v5049
    %v6584 = vpack.c.b16 %v5052, %v5050
    %v6585 = vpack.c.b16 %v5055, %v5053
    %v6586 = vpack.c.b16 %v5056, %v5054
    %v6587 = vpack.c.b16 %v5059, %v5057
    %v6588 = vpack.c.b16 %v5060, %v5058
    %v6589 = vpack.c.b16 %v5063, %v5061
    %v6590 = vpack.c.b16 %v5064, %v5062
    %v6591 = vpack.c.b16 %v5067, %v5065
    %v6592 = vpack.c.b16 %v5068, %v5066
    %v6593 = vpack.c.b16 %v5071, %v5069
    %v6594 = vpack.c.b16 %v5072, %v5070
    %v6595 = vpack.c.b16 %v5075, %v5073
    %v6596 = vpack.c.b16 %v5076, %v5074
    %v6597 = vpack.c.b16 %v5079, %v5077
    %v6598 = vpack.c.b16 %v5080, %v5078
    %v6599 = vpack.c.b16 %v5083, %v5081
    %v6600 = vpack.c.b16 %v5084, %v5082
    %v6601 = vpack.c.b16 %v5087, %v5085
    %v6602 = vpack.c.b16 %v5088, %v5086
    %v6603 = vpack.c.b16 %v5091, %v5089
    %v6604 = vpack.c.b16 %v5092, %v5090
    %v6605 = vpack.c.b16 %v5095, %v5093
    %v6606 = vpack.c.b16 %v5096, %v5094
    %v6607 = vpack.c.b16 %v5099, %v5097
    %v6608 = vpack.c.b16 %v5100, %v5098
    %v6609 = vpack.c.b16 %v5103, %v5101
    %v6610 = vpack.c.b16 %v5104, %v5102
    %v6611 = vpack.c.b16 %v5107, %v5105
    %v6612 = vpack.c.b16 %v5108, %v5106
    %v6613 = vpack.c.b16 %v5111, %v5109
    %v6614 = vpack.c.b16 %v5112, %v5110
    %v6615 = vpack.c.b16 %v5115, %v5113
    %v6616 = vpack.c.b16 %v5116, %v5114
    %v6617 = vpack.c.b16 %v5119, %v5117
    %v6618 = vpack.c.b16 %v5120, %v5118
    %v6619 = vpack.c.b16 %v5123, %v5121
    %v6620 = vpack.c.b16 %v5124, %v5122
    %v6621 = vpack.c.b16 %v5127, %v5125
    %v6622 = vpack.c.b16 %v5128, %v5126
    %v6623 = vpack.c.b16 %v5131, %v5129
    %v6624 = vpack.c.b16 %v5132, %v5130
    %v6625 = vpack.c.b16 %v5135, %v5133
    %v6626 = vpack.c.b16 %v5136, %v5134
    %v6627 = vpack.c.b16 %v5139, %v5137
    %v6628 = vpack.c.b16 %v5140, %v5138
    %v6629 = vpack.c.b16 %v5143, %v5141
    %v6630 = vpack.c.b16 %v5144, %v5142
    %v6631 = vpack.c.b16 %v5147, %v5145
    %v6632 = vpack.c.b16 %v5148, %v5146
    %v6633 = vpack.c.b16 %v5151, %v5149
    %v6634 = vpack.c.b16 %v5152, %v5150
    %v6635 = vpack.c.b16 %v5155, %v5153
    %v6636 = vpack.c.b16 %v5156, %v5154
    %v6637 = vpack.c.b16 %v5159, %v5157
    %v6638 = vpack.c.b16 %v5160, %v5158
    %v6639 = vpack.c.b16 %v5163, %v5161
    %v6640 = vpack.c.b16 %v5164, %v5162
    %v6641 = vpack.c.b16 %v5167, %v5165
    %v6642 = vpack.c.b16 %v5168, %v5166
    %v6643 = vpack.c.b16 %v5171, %v5169
    %v6644 = vpack.c.b16 %v5172, %v5170
    %v6645 = vpack.c.b16 %v5175, %v5173
    %v6646 = vpack.c.b16 %v5176, %v5174
    %v6647 = vpack.c.b16 %v5179, %v5177
    %v6648 = vpack.c.b16 %v5180, %v5178
    %v6649 = vpack.c.b16 %v5183, %v5181
    %v6650 = vpack.c.b16 %v5184, %v5182
    %v6651 = vpack.c.b16 %v5187, %v5185
    %v6652 = vpack.c.b16 %v5188, %v5186
    %v6653 = vpack.c.b16 %v5191, %v5189
    %v6654 = vpack.c.b16 %v5192, %v5190
    %v6655 = vpack.c.b16 %v5195, %v5193
    %v6656 = vpack.c.b16 %v5196, %v5194
    %v6657 = vpack.c.b16 %v5199, %v5197
    %v6658 = vpack.c.b16 %v5200, %v5198
    %v6659 = vpack.c.b16 %v5203, %v5201
    %v6660 = vpack.c.b16 %v5204, %v5202
    %v6661 = vpack.c.b16 %v5207, %v5205
    %v6662 = vpack.c.b16 %v5208, %v5206
    %v6663 = vpack.c.b16 %v5211, %v5209
    %v6664 = vpack.c.b16 %v5212, %v5210
    %v6665 = vpack.c.b16 %v5215, %v5213
    %v6666 = vpack.c.b16 %v5216, %v5214
    %v6667 = vpack.c.b16 %v5219, %v5217
    %v6668 = vpack.c.b16 %v5220, %v5218
    %v6669 = vpack.c.b16 %v5223, %v5221
    %v6670 = vpack.c.b16 %v5224, %v5222
    %v6671 = vpack.c.b16 %v5227, %v5225
    %v6672 = vpack.c.b16 %v5228, %v5226
    %v6673 = vpack.c.b16 %v5231, %v5229
    %v6674 = vpack.c.b16 %v5232, %v5230
    %v6675 = vpack.c.b16 %v5235, %v5233
    %v6676 = vpack.c.b16 %v5236, %v5234
    %v6677 = vpack.c.b16 %v5239, %v5237
    %v6678 = vpack.c.b16 %v5240, %v5238
    %v6679 = vpack.c.b16 %v5243, %v5241
    %v6680 = vpack.c.b16 %v5244, %v5242
    %v6681 = vpack.c.b16 %v5247, %v5245
    %v6682 = vpack.c.b16 %v5248, %v5246
    %v6683 = vpack.c.b16 %v5251, %v5249
    %v6684 = vpack.c.b16 %v5252, %v5250
    %v6685 = vpack.c.b16 %v5255, %v5253
    %v6686 = vpack.c.b16 %v5256, %v5254
    %v6687 = vpack.c.b16 %v5259, %v5257
    %v6688 = vpack.c.b16 %v5260, %v5258
    %v6689 = vpack.c.b16 %v5263, %v5261
    %v6690 = vpack.c.b16 %v5264, %v5262
    %v6691 = vpack.c.b16 %v5267, %v5265
    %v6692 = vpack.c.b16 %v5268, %v5266
    %v6693 = vpack.c.b16 %v5271, %v5269
    %v6694 = vpack.c.b16 %v5272, %v5270
    %v6695 = vpack.c.b16 %v5275, %v5273
    %v6696 = vpack.c.b16 %v5276, %v5274
    %v6697 = vpack.c.b16 %v5279, %v5277
    %v6698 = vpack.c.b16 %v5280, %v5278
    %v6699 = vpack.c.b16 %v5283, %v5281
    %v6700 = vpack.c.b16 %v5284, %v5282
    %v6701 = vpack.c.b16 %v5287, %v5285
    %v6702 = vpack.c.b16 %v5288, %v5286
    %v6703 = vpack.c.b16 %v5291, %v5289
    %v6704 = vpack.c.b16 %v5292, %v5290
    %v6705 = vpack.c.b16 %v5295, %v5293
    %v6706 = vpack.c.b16 %v5296, %v5294
    %v6707 = vpack.c.b16 %v5299, %v5297
    %v6708 = vpack.c.b16 %v5300, %v5298
    %v6709 = vpack.c.b16 %v5303, %v5301
    %v6710 = vpack.c.b16 %v5304, %v5302
    %v6711 = vpack.c.b16 %v5307, %v5305
    %v6712 = vpack.c.b16 %v5308, %v5306
    %v6713 = vpack.c.b16 %v5311, %v5309
    %v6714 = vpack.c.b16 %v5312, %v5310
    %v6715 = vpack.c.b16 %v5315, %v5313
    %v6716 = vpack.c.b16 %v5316, %v5314
    %v6717 = vpack.c.b16 %v5319, %v5317
    %v6718 = vpack.c.b16 %v5320, %v5318
    %v6719 = vpack.c.b16 %v5323, %v5321
    %v6720 = vpack.c.b16 %v5324, %v5322
    %v6721 = vpack.c.b16 %v5327, %v5325
    %v6722 = vpack.c.b16 %v5328, %v5326
    %v6723 = vpack.c.b16 %v5331, %v5329
    %v6724 = vpack.c.b16 %v5332, %v5330
    %v6725 = vpack.c.b16 %v5335, %v5333
    %v6726 = vpack.c.b16 %v5336, %v5334
    %v6727 = vpack.c.b16 %v5339, %v5337
    %v6728 = vpack.c.b16 %v5340, %v5338
    %v6729 = vpack.c.b16 %v5343, %v5341
    %v6730 = vpack.c.b16 %v5344, %v5342
    %v6731 = vpack.c.b16 %v5347, %v5345
    %v6732 = vpack.c.b16 %v5348, %v5346
    %v6733 = vpack.c.b16 %v5351, %v5349
    %v6734 = vpack.c.b16 %v5352, %v5350
    %v6735 = vpack.c.b16 %v5355, %v5353
    %v6736 = vpack.c.b16 %v5356, %v5354
    %v6737 = vpack.c.b16 %v5359, %v5357
    %v6738 = vpack.c.b16 %v5360, %v5358
    %v6739 = vpack.c.b16 %v5363, %v5361
    %v6740 = vpack.c.b16 %v5364, %v5362
    %v6741 = vpack.c.b16 %v5367, %v5365
    %v6742 = vpack.c.b16 %v5368, %v5366
    %v6743 = vpack.c.b16 %v5371, %v5369
    %v6744 = vpack.c.b16 %v5372, %v5370
    %v6745 = vpack.c.b16 %v5375, %v5373
    %v6746 = vpack.c.b16 %v5376, %v5374
    %v6747 = vpack.c.b16 %v5379, %v5377
    %v6748 = vpack.c.b16 %v5380, %v5378
    %v6749 = vpack.c.b16 %v5383, %v5381
    %v6750 = vpack.c.b16 %v5384, %v5382
    %v6751 = vpack.c.b16 %v5387, %v5385
    %v6752 = vpack.c.b16 %v5388, %v5386
    %v6753 = vpack.c.b16 %v5391, %v5389
    %v6754 = vpack.c.b16 %v5392, %v5390
    %v6755 = vpack.c.b16 %v5395, %v5393
    %v6756 = vpack.c.b16 %v5396, %v5394
    %v6757 = vpack.c.b16 %v5399, %v5397
    %v6758 = vpack.c.b16 %v5400, %v5398
    %v6759 = vpack.c.b16 %v5403, %v5401
    %v6760 = vpack.c.b16 %v5404, %v5402
    %v6761 = vpack.c.b16 %v5407, %v5405
    %v6762 = vpack.c.b16 %v5408, %v5406
    %v6763 = vpack.c.b16 %v5411, %v5409
    %v6764 = vpack.c.b16 %v5412, %v5410
    %v6765 = vpack.c.b16 %v5415, %v5413
    %v6766 = vpack.c.b16 %v5416, %v5414
    %v6767 = vpack.c.b16 %v5419, %v5417
    %v6768 = vpack.c.b16 %v5420, %v5418
    %v6769 = vpack.c.b16 %v5423, %v5421
    %v6770 = vpack.c.b16 %v5424, %v5422
    %v6771 = vpack.c.b16 %v5427, %v5425
    %v6772 = vpack.c.b16 %v5428, %v5426
    %v6773 = vpack.c.b16 %v5431, %v5429
    %v6774 = vpack.c.b16 %v5432, %v5430
    %v6775 = vpack.c.b16 %v5435, %v5433
    %v6776 = vpack.c.b16 %v5436, %v5434
    %v6777 = vpack.c.b16 %v5439, %v5437
    %v6778 = vpack.c.b16 %v5440, %v5438
    %v6779 = vpack.c.b16 %v5443, %v5441
    %v6780 = vpack.c.b16 %v5444, %v5442
    %v6781 = vpack.c.b16 %v5447, %v5445
    %v6782 = vpack.c.b16 %v5448, %v5446
    %v6783 = vpack.c.b16 %v5451, %v5449
    %v6784 = vpack.c.b16 %v5452, %v5450
    %v6785 = vpack.c.b16 %v5455, %v5453
    %v6786 = vpack.c.b16 %v5456, %v5454
    %v6787 = vpack.c.b16 %v5459, %v5457
    %v6788 = vpack.c.b16 %v5460, %v5458
    %v6789 = vpack.c.b16 %v5463, %v5461
    %v6790 = vpack.c.b16 %v5464, %v5462
    %v6791 = vpack.c.b16 %v5467, %v5465
    %v6792 = vpack.c.b16 %v5468, %v5466
    %v6793 = vpack.c.b16 %v5471, %v5469
    %v6794 = vpack.c.b16 %v5472, %v5470
    %v6795 = vpack.c.b16 %v5475, %v5473
    %v6796 = vpack.c.b16 %v5476, %v5474
    %v6797 = vpack.c.b16 %v5479, %v5477
    %v6798 = vpack.c.b16 %v5480, %v5478
    %v6799 = vpack.c.b16 %v5483, %v5481
    %v6800 = vpack.c.b16 %v5484, %v5482
    %v6801 = vpack.c.b16 %v5487, %v5485
    %v6802 = vpack.c.b16 %v5488, %v5486
    %v6803 = vpack.c.b16 %v5491, %v5489
    %v6804 = vpack.c.b16 %v5492, %v5490
    %v6805 = vpack.c.b16 %v5495, %v5493
    %v6806 = vpack.c.b16 %v5496, %v5494
    %v6807 = vpack.c.b16 %v5499, %v5497
    %v6808 = vpack.c.b16 %v5500, %v5498
    %v6809 = vpack.c.b16 %v5503, %v5501
    %v6810 = vpack.c.b16 %v5504, %v5502
    %v6811 = vpack.c.b16 %v5507, %v5505
    %v6812 = vpack.c.b16 %v5508, %v5506
    %v6813 = vpack.c.b16 %v5511, %v5509
    %v6814 = vpack.c.b16 %v5512, %v5510
    %v6815 = vpack.c.b16 %v5515, %v5513
    %v6816 = vpack.c.b16 %v5516, %v5514
    %v6817 = vpack.c.b16 %v5519, %v5517
    %v6818 = vpack.c.b16 %v5520, %v5518
    %v6819 = vpack.c.b16 %v5523, %v5521
    %v6820 = vpack.c.b16 %v5524, %v5522
    %8117 = vmatprep.subr.bf16.mxu0 %v5526
    %8118 = vmatpush1.bf16.msra.mxu0 %v5525
    %8119 = vmatprep.subr.bf16.mxu0 %v5528
    %8120 = vmatpush1.bf16.msra.mxu0 %v5527
    %8121 = vmatprep.subr.bf16.mxu0 %v5530
    %8122 = vmatpush1.bf16.msra.mxu0 %v5529
    %8123 = vmatprep.subr.bf16.mxu0 %v5532
    %8124 = vmatpush1.bf16.msra.mxu0 %v5531
    %8125 = vmatprep.subr.bf16.mxu0 %v5534
    %8126 = vmatpush1.bf16.msra.mxu0 %v5533
    %8127 = vmatprep.subr.bf16.mxu0 %v5536
    %8128 = vmatpush1.bf16.msra.mxu0 %v5535
    %8129 = vmatprep.subr.bf16.mxu0 %v5538
    %8130 = vmatpush1.bf16.msra.mxu0 %v5537
    %8131 = vmatprep.subr.bf16.mxu0 %v5540
    %8132 = vmatpush1.bf16.msra.mxu0 %v5539
    %8133 = vmatprep.subr.bf16.mxu0 %v5542
    %8134 = vmatpush1.bf16.msra.mxu0 %v5541
    %8135 = vmatprep.subr.bf16.mxu0 %v5544
    %8136 = vmatpush1.bf16.msra.mxu0 %v5543
    %8137 = vmatprep.subr.bf16.mxu0 %v5546
    %8138 = vmatpush1.bf16.msra.mxu0 %v5545
    %8139 = vmatprep.subr.bf16.mxu0 %v5548
    %8140 = vmatpush1.bf16.msra.mxu0 %v5547
    %8141 = vmatprep.subr.bf16.mxu0 %v5550
    %8142 = vmatpush1.bf16.msra.mxu0 %v5549
    %8143 = vmatprep.subr.bf16.mxu0 %v5552
    %8144 = vmatpush1.bf16.msra.mxu0 %v5551
    %8145 = vmatprep.subr.bf16.mxu0 %v5554
    %8146 = vmatpush1.bf16.msra.mxu0 %v5553
    %8147 = vmatprep.subr.bf16.mxu0 %v5556
    %8148 = vmatpush1.bf16.msra.mxu0 %v5555
    %8149 = vmatprep.mubr.bf16.mxu0 %v249
    %8150 = vmatmul.mubr.bf16.gmra.mrb[0].mxu0 %v248
    %v8151 = vpop.f32.mrb[0].mxu0
    %v8152 = vadd.f32 %v1630, %v8151
    %v8153 = vpop.f32.mrb[0].mxu0
    %v8154 = vadd.f32 %v1634, %v8153
    %v8155 = vpop.f32.mrb[0].mxu0
    %v8156 = vadd.f32 %v1630, %v8155
    %v8157 = vpop.f32.mrb[0].mxu0
    %v8158 = vadd.f32 %v1634, %v8157
    %8159 = vdwg.mxu0
    %8160 = vmatprep.subr.bf16.mxu0 %v5558
    %8161 = vmatpush1.bf16.msra.mxu0 %v5557
    %8162 = vmatprep.subr.bf16.mxu0 %v5560
    %8163 = vmatpush1.bf16.msra.mxu0 %v5559
    %8164 = vmatprep.subr.bf16.mxu0 %v5562
    %8165 = vmatpush1.bf16.msra.mxu0 %v5561
    %8166 = vmatprep.subr.bf16.mxu0 %v5564
    %8167 = vmatpush1.bf16.msra.mxu0 %v5563
    %8168 = vmatprep.subr.bf16.mxu0 %v5566
    %8169 = vmatpush1.bf16.msra.mxu0 %v5565
    %8170 = vmatprep.subr.bf16.mxu0 %v5568
    %8171 = vmatpush1.bf16.msra.mxu0 %v5567
    %8172 = vmatprep.subr.bf16.mxu0 %v5570
    %8173 = vmatpush1.bf16.msra.mxu0 %v5569
    %8174 = vmatprep.subr.bf16.mxu0 %v5572
    %8175 = vmatpush1.bf16.msra.mxu0 %v5571
    %8176 = vmatprep.subr.bf16.mxu0 %v5574
    %8177 = vmatpush1.bf16.msra.mxu0 %v5573
    %8178 = vmatprep.subr.bf16.mxu0 %v5576
    %8179 = vmatpush1.bf16.msra.mxu0 %v5575
    %8180 = vmatprep.subr.bf16.mxu0 %v5578
    %8181 = vmatpush1.bf16.msra.mxu0 %v5577
    %8182 = vmatprep.subr.bf16.mxu0 %v5580
    %8183 = vmatpush1.bf16.msra.mxu0 %v5579
    %8184 = vmatprep.subr.bf16.mxu0 %v5582
    %8185 = vmatpush1.bf16.msra.mxu0 %v5581
    %8186 = vmatprep.subr.bf16.mxu0 %v5584
    %8187 = vmatpush1.bf16.msra.mxu0 %v5583
    %8188 = vmatprep.subr.bf16.mxu0 %v5586
    %8189 = vmatpush1.bf16.msra.mxu0 %v5585
    %8190 = vmatprep.subr.bf16.mxu0 %v5588
    %8191 = vmatpush1.bf16.msra.mxu0 %v5587
    %8192 = vmatprep.mubr.bf16.mxu0 %v251
    %8193 = vmatmul.mubr.bf16.gmra.mrb[0].mxu0 %v250
    %v8194 = vpop.f32.mrb[0].mxu0
    %v8195 = vadd.f32 %v8152, %v8194
    %v8196 = vpop.f32.mrb[0].mxu0
    %v8197 = vadd.f32 %v8154, %v8196
    %v8198 = vpop.f32.mrb[0].mxu0
    %v8199 = vadd.f32 %v8156, %v8198
    %v8200 = vpop.f32.mrb[0].mxu0
    %v8201 = vadd.f32 %v8158, %v8200
    %8202 = vdwg.mxu0
    %8203 = vmatprep.subr.bf16.mxu0 %v5590
    %8204 = vmatpush1.bf16.msra.mxu0 %v5589
    %8205 = vmatprep.subr.bf16.mxu0 %v5592
    %8206 = vmatpush1.bf16.msra.mxu0 %v5591
    %8207 = vmatprep.subr.bf16.mxu0 %v5594
    %8208 = vmatpush1.bf16.msra.mxu0 %v5593
    %8209 = vmatprep.subr.bf16.mxu0 %v5596
    %8210 = vmatpush1.bf16.msra.mxu0 %v5595
    %8211 = vmatprep.subr.bf16.mxu0 %v5598
    %8212 = vmatpush1.bf16.msra.mxu0 %v5597
    %8213 = vmatprep.subr.bf16.mxu0 %v5600
    %8214 = vmatpush1.bf16.msra.mxu0 %v5599
    %8215 = vmatprep.subr.bf16.mxu0 %v5602
    %8216 = vmatpush1.bf16.msra.mxu0 %v5601
    %8217 = vmatprep.subr.bf16.mxu0 %v5604
    %8218 = vmatpush1.bf16.msra.mxu0 %v5603
    %8219 = vmatprep.subr.bf16.mxu0 %v5606
    %8220 = vmatpush1.bf16.msra.mxu0 %v5605
    %8221 = vmatprep.subr.bf16.mxu0 %v5608
    %8222 = vmatpush1.bf16.msra.mxu0 %v5607
    %8223 = vmatprep.subr.bf16.mxu0 %v5610
    %8224 = vmatpush1.bf16.msra.mxu0 %v5609
    %8225 = vmatprep.subr.bf16.mxu0 %v5612
    %8226 = vmatpush1.bf16.msra.mxu0 %v5611
    %8227 = vmatprep.subr.bf16.mxu0 %v5614
    %8228 = vmatpush1.bf16.msra.mxu0 %v5613
    %8229 = vmatprep.subr.bf16.mxu0 %v5616
    %8230 = vmatpush1.bf16.msra.mxu0 %v5615
    %8231 = vmatprep.subr.bf16.mxu0 %v5618
    %8232 = vmatpush1.bf16.msra.mxu0 %v5617
    %8233 = vmatprep.subr.bf16.mxu0 %v5620
    %8234 = vmatpush1.bf16.msra.mxu0 %v5619
    %8235 = vmatprep.mubr.bf16.mxu0 %v253
    %8236 = vmatmul.mubr.bf16.gmra.mrb[0].mxu0 %v252
    %v8237 = vpop.f32.mrb[0].mxu0
    %v8238 = vadd.f32 %v8195, %v8237
    %v8239 = vpop.f32.mrb[0].mxu0
    %v8240 = vadd.f32 %v8197, %v8239
    %v8241 = vpop.f32.mrb[0].mxu0
    %v8242 = vadd.f32 %v8199, %v8241
    %v8243 = vpop.f32.mrb[0].mxu0
    %v8244 = vadd.f32 %v8201, %v8243
    %8245 = vdwg.mxu0
    %8246 = vmatprep.subr.bf16.mxu0 %v5622
    %8247 = vmatpush1.bf16.msra.mxu0 %v5621
    %8248 = vmatprep.subr.bf16.mxu0 %v5624
    %8249 = vmatpush1.bf16.msra.mxu0 %v5623
    %8250 = vmatprep.subr.bf16.mxu0 %v5626
    %8251 = vmatpush1.bf16.msra.mxu0 %v5625
    %8252 = vmatprep.subr.bf16.mxu0 %v5628
    %8253 = vmatpush1.bf16.msra.mxu0 %v5627
    %8254 = vmatprep.subr.bf16.mxu0 %v5630
    %8255 = vmatpush1.bf16.msra.mxu0 %v5629
    %8256 = vmatprep.subr.bf16.mxu0 %v5632
    %8257 = vmatpush1.bf16.msra.mxu0 %v5631
    %8258 = vmatprep.subr.bf16.mxu0 %v5634
    %8259 = vmatpush1.bf16.msra.mxu0 %v5633
    %8260 = vmatprep.subr.bf16.mxu0 %v5636
    %8261 = vmatpush1.bf16.msra.mxu0 %v5635
    %8262 = vmatprep.subr.bf16.mxu0 %v5638
    %8263 = vmatpush1.bf16.msra.mxu0 %v5637
    %8264 = vmatprep.subr.bf16.mxu0 %v5640
    %8265 = vmatpush1.bf16.msra.mxu0 %v5639
    %8266 = vmatprep.subr.bf16.mxu0 %v5642
    %8267 = vmatpush1.bf16.msra.mxu0 %v5641
    %8268 = vmatprep.subr.bf16.mxu0 %v5644
    %8269 = vmatpush1.bf16.msra.mxu0 %v5643
    %8270 = vmatprep.subr.bf16.mxu0 %v5646
    %8271 = vmatpush1.bf16.msra.mxu0 %v5645
    %8272 = vmatprep.subr.bf16.mxu0 %v5648
    %8273 = vmatpush1.bf16.msra.mxu0 %v5647
    %8274 = vmatprep.subr.bf16.mxu0 %v5650
    %8275 = vmatpush1.bf16.msra.mxu0 %v5649
    %8276 = vmatprep.subr.bf16.mxu0 %v5652
    %8277 = vmatpush1.bf16.msra.mxu0 %v5651
    %8278 = vmatprep.mubr.bf16.mxu0 %v255
    %8279 = vmatmul.mubr.bf16.gmra.mrb[0].mxu0 %v254
    %v8280 = vpop.f32.mrb[0].mxu0
    %v8281 = vadd.f32 %v8238, %v8280
    %v8282 = vpop.f32.mrb[0].mxu0
    %v8283 = vadd.f32 %v8240, %v8282
    %v8284 = vpop.f32.mrb[0].mxu0
    %v8285 = vadd.f32 %v8242, %v8284
    %v8286 = vpop.f32.mrb[0].mxu0
    %v8287 = vadd.f32 %v8244, %v8286
    %8288 = vdwg.mxu0
    %8289 = vmatprep.subr.bf16.mxu0 %v5654
    %8290 = vmatpush1.bf16.msra.mxu0 %v5653
    %8291 = vmatprep.subr.bf16.mxu0 %v5656
    %8292 = vmatpush1.bf16.msra.mxu0 %v5655
    %8293 = vmatprep.subr.bf16.mxu0 %v5658
    %8294 = vmatpush1.bf16.msra.mxu0 %v5657
    %8295 = vmatprep.subr.bf16.mxu0 %v5660
    %8296 = vmatpush1.bf16.msra.mxu0 %v5659
    %8297 = vmatprep.subr.bf16.mxu0 %v5662
    %8298 = vmatpush1.bf16.msra.mxu0 %v5661
    %8299 = vmatprep.subr.bf16.mxu0 %v5664
    %8300 = vmatpush1.bf16.msra.mxu0 %v5663
    %8301 = vmatprep.subr.bf16.mxu0 %v5666
    %8302 = vmatpush1.bf16.msra.mxu0 %v5665
    %8303 = vmatprep.subr.bf16.mxu0 %v5668
    %8304 = vmatpush1.bf16.msra.mxu0 %v5667
    %8305 = vmatprep.subr.bf16.mxu0 %v5670
    %8306 = vmatpush1.bf16.msra.mxu0 %v5669
    %8307 = vmatprep.subr.bf16.mxu0 %v5672
    %8308 = vmatpush1.bf16.msra.mxu0 %v5671
    %8309 = vmatprep.subr.bf16.mxu0 %v5674
    %8310 = vmatpush1.bf16.msra.mxu0 %v5673
    %8311 = vmatprep.subr.bf16.mxu0 %v5676
    %8312 = vmatpush1.bf16.msra.mxu0 %v5675
    %8313 = vmatprep.subr.bf16.mxu0 %v5678
    %8314 = vmatpush1.bf16.msra.mxu0 %v5677
    %8315 = vmatprep.subr.bf16.mxu0 %v5680
    %8316 = vmatpush1.bf16.msra.mxu0 %v5679
    %8317 = vmatprep.subr.bf16.mxu0 %v5682
    %8318 = vmatpush1.bf16.msra.mxu0 %v5681
    %8319 = vmatprep.subr.bf16.mxu0 %v5684
    %8320 = vmatpush1.bf16.msra.mxu0 %v5683
    %8321 = vmatprep.mubr.bf16.mxu0 %v257
    %8322 = vmatmul.mubr.bf16.gmra.mrb[0].mxu0 %v256
    %v8323 = vpop.f32.mrb[0].mxu0
    %v8324 = vadd.f32 %v8281, %v8323
    %v8325 = vpop.f32.mrb[0].mxu0
    %v8326 = vadd.f32 %v8283, %v8325
    %v8327 = vpop.f32.mrb[0].mxu0
    %v8328 = vadd.f32 %v8285, %v8327
    %v8329 = vpop.f32.mrb[0].mxu0
    %v8330 = vadd.f32 %v8287, %v8329
    %8331 = vdwg.mxu0
    %8332 = vmatprep.subr.bf16.mxu0 %v5686
    %8333 = vmatpush1.bf16.msra.mxu0 %v5685
    %8334 = vmatprep.subr.bf16.mxu0 %v5688
    %8335 = vmatpush1.bf16.msra.mxu0 %v5687
    %8336 = vmatprep.subr.bf16.mxu0 %v5690
    %8337 = vmatpush1.bf16.msra.mxu0 %v5689
    %8338 = vmatprep.subr.bf16.mxu0 %v5692
    %8339 = vmatpush1.bf16.msra.mxu0 %v5691
    %8340 = vmatprep.subr.bf16.mxu0 %v5694
    %8341 = vmatpush1.bf16.msra.mxu0 %v5693
    %8342 = vmatprep.subr.bf16.mxu0 %v5696
    %8343 = vmatpush1.bf16.msra.mxu0 %v5695
    %8344 = vmatprep.subr.bf16.mxu0 %v5698
    %8345 = vmatpush1.bf16.msra.mxu0 %v5697
    %8346 = vmatprep.subr.bf16.mxu0 %v5700
    %8347 = vmatpush1.bf16.msra.mxu0 %v5699
    %8348 = vmatprep.subr.bf16.mxu0 %v5702
    %8349 = vmatpush1.bf16.msra.mxu0 %v5701
    %8350 = vmatprep.subr.bf16.mxu0 %v5704
    %8351 = vmatpush1.bf16.msra.mxu0 %v5703
    %8352 = vmatprep.subr.bf16.mxu0 %v5706
    %8353 = vmatpush1.bf16.msra.mxu0 %v5705
    %8354 = vmatprep.subr.bf16.mxu0 %v5708
    %8355 = vmatpush1.bf16.msra.mxu0 %v5707
    %8356 = vmatprep.subr.bf16.mxu0 %v5710
    %8357 = vmatpush1.bf16.msra.mxu0 %v5709
    %8358 = vmatprep.subr.bf16.mxu0 %v5712
    %8359 = vmatpush1.bf16.msra.mxu0 %v5711
    %8360 = vmatprep.subr.bf16.mxu0 %v5714
    %8361 = vmatpush1.bf16.msra.mxu0 %v5713
    %8362 = vmatprep.subr.bf16.mxu0 %v5716
    %8363 = vmatpush1.bf16.msra.mxu0 %v5715
    %8364 = vmatprep.mubr.bf16.mxu0 %v259
    %8365 = vmatmul.mubr.bf16.gmra.mrb[0].mxu0 %v258
    %v8366 = vpop.f32.mrb[0].mxu0
    %v8367 = vadd.f32 %v8324, %v8366
    %v8368 = vpop.f32.mrb[0].mxu0
    %v8369 = vadd.f32 %v8326, %v8368
    %v8370 = vpop.f32.mrb[0].mxu0
    %v8371 = vadd.f32 %v8328, %v8370
    %v8372 = vpop.f32.mrb[0].mxu0
    %v8373 = vadd.f32 %v8330, %v8372
    %8374 = vdwg.mxu0
    %8375 = vmatprep.subr.bf16.mxu0 %v5718
    %8376 = vmatpush1.bf16.msra.mxu0 %v5717
    %8377 = vmatprep.subr.bf16.mxu0 %v5720
    %8378 = vmatpush1.bf16.msra.mxu0 %v5719
    %8379 = vmatprep.subr.bf16.mxu0 %v5722
    %8380 = vmatpush1.bf16.msra.mxu0 %v5721
    %8381 = vmatprep.subr.bf16.mxu0 %v5724
    %8382 = vmatpush1.bf16.msra.mxu0 %v5723
    %8383 = vmatprep.subr.bf16.mxu0 %v5726
    %8384 = vmatpush1.bf16.msra.mxu0 %v5725
    %8385 = vmatprep.subr.bf16.mxu0 %v5728
    %8386 = vmatpush1.bf16.msra.mxu0 %v5727
    %8387 = vmatprep.subr.bf16.mxu0 %v5730
    %8388 = vmatpush1.bf16.msra.mxu0 %v5729
    %8389 = vmatprep.subr.bf16.mxu0 %v5732
    %8390 = vmatpush1.bf16.msra.mxu0 %v5731
    %8391 = vmatprep.subr.bf16.mxu0 %v5734
    %8392 = vmatpush1.bf16.msra.mxu0 %v5733
    %8393 = vmatprep.subr.bf16.mxu0 %v5736
    %8394 = vmatpush1.bf16.msra.mxu0 %v5735
    %8395 = vmatprep.subr.bf16.mxu0 %v5738
    %8396 = vmatpush1.bf16.msra.mxu0 %v5737
    %8397 = vmatprep.subr.bf16.mxu0 %v5740
    %8398 = vmatpush1.bf16.msra.mxu0 %v5739
    %8399 = vmatprep.subr.bf16.mxu0 %v5742
    %8400 = vmatpush1.bf16.msra.mxu0 %v5741
    %8401 = vmatprep.subr.bf16.mxu0 %v5744
    %8402 = vmatpush1.bf16.msra.mxu0 %v5743
    %8403 = vmatprep.subr.bf16.mxu0 %v5746
    %8404 = vmatpush1.bf16.msra.mxu0 %v5745
    %8405 = vmatprep.subr.bf16.mxu0 %v5748
    %8406 = vmatpush1.bf16.msra.mxu0 %v5747
    %8407 = vmatprep.mubr.bf16.mxu0 %v261
    %8408 = vmatmul.mubr.bf16.gmra.mrb[0].mxu0 %v260
    %v8409 = vpop.f32.mrb[0].mxu0
    %v8410 = vadd.f32 %v8367, %v8409
    %v8411 = vpop.f32.mrb[0].mxu0
    %v8412 = vadd.f32 %v8369, %v8411
    %v8413 = vpop.f32.mrb[0].mxu0
    %v8414 = vadd.f32 %v8371, %v8413
    %v8415 = vpop.f32.mrb[0].mxu0
    %v8416 = vadd.f32 %v8373, %v8415
    %8417 = vdwg.mxu0
    %8418 = vmatprep.subr.bf16.mxu0 %v5750
    %8419 = vmatpush1.bf16.msra.mxu0 %v5749
    %8420 = vmatprep.subr.bf16.mxu0 %v5752
    %8421 = vmatpush1.bf16.msra.mxu0 %v5751
    %8422 = vmatprep.subr.bf16.mxu0 %v5754
    %8423 = vmatpush1.bf16.msra.mxu0 %v5753
    %8424 = vmatprep.subr.bf16.mxu0 %v5756
    %8425 = vmatpush1.bf16.msra.mxu0 %v5755
    %8426 = vmatprep.subr.bf16.mxu0 %v5758
    %8427 = vmatpush1.bf16.msra.mxu0 %v5757
    %8428 = vmatprep.subr.bf16.mxu0 %v5760
    %8429 = vmatpush1.bf16.msra.mxu0 %v5759
    %8430 = vmatprep.subr.bf16.mxu0 %v5762
    %8431 = vmatpush1.bf16.msra.mxu0 %v5761
    %8432 = vmatprep.subr.bf16.mxu0 %v5764
    %8433 = vmatpush1.bf16.msra.mxu0 %v5763
    %8434 = vmatprep.subr.bf16.mxu0 %v5766
    %8435 = vmatpush1.bf16.msra.mxu0 %v5765
    %8436 = vmatprep.subr.bf16.mxu0 %v5768
    %8437 = vmatpush1.bf16.msra.mxu0 %v5767
    %8438 = vmatprep.subr.bf16.mxu0 %v5770
    %8439 = vmatpush1.bf16.msra.mxu0 %v5769
    %8440 = vmatprep.subr.bf16.mxu0 %v5772
    %8441 = vmatpush1.bf16.msra.mxu0 %v5771
    %8442 = vmatprep.subr.bf16.mxu0 %v5774
    %8443 = vmatpush1.bf16.msra.mxu0 %v5773
    %8444 = vmatprep.subr.bf16.mxu0 %v5776
    %8445 = vmatpush1.bf16.msra.mxu0 %v5775
    %8446 = vmatprep.subr.bf16.mxu0 %v5778
    %8447 = vmatpush1.bf16.msra.mxu0 %v5777
    %8448 = vmatprep.subr.bf16.mxu0 %v5780
    %8449 = vmatpush1.bf16.msra.mxu0 %v5779
    %8450 = vmatprep.mubr.bf16.mxu0 %v263
    %8451 = vmatmul.mubr.bf16.gmra.mrb[0].mxu0 %v262
    %v8452 = vpop.f32.mrb[0].mxu0
    %v8453 = vadd.f32 %v8410, %v8452
    %v8454 = vpop.f32.mrb[0].mxu0
    %v8455 = vadd.f32 %v8412, %v8454
    %v8456 = vpop.f32.mrb[0].mxu0
    %v8457 = vadd.f32 %v8414, %v8456
    %v8458 = vpop.f32.mrb[0].mxu0
    %v8459 = vadd.f32 %v8416, %v8458
    %8460 = vdwg.mxu0
    %8461 = vmatprep.subr.bf16.mxu0 %v5782
    %8462 = vmatpush1.bf16.msra.mxu0 %v5781
    %8463 = vmatprep.subr.bf16.mxu0 %v5784
    %8464 = vmatpush1.bf16.msra.mxu0 %v5783
    %8465 = vmatprep.subr.bf16.mxu0 %v5786
    %8466 = vmatpush1.bf16.msra.mxu0 %v5785
    %8467 = vmatprep.subr.bf16.mxu0 %v5788
    %8468 = vmatpush1.bf16.msra.mxu0 %v5787
    %8469 = vmatprep.subr.bf16.mxu0 %v5790
    %8470 = vmatpush1.bf16.msra.mxu0 %v5789
    %8471 = vmatprep.subr.bf16.mxu0 %v5792
    %8472 = vmatpush1.bf16.msra.mxu0 %v5791
    %8473 = vmatprep.subr.bf16.mxu0 %v5794
    %8474 = vmatpush1.bf16.msra.mxu0 %v5793
    %8475 = vmatprep.subr.bf16.mxu0 %v5796
    %8476 = vmatpush1.bf16.msra.mxu0 %v5795
    %8477 = vmatprep.subr.bf16.mxu0 %v5798
    %8478 = vmatpush1.bf16.msra.mxu0 %v5797
    %8479 = vmatprep.subr.bf16.mxu0 %v5800
    %8480 = vmatpush1.bf16.msra.mxu0 %v5799
    %8481 = vmatprep.subr.bf16.mxu0 %v5802
    %8482 = vmatpush1.bf16.msra.mxu0 %v5801
    %8483 = vmatprep.subr.bf16.mxu0 %v5804
    %8484 = vmatpush1.bf16.msra.mxu0 %v5803
    %8485 = vmatprep.subr.bf16.mxu0 %v5806
    %8486 = vmatpush1.bf16.msra.mxu0 %v5805
    %8487 = vmatprep.subr.bf16.mxu0 %v5808
    %8488 = vmatpush1.bf16.msra.mxu0 %v5807
    %8489 = vmatprep.subr.bf16.mxu0 %v5810
    %8490 = vmatpush1.bf16.msra.mxu0 %v5809
    %8491 = vmatprep.subr.bf16.mxu0 %v5812
    %8492 = vmatpush1.bf16.msra.mxu0 %v5811
    %8493 = vmatprep.mubr.bf16.mxu0 %v265
    %8494 = vmatmul.mubr.bf16.gmra.mrb[0].mxu0 %v264
    %v8495 = vpop.f32.mrb[0].mxu0
    %v8496 = vadd.f32 %v8453, %v8495
    %v8497 = vpop.f32.mrb[0].mxu0
    %v8498 = vadd.f32 %v8455, %v8497
    %v8499 = vpop.f32.mrb[0].mxu0
    %v8500 = vadd.f32 %v8457, %v8499
    %v8501 = vpop.f32.mrb[0].mxu0
    %v8502 = vadd.f32 %v8459, %v8501
    %8503 = vdwg.mxu0
    %8504 = vmatprep.subr.bf16.mxu0 %v5814
    %8505 = vmatpush1.bf16.msra.mxu0 %v5813
    %8506 = vmatprep.subr.bf16.mxu0 %v5816
    %8507 = vmatpush1.bf16.msra.mxu0 %v5815
    %8508 = vmatprep.subr.bf16.mxu0 %v5818
    %8509 = vmatpush1.bf16.msra.mxu0 %v5817
    %8510 = vmatprep.subr.bf16.mxu0 %v5820
    %8511 = vmatpush1.bf16.msra.mxu0 %v5819
    %8512 = vmatprep.subr.bf16.mxu0 %v5822
    %8513 = vmatpush1.bf16.msra.mxu0 %v5821
    %8514 = vmatprep.subr.bf16.mxu0 %v5824
    %8515 = vmatpush1.bf16.msra.mxu0 %v5823
    %8516 = vmatprep.subr.bf16.mxu0 %v5826
    %8517 = vmatpush1.bf16.msra.mxu0 %v5825
    %8518 = vmatprep.subr.bf16.mxu0 %v5828
    %8519 = vmatpush1.bf16.msra.mxu0 %v5827
    %8520 = vmatprep.subr.bf16.mxu0 %v5830
    %8521 = vmatpush1.bf16.msra.mxu0 %v5829
    %8522 = vmatprep.subr.bf16.mxu0 %v5832
    %8523 = vmatpush1.bf16.msra.mxu0 %v5831
    %8524 = vmatprep.subr.bf16.mxu0 %v5834
    %8525 = vmatpush1.bf16.msra.mxu0 %v5833
    %8526 = vmatprep.subr.bf16.mxu0 %v5836
    %8527 = vmatpush1.bf16.msra.mxu0 %v5835
    %8528 = vmatprep.subr.bf16.mxu0 %v5838
    %8529 = vmatpush1.bf16.msra.mxu0 %v5837
    %8530 = vmatprep.subr.bf16.mxu0 %v5840
    %8531 = vmatpush1.bf16.msra.mxu0 %v5839
    %8532 = vmatprep.subr.bf16.mxu0 %v5842
    %8533 = vmatpush1.bf16.msra.mxu0 %v5841
    %8534 = vmatprep.subr.bf16.mxu0 %v5844
    %8535 = vmatpush1.bf16.msra.mxu0 %v5843
    %8536 = vmatprep.mubr.bf16.mxu0 %v267
    %8537 = vmatmul.mubr.bf16.gmra.mrb[0].mxu0 %v266
    %v8538 = vpop.f32.mrb[0].mxu0
    %v8539 = vadd.f32 %v8496, %v8538
    %v8540 = vpop.f32.mrb[0].mxu0
    %v8541 = vadd.f32 %v8498, %v8540
    %v8542 = vpop.f32.mrb[0].mxu0
    %v8543 = vadd.f32 %v8500, %v8542
    %v8544 = vpop.f32.mrb[0].mxu0
    %v8545 = vadd.f32 %v8502, %v8544
    %8546 = vdwg.mxu0
    %8547 = vmatprep.subr.bf16.mxu0 %v5846
    %8548 = vmatpush1.bf16.msra.mxu0 %v5845
    %8549 = vmatprep.subr.bf16.mxu0 %v5848
    %8550 = vmatpush1.bf16.msra.mxu0 %v5847
    %8551 = vmatprep.subr.bf16.mxu0 %v5850
    %8552 = vmatpush1.bf16.msra.mxu0 %v5849
    %8553 = vmatprep.subr.bf16.mxu0 %v5852
    %8554 = vmatpush1.bf16.msra.mxu0 %v5851
    %8555 = vmatprep.subr.bf16.mxu0 %v5854
    %8556 = vmatpush1.bf16.msra.mxu0 %v5853
    %8557 = vmatprep.subr.bf16.mxu0 %v5856
    %8558 = vmatpush1.bf16.msra.mxu0 %v5855
    %8559 = vmatprep.subr.bf16.mxu0 %v5858
    %8560 = vmatpush1.bf16.msra.mxu0 %v5857
    %8561 = vmatprep.subr.bf16.mxu0 %v5860
    %8562 = vmatpush1.bf16.msra.mxu0 %v5859
    %8563 = vmatprep.subr.bf16.mxu0 %v5862
    %8564 = vmatpush1.bf16.msra.mxu0 %v5861
    %8565 = vmatprep.subr.bf16.mxu0 %v5864
    %8566 = vmatpush1.bf16.msra.mxu0 %v5863
    %8567 = vmatprep.subr.bf16.mxu0 %v5866
    %8568 = vmatpush1.bf16.msra.mxu0 %v5865
    %8569 = vmatprep.subr.bf16.mxu0 %v5868
    %8570 = vmatpush1.bf16.msra.mxu0 %v5867
    %8571 = vmatprep.subr.bf16.mxu0 %v5870
    %8572 = vmatpush1.bf16.msra.mxu0 %v5869
    %8573 = vmatprep.subr.bf16.mxu0 %v5872
    %8574 = vmatpush1.bf16.msra.mxu0 %v5871
    %8575 = vmatprep.subr.bf16.mxu0 %v5874
    %8576 = vmatpush1.bf16.msra.mxu0 %v5873
    %8577 = vmatprep.subr.bf16.mxu0 %v5876
    %8578 = vmatpush1.bf16.msra.mxu0 %v5875
    %8579 = vmatprep.mubr.bf16.mxu0 %v269
    %8580 = vmatmul.mubr.bf16.gmra.mrb[0].mxu0 %v268
    %v8581 = vpop.f32.mrb[0].mxu0
    %v8582 = vadd.f32 %v8539, %v8581
    %v8583 = vpop.f32.mrb[0].mxu0
    %v8584 = vadd.f32 %v8541, %v8583
    %v8585 = vpop.f32.mrb[0].mxu0
    %v8586 = vadd.f32 %v8543, %v8585
    %v8587 = vpop.f32.mrb[0].mxu0
    %v8588 = vadd.f32 %v8545, %v8587
    %8589 = vdwg.mxu0
    %8590 = vmatprep.subr.bf16.mxu0 %v5878
    %8591 = vmatpush1.bf16.msra.mxu0 %v5877
    %8592 = vmatprep.subr.bf16.mxu0 %v5880
    %8593 = vmatpush1.bf16.msra.mxu0 %v5879
    %8594 = vmatprep.subr.bf16.mxu0 %v5882
    %8595 = vmatpush1.bf16.msra.mxu0 %v5881
    %8596 = vmatprep.subr.bf16.mxu0 %v5884
    %8597 = vmatpush1.bf16.msra.mxu0 %v5883
    %8598 = vmatprep.subr.bf16.mxu0 %v5886
    %8599 = vmatpush1.bf16.msra.mxu0 %v5885
    %8600 = vmatprep.subr.bf16.mxu0 %v5888
    %8601 = vmatpush1.bf16.msra.mxu0 %v5887
    %8602 = vmatprep.subr.bf16.mxu0 %v5890
    %8603 = vmatpush1.bf16.msra.mxu0 %v5889
    %8604 = vmatprep.subr.bf16.mxu0 %v5892
    %8605 = vmatpush1.bf16.msra.mxu0 %v5891
    %8606 = vmatprep.subr.bf16.mxu0 %v5894
    %8607 = vmatpush1.bf16.msra.mxu0 %v5893
    %8608 = vmatprep.subr.bf16.mxu0 %v5896
    %8609 = vmatpush1.bf16.msra.mxu0 %v5895
    %8610 = vmatprep.subr.bf16.mxu0 %v5898
    %8611 = vmatpush1.bf16.msra.mxu0 %v5897
    %8612 = vmatprep.subr.bf16.mxu0 %v5900
    %8613 = vmatpush1.bf16.msra.mxu0 %v5899
    %8614 = vmatprep.subr.bf16.mxu0 %v5902
    %8615 = vmatpush1.bf16.msra.mxu0 %v5901
    %8616 = vmatprep.subr.bf16.mxu0 %v5904
    %8617 = vmatpush1.bf16.msra.mxu0 %v5903
    %8618 = vmatprep.subr.bf16.mxu0 %v5906
    %8619 = vmatpush1.bf16.msra.mxu0 %v5905
    %8620 = vmatprep.subr.bf16.mxu0 %v5908
    %8621 = vmatpush1.bf16.msra.mxu0 %v5907
    %8622 = vmatprep.mubr.bf16.mxu0 %v271
    %8623 = vmatmul.mubr.bf16.gmra.mrb[0].mxu0 %v270
    %v8624 = vpop.f32.mrb[0].mxu0
    %v8625 = vadd.f32 %v8582, %v8624
    %v8626 = vpop.f32.mrb[0].mxu0
    %v8627 = vadd.f32 %v8584, %v8626
    %v8628 = vpop.f32.mrb[0].mxu0
    %v8629 = vadd.f32 %v8586, %v8628
    %v8630 = vpop.f32.mrb[0].mxu0
    %v8631 = vadd.f32 %v8588, %v8630
    %8632 = vdwg.mxu0
    %8633 = vmatprep.subr.bf16.mxu0 %v5910
    %8634 = vmatpush1.bf16.msra.mxu0 %v5909
    %8635 = vmatprep.subr.bf16.mxu0 %v5912
    %8636 = vmatpush1.bf16.msra.mxu0 %v5911
    %8637 = vmatprep.subr.bf16.mxu0 %v5914
    %8638 = vmatpush1.bf16.msra.mxu0 %v5913
    %8639 = vmatprep.subr.bf16.mxu0 %v5916
    %8640 = vmatpush1.bf16.msra.mxu0 %v5915
    %8641 = vmatprep.subr.bf16.mxu0 %v5918
    %8642 = vmatpush1.bf16.msra.mxu0 %v5917
    %8643 = vmatprep.subr.bf16.mxu0 %v5920
    %8644 = vmatpush1.bf16.msra.mxu0 %v5919
    %8645 = vmatprep.subr.bf16.mxu0 %v5922
    %8646 = vmatpush1.bf16.msra.mxu0 %v5921
    %8647 = vmatprep.subr.bf16.mxu0 %v5924
    %8648 = vmatpush1.bf16.msra.mxu0 %v5923
    %8649 = vmatprep.subr.bf16.mxu0 %v5926
    %8650 = vmatpush1.bf16.msra.mxu0 %v5925
    %8651 = vmatprep.subr.bf16.mxu0 %v5928
    %8652 = vmatpush1.bf16.msra.mxu0 %v5927
    %8653 = vmatprep.subr.bf16.mxu0 %v5930
    %8654 = vmatpush1.bf16.msra.mxu0 %v5929
    %8655 = vmatprep.subr.bf16.mxu0 %v5932
    %8656 = vmatpush1.bf16.msra.mxu0 %v5931
    %8657 = vmatprep.subr.bf16.mxu0 %v5934
    %8658 = vmatpush1.bf16.msra.mxu0 %v5933
    %8659 = vmatprep.subr.bf16.mxu0 %v5936
    %8660 = vmatpush1.bf16.msra.mxu0 %v5935
    %8661 = vmatprep.subr.bf16.mxu0 %v5938
    %8662 = vmatpush1.bf16.msra.mxu0 %v5937
    %8663 = vmatprep.subr.bf16.mxu0 %v5940
    %8664 = vmatpush1.bf16.msra.mxu0 %v5939
    %8665 = vmatprep.mubr.bf16.mxu0 %v273
    %8666 = vmatmul.mubr.bf16.gmra.mrb[0].mxu0 %v272
    %v8667 = vpop.f32.mrb[0].mxu0
    %v8668 = vadd.f32 %v8625, %v8667
    %v8669 = vpop.f32.mrb[0].mxu0
    %v8670 = vadd.f32 %v8627, %v8669
    %v8671 = vpop.f32.mrb[0].mxu0
    %v8672 = vadd.f32 %v8629, %v8671
    %v8673 = vpop.f32.mrb[0].mxu0
    %v8674 = vadd.f32 %v8631, %v8673
    %8675 = vdwg.mxu0
    %8676 = vmatprep.subr.bf16.mxu0 %v5942
    %8677 = vmatpush1.bf16.msra.mxu0 %v5941
    %8678 = vmatprep.subr.bf16.mxu0 %v5944
    %8679 = vmatpush1.bf16.msra.mxu0 %v5943
    %8680 = vmatprep.subr.bf16.mxu0 %v5946
    %8681 = vmatpush1.bf16.msra.mxu0 %v5945
    %8682 = vmatprep.subr.bf16.mxu0 %v5948
    %8683 = vmatpush1.bf16.msra.mxu0 %v5947
    %8684 = vmatprep.subr.bf16.mxu0 %v5950
    %8685 = vmatpush1.bf16.msra.mxu0 %v5949
    %8686 = vmatprep.subr.bf16.mxu0 %v5952
    %8687 = vmatpush1.bf16.msra.mxu0 %v5951
    %8688 = vmatprep.subr.bf16.mxu0 %v5954
    %8689 = vmatpush1.bf16.msra.mxu0 %v5953
    %8690 = vmatprep.subr.bf16.mxu0 %v5956
    %8691 = vmatpush1.bf16.msra.mxu0 %v5955
    %8692 = vmatprep.subr.bf16.mxu0 %v5958
    %8693 = vmatpush1.bf16.msra.mxu0 %v5957
    %8694 = vmatprep.subr.bf16.mxu0 %v5960
    %8695 = vmatpush1.bf16.msra.mxu0 %v5959
    %8696 = vmatprep.subr.bf16.mxu0 %v5962
    %8697 = vmatpush1.bf16.msra.mxu0 %v5961
    %8698 = vmatprep.subr.bf16.mxu0 %v5964
    %8699 = vmatpush1.bf16.msra.mxu0 %v5963
    %8700 = vmatprep.subr.bf16.mxu0 %v5966
    %8701 = vmatpush1.bf16.msra.mxu0 %v5965
    %8702 = vmatprep.subr.bf16.mxu0 %v5968
    %8703 = vmatpush1.bf16.msra.mxu0 %v5967
    %8704 = vmatprep.subr.bf16.mxu0 %v5970
    %8705 = vmatpush1.bf16.msra.mxu0 %v5969
    %8706 = vmatprep.subr.bf16.mxu0 %v5972
    %8707 = vmatpush1.bf16.msra.mxu0 %v5971
    %8708 = vmatprep.mubr.bf16.mxu0 %v275
    %8709 = vmatmul.mubr.bf16.gmra.mrb[0].mxu0 %v274
    %v8710 = vpop.f32.mrb[0].mxu0
    %v8711 = vadd.f32 %v8668, %v8710
    %v8712 = vpop.f32.mrb[0].mxu0
    %v8713 = vadd.f32 %v8670, %v8712
    %v8714 = vpop.f32.mrb[0].mxu0
    %v8715 = vadd.f32 %v8672, %v8714
    %v8716 = vpop.f32.mrb[0].mxu0
    %v8717 = vadd.f32 %v8674, %v8716
    %8718 = vdwg.mxu0
    %8719 = vmatprep.subr.bf16.mxu0 %v5974
    %8720 = vmatpush1.bf16.msra.mxu0 %v5973
    %8721 = vmatprep.subr.bf16.mxu0 %v5976
    %8722 = vmatpush1.bf16.msra.mxu0 %v5975
    %8723 = vmatprep.subr.bf16.mxu0 %v5978
    %8724 = vmatpush1.bf16.msra.mxu0 %v5977
    %8725 = vmatprep.subr.bf16.mxu0 %v5980
    %8726 = vmatpush1.bf16.msra.mxu0 %v5979
    %8727 = vmatprep.subr.bf16.mxu0 %v5982
    %8728 = vmatpush1.bf16.msra.mxu0 %v5981
    %8729 = vmatprep.subr.bf16.mxu0 %v5984
    %8730 = vmatpush1.bf16.msra.mxu0 %v5983
    %8731 = vmatprep.subr.bf16.mxu0 %v5986
    %8732 = vmatpush1.bf16.msra.mxu0 %v5985
    %8733 = vmatprep.subr.bf16.mxu0 %v5988
    %8734 = vmatpush1.bf16.msra.mxu0 %v5987
    %8735 = vmatprep.subr.bf16.mxu0 %v5990
    %8736 = vmatpush1.bf16.msra.mxu0 %v5989
    %8737 = vmatprep.subr.bf16.mxu0 %v5992
    %8738 = vmatpush1.bf16.msra.mxu0 %v5991
    %8739 = vmatprep.subr.bf16.mxu0 %v5994
    %8740 = vmatpush1.bf16.msra.mxu0 %v5993
    %8741 = vmatprep.subr.bf16.mxu0 %v5996
    %8742 = vmatpush1.bf16.msra.mxu0 %v5995
    %8743 = vmatprep.subr.bf16.mxu0 %v5998
    %8744 = vmatpush1.bf16.msra.mxu0 %v5997
    %8745 = vmatprep.subr.bf16.mxu0 %v6000
    %8746 = vmatpush1.bf16.msra.mxu0 %v5999
    %8747 = vmatprep.subr.bf16.mxu0 %v6002
    %8748 = vmatpush1.bf16.msra.mxu0 %v6001
    %8749 = vmatprep.subr.bf16.mxu0 %v6004
    %8750 = vmatpush1.bf16.msra.mxu0 %v6003
    %8751 = vmatprep.mubr.bf16.mxu0 %v277
    %8752 = vmatmul.mubr.bf16.gmra.mrb[0].mxu0 %v276
    %v8753 = vpop.f32.mrb[0].mxu0
    %v8754 = vadd.f32 %v8711, %v8753
    %v8755 = vpop.f32.mrb[0].mxu0
    %v8756 = vadd.f32 %v8713, %v8755
    %v8757 = vpop.f32.mrb[0].mxu0
    %v8758 = vadd.f32 %v8715, %v8757
    %v8759 = vpop.f32.mrb[0].mxu0
    %v8760 = vadd.f32 %v8717, %v8759
    %8761 = vdwg.mxu0
    %8762 = vmatprep.subr.bf16.mxu0 %v6006
    %8763 = vmatpush1.bf16.msra.mxu0 %v6005
    %8764 = vmatprep.subr.bf16.mxu0 %v6008
    %8765 = vmatpush1.bf16.msra.mxu0 %v6007
    %8766 = vmatprep.subr.bf16.mxu0 %v6010
    %8767 = vmatpush1.bf16.msra.mxu0 %v6009
    %8768 = vmatprep.subr.bf16.mxu0 %v6012
    %8769 = vmatpush1.bf16.msra.mxu0 %v6011
    %8770 = vmatprep.subr.bf16.mxu0 %v6014
    %8771 = vmatpush1.bf16.msra.mxu0 %v6013
    %8772 = vmatprep.subr.bf16.mxu0 %v6016
    %8773 = vmatpush1.bf16.msra.mxu0 %v6015
    %8774 = vmatprep.subr.bf16.mxu0 %v6018
    %8775 = vmatpush1.bf16.msra.mxu0 %v6017
    %8776 = vmatprep.subr.bf16.mxu0 %v6020
    %8777 = vmatpush1.bf16.msra.mxu0 %v6019
    %8778 = vmatprep.subr.bf16.mxu0 %v6022
    %8779 = vmatpush1.bf16.msra.mxu0 %v6021
    %8780 = vmatprep.subr.bf16.mxu0 %v6024
    %8781 = vmatpush1.bf16.msra.mxu0 %v6023
    %8782 = vmatprep.subr.bf16.mxu0 %v6026
    %8783 = vmatpush1.bf16.msra.mxu0 %v6025
    %8784 = vmatprep.subr.bf16.mxu0 %v6028
    %8785 = vmatpush1.bf16.msra.mxu0 %v6027
    %8786 = vmatprep.subr.bf16.mxu0 %v6030
    %8787 = vmatpush1.bf16.msra.mxu0 %v6029
    %8788 = vmatprep.subr.bf16.mxu0 %v6032
    %8789 = vmatpush1.bf16.msra.mxu0 %v6031
    %8790 = vmatprep.subr.bf16.mxu0 %v6034
    %8791 = vmatpush1.bf16.msra.mxu0 %v6033
    %8792 = vmatprep.subr.bf16.mxu0 %v6036
    %8793 = vmatpush1.bf16.msra.mxu0 %v6035
    %8794 = vmatprep.mubr.bf16.mxu0 %v279
    %8795 = vmatmul.mubr.bf16.gmra.mrb[0].mxu0 %v278
    %v8796 = vpop.f32.mrb[0].mxu0
    %v8797 = vadd.f32 %v8754, %v8796
    %v8798 = vpop.f32.mrb[0].mxu0
    %v8799 = vadd.f32 %v8756, %v8798
    %v8800 = vpop.f32.mrb[0].mxu0
    %v8801 = vadd.f32 %v8758, %v8800
    %v8802 = vpop.f32.mrb[0].mxu0
    %v8803 = vadd.f32 %v8760, %v8802
    %8804 = vdwg.mxu0
    %8805 = vmatprep.subr.bf16.mxu0 %v6038
    %8806 = vmatpush1.bf16.msra.mxu0 %v6037
    %8807 = vmatprep.subr.bf16.mxu0 %v6040
    %8808 = vmatpush1.bf16.msra.mxu0 %v6039
    %8809 = vmatprep.subr.bf16.mxu0 %v6042
    %8810 = vmatpush1.bf16.msra.mxu0 %v6041
    %8811 = vmatprep.subr.bf16.mxu0 %v6044
    %8812 = vmatpush1.bf16.msra.mxu0 %v6043
    %8813 = vmatprep.subr.bf16.mxu0 %v6046
    %8814 = vmatpush1.bf16.msra.mxu0 %v6045
    %8815 = vmatprep.subr.bf16.mxu0 %v6048
    %8816 = vmatpush1.bf16.msra.mxu0 %v6047
    %8817 = vmatprep.subr.bf16.mxu0 %v6050
    %8818 = vmatpush1.bf16.msra.mxu0 %v6049
    %8819 = vmatprep.subr.bf16.mxu0 %v6052
    %8820 = vmatpush1.bf16.msra.mxu0 %v6051
    %8821 = vmatprep.subr.bf16.mxu0 %v6054
    %8822 = vmatpush1.bf16.msra.mxu0 %v6053
    %8823 = vmatprep.subr.bf16.mxu0 %v6056
    %8824 = vmatpush1.bf16.msra.mxu0 %v6055
    %8825 = vmatprep.subr.bf16.mxu0 %v6058
    %8826 = vmatpush1.bf16.msra.mxu0 %v6057
    %8827 = vmatprep.subr.bf16.mxu0 %v6060
    %8828 = vmatpush1.bf16.msra.mxu0 %v6059
    %8829 = vmatprep.subr.bf16.mxu0 %v6062
    %8830 = vmatpush1.bf16.msra.mxu0 %v6061
    %8831 = vmatprep.subr.bf16.mxu0 %v6064
    %8832 = vmatpush1.bf16.msra.mxu0 %v6063
    %8833 = vmatprep.subr.bf16.mxu0 %v6066
    %8834 = vmatpush1.bf16.msra.mxu0 %v6065
    %8835 = vmatprep.subr.bf16.mxu0 %v6068
    %8836 = vmatpush1.bf16.msra.mxu0 %v6067
    %8837 = vmatprep.mubr.bf16.mxu0 %v281
    %8838 = vmatmul.mubr.bf16.gmra.mrb[0].mxu0 %v280
    %v8839 = vpop.f32.mrb[0].mxu0
    %v8840 = vadd.f32 %v8797, %v8839
    %v8841 = vpop.f32.mrb[0].mxu0
    %v8842 = vadd.f32 %v8799, %v8841
    %v8843 = vpop.f32.mrb[0].mxu0
    %v8844 = vadd.f32 %v8801, %v8843
    %v8845 = vpop.f32.mrb[0].mxu0
    %v8846 = vadd.f32 %v8803, %v8845
    %8847 = vdwg.mxu0
    %8848 = vmatprep.subr.bf16.mxu0 %v6070
    %8849 = vmatpush1.bf16.msra.mxu0 %v6069
    %8850 = vmatprep.subr.bf16.mxu0 %v6072
    %8851 = vmatpush1.bf16.msra.mxu0 %v6071
    %8852 = vmatprep.subr.bf16.mxu0 %v6074
    %8853 = vmatpush1.bf16.msra.mxu0 %v6073
    %8854 = vmatprep.subr.bf16.mxu0 %v6076
    %8855 = vmatpush1.bf16.msra.mxu0 %v6075
    %8856 = vmatprep.subr.bf16.mxu0 %v6078
    %8857 = vmatpush1.bf16.msra.mxu0 %v6077
    %8858 = vmatprep.subr.bf16.mxu0 %v6080
    %8859 = vmatpush1.bf16.msra.mxu0 %v6079
    %8860 = vmatprep.subr.bf16.mxu0 %v6082
    %8861 = vmatpush1.bf16.msra.mxu0 %v6081
    %8862 = vmatprep.subr.bf16.mxu0 %v6084
    %8863 = vmatpush1.bf16.msra.mxu0 %v6083
    %8864 = vmatprep.subr.bf16.mxu0 %v6086
    %8865 = vmatpush1.bf16.msra.mxu0 %v6085
    %8866 = vmatprep.subr.bf16.mxu0 %v6088
    %8867 = vmatpush1.bf16.msra.mxu0 %v6087
    %8868 = vmatprep.subr.bf16.mxu0 %v6090
    %8869 = vmatpush1.bf16.msra.mxu0 %v6089
    %8870 = vmatprep.subr.bf16.mxu0 %v6092
    %8871 = vmatpush1.bf16.msra.mxu0 %v6091
    %8872 = vmatprep.subr.bf16.mxu0 %v6094
    %8873 = vmatpush1.bf16.msra.mxu0 %v6093
    %8874 = vmatprep.subr.bf16.mxu0 %v6096
    %8875 = vmatpush1.bf16.msra.mxu0 %v6095
    %8876 = vmatprep.subr.bf16.mxu0 %v6098
    %8877 = vmatpush1.bf16.msra.mxu0 %v6097
    %8878 = vmatprep.subr.bf16.mxu0 %v6100
    %8879 = vmatpush1.bf16.msra.mxu0 %v6099
    %8880 = vmatprep.mubr.bf16.mxu0 %v283
    %8881 = vmatmul.mubr.bf16.gmra.mrb[0].mxu0 %v282
    %v8882 = vpop.f32.mrb[0].mxu0
    %v8883 = vadd.f32 %v8840, %v8882
    %v8884 = vpop.f32.mrb[0].mxu0
    %v8885 = vadd.f32 %v8842, %v8884
    %v8886 = vpop.f32.mrb[0].mxu0
    %v8887 = vadd.f32 %v8844, %v8886
    %v8888 = vpop.f32.mrb[0].mxu0
    %v8889 = vadd.f32 %v8846, %v8888
    %8890 = vdwg.mxu0
    %8891 = vmatprep.subr.bf16.mxu0 %v6102
    %8892 = vmatpush1.bf16.msra.mxu0 %v6101
    %8893 = vmatprep.subr.bf16.mxu0 %v6104
    %8894 = vmatpush1.bf16.msra.mxu0 %v6103
    %8895 = vmatprep.subr.bf16.mxu0 %v6106
    %8896 = vmatpush1.bf16.msra.mxu0 %v6105
    %8897 = vmatprep.subr.bf16.mxu0 %v6108
    %8898 = vmatpush1.bf16.msra.mxu0 %v6107
    %8899 = vmatprep.subr.bf16.mxu0 %v6110
    %8900 = vmatpush1.bf16.msra.mxu0 %v6109
    %8901 = vmatprep.subr.bf16.mxu0 %v6112
    %8902 = vmatpush1.bf16.msra.mxu0 %v6111
    %8903 = vmatprep.subr.bf16.mxu0 %v6114
    %8904 = vmatpush1.bf16.msra.mxu0 %v6113
    %8905 = vmatprep.subr.bf16.mxu0 %v6116
    %8906 = vmatpush1.bf16.msra.mxu0 %v6115
    %8907 = vmatprep.subr.bf16.mxu0 %v6118
    %8908 = vmatpush1.bf16.msra.mxu0 %v6117
    %8909 = vmatprep.subr.bf16.mxu0 %v6120
    %8910 = vmatpush1.bf16.msra.mxu0 %v6119
    %8911 = vmatprep.subr.bf16.mxu0 %v6122
    %8912 = vmatpush1.bf16.msra.mxu0 %v6121
    %8913 = vmatprep.subr.bf16.mxu0 %v6124
    %8914 = vmatpush1.bf16.msra.mxu0 %v6123
    %8915 = vmatprep.subr.bf16.mxu0 %v6126
    %8916 = vmatpush1.bf16.msra.mxu0 %v6125
    %8917 = vmatprep.subr.bf16.mxu0 %v6128
    %8918 = vmatpush1.bf16.msra.mxu0 %v6127
    %8919 = vmatprep.subr.bf16.mxu0 %v6130
    %8920 = vmatpush1.bf16.msra.mxu0 %v6129
    %8921 = vmatprep.subr.bf16.mxu0 %v6132
    %8922 = vmatpush1.bf16.msra.mxu0 %v6131
    %8923 = vmatprep.mubr.bf16.mxu0 %v285
    %8924 = vmatmul.mubr.bf16.gmra.mrb[0].mxu0 %v284
    %v8925 = vpop.f32.mrb[0].mxu0
    %v8926 = vadd.f32 %v8883, %v8925
    %v8927 = vpop.f32.mrb[0].mxu0
    %v8928 = vadd.f32 %v8885, %v8927
    %v8929 = vpop.f32.mrb[0].mxu0
    %v8930 = vadd.f32 %v8887, %v8929
    %v8931 = vpop.f32.mrb[0].mxu0
    %v8932 = vadd.f32 %v8889, %v8931
    %8933 = vdwg.mxu0
    %8934 = vmatprep.subr.bf16.mxu0 %v6134
    %8935 = vmatpush1.bf16.msra.mxu0 %v6133
    %8936 = vmatprep.subr.bf16.mxu0 %v6136
    %8937 = vmatpush1.bf16.msra.mxu0 %v6135
    %8938 = vmatprep.subr.bf16.mxu0 %v6138
    %8939 = vmatpush1.bf16.msra.mxu0 %v6137
    %8940 = vmatprep.subr.bf16.mxu0 %v6140
    %8941 = vmatpush1.bf16.msra.mxu0 %v6139
    %8942 = vmatprep.subr.bf16.mxu0 %v6142
    %8943 = vmatpush1.bf16.msra.mxu0 %v6141
    %8944 = vmatprep.subr.bf16.mxu0 %v6144
    %8945 = vmatpush1.bf16.msra.mxu0 %v6143
    %8946 = vmatprep.subr.bf16.mxu0 %v6146
    %8947 = vmatpush1.bf16.msra.mxu0 %v6145
    %8948 = vmatprep.subr.bf16.mxu0 %v6148
    %8949 = vmatpush1.bf16.msra.mxu0 %v6147
    %8950 = vmatprep.subr.bf16.mxu0 %v6150
    %8951 = vmatpush1.bf16.msra.mxu0 %v6149
    %8952 = vmatprep.subr.bf16.mxu0 %v6152
    %8953 = vmatpush1.bf16.msra.mxu0 %v6151
    %8954 = vmatprep.subr.bf16.mxu0 %v6154
    %8955 = vmatpush1.bf16.msra.mxu0 %v6153
    %8956 = vmatprep.subr.bf16.mxu0 %v6156
    %8957 = vmatpush1.bf16.msra.mxu0 %v6155
    %8958 = vmatprep.subr.bf16.mxu0 %v6158
    %8959 = vmatpush1.bf16.msra.mxu0 %v6157
    %8960 = vmatprep.subr.bf16.mxu0 %v6160
    %8961 = vmatpush1.bf16.msra.mxu0 %v6159
    %8962 = vmatprep.subr.bf16.mxu0 %v6162
    %8963 = vmatpush1.bf16.msra.mxu0 %v6161
    %8964 = vmatprep.subr.bf16.mxu0 %v6164
    %8965 = vmatpush1.bf16.msra.mxu0 %v6163
    %8966 = vmatprep.mubr.bf16.mxu0 %v287
    %8967 = vmatmul.mubr.bf16.gmra.mrb[0].mxu0 %v286
    %v8968 = vpop.f32.mrb[0].mxu0
    %v8969 = vadd.f32 %v8926, %v8968
    %v8970 = vpop.f32.mrb[0].mxu0
    %v8971 = vadd.f32 %v8928, %v8970
    %v8972 = vpop.f32.mrb[0].mxu0
    %v8973 = vadd.f32 %v8930, %v8972
    %v8974 = vpop.f32.mrb[0].mxu0
    %v8975 = vadd.f32 %v8932, %v8974
    %8976 = vdwg.mxu0
    %8977 = vmatprep.subr.bf16.mxu0 %v6166
    %8978 = vmatpush1.bf16.msra.mxu0 %v6165
    %8979 = vmatprep.subr.bf16.mxu0 %v6168
    %8980 = vmatpush1.bf16.msra.mxu0 %v6167
    %8981 = vmatprep.subr.bf16.mxu0 %v6170
    %8982 = vmatpush1.bf16.msra.mxu0 %v6169
    %8983 = vmatprep.subr.bf16.mxu0 %v6172
    %8984 = vmatpush1.bf16.msra.mxu0 %v6171
    %8985 = vmatprep.subr.bf16.mxu0 %v6174
    %8986 = vmatpush1.bf16.msra.mxu0 %v6173
    %8987 = vmatprep.subr.bf16.mxu0 %v6176
    %8988 = vmatpush1.bf16.msra.mxu0 %v6175
    %8989 = vmatprep.subr.bf16.mxu0 %v6178
    %8990 = vmatpush1.bf16.msra.mxu0 %v6177
    %8991 = vmatprep.subr.bf16.mxu0 %v6180
    %8992 = vmatpush1.bf16.msra.mxu0 %v6179
    %8993 = vmatprep.subr.bf16.mxu0 %v6182
    %8994 = vmatpush1.bf16.msra.mxu0 %v6181
    %8995 = vmatprep.subr.bf16.mxu0 %v6184
    %8996 = vmatpush1.bf16.msra.mxu0 %v6183
    %8997 = vmatprep.subr.bf16.mxu0 %v6186
    %8998 = vmatpush1.bf16.msra.mxu0 %v6185
    %8999 = vmatprep.subr.bf16.mxu0 %v6188
    %9000 = vmatpush1.bf16.msra.mxu0 %v6187
    %9001 = vmatprep.subr.bf16.mxu0 %v6190
    %9002 = vmatpush1.bf16.msra.mxu0 %v6189
    %9003 = vmatprep.subr.bf16.mxu0 %v6192
    %9004 = vmatpush1.bf16.msra.mxu0 %v6191
    %9005 = vmatprep.subr.bf16.mxu0 %v6194
    %9006 = vmatpush1.bf16.msra.mxu0 %v6193
    %9007 = vmatprep.subr.bf16.mxu0 %v6196
    %9008 = vmatpush1.bf16.msra.mxu0 %v6195
    %9009 = vmatprep.mubr.bf16.mxu0 %v289
    %9010 = vmatmul.mubr.bf16.gmra.mrb[0].mxu0 %v288
    %v9011 = vpop.f32.mrb[0].mxu0
    %v9012 = vadd.f32 %v8969, %v9011
    %v9013 = vpop.f32.mrb[0].mxu0
    %v9014 = vadd.f32 %v8971, %v9013
    %v9015 = vpop.f32.mrb[0].mxu0
    %v9016 = vadd.f32 %v8973, %v9015
    %v9017 = vpop.f32.mrb[0].mxu0
    %v9018 = vadd.f32 %v8975, %v9017
    %9019 = vdwg.mxu0
    %9020 = vmatprep.subr.bf16.mxu0 %v6198
    %9021 = vmatpush1.bf16.msra.mxu0 %v6197
    %9022 = vmatprep.subr.bf16.mxu0 %v6200
    %9023 = vmatpush1.bf16.msra.mxu0 %v6199
    %9024 = vmatprep.subr.bf16.mxu0 %v6202
    %9025 = vmatpush1.bf16.msra.mxu0 %v6201
    %9026 = vmatprep.subr.bf16.mxu0 %v6204
    %9027 = vmatpush1.bf16.msra.mxu0 %v6203
    %9028 = vmatprep.subr.bf16.mxu0 %v6206
    %9029 = vmatpush1.bf16.msra.mxu0 %v6205
    %9030 = vmatprep.subr.bf16.mxu0 %v6208
    %9031 = vmatpush1.bf16.msra.mxu0 %v6207
    %9032 = vmatprep.subr.bf16.mxu0 %v6210
    %9033 = vmatpush1.bf16.msra.mxu0 %v6209
    %9034 = vmatprep.subr.bf16.mxu0 %v6212
    %9035 = vmatpush1.bf16.msra.mxu0 %v6211
    %9036 = vmatprep.subr.bf16.mxu0 %v6214
    %9037 = vmatpush1.bf16.msra.mxu0 %v6213
    %9038 = vmatprep.subr.bf16.mxu0 %v6216
    %9039 = vmatpush1.bf16.msra.mxu0 %v6215
    %9040 = vmatprep.subr.bf16.mxu0 %v6218
    %9041 = vmatpush1.bf16.msra.mxu0 %v6217
    %9042 = vmatprep.subr.bf16.mxu0 %v6220
    %9043 = vmatpush1.bf16.msra.mxu0 %v6219
    %9044 = vmatprep.subr.bf16.mxu0 %v6222
    %9045 = vmatpush1.bf16.msra.mxu0 %v6221
    %9046 = vmatprep.subr.bf16.mxu0 %v6224
    %9047 = vmatpush1.bf16.msra.mxu0 %v6223
    %9048 = vmatprep.subr.bf16.mxu0 %v6226
    %9049 = vmatpush1.bf16.msra.mxu0 %v6225
    %9050 = vmatprep.subr.bf16.mxu0 %v6228
    %9051 = vmatpush1.bf16.msra.mxu0 %v6227
    %9052 = vmatprep.mubr.bf16.mxu0 %v291
    %9053 = vmatmul.mubr.bf16.gmra.mrb[0].mxu0 %v290
    %v9054 = vpop.f32.mrb[0].mxu0
    %v9055 = vadd.f32 %v9012, %v9054
    %v9056 = vpop.f32.mrb[0].mxu0
    %v9057 = vadd.f32 %v9014, %v9056
    %v9058 = vpop.f32.mrb[0].mxu0
    %v9059 = vadd.f32 %v9016, %v9058
    %v9060 = vpop.f32.mrb[0].mxu0
    %v9061 = vadd.f32 %v9018, %v9060
    %9062 = vdwg.mxu0
    %9063 = vmatprep.subr.bf16.mxu0 %v6230
    %9064 = vmatpush1.bf16.msra.mxu0 %v6229
    %9065 = vmatprep.subr.bf16.mxu0 %v6232
    %9066 = vmatpush1.bf16.msra.mxu0 %v6231
    %9067 = vmatprep.subr.bf16.mxu0 %v6234
    %9068 = vmatpush1.bf16.msra.mxu0 %v6233
    %9069 = vmatprep.subr.bf16.mxu0 %v6236
    %9070 = vmatpush1.bf16.msra.mxu0 %v6235
    %9071 = vmatprep.subr.bf16.mxu0 %v6238
    %9072 = vmatpush1.bf16.msra.mxu0 %v6237
    %9073 = vmatprep.subr.bf16.mxu0 %v6240
    %9074 = vmatpush1.bf16.msra.mxu0 %v6239
    %9075 = vmatprep.subr.bf16.mxu0 %v6242
    %9076 = vmatpush1.bf16.msra.mxu0 %v6241
    %9077 = vmatprep.subr.bf16.mxu0 %v6244
    %9078 = vmatpush1.bf16.msra.mxu0 %v6243
    %9079 = vmatprep.subr.bf16.mxu0 %v6246
    %9080 = vmatpush1.bf16.msra.mxu0 %v6245
    %9081 = vmatprep.subr.bf16.mxu0 %v6248
    %9082 = vmatpush1.bf16.msra.mxu0 %v6247
    %9083 = vmatprep.subr.bf16.mxu0 %v6250
    %9084 = vmatpush1.bf16.msra.mxu0 %v6249
    %9085 = vmatprep.subr.bf16.mxu0 %v6252
    %9086 = vmatpush1.bf16.msra.mxu0 %v6251
    %9087 = vmatprep.subr.bf16.mxu0 %v6254
    %9088 = vmatpush1.bf16.msra.mxu0 %v6253
    %9089 = vmatprep.subr.bf16.mxu0 %v6256
    %9090 = vmatpush1.bf16.msra.mxu0 %v6255
    %9091 = vmatprep.subr.bf16.mxu0 %v6258
    %9092 = vmatpush1.bf16.msra.mxu0 %v6257
    %9093 = vmatprep.subr.bf16.mxu0 %v6260
    %9094 = vmatpush1.bf16.msra.mxu0 %v6259
    %9095 = vmatprep.mubr.bf16.mxu0 %v293
    %9096 = vmatmul.mubr.bf16.gmra.mrb[0].mxu0 %v292
    %v9097 = vpop.f32.mrb[0].mxu0
    %v9098 = vadd.f32 %v9055, %v9097
    %v9099 = vpop.f32.mrb[0].mxu0
    %v9100 = vadd.f32 %v9057, %v9099
    %v9101 = vpop.f32.mrb[0].mxu0
    %v9102 = vadd.f32 %v9059, %v9101
    %v9103 = vpop.f32.mrb[0].mxu0
    %v9104 = vadd.f32 %v9061, %v9103
    %9105 = vdwg.mxu0
    %9106 = vmatprep.subr.bf16.mxu0 %v6262
    %9107 = vmatpush1.bf16.msra.mxu0 %v6261
    %9108 = vmatprep.subr.bf16.mxu0 %v6264
    %9109 = vmatpush1.bf16.msra.mxu0 %v6263
    %9110 = vmatprep.subr.bf16.mxu0 %v6266
    %9111 = vmatpush1.bf16.msra.mxu0 %v6265
    %9112 = vmatprep.subr.bf16.mxu0 %v6268
    %9113 = vmatpush1.bf16.msra.mxu0 %v6267
    %9114 = vmatprep.subr.bf16.mxu0 %v6270
    %9115 = vmatpush1.bf16.msra.mxu0 %v6269
    %9116 = vmatprep.subr.bf16.mxu0 %v6272
    %9117 = vmatpush1.bf16.msra.mxu0 %v6271
    %9118 = vmatprep.subr.bf16.mxu0 %v6274
    %9119 = vmatpush1.bf16.msra.mxu0 %v6273
    %9120 = vmatprep.subr.bf16.mxu0 %v6276
    %9121 = vmatpush1.bf16.msra.mxu0 %v6275
    %9122 = vmatprep.subr.bf16.mxu0 %v6278
    %9123 = vmatpush1.bf16.msra.mxu0 %v6277
    %9124 = vmatprep.subr.bf16.mxu0 %v6280
    %9125 = vmatpush1.bf16.msra.mxu0 %v6279
    %9126 = vmatprep.subr.bf16.mxu0 %v6282
    %9127 = vmatpush1.bf16.msra.mxu0 %v6281
    %9128 = vmatprep.subr.bf16.mxu0 %v6284
    %9129 = vmatpush1.bf16.msra.mxu0 %v6283
    %9130 = vmatprep.subr.bf16.mxu0 %v6286
    %9131 = vmatpush1.bf16.msra.mxu0 %v6285
    %9132 = vmatprep.subr.bf16.mxu0 %v6288
    %9133 = vmatpush1.bf16.msra.mxu0 %v6287
    %9134 = vmatprep.subr.bf16.mxu0 %v6290
    %9135 = vmatpush1.bf16.msra.mxu0 %v6289
    %9136 = vmatprep.subr.bf16.mxu0 %v6292
    %9137 = vmatpush1.bf16.msra.mxu0 %v6291
    %9138 = vmatprep.mubr.bf16.mxu0 %v295
    %9139 = vmatmul.mubr.bf16.gmra.mrb[0].mxu0 %v294
    %v9140 = vpop.f32.mrb[0].mxu0
    %v9141 = vadd.f32 %v9098, %v9140
    %v9142 = vpop.f32.mrb[0].mxu0
    %v9143 = vadd.f32 %v9100, %v9142
    %v9144 = vpop.f32.mrb[0].mxu0
    %v9145 = vadd.f32 %v9102, %v9144
    %v9146 = vpop.f32.mrb[0].mxu0
    %v9147 = vadd.f32 %v9104, %v9146
    %9148 = vdwg.mxu0
    %9149 = vmatprep.subr.bf16.mxu0 %v6294
    %9150 = vmatpush1.bf16.msra.mxu0 %v6293
    %9151 = vmatprep.subr.bf16.mxu0 %v6296
    %9152 = vmatpush1.bf16.msra.mxu0 %v6295
    %9153 = vmatprep.subr.bf16.mxu0 %v6298
    %9154 = vmatpush1.bf16.msra.mxu0 %v6297
    %9155 = vmatprep.subr.bf16.mxu0 %v6300
    %9156 = vmatpush1.bf16.msra.mxu0 %v6299
    %9157 = vmatprep.subr.bf16.mxu0 %v6302
    %9158 = vmatpush1.bf16.msra.mxu0 %v6301
    %9159 = vmatprep.subr.bf16.mxu0 %v6304
    %9160 = vmatpush1.bf16.msra.mxu0 %v6303
    %9161 = vmatprep.subr.bf16.mxu0 %v6306
    %9162 = vmatpush1.bf16.msra.mxu0 %v6305
    %9163 = vmatprep.subr.bf16.mxu0 %v6308
    %9164 = vmatpush1.bf16.msra.mxu0 %v6307
    %9165 = vmatprep.subr.bf16.mxu0 %v6310
    %9166 = vmatpush1.bf16.msra.mxu0 %v6309
    %9167 = vmatprep.subr.bf16.mxu0 %v6312
    %9168 = vmatpush1.bf16.msra.mxu0 %v6311
    %9169 = vmatprep.subr.bf16.mxu0 %v6314
    %9170 = vmatpush1.bf16.msra.mxu0 %v6313
    %9171 = vmatprep.subr.bf16.mxu0 %v6316
    %9172 = vmatpush1.bf16.msra.mxu0 %v6315
    %9173 = vmatprep.subr.bf16.mxu0 %v6318
    %9174 = vmatpush1.bf16.msra.mxu0 %v6317
    %9175 = vmatprep.subr.bf16.mxu0 %v6320
    %9176 = vmatpush1.bf16.msra.mxu0 %v6319
    %9177 = vmatprep.subr.bf16.mxu0 %v6322
    %9178 = vmatpush1.bf16.msra.mxu0 %v6321
    %9179 = vmatprep.subr.bf16.mxu0 %v6324
    %9180 = vmatpush1.bf16.msra.mxu0 %v6323
    %9181 = vmatprep.mubr.bf16.mxu0 %v297
    %9182 = vmatmul.mubr.bf16.gmra.mrb[0].mxu0 %v296
    %v9183 = vpop.f32.mrb[0].mxu0
    %v9184 = vadd.f32 %v9141, %v9183
    %v9185 = vpop.f32.mrb[0].mxu0
    %v9186 = vadd.f32 %v9143, %v9185
    %v9187 = vpop.f32.mrb[0].mxu0
    %v9188 = vadd.f32 %v9145, %v9187
    %v9189 = vpop.f32.mrb[0].mxu0
    %v9190 = vadd.f32 %v9147, %v9189
    %9191 = vdwg.mxu0
    %9192 = vmatprep.subr.bf16.mxu0 %v6326
    %9193 = vmatpush1.bf16.msra.mxu0 %v6325
    %9194 = vmatprep.subr.bf16.mxu0 %v6328
    %9195 = vmatpush1.bf16.msra.mxu0 %v6327
    %9196 = vmatprep.subr.bf16.mxu0 %v6330
    %9197 = vmatpush1.bf16.msra.mxu0 %v6329
    %9198 = vmatprep.subr.bf16.mxu0 %v6332
    %9199 = vmatpush1.bf16.msra.mxu0 %v6331
    %9200 = vmatprep.subr.bf16.mxu0 %v6334
    %9201 = vmatpush1.bf16.msra.mxu0 %v6333
    %9202 = vmatprep.subr.bf16.mxu0 %v6336
    %9203 = vmatpush1.bf16.msra.mxu0 %v6335
    %9204 = vmatprep.subr.bf16.mxu0 %v6338
    %9205 = vmatpush1.bf16.msra.mxu0 %v6337
    %9206 = vmatprep.subr.bf16.mxu0 %v6340
    %9207 = vmatpush1.bf16.msra.mxu0 %v6339
    %9208 = vmatprep.subr.bf16.mxu0 %v6342
    %9209 = vmatpush1.bf16.msra.mxu0 %v6341
    %9210 = vmatprep.subr.bf16.mxu0 %v6344
    %9211 = vmatpush1.bf16.msra.mxu0 %v6343
    %9212 = vmatprep.subr.bf16.mxu0 %v6346
    %9213 = vmatpush1.bf16.msra.mxu0 %v6345
    %9214 = vmatprep.subr.bf16.mxu0 %v6348
    %9215 = vmatpush1.bf16.msra.mxu0 %v6347
    %9216 = vmatprep.subr.bf16.mxu0 %v6350
    %9217 = vmatpush1.bf16.msra.mxu0 %v6349
    %9218 = vmatprep.subr.bf16.mxu0 %v6352
    %9219 = vmatpush1.bf16.msra.mxu0 %v6351
    %9220 = vmatprep.subr.bf16.mxu0 %v6354
    %9221 = vmatpush1.bf16.msra.mxu0 %v6353
    %9222 = vmatprep.subr.bf16.mxu0 %v6356
    %9223 = vmatpush1.bf16.msra.mxu0 %v6355
    %9224 = vmatprep.mubr.bf16.mxu0 %v299
    %9225 = vmatmul.mubr.bf16.gmra.mrb[0].mxu0 %v298
    %v9226 = vpop.f32.mrb[0].mxu0
    %v9227 = vadd.f32 %v9184, %v9226
    %v9228 = vpop.f32.mrb[0].mxu0
    %v9229 = vadd.f32 %v9186, %v9228
    %v9230 = vpop.f32.mrb[0].mxu0
    %v9231 = vadd.f32 %v9188, %v9230
    %v9232 = vpop.f32.mrb[0].mxu0
    %v9233 = vadd.f32 %v9190, %v9232
    %9234 = vdwg.mxu0
    %9235 = vmatprep.subr.bf16.mxu0 %v6358
    %9236 = vmatpush1.bf16.msra.mxu0 %v6357
    %9237 = vmatprep.subr.bf16.mxu0 %v6360
    %9238 = vmatpush1.bf16.msra.mxu0 %v6359
    %9239 = vmatprep.subr.bf16.mxu0 %v6362
    %9240 = vmatpush1.bf16.msra.mxu0 %v6361
    %9241 = vmatprep.subr.bf16.mxu0 %v6364
    %9242 = vmatpush1.bf16.msra.mxu0 %v6363
    %9243 = vmatprep.subr.bf16.mxu0 %v6366
    %9244 = vmatpush1.bf16.msra.mxu0 %v6365
    %9245 = vmatprep.subr.bf16.mxu0 %v6368
    %9246 = vmatpush1.bf16.msra.mxu0 %v6367
    %9247 = vmatprep.subr.bf16.mxu0 %v6370
    %9248 = vmatpush1.bf16.msra.mxu0 %v6369
    %9249 = vmatprep.subr.bf16.mxu0 %v6372
    %9250 = vmatpush1.bf16.msra.mxu0 %v6371
    %9251 = vmatprep.subr.bf16.mxu0 %v6374
    %9252 = vmatpush1.bf16.msra.mxu0 %v6373
    %9253 = vmatprep.subr.bf16.mxu0 %v6376
    %9254 = vmatpush1.bf16.msra.mxu0 %v6375
    %9255 = vmatprep.subr.bf16.mxu0 %v6378
    %9256 = vmatpush1.bf16.msra.mxu0 %v6377
    %9257 = vmatprep.subr.bf16.mxu0 %v6380
    %9258 = vmatpush1.bf16.msra.mxu0 %v6379
    %9259 = vmatprep.subr.bf16.mxu0 %v6382
    %9260 = vmatpush1.bf16.msra.mxu0 %v6381
    %9261 = vmatprep.subr.bf16.mxu0 %v6384
    %9262 = vmatpush1.bf16.msra.mxu0 %v6383
    %9263 = vmatprep.subr.bf16.mxu0 %v6386
    %9264 = vmatpush1.bf16.msra.mxu0 %v6385
    %9265 = vmatprep.subr.bf16.mxu0 %v6388
    %9266 = vmatpush1.bf16.msra.mxu0 %v6387
    %9267 = vmatprep.mubr.bf16.mxu0 %v301
    %9268 = vmatmul.mubr.bf16.gmra.mrb[0].mxu0 %v300
    %v9269 = vpop.f32.mrb[0].mxu0
    %v9270 = vadd.f32 %v9227, %v9269
    %v9271 = vpop.f32.mrb[0].mxu0
    %v9272 = vadd.f32 %v9229, %v9271
    %v9273 = vpop.f32.mrb[0].mxu0
    %v9274 = vadd.f32 %v9231, %v9273
    %v9275 = vpop.f32.mrb[0].mxu0
    %v9276 = vadd.f32 %v9233, %v9275
    %9277 = vdwg.mxu0
    %9278 = vmatprep.subr.bf16.mxu0 %v6390
    %9279 = vmatpush1.bf16.msra.mxu0 %v6389
    %9280 = vmatprep.subr.bf16.mxu0 %v6392
    %9281 = vmatpush1.bf16.msra.mxu0 %v6391
    %9282 = vmatprep.subr.bf16.mxu0 %v6394
    %9283 = vmatpush1.bf16.msra.mxu0 %v6393
    %9284 = vmatprep.subr.bf16.mxu0 %v6396
    %9285 = vmatpush1.bf16.msra.mxu0 %v6395
    %9286 = vmatprep.subr.bf16.mxu0 %v6398
    %9287 = vmatpush1.bf16.msra.mxu0 %v6397
    %9288 = vmatprep.subr.bf16.mxu0 %v6400
    %9289 = vmatpush1.bf16.msra.mxu0 %v6399
    %9290 = vmatprep.subr.bf16.mxu0 %v6402
    %9291 = vmatpush1.bf16.msra.mxu0 %v6401
    %9292 = vmatprep.subr.bf16.mxu0 %v6404
    %9293 = vmatpush1.bf16.msra.mxu0 %v6403
    %9294 = vmatprep.subr.bf16.mxu0 %v6406
    %9295 = vmatpush1.bf16.msra.mxu0 %v6405
    %9296 = vmatprep.subr.bf16.mxu0 %v6408
    %9297 = vmatpush1.bf16.msra.mxu0 %v6407
    %9298 = vmatprep.subr.bf16.mxu0 %v6410
    %9299 = vmatpush1.bf16.msra.mxu0 %v6409
    %9300 = vmatprep.subr.bf16.mxu0 %v6412
    %9301 = vmatpush1.bf16.msra.mxu0 %v6411
    %9302 = vmatprep.subr.bf16.mxu0 %v6414
    %9303 = vmatpush1.bf16.msra.mxu0 %v6413
    %9304 = vmatprep.subr.bf16.mxu0 %v6416
    %9305 = vmatpush1.bf16.msra.mxu0 %v6415
    %9306 = vmatprep.subr.bf16.mxu0 %v6418
    %9307 = vmatpush1.bf16.msra.mxu0 %v6417
    %9308 = vmatprep.subr.bf16.mxu0 %v6420
    %9309 = vmatpush1.bf16.msra.mxu0 %v6419
    %9310 = vmatprep.mubr.bf16.mxu0 %v303
    %9311 = vmatmul.mubr.bf16.gmra.mrb[0].mxu0 %v302
    %v9312 = vpop.f32.mrb[0].mxu0
    %v9313 = vadd.f32 %v9270, %v9312
    %v9314 = vpop.f32.mrb[0].mxu0
    %v9315 = vadd.f32 %v9272, %v9314
    %v9316 = vpop.f32.mrb[0].mxu0
    %v9317 = vadd.f32 %v9274, %v9316
    %v9318 = vpop.f32.mrb[0].mxu0
    %v9319 = vadd.f32 %v9276, %v9318
    %9320 = vdwg.mxu0
    %9321 = vmatprep.subr.bf16.mxu0 %v6422
    %9322 = vmatpush1.bf16.msra.mxu0 %v6421
    %9323 = vmatprep.subr.bf16.mxu0 %v6424
    %9324 = vmatpush1.bf16.msra.mxu0 %v6423
    %9325 = vmatprep.subr.bf16.mxu0 %v6426
    %9326 = vmatpush1.bf16.msra.mxu0 %v6425
    %9327 = vmatprep.subr.bf16.mxu0 %v6428
    %9328 = vmatpush1.bf16.msra.mxu0 %v6427
    %9329 = vmatprep.subr.bf16.mxu0 %v6430
    %9330 = vmatpush1.bf16.msra.mxu0 %v6429
    %9331 = vmatprep.subr.bf16.mxu0 %v6432
    %9332 = vmatpush1.bf16.msra.mxu0 %v6431
    %9333 = vmatprep.subr.bf16.mxu0 %v6434
    %9334 = vmatpush1.bf16.msra.mxu0 %v6433
    %9335 = vmatprep.subr.bf16.mxu0 %v6436
    %9336 = vmatpush1.bf16.msra.mxu0 %v6435
    %9337 = vmatprep.subr.bf16.mxu0 %v6438
    %9338 = vmatpush1.bf16.msra.mxu0 %v6437
    %9339 = vmatprep.subr.bf16.mxu0 %v6440
    %9340 = vmatpush1.bf16.msra.mxu0 %v6439
    %9341 = vmatprep.subr.bf16.mxu0 %v6442
    %9342 = vmatpush1.bf16.msra.mxu0 %v6441
    %9343 = vmatprep.subr.bf16.mxu0 %v6444
    %9344 = vmatpush1.bf16.msra.mxu0 %v6443
    %9345 = vmatprep.subr.bf16.mxu0 %v6446
    %9346 = vmatpush1.bf16.msra.mxu0 %v6445
    %9347 = vmatprep.subr.bf16.mxu0 %v6448
    %9348 = vmatpush1.bf16.msra.mxu0 %v6447
    %9349 = vmatprep.subr.bf16.mxu0 %v6450
    %9350 = vmatpush1.bf16.msra.mxu0 %v6449
    %9351 = vmatprep.subr.bf16.mxu0 %v6452
    %9352 = vmatpush1.bf16.msra.mxu0 %v6451
    %9353 = vmatprep.mubr.bf16.mxu0 %v305
    %9354 = vmatmul.mubr.bf16.gmra.mrb[0].mxu0 %v304
    %v9355 = vpop.f32.mrb[0].mxu0
    %v9356 = vadd.f32 %v9313, %v9355
    %v9357 = vpop.f32.mrb[0].mxu0
    %v9358 = vadd.f32 %v9315, %v9357
    %v9359 = vpop.f32.mrb[0].mxu0
    %v9360 = vadd.f32 %v9317, %v9359
    %v9361 = vpop.f32.mrb[0].mxu0
    %v9362 = vadd.f32 %v9319, %v9361
    %9363 = vdwg.mxu0
    %9364 = vmatprep.subr.bf16.mxu0 %v6454
    %9365 = vmatpush1.bf16.msra.mxu0 %v6453
    %9366 = vmatprep.subr.bf16.mxu0 %v6456
    %9367 = vmatpush1.bf16.msra.mxu0 %v6455
    %9368 = vmatprep.subr.bf16.mxu0 %v6458
    %9369 = vmatpush1.bf16.msra.mxu0 %v6457
    %9370 = vmatprep.subr.bf16.mxu0 %v6460
    %9371 = vmatpush1.bf16.msra.mxu0 %v6459
    %9372 = vmatprep.subr.bf16.mxu0 %v6462
    %9373 = vmatpush1.bf16.msra.mxu0 %v6461
    %9374 = vmatprep.subr.bf16.mxu0 %v6464
    %9375 = vmatpush1.bf16.msra.mxu0 %v6463
    %9376 = vmatprep.subr.bf16.mxu0 %v6466
    %9377 = vmatpush1.bf16.msra.mxu0 %v6465
    %9378 = vmatprep.subr.bf16.mxu0 %v6468
    %9379 = vmatpush1.bf16.msra.mxu0 %v6467
    %9380 = vmatprep.subr.bf16.mxu0 %v6470
    %9381 = vmatpush1.bf16.msra.mxu0 %v6469
    %9382 = vmatprep.subr.bf16.mxu0 %v6472
    %9383 = vmatpush1.bf16.msra.mxu0 %v6471
    %9384 = vmatprep.subr.bf16.mxu0 %v6474
    %9385 = vmatpush1.bf16.msra.mxu0 %v6473
    %9386 = vmatprep.subr.bf16.mxu0 %v6476
    %9387 = vmatpush1.bf16.msra.mxu0 %v6475
    %9388 = vmatprep.subr.bf16.mxu0 %v6478
    %9389 = vmatpush1.bf16.msra.mxu0 %v6477
    %9390 = vmatprep.subr.bf16.mxu0 %v6480
    %9391 = vmatpush1.bf16.msra.mxu0 %v6479
    %9392 = vmatprep.subr.bf16.mxu0 %v6482
    %9393 = vmatpush1.bf16.msra.mxu0 %v6481
    %9394 = vmatprep.subr.bf16.mxu0 %v6484
    %9395 = vmatpush1.bf16.msra.mxu0 %v6483
    %9396 = vmatprep.mubr.bf16.mxu0 %v307
    %9397 = vmatmul.mubr.bf16.gmra.mrb[0].mxu0 %v306
    %v9398 = vpop.f32.mrb[0].mxu0
    %v9399 = vadd.f32 %v9356, %v9398
    %v9400 = vpop.f32.mrb[0].mxu0
    %v9401 = vadd.f32 %v9358, %v9400
    %v9402 = vpop.f32.mrb[0].mxu0
    %v9403 = vadd.f32 %v9360, %v9402
    %v9404 = vpop.f32.mrb[0].mxu0
    %v9405 = vadd.f32 %v9362, %v9404
    %9406 = vdwg.mxu0
    %9407 = vmatprep.subr.bf16.mxu0 %v6486
    %9408 = vmatpush1.bf16.msra.mxu0 %v6485
    %9409 = vmatprep.subr.bf16.mxu0 %v6488
    %9410 = vmatpush1.bf16.msra.mxu0 %v6487
    %9411 = vmatprep.subr.bf16.mxu0 %v6490
    %9412 = vmatpush1.bf16.msra.mxu0 %v6489
    %9413 = vmatprep.subr.bf16.mxu0 %v6492
    %9414 = vmatpush1.bf16.msra.mxu0 %v6491
    %9415 = vmatprep.subr.bf16.mxu0 %v6494
    %9416 = vmatpush1.bf16.msra.mxu0 %v6493
    %9417 = vmatprep.subr.bf16.mxu0 %v6496
    %9418 = vmatpush1.bf16.msra.mxu0 %v6495
    %9419 = vmatprep.subr.bf16.mxu0 %v6498
    %9420 = vmatpush1.bf16.msra.mxu0 %v6497
    %9421 = vmatprep.subr.bf16.mxu0 %v6500
    %9422 = vmatpush1.bf16.msra.mxu0 %v6499
    %9423 = vmatprep.subr.bf16.mxu0 %v6502
    %9424 = vmatpush1.bf16.msra.mxu0 %v6501
    %9425 = vmatprep.subr.bf16.mxu0 %v6504
    %9426 = vmatpush1.bf16.msra.mxu0 %v6503
    %9427 = vmatprep.subr.bf16.mxu0 %v6506
    %9428 = vmatpush1.bf16.msra.mxu0 %v6505
    %9429 = vmatprep.subr.bf16.mxu0 %v6508
    %9430 = vmatpush1.bf16.msra.mxu0 %v6507
    %9431 = vmatprep.subr.bf16.mxu0 %v6510
    %9432 = vmatpush1.bf16.msra.mxu0 %v6509
    %9433 = vmatprep.subr.bf16.mxu0 %v6512
    %9434 = vmatpush1.bf16.msra.mxu0 %v6511
    %9435 = vmatprep.subr.bf16.mxu0 %v6514
    %9436 = vmatpush1.bf16.msra.mxu0 %v6513
    %9437 = vmatprep.subr.bf16.mxu0 %v6516
    %9438 = vmatpush1.bf16.msra.mxu0 %v6515
    %9439 = vmatprep.mubr.bf16.mxu0 %v309
    %9440 = vmatmul.mubr.bf16.gmra.mrb[0].mxu0 %v308
    %v9441 = vpop.f32.mrb[0].mxu0
    %v9442 = vadd.f32 %v9399, %v9441
    %v9443 = vpop.f32.mrb[0].mxu0
    %v9444 = vadd.f32 %v9401, %v9443
    %v9445 = vpop.f32.mrb[0].mxu0
    %v9446 = vadd.f32 %v9403, %v9445
    %v9447 = vpop.f32.mrb[0].mxu0
    %v9448 = vadd.f32 %v9405, %v9447
    %9449 = vdwg.mxu0
    %9450 = vmatprep.subr.bf16.mxu0 %v6518
    %9451 = vmatpush1.bf16.msra.mxu0 %v6517
    %9452 = vmatprep.subr.bf16.mxu0 %v6520
    %9453 = vmatpush1.bf16.msra.mxu0 %v6519
    %9454 = vmatprep.subr.bf16.mxu0 %v6522
    %9455 = vmatpush1.bf16.msra.mxu0 %v6521
    %9456 = vmatprep.subr.bf16.mxu0 %v6524
    %9457 = vmatpush1.bf16.msra.mxu0 %v6523
    %9458 = vmatprep.subr.bf16.mxu0 %v6526
    %9459 = vmatpush1.bf16.msra.mxu0 %v6525
    %9460 = vmatprep.subr.bf16.mxu0 %v6528
    %9461 = vmatpush1.bf16.msra.mxu0 %v6527
    %9462 = vmatprep.subr.bf16.mxu0 %v6530
    %9463 = vmatpush1.bf16.msra.mxu0 %v6529
    %9464 = vmatprep.subr.bf16.mxu0 %v6532
    %9465 = vmatpush1.bf16.msra.mxu0 %v6531
    %9466 = vmatprep.subr.bf16.mxu0 %v6534
    %9467 = vmatpush1.bf16.msra.mxu0 %v6533
    %9468 = vmatprep.subr.bf16.mxu0 %v6536
    %9469 = vmatpush1.bf16.msra.mxu0 %v6535
    %9470 = vmatprep.subr.bf16.mxu0 %v6538
    %9471 = vmatpush1.bf16.msra.mxu0 %v6537
    %9472 = vmatprep.subr.bf16.mxu0 %v6540
    %9473 = vmatpush1.bf16.msra.mxu0 %v6539
    %9474 = vmatprep.subr.bf16.mxu0 %v6542
    %9475 = vmatpush1.bf16.msra.mxu0 %v6541
    %9476 = vmatprep.subr.bf16.mxu0 %v6544
    %9477 = vmatpush1.bf16.msra.mxu0 %v6543
    %9478 = vmatprep.subr.bf16.mxu0 %v6546
    %9479 = vmatpush1.bf16.msra.mxu0 %v6545
    %9480 = vmatprep.subr.bf16.mxu0 %v6548
    %9481 = vmatpush1.bf16.msra.mxu0 %v6547
    %9482 = vmatprep.mubr.bf16.mxu0 %v311
    %9483 = vmatmul.mubr.bf16.gmra.mrb[0].mxu0 %v310
    %v9484 = vpop.f32.mrb[0].mxu0
    %v9485 = vadd.f32 %v9442, %v9484
    %v9486 = vpop.f32.mrb[0].mxu0
    %v9487 = vadd.f32 %v9444, %v9486
    %v9488 = vpop.f32.mrb[0].mxu0
    %v9489 = vadd.f32 %v9446, %v9488
    %v9490 = vpop.f32.mrb[0].mxu0
    %v9491 = vadd.f32 %v9448, %v9490
    %9492 = vdwg.mxu0
    %9493 = vmatprep.subr.bf16.mxu0 %v6550
    %9494 = vmatpush1.bf16.msra.mxu0 %v6549
    %9495 = vmatprep.subr.bf16.mxu0 %v6552
    %9496 = vmatpush1.bf16.msra.mxu0 %v6551
    %9497 = vmatprep.subr.bf16.mxu0 %v6554
    %9498 = vmatpush1.bf16.msra.mxu0 %v6553
    %9499 = vmatprep.subr.bf16.mxu0 %v6556
    %9500 = vmatpush1.bf16.msra.mxu0 %v6555
    %9501 = vmatprep.subr.bf16.mxu0 %v6558
    %9502 = vmatpush1.bf16.msra.mxu0 %v6557
    %9503 = vmatprep.subr.bf16.mxu0 %v6560
    %9504 = vmatpush1.bf16.msra.mxu0 %v6559
    %9505 = vmatprep.subr.bf16.mxu0 %v6562
    %9506 = vmatpush1.bf16.msra.mxu0 %v6561
    %9507 = vmatprep.subr.bf16.mxu0 %v6564
    %9508 = vmatpush1.bf16.msra.mxu0 %v6563
    %9509 = vmatprep.subr.bf16.mxu0 %v6566
    %9510 = vmatpush1.bf16.msra.mxu0 %v6565
    %9511 = vmatprep.subr.bf16.mxu0 %v6568
    %9512 = vmatpush1.bf16.msra.mxu0 %v6567
    %9513 = vmatprep.subr.bf16.mxu0 %v6570
    %9514 = vmatpush1.bf16.msra.mxu0 %v6569
    %9515 = vmatprep.subr.bf16.mxu0 %v6572
    %9516 = vmatpush1.bf16.msra.mxu0 %v6571
    %9517 = vmatprep.subr.bf16.mxu0 %v6574
    %9518 = vmatpush1.bf16.msra.mxu0 %v6573
    %9519 = vmatprep.subr.bf16.mxu0 %v6576
    %9520 = vmatpush1.bf16.msra.mxu0 %v6575
    %9521 = vmatprep.subr.bf16.mxu0 %v6578
    %9522 = vmatpush1.bf16.msra.mxu0 %v6577
    %9523 = vmatprep.subr.bf16.mxu0 %v6580
    %9524 = vmatpush1.bf16.msra.mxu0 %v6579
    %9525 = vmatprep.mubr.bf16.mxu0 %v313
    %9526 = vmatmul.mubr.bf16.gmra.mrb[0].mxu0 %v312
    %v9527 = vpop.f32.mrb[0].mxu0
    %v9528 = vadd.f32 %v9485, %v9527
    %v9529 = vpop.f32.mrb[0].mxu0
    %v9530 = vadd.f32 %v9487, %v9529
    %v9531 = vpop.f32.mrb[0].mxu0
    %v9532 = vadd.f32 %v9489, %v9531
    %v9533 = vpop.f32.mrb[0].mxu0
    %v9534 = vadd.f32 %v9491, %v9533
    %9535 = vdwg.mxu0
    %9536 = vmatprep.subr.bf16.mxu0 %v6582
    %9537 = vmatpush1.bf16.msra.mxu0 %v6581
    %9538 = vmatprep.subr.bf16.mxu0 %v6584
    %9539 = vmatpush1.bf16.msra.mxu0 %v6583
    %9540 = vmatprep.subr.bf16.mxu0 %v6586
    %9541 = vmatpush1.bf16.msra.mxu0 %v6585
    %9542 = vmatprep.subr.bf16.mxu0 %v6588
    %9543 = vmatpush1.bf16.msra.mxu0 %v6587
    %9544 = vmatprep.subr.bf16.mxu0 %v6590
    %9545 = vmatpush1.bf16.msra.mxu0 %v6589
    %9546 = vmatprep.subr.bf16.mxu0 %v6592
    %9547 = vmatpush1.bf16.msra.mxu0 %v6591
    %9548 = vmatprep.subr.bf16.mxu0 %v6594
    %9549 = vmatpush1.bf16.msra.mxu0 %v6593
    %9550 = vmatprep.subr.bf16.mxu0 %v6596
    %9551 = vmatpush1.bf16.msra.mxu0 %v6595
    %9552 = vmatprep.subr.bf16.mxu0 %v6598
    %9553 = vmatpush1.bf16.msra.mxu0 %v6597
    %9554 = vmatprep.subr.bf16.mxu0 %v6600
    %9555 = vmatpush1.bf16.msra.mxu0 %v6599
    %9556 = vmatprep.subr.bf16.mxu0 %v6602
    %9557 = vmatpush1.bf16.msra.mxu0 %v6601
    %9558 = vmatprep.subr.bf16.mxu0 %v6604
    %9559 = vmatpush1.bf16.msra.mxu0 %v6603
    %9560 = vmatprep.subr.bf16.mxu0 %v6606
    %9561 = vmatpush1.bf16.msra.mxu0 %v6605
    %9562 = vmatprep.subr.bf16.mxu0 %v6608
    %9563 = vmatpush1.bf16.msra.mxu0 %v6607
    %9564 = vmatprep.subr.bf16.mxu0 %v6610
    %9565 = vmatpush1.bf16.msra.mxu0 %v6609
    %9566 = vmatprep.subr.bf16.mxu0 %v6612
    %9567 = vmatpush1.bf16.msra.mxu0 %v6611
    %9568 = vmatprep.mubr.bf16.mxu0 %v315
    %9569 = vmatmul.mubr.bf16.gmra.mrb[0].mxu0 %v314
    %v9570 = vpop.f32.mrb[0].mxu0
    %v9571 = vadd.f32 %v9528, %v9570
    %v9572 = vpop.f32.mrb[0].mxu0
    %v9573 = vadd.f32 %v9530, %v9572
    %v9574 = vpop.f32.mrb[0].mxu0
    %v9575 = vadd.f32 %v9532, %v9574
    %v9576 = vpop.f32.mrb[0].mxu0
    %v9577 = vadd.f32 %v9534, %v9576
    %9578 = vdwg.mxu0
    %9579 = vmatprep.subr.bf16.mxu0 %v6614
    %9580 = vmatpush1.bf16.msra.mxu0 %v6613
    %9581 = vmatprep.subr.bf16.mxu0 %v6616
    %9582 = vmatpush1.bf16.msra.mxu0 %v6615
    %9583 = vmatprep.subr.bf16.mxu0 %v6618
    %9584 = vmatpush1.bf16.msra.mxu0 %v6617
    %9585 = vmatprep.subr.bf16.mxu0 %v6620
    %9586 = vmatpush1.bf16.msra.mxu0 %v6619
    %9587 = vmatprep.subr.bf16.mxu0 %v6622
    %9588 = vmatpush1.bf16.msra.mxu0 %v6621
    %9589 = vmatprep.subr.bf16.mxu0 %v6624
    %9590 = vmatpush1.bf16.msra.mxu0 %v6623
    %9591 = vmatprep.subr.bf16.mxu0 %v6626
    %9592 = vmatpush1.bf16.msra.mxu0 %v6625
    %9593 = vmatprep.subr.bf16.mxu0 %v6628
    %9594 = vmatpush1.bf16.msra.mxu0 %v6627
    %9595 = vmatprep.subr.bf16.mxu0 %v6630
    %9596 = vmatpush1.bf16.msra.mxu0 %v6629
    %9597 = vmatprep.subr.bf16.mxu0 %v6632
    %9598 = vmatpush1.bf16.msra.mxu0 %v6631
    %9599 = vmatprep.subr.bf16.mxu0 %v6634
    %9600 = vmatpush1.bf16.msra.mxu0 %v6633
    %9601 = vmatprep.subr.bf16.mxu0 %v6636
    %9602 = vmatpush1.bf16.msra.mxu0 %v6635
    %9603 = vmatprep.subr.bf16.mxu0 %v6638
    %9604 = vmatpush1.bf16.msra.mxu0 %v6637
    %9605 = vmatprep.subr.bf16.mxu0 %v6640
    %9606 = vmatpush1.bf16.msra.mxu0 %v6639
    %9607 = vmatprep.subr.bf16.mxu0 %v6642
    %9608 = vmatpush1.bf16.msra.mxu0 %v6641
    %9609 = vmatprep.subr.bf16.mxu0 %v6644
    %9610 = vmatpush1.bf16.msra.mxu0 %v6643
    %9611 = vmatprep.mubr.bf16.mxu0 %v317
    %9612 = vmatmul.mubr.bf16.gmra.mrb[0].mxu0 %v316
    %v9613 = vpop.f32.mrb[0].mxu0
    %v9614 = vadd.f32 %v9571, %v9613
    %v9615 = vpop.f32.mrb[0].mxu0
    %v9616 = vadd.f32 %v9573, %v9615
    %v9617 = vpop.f32.mrb[0].mxu0
    %v9618 = vadd.f32 %v9575, %v9617
    %v9619 = vpop.f32.mrb[0].mxu0
    %v9620 = vadd.f32 %v9577, %v9619
    %9621 = vdwg.mxu0
    %9622 = vmatprep.subr.bf16.mxu0 %v6646
    %9623 = vmatpush1.bf16.msra.mxu0 %v6645
    %9624 = vmatprep.subr.bf16.mxu0 %v6648
    %9625 = vmatpush1.bf16.msra.mxu0 %v6647
    %9626 = vmatprep.subr.bf16.mxu0 %v6650
    %9627 = vmatpush1.bf16.msra.mxu0 %v6649
    %9628 = vmatprep.subr.bf16.mxu0 %v6652
    %9629 = vmatpush1.bf16.msra.mxu0 %v6651
    %9630 = vmatprep.subr.bf16.mxu0 %v6654
    %9631 = vmatpush1.bf16.msra.mxu0 %v6653
    %9632 = vmatprep.subr.bf16.mxu0 %v6656
    %9633 = vmatpush1.bf16.msra.mxu0 %v6655
    %9634 = vmatprep.subr.bf16.mxu0 %v6658
    %9635 = vmatpush1.bf16.msra.mxu0 %v6657
    %9636 = vmatprep.subr.bf16.mxu0 %v6660
    %9637 = vmatpush1.bf16.msra.mxu0 %v6659
    %9638 = vmatprep.subr.bf16.mxu0 %v6662
    %9639 = vmatpush1.bf16.msra.mxu0 %v6661
    %9640 = vmatprep.subr.bf16.mxu0 %v6664
    %9641 = vmatpush1.bf16.msra.mxu0 %v6663
    %9642 = vmatprep.subr.bf16.mxu0 %v6666
    %9643 = vmatpush1.bf16.msra.mxu0 %v6665
    %9644 = vmatprep.subr.bf16.mxu0 %v6668
    %9645 = vmatpush1.bf16.msra.mxu0 %v6667
    %9646 = vmatprep.subr.bf16.mxu0 %v6670
    %9647 = vmatpush1.bf16.msra.mxu0 %v6669
    %9648 = vmatprep.subr.bf16.mxu0 %v6672
    %9649 = vmatpush1.bf16.msra.mxu0 %v6671
    %9650 = vmatprep.subr.bf16.mxu0 %v6674
    %9651 = vmatpush1.bf16.msra.mxu0 %v6673
    %9652 = vmatprep.subr.bf16.mxu0 %v6676
    %9653 = vmatpush1.bf16.msra.mxu0 %v6675
    %9654 = vmatprep.mubr.bf16.mxu0 %v319
    %9655 = vmatmul.mubr.bf16.gmra.mrb[0].mxu0 %v318
    %v9656 = vpop.f32.mrb[0].mxu0
    %v9657 = vadd.f32 %v9614, %v9656
    %v9658 = vpop.f32.mrb[0].mxu0
    %v9659 = vadd.f32 %v9616, %v9658
    %v9660 = vpop.f32.mrb[0].mxu0
    %v9661 = vadd.f32 %v9618, %v9660
    %v9662 = vpop.f32.mrb[0].mxu0
    %v9663 = vadd.f32 %v9620, %v9662
    %9664 = vdwg.mxu0
    %9665 = vmatprep.subr.bf16.mxu0 %v6678
    %9666 = vmatpush1.bf16.msra.mxu0 %v6677
    %9667 = vmatprep.subr.bf16.mxu0 %v6680
    %9668 = vmatpush1.bf16.msra.mxu0 %v6679
    %9669 = vmatprep.subr.bf16.mxu0 %v6682
    %9670 = vmatpush1.bf16.msra.mxu0 %v6681
    %9671 = vmatprep.subr.bf16.mxu0 %v6684
    %9672 = vmatpush1.bf16.msra.mxu0 %v6683
    %9673 = vmatprep.subr.bf16.mxu0 %v6686
    %9674 = vmatpush1.bf16.msra.mxu0 %v6685
    %9675 = vmatprep.subr.bf16.mxu0 %v6688
    %9676 = vmatpush1.bf16.msra.mxu0 %v6687
    %9677 = vmatprep.subr.bf16.mxu0 %v6690
    %9678 = vmatpush1.bf16.msra.mxu0 %v6689
    %9679 = vmatprep.subr.bf16.mxu0 %v6692
    %9680 = vmatpush1.bf16.msra.mxu0 %v6691
    %9681 = vmatprep.subr.bf16.mxu0 %v6694
    %9682 = vmatpush1.bf16.msra.mxu0 %v6693
    %9683 = vmatprep.subr.bf16.mxu0 %v6696
    %9684 = vmatpush1.bf16.msra.mxu0 %v6695
    %9685 = vmatprep.subr.bf16.mxu0 %v6698
    %9686 = vmatpush1.bf16.msra.mxu0 %v6697
    %9687 = vmatprep.subr.bf16.mxu0 %v6700
    %9688 = vmatpush1.bf16.msra.mxu0 %v6699
    %9689 = vmatprep.subr.bf16.mxu0 %v6702
    %9690 = vmatpush1.bf16.msra.mxu0 %v6701
    %9691 = vmatprep.subr.bf16.mxu0 %v6704
    %9692 = vmatpush1.bf16.msra.mxu0 %v6703
    %9693 = vmatprep.subr.bf16.mxu0 %v6706
    %9694 = vmatpush1.bf16.msra.mxu0 %v6705
    %9695 = vmatprep.subr.bf16.mxu0 %v6708
    %9696 = vmatpush1.bf16.msra.mxu0 %v6707
    %9697 = vmatprep.mubr.bf16.mxu0 %v321
    %9698 = vmatmul.mubr.bf16.gmra.mrb[0].mxu0 %v320
    %v9699 = vpop.f32.mrb[0].mxu0
    %v9700 = vadd.f32 %v9657, %v9699
    %v9701 = vpop.f32.mrb[0].mxu0
    %v9702 = vadd.f32 %v9659, %v9701
    %v9703 = vpop.f32.mrb[0].mxu0
    %v9704 = vadd.f32 %v9661, %v9703
    %v9705 = vpop.f32.mrb[0].mxu0
    %v9706 = vadd.f32 %v9663, %v9705
    %9707 = vdwg.mxu0
    %9708 = vmatprep.subr.bf16.mxu0 %v6710
    %9709 = vmatpush1.bf16.msra.mxu0 %v6709
    %9710 = vmatprep.subr.bf16.mxu0 %v6712
    %9711 = vmatpush1.bf16.msra.mxu0 %v6711
    %9712 = vmatprep.subr.bf16.mxu0 %v6714
    %9713 = vmatpush1.bf16.msra.mxu0 %v6713
    %9714 = vmatprep.subr.bf16.mxu0 %v6716
    %9715 = vmatpush1.bf16.msra.mxu0 %v6715
    %9716 = vmatprep.subr.bf16.mxu0 %v6718
    %9717 = vmatpush1.bf16.msra.mxu0 %v6717
    %9718 = vmatprep.subr.bf16.mxu0 %v6720
    %9719 = vmatpush1.bf16.msra.mxu0 %v6719
    %9720 = vmatprep.subr.bf16.mxu0 %v6722
    %9721 = vmatpush1.bf16.msra.mxu0 %v6721
    %9722 = vmatprep.subr.bf16.mxu0 %v6724
    %9723 = vmatpush1.bf16.msra.mxu0 %v6723
    %9724 = vmatprep.subr.bf16.mxu0 %v6726
    %9725 = vmatpush1.bf16.msra.mxu0 %v6725
    %9726 = vmatprep.subr.bf16.mxu0 %v6728
    %9727 = vmatpush1.bf16.msra.mxu0 %v6727
    %9728 = vmatprep.subr.bf16.mxu0 %v6730
    %9729 = vmatpush1.bf16.msra.mxu0 %v6729
    %9730 = vmatprep.subr.bf16.mxu0 %v6732
    %9731 = vmatpush1.bf16.msra.mxu0 %v6731
    %9732 = vmatprep.subr.bf16.mxu0 %v6734
    %9733 = vmatpush1.bf16.msra.mxu0 %v6733
    %9734 = vmatprep.subr.bf16.mxu0 %v6736
    %9735 = vmatpush1.bf16.msra.mxu0 %v6735
    %9736 = vmatprep.subr.bf16.mxu0 %v6738
    %9737 = vmatpush1.bf16.msra.mxu0 %v6737
    %9738 = vmatprep.subr.bf16.mxu0 %v6740
    %9739 = vmatpush1.bf16.msra.mxu0 %v6739
    %9740 = vmatprep.mubr.bf16.mxu0 %v323
    %9741 = vmatmul.mubr.bf16.gmra.mrb[0].mxu0 %v322
    %v9742 = vpop.f32.mrb[0].mxu0
    %v9743 = vadd.f32 %v9700, %v9742
    %v9744 = vpop.f32.mrb[0].mxu0
    %v9745 = vadd.f32 %v9702, %v9744
    %v9746 = vpop.f32.mrb[0].mxu0
    %v9747 = vadd.f32 %v9704, %v9746
    %v9748 = vpop.f32.mrb[0].mxu0
    %v9749 = vadd.f32 %v9706, %v9748
    %9750 = vdwg.mxu0
    %9751 = vmatprep.subr.bf16.mxu0 %v6742
    %9752 = vmatpush1.bf16.msra.mxu0 %v6741
    %9753 = vmatprep.subr.bf16.mxu0 %v6744
    %9754 = vmatpush1.bf16.msra.mxu0 %v6743
    %9755 = vmatprep.subr.bf16.mxu0 %v6746
    %9756 = vmatpush1.bf16.msra.mxu0 %v6745
    %9757 = vmatprep.subr.bf16.mxu0 %v6748
    %9758 = vmatpush1.bf16.msra.mxu0 %v6747
    %9759 = vmatprep.subr.bf16.mxu0 %v6750
    %9760 = vmatpush1.bf16.msra.mxu0 %v6749
    %9761 = vmatprep.subr.bf16.mxu0 %v6752
    %9762 = vmatpush1.bf16.msra.mxu0 %v6751
    %9763 = vmatprep.subr.bf16.mxu0 %v6754
    %9764 = vmatpush1.bf16.msra.mxu0 %v6753
    %9765 = vmatprep.subr.bf16.mxu0 %v6756
    %9766 = vmatpush1.bf16.msra.mxu0 %v6755
    %9767 = vmatprep.subr.bf16.mxu0 %v6758
    %9768 = vmatpush1.bf16.msra.mxu0 %v6757
    %9769 = vmatprep.subr.bf16.mxu0 %v6760
    %9770 = vmatpush1.bf16.msra.mxu0 %v6759
    %9771 = vmatprep.subr.bf16.mxu0 %v6762
    %9772 = vmatpush1.bf16.msra.mxu0 %v6761
    %9773 = vmatprep.subr.bf16.mxu0 %v6764
    %9774 = vmatpush1.bf16.msra.mxu0 %v6763
    %9775 = vmatprep.subr.bf16.mxu0 %v6766
    %9776 = vmatpush1.bf16.msra.mxu0 %v6765
    %9777 = vmatprep.subr.bf16.mxu0 %v6768
    %9778 = vmatpush1.bf16.msra.mxu0 %v6767
    %9779 = vmatprep.subr.bf16.mxu0 %v6770
    %9780 = vmatpush1.bf16.msra.mxu0 %v6769
    %9781 = vmatprep.subr.bf16.mxu0 %v6772
    %9782 = vmatpush1.bf16.msra.mxu0 %v6771
    %9783 = vmatprep.mubr.bf16.mxu0 %v325
    %9784 = vmatmul.mubr.bf16.gmra.mrb[0].mxu0 %v324
    %v9785 = vpop.f32.mrb[0].mxu0
    %v9786 = vadd.f32 %v9743, %v9785
    %v9787 = vpop.f32.mrb[0].mxu0
    %v9788 = vadd.f32 %v9745, %v9787
    %v9789 = vpop.f32.mrb[0].mxu0
    %v9790 = vadd.f32 %v9747, %v9789
    %v9791 = vpop.f32.mrb[0].mxu0
    %v9792 = vadd.f32 %v9749, %v9791
    %9793 = vdwg.mxu0
    %9794 = vmatprep.subr.bf16.mxu0 %v6774
    %9795 = vmatpush1.bf16.msra.mxu0 %v6773
    %9796 = vmatprep.subr.bf16.mxu0 %v6776
    %9797 = vmatpush1.bf16.msra.mxu0 %v6775
    %9798 = vmatprep.subr.bf16.mxu0 %v6778
    %9799 = vmatpush1.bf16.msra.mxu0 %v6777
    %9800 = vmatprep.subr.bf16.mxu0 %v6780
    %9801 = vmatpush1.bf16.msra.mxu0 %v6779
    %9802 = vmatprep.subr.bf16.mxu0 %v6782
    %9803 = vmatpush1.bf16.msra.mxu0 %v6781
    %9804 = vmatprep.subr.bf16.mxu0 %v6784
    %9805 = vmatpush1.bf16.msra.mxu0 %v6783
    %9806 = vmatprep.subr.bf16.mxu0 %v6786
    %9807 = vmatpush1.bf16.msra.mxu0 %v6785
    %9808 = vmatprep.subr.bf16.mxu0 %v6788
    %9809 = vmatpush1.bf16.msra.mxu0 %v6787
    %9810 = vmatprep.subr.bf16.mxu0 %v6790
    %9811 = vmatpush1.bf16.msra.mxu0 %v6789
    %9812 = vmatprep.subr.bf16.mxu0 %v6792
    %9813 = vmatpush1.bf16.msra.mxu0 %v6791
    %9814 = vmatprep.subr.bf16.mxu0 %v6794
    %9815 = vmatpush1.bf16.msra.mxu0 %v6793
    %9816 = vmatprep.subr.bf16.mxu0 %v6796
    %9817 = vmatpush1.bf16.msra.mxu0 %v6795
    %9818 = vmatprep.subr.bf16.mxu0 %v6798
    %9819 = vmatpush1.bf16.msra.mxu0 %v6797
    %9820 = vmatprep.subr.bf16.mxu0 %v6800
    %9821 = vmatpush1.bf16.msra.mxu0 %v6799
    %9822 = vmatprep.subr.bf16.mxu0 %v6802
    %9823 = vmatpush1.bf16.msra.mxu0 %v6801
    %9824 = vmatprep.subr.bf16.mxu0 %v6804
    %9825 = vmatpush1.bf16.msra.mxu0 %v6803
    %9826 = vmatprep.mubr.bf16.mxu0 %v327
    %9827 = vmatmul.mubr.bf16.gmra.mrb[0].mxu0 %v326
    %v9828 = vpop.f32.mrb[0].mxu0
    %v9829 = vadd.f32 %v9786, %v9828
    %v9830 = vpop.f32.mrb[0].mxu0
    %v9831 = vadd.f32 %v9788, %v9830
    %v9832 = vpop.f32.mrb[0].mxu0
    %v9833 = vadd.f32 %v9790, %v9832
    %v9834 = vpop.f32.mrb[0].mxu0
    %v9835 = vadd.f32 %v9792, %v9834
    %9836 = vdwg.mxu0
    %9837 = vmatprep.subr.bf16.mxu0 %v6806
    %9838 = vmatpush1.bf16.msra.mxu0 %v6805
    %9839 = vmatprep.subr.bf16.mxu0 %v6808
    %9840 = vmatpush1.bf16.msra.mxu0 %v6807
    %9841 = vmatprep.subr.bf16.mxu0 %v6810
    %9842 = vmatpush1.bf16.msra.mxu0 %v6809
    %9843 = vmatprep.subr.bf16.mxu0 %v6812
    %9844 = vmatpush1.bf16.msra.mxu0 %v6811
    %9845 = vmatprep.subr.bf16.mxu0 %v6814
    %9846 = vmatpush1.bf16.msra.mxu0 %v6813
    %9847 = vmatprep.subr.bf16.mxu0 %v6816
    %9848 = vmatpush1.bf16.msra.mxu0 %v6815
    %9849 = vmatprep.subr.bf16.mxu0 %v6818
    %9850 = vmatpush1.bf16.msra.mxu0 %v6817
    %9851 = vmatprep.subr.bf16.mxu0 %v6820
    %9852 = vmatpush1.bf16.msra.mxu0 %v6819
    %9853 = vmatprep.subr.bf16.mxu0 0
    %9854 = vmatpush1.bf16.msra.mxu0 0
    %9855 = vmatprep.subr.bf16.mxu0 0
    %9856 = vmatpush1.bf16.msra.mxu0 0
    %9857 = vmatprep.subr.bf16.mxu0 0
    %9858 = vmatpush1.bf16.msra.mxu0 0
    %9859 = vmatprep.subr.bf16.mxu0 0
    %9860 = vmatpush1.bf16.msra.mxu0 0
    %9861 = vmatprep.subr.bf16.mxu0 0
    %9862 = vmatpush1.bf16.msra.mxu0 0
    %9863 = vmatprep.subr.bf16.mxu0 0
    %9864 = vmatpush1.bf16.msra.mxu0 0
    %9865 = vmatprep.subr.bf16.mxu0 0
    %9866 = vmatpush1.bf16.msra.mxu0 0
    %9867 = vmatprep.subr.bf16.mxu0 0
    %9868 = vmatpush1.bf16.msra.mxu0 0
    %9869 = vmatprep.mubr.bf16.mxu0 0
    %9870 = vmatmul.mubr.bf16.gmra.mrb[0].mxu0 %v328
    %v9871 = vpop.f32.mrb[0].mxu0
    %v9872 = vadd.f32 %v9829, %v9871
    %v9873 = vpop.f32.mrb[0].mxu0
    %v9874 = vadd.f32 %v9831, %v9873
    %v9875 = vpop.f32.mrb[0].mxu0
    %v9876 = vadd.f32 %v9833, %v9875
    %v9877 = vpop.f32.mrb[0].mxu0
    %v9878 = vadd.f32 %v9835, %v9877
    %9879 = vdwg.mxu0
    %v9880 = vmax.f32 %v9872, 0.0
    %v9881 = vmax.f32 %v9874, 0.0
    %v9882 = vmax.f32 %v9876, 0.0
    %v9883 = vmax.f32 %v9878, 0.0
    %v9884 = vld [vmem:[#allocation8] sm:$0xff]
    %v9885 = vld [vmem:[#allocation8 + $0x8] sm:$0xff]
    %v9886 = vld [vmem:[#allocation8 + $0x10] sm:$0xff]
    %v9887 = vld [vmem:[#allocation8 + $0x18] sm:$0xff]
    %v9888 = vld [vmem:[#allocation8 + $0x20] sm:$0xff]
    %v9889 = vld [vmem:[#allocation8 + $0x28] sm:$0xff]
    %v9890 = vld [vmem:[#allocation8 + $0x30] sm:$0xff]
    %v9891 = vld [vmem:[#allocation8 + $0x38] sm:$0xff]
    %v9892 = vld [vmem:[#allocation8 + $0x40] sm:$0xff]
    %v9893 = vld [vmem:[#allocation8 + $0x48] sm:$0xff]
    %v9894 = vld [vmem:[#allocation8 + $0x50] sm:$0xff]
    %v9895 = vld [vmem:[#allocation8 + $0x58] sm:$0xff]
    %v9896 = vld [vmem:[#allocation8 + $0x60] sm:$0xff]
    %v9897 = vld [vmem:[#allocation8 + $0x68] sm:$0xff]
    %v9898 = vld [vmem:[#allocation8 + $0x70] sm:$0xff]
    %v9899 = vld [vmem:[#allocation8 + $0x78] sm:$0xff]
    %v9900 = vld [vmem:[#allocation8 + $0x80] sm:$0xff]
    %v9901 = vld [vmem:[#allocation8 + $0x88] sm:$0xff]
    %v9902 = vld [vmem:[#allocation8 + $0x90] sm:$0xff]
    %v9903 = vld [vmem:[#allocation8 + $0x98] sm:$0xff]
    %v9904 = vld [vmem:[#allocation8 + $0xa0] sm:$0xff]
    %v9905 = vld [vmem:[#allocation8 + $0xa8] sm:$0xff]
    %v9906 = vld [vmem:[#allocation8 + $0xb0] sm:$0xff]
    %v9907 = vld [vmem:[#allocation8 + $0xb8] sm:$0xff]
    %v9908 = vld [vmem:[#allocation8 + $0xc0] sm:$0xff]
    %v9909 = vld [vmem:[#allocation8 + $0xc8] sm:$0xff]
    %v9910 = vld [vmem:[#allocation8 + $0xd0] sm:$0xff]
    %v9911 = vld [vmem:[#allocation8 + $0xd8] sm:$0xff]
    %v9912 = vld [vmem:[#allocation8 + $0xe0] sm:$0xff]
    %v9913 = vld [vmem:[#allocation8 + $0xe8] sm:$0xff]
    %v9914 = vld [vmem:[#allocation8 + $0xf0] sm:$0xff]
    %v9915 = vld [vmem:[#allocation8 + $0xf8] sm:$0xff]
    %v9916 = vld [vmem:[#allocation10] sm:$0x1]
    %v9918 = vlaneseq
    %v9919 = vshrl.u32 %v9918, 7
    %v9920 = vsub.s32 0, %v9919
    %v9921 = vrot.slane %v9916, %v9920
    %9923 = vmatprep.subr.mxu0 0.0
    %9924 = vmatpush1.msra.mxu0 %v9884
    %9925 = vmatprep.subr.mxu0 0.0
    %9926 = vmatpush1.msra.mxu0 %v9885
    %9927 = vmatprep.subr.mxu0 0.0
    %9928 = vmatpush1.msra.mxu0 %v9886
    %9929 = vmatprep.subr.mxu0 0.0
    %9930 = vmatpush1.msra.mxu0 %v9887
    %9931 = vmatprep.subr.mxu0 0.0
    %9932 = vmatpush1.msra.mxu0 %v9888
    %9933 = vmatprep.subr.mxu0 0.0
    %9934 = vmatpush1.msra.mxu0 %v9889
    %9935 = vmatprep.subr.mxu0 0.0
    %9936 = vmatpush1.msra.mxu0 %v9890
    %9937 = vmatprep.subr.mxu0 0.0
    %9938 = vmatpush1.msra.mxu0 %v9891
    %9939 = vmatprep.subr.mxu0 0.0
    %9940 = vmatpush1.msra.mxu0 %v9892
    %9941 = vmatprep.subr.mxu0 0.0
    %9942 = vmatpush1.msra.mxu0 %v9893
    %9943 = vmatprep.subr.mxu0 0.0
    %9944 = vmatpush1.msra.mxu0 %v9894
    %9945 = vmatprep.subr.mxu0 0.0
    %9946 = vmatpush1.msra.mxu0 %v9895
    %9947 = vmatprep.subr.mxu0 0.0
    %9948 = vmatpush1.msra.mxu0 %v9896
    %9949 = vmatprep.subr.mxu0 0.0
    %9950 = vmatpush1.msra.mxu0 %v9897
    %9951 = vmatprep.subr.mxu0 0.0
    %9952 = vmatpush1.msra.mxu0 %v9898
    %9953 = vmatprep.subr.mxu0 0.0
    %9954 = vmatpush1.msra.mxu0 %v9899
    %9955 = vmatprep.subr.mxu0 0.0
    %9956 = vmatpush1.msra.mxu0 %v9900
    %9957 = vmatprep.subr.mxu0 0.0
    %9958 = vmatpush1.msra.mxu0 %v9901
    %9959 = vmatprep.subr.mxu0 0.0
    %9960 = vmatpush1.msra.mxu0 %v9902
    %9961 = vmatprep.subr.mxu0 0.0
    %9962 = vmatpush1.msra.mxu0 %v9903
    %9963 = vmatprep.subr.mxu0 0.0
    %9964 = vmatpush1.msra.mxu0 %v9904
    %9965 = vmatprep.subr.mxu0 0.0
    %9966 = vmatpush1.msra.mxu0 %v9905
    %9967 = vmatprep.subr.mxu0 0.0
    %9968 = vmatpush1.msra.mxu0 %v9906
    %9969 = vmatprep.subr.mxu0 0.0
    %9970 = vmatpush1.msra.mxu0 %v9907
    %9971 = vmatprep.subr.mxu0 0.0
    %9972 = vmatpush1.msra.mxu0 %v9908
    %9973 = vmatprep.subr.mxu0 0.0
    %9974 = vmatpush1.msra.mxu0 %v9909
    %9975 = vmatprep.subr.mxu0 0.0
    %9976 = vmatpush1.msra.mxu0 %v9910
    %9977 = vmatprep.subr.mxu0 0.0
    %9978 = vmatpush1.msra.mxu0 %v9911
    %9979 = vmatprep.subr.mxu0 0.0
    %9980 = vmatpush1.msra.mxu0 %v9912
    %9981 = vmatprep.subr.mxu0 0.0
    %9982 = vmatpush1.msra.mxu0 %v9913
    %9983 = vmatprep.subr.mxu0 0.0
    %9984 = vmatpush1.msra.mxu0 %v9914
    %9985 = vmatprep.subr.mxu0 0.0
    %9986 = vmatpush1.msra.mxu0 %v9915
    %9987 = vmatprep.mubr.f32.mxu0 %v9881
    %9988 = vmatmul.mubr.f32.gmra.mrb[0].mxu0 %v9880
    %v9989 = vpop.f32.mrb[0].mxu0
    %v9990 = vadd.f32 %v9921, %v9989
    %v9991 = vpop.f32.mrb[0].mxu0
    %9992 = vmatprep.mubr.f32.mxu0 %v9883
    %9993 = vmatmul.mubr.f32.gmra.mrb[0].mxu0 %v9882
    %v9994 = vpop.f32.mrb[0].mxu0
    %v9995 = vadd.f32 %v9921, %v9994
    %v9996 = vpop.f32.mrb[0].mxu0
    %9997 = vdwg.mxu0
    %9998 = vmax.xlane.f32.xlu0 %v9990
    %v9999 = vpop.xlane.xlu0 %9998
    %10000 = vmax.xlane.f32.xlu0 %v9995
    %v10001 = vpop.xlane.xlu0 %10000
    %v10002 = vsub.f32 %v9990, %v9999
    %v10003 = vsub.f32 %v9995, %v10001
    %v10004 = vmul.f32 %v10002, 1.442695
    %v10005 = vpow.pop %v10004
    %v10006 = vmul.f32 %v10003, 1.442695
    %v10007 = vpow.pop %v10006
    %10008 = vadd.xlane.f32.xlu0 %v10005
    %v10009 = vpop.xlane.xlu0 %10008
    %10010 = vadd.xlane.f32.xlu0 %v10007
    %v10011 = vpop.xlane.xlu0 %10010
    %v10012 = vlog2.pop %v10009
    %v10013 = vmul.f32 %v10012, 0.6931472
    %v10014 = vlog2.pop %v10011
    %v10015 = vmul.f32 %v10014, 0.6931472
    %v10016 = vsub.f32 %v10002, %v10013
    %v10017 = vsub.f32 %v10003, %v10015
    %10018 = vst [vmem:[#allocation11] sm:$0xff] %v10016
    %10019 = vst [vmem:[#allocation11 + $0x8] sm:$0xff] %v10017
    // Predicated region
    $region42: #{tpu_custom_call.1} parent=1 // pred_check
      _
    $region43: #{tpu_custom_call.1} parent=1 // pred_check_branch
      %10021 = sbr.rel (0) target = $region45
    $region44: #{tpu_custom_call.1} parent=1 // pred_region
      %s10023 = ssub.s32 256, 256
      %10024 = vsyncadd [#allocation4], %s10023
      %s10025 = sshll.u32 [#allocation11], 4
      %s10026 = int_to_ptr.vmem [resolvable:$true] %s10025
      %10031 = dma.vmem_to_hbm [thread:$0]  %s10026, 256, %s5, [#allocation4], 128, 128, 8
    $region45: #{tpu_custom_call.1} parent=1 // pred_fallthru
      _
    // Predicated region
    $region46: #{tpu_custom_call.1} parent=1 // pred_check
      _
    $region47: #{tpu_custom_call.1} parent=1 // pred_check_branch
      %10033 = sbr.rel (0) target = $region49
    $region48: #{tpu_custom_call.1} parent=1 // pred_region
      %10034 = dma.done [#allocation4], 256
    $region49: #{tpu_custom_call.1} parent=1 // pred_fallthru
      _
    %10035 = vsyncpa [#allocation3], 1
    %10036 = vsyncpa [#allocation6], 1
    %10037 = vsyncpa [#allocation9], 1
    %10038 = vsyncpa [#allocation4], 1

</llo_original>
